<compile_context>
chip_gen: v5e
topology: v5e:2x2
jax: 0.10.0
libtpu: 0.0.40
codegen_flags: <defaults>
</compile_context>

<pallas_src>
import functools

import jax
import jax.numpy as jnp
import numpy as np
from jax import lax
from jax.experimental import pallas as pl
from jax.experimental.pallas import tpu as pltpu


# ---------------------------------------------------------------------------
# Fused kernel: per image (grid over B)
#   channel MLP att -> xc = x*att -> conv7+BN+ReLU -> conv7+BN -> sigmoid
#   -> out = xc * att_spatial, stored directly in NCHW ((C, H*W) block).
# ---------------------------------------------------------------------------
def _sccsa_kernel(x_ref, w1t_ref, b1t_ref, w2t_ref, b2t_ref,
                  w1f_ref, s1_ref, t1_ref, w2f_ref, s2_ref, t2_ref,
                  out_ref, xpad_ref, h1pad_ref, *, H, W):
    C = x_ref.shape[1]
    mid = w1t_ref.shape[0]
    Cout = s2_ref.shape[1]
    HW = H * W

    # ---- re-zero only the 3-wide halos; the interior is fully overwritten ----
    def zero_halo(pad_ref, ch):
        row = jnp.zeros((3, W + 6, ch), jnp.float32)
        col = jnp.zeros((H + 6, 3, ch), jnp.float32)
        pad_ref[0:3, :, :] = row
        pad_ref[H + 3:H + 6, :, :] = row
        pad_ref[:, 0:3, :] = col
        pad_ref[:, W + 3:W + 6, :] = col

    zero_halo(xpad_ref, C)
    zero_halo(h1pad_ref, mid)

    # ---- channel attention (per-pixel MLP) in lane-dense (C, H*W) layout ----
    x_cn = x_ref[0].astype(jnp.float32)                                 # (C, HW)
    h = jnp.dot(w1t_ref[...], x_cn, preferred_element_type=jnp.float32) + b1t_ref[...]
    h = jnp.maximum(h, 0.0)                                             # (mid, HW)
    att = jnp.dot(w2t_ref[...], h, preferred_element_type=jnp.float32) + b2t_ref[...]
    xc_cn = x_cn * att                                                  # (C, HW)

    # ---- transpose to channel-minor on the XLU, pad into the VMEM scratch ----
    xc_img = jnp.transpose(xc_cn).reshape(H, W, C)                      # (H, W, C)
    xpad_ref[3:3 + H, 3:3 + W, :] = xc_img

    def conv7(xpad, wf_ref, cin, cout):
        # ky-folded 7x7 conv: one MXU matmul with K = 7*cin, N = 7*cout,
        # then 7 shifted partial-row accumulations (cheap VPU adds).
        slab = jnp.concatenate(
            [xpad[:, kx:kx + W, :] for kx in range(7)], axis=-1)        # (H+6, W, 7cin)
        part = jnp.dot(slab.reshape((H + 6) * W, 7 * cin), wf_ref[...],
                       preferred_element_type=jnp.float32)              # ((H+6)W, 7cout)
        part = part.reshape(H + 6, W, 7 * cout)
        acc = part[0:H, :, 0:cout]
        for ky in range(1, 7):
            acc = acc + part[ky:ky + H, :, ky * cout:(ky + 1) * cout]
        return acc                                                      # (H, W, cout)

    # conv1 (C -> mid) + fused bias/BN + ReLU; padded result stays in VMEM.
    h1 = conv7(xpad_ref[...], w1f_ref, C, mid)
    h1 = jnp.maximum(h1 * s1_ref[...].reshape(1, 1, mid)
                     + t1_ref[...].reshape(1, 1, mid), 0.0)
    h1pad_ref[3:3 + H, 3:3 + W, :] = h1

    # conv2 (mid -> Cout) + fused bias/BN + sigmoid, multiply, store NCHW.
    y = conv7(h1pad_ref[...], w2f_ref, mid, Cout)
    y = y * s2_ref[...].reshape(1, 1, Cout) + t2_ref[...].reshape(1, 1, Cout)
    out_hwc = xc_img * jax.nn.sigmoid(y)                                # (H, W, C)
    out_ref[0] = jnp.transpose(out_hwc.reshape(HW, C)).astype(out_ref.dtype)


def sccsa_pallas(x_cn, w1t, b1t, w2t, b2t, w1f, s1, t1, w2f, s2, t2, *, H, W):
    """x_cn: (B, C, H*W) NCHW-flattened input. Returns the SCCSA output in the
    same (B, C, H*W) layout."""
    B, C, HW = x_cn.shape
    mid = w1t.shape[0]
    Cout = s2.shape[1]
    assert Cout == C, "out_channels must equal in_channels for the final x * att"
    itemsize = jnp.dtype(x_cn.dtype).itemsize

    # Explicit scoped-VMEM budget (review): lane/sublane-padded blocks,
    # scratches and in-kernel transients, clamped to v7x's 64 MiB.
    def pad_bytes(shape, isz=4):
        s = list(shape)
        s[-1] = -(-s[-1] // 128) * 128
        if len(s) >= 2:
            s[-2] = -(-s[-2] // 8) * 8
        n = 1
        for d in s:
            n *= d
        return n * isz

    est = 2 * 2 * pad_bytes((C, HW), itemsize)                  # double-buffered x / out
    for shp in [(mid, C), (mid, 1), (C, mid), (C, 1), (7 * C, 7 * mid),
                (1, mid), (1, mid), (7 * mid, 7 * Cout), (1, Cout), (1, Cout)]:
        est += 2 * pad_bytes(shp)
    est += pad_bytes((H + 6, W + 6, C)) + pad_bytes((H + 6, W + 6, mid))
    est += pad_bytes(((H + 6) * W, 7 * C)) + pad_bytes(((H + 6) * W, 7 * mid))
    est += pad_bytes(((H + 6) * W, 7 * mid)) + pad_bytes(((H + 6) * W, 7 * Cout))
    est += 8 * pad_bytes((HW, C))                                # misc image-sized temps
    vmem_limit = int(min(64 * 1024 * 1024, max(32 * 1024 * 1024, 2 * est)))

    flops = int(B * (4 * HW * C * mid + 2 * HW * C
                     + 2 * (H + 6) * W * 49 * (C * mid + mid * Cout)
                     + 4 * HW * Cout))
    transc = int(B * HW * Cout)
    w_bytes = 4 * (w1t.size + b1t.size + w2t.size + b2t.size + w1f.size
                   + w2f.size + s1.size + t1.size + s2.size + t2.size)
    bytes_accessed = int(2 * B * C * HW * itemsize + w_bytes)

    return pl.pallas_call(
        functools.partial(_sccsa_kernel, H=H, W=W),
        out_shape=jax.ShapeDtypeStruct((B, C, HW), x_cn.dtype),
        grid_spec=pltpu.PrefetchScalarGridSpec(
            num_scalar_prefetch=0,
            grid=(B,),
            in_specs=[
                pl.BlockSpec((1, C, HW), lambda b: (b, 0, 0)),
                pl.BlockSpec((mid, C), lambda b: (0, 0)),
                pl.BlockSpec((mid, 1), lambda b: (0, 0)),
                pl.BlockSpec((C, mid), lambda b: (0, 0)),
                pl.BlockSpec((C, 1), lambda b: (0, 0)),
                pl.BlockSpec((7 * C, 7 * mid), lambda b: (0, 0)),
                pl.BlockSpec((1, mid), lambda b: (0, 0)),
                pl.BlockSpec((1, mid), lambda b: (0, 0)),
                pl.BlockSpec((7 * mid, 7 * Cout), lambda b: (0, 0)),
                pl.BlockSpec((1, Cout), lambda b: (0, 0)),
                pl.BlockSpec((1, Cout), lambda b: (0, 0)),
            ],
            out_specs=pl.BlockSpec((1, C, HW), lambda b: (b, 0, 0)),
            scratch_shapes=[
                pltpu.VMEM((H + 6, W + 6, C), jnp.float32),
                pltpu.VMEM((H + 6, W + 6, mid), jnp.float32),
            ],
        ),
        compiler_params=pltpu.CompilerParams(
            dimension_semantics=("parallel",),
            vmem_limit_bytes=vmem_limit),
        cost_estimate=pl.CostEstimate(flops=flops, transcendentals=transc,
                                      bytes_accessed=bytes_accessed),
    )(x_cn, w1t, b1t, w2t, b2t, w1f, s1, t1, w2f, s2, t2)


# ---------------------------------------------------------------------------
# Parameter construction + fused BN scale/shift (glue, plain JAX)
# ---------------------------------------------------------------------------
def make_params(key, in_channels, out_channels, rate=4):
    mid = int(in_channels / rate)
    ks = jax.random.split(key, 8)
    p = {
        # channel attention (Linear weights stored as (in, out))
        "w1": 0.2 * jax.random.normal(ks[0], (in_channels, mid), jnp.float32),
        "b1": 0.1 * jax.random.normal(ks[1], (1, mid), jnp.float32),
        "w2": 0.2 * jax.random.normal(ks[2], (mid, in_channels), jnp.float32),
        "b2": 0.1 * jax.random.normal(ks[3], (1, in_channels), jnp.float32),
        # spatial attention convs (HWIO)
        "cw1": 0.05 * jax.random.normal(ks[4], (7, 7, in_channels, mid), jnp.float32),
        "cb1": 0.05 * jax.random.normal(ks[5], (mid,), jnp.float32),
        "cw2": 0.05 * jax.random.normal(ks[6], (7, 7, mid, out_channels), jnp.float32),
        "cb2": 0.05 * jax.random.normal(ks[7], (out_channels,), jnp.float32),
        # BatchNorm (inference) parameters
        "bn1_gamma": jnp.linspace(0.9, 1.1, mid, dtype=jnp.float32),
        "bn1_beta": jnp.linspace(-0.1, 0.1, mid, dtype=jnp.float32),
        "bn1_mean": jnp.linspace(-0.2, 0.2, mid, dtype=jnp.float32),
        "bn1_var": jnp.linspace(0.5, 1.5, mid, dtype=jnp.float32),
        "bn2_gamma": jnp.linspace(0.9, 1.1, out_channels, dtype=jnp.float32),
        "bn2_beta": jnp.linspace(-0.1, 0.1, out_channels, dtype=jnp.float32),
        "bn2_mean": jnp.linspace(-0.2, 0.2, out_channels, dtype=jnp.float32),
        "bn2_var": jnp.linspace(0.5, 1.5, out_channels, dtype=jnp.float32),
    }
    return p


def _fuse_bn(bias, gamma, beta, mean, var, eps=1e-5):
    scale = gamma * lax.rsqrt(var + eps)
    shift = (bias - mean) * scale + beta
    return scale.reshape(1, -1), shift.reshape(1, -1)


# ---------------------------------------------------------------------------
# Public wrapper: NCHW in -> NCHW out (matches PyTorch SCCSA.forward)
# ---------------------------------------------------------------------------
@jax.jit
def sccsa_forward(x_nchw, params):
    B, C, H, W = x_nchw.shape
    mid = params["w1"].shape[1]
    Cout = params["cw2"].shape[-1]

    s1, t1 = _fuse_bn(params["cb1"], params["bn1_gamma"], params["bn1_beta"],
                      params["bn1_mean"], params["bn1_var"])
    s2, t2 = _fuse_bn(params["cb2"], params["bn2_gamma"], params["bn2_beta"],
                      params["bn2_mean"], params["bn2_var"])

    # ky-folded conv weights: HWIO (7,7,Cin,Cout) -> (kx,ci,ky,co) -> (7*Cin, 7*Cout)
    w1f = jnp.transpose(params["cw1"], (1, 2, 0, 3)).reshape(7 * C, 7 * mid)
    w2f = jnp.transpose(params["cw2"], (1, 2, 0, 3)).reshape(7 * mid, 7 * Cout)

    out_cn = sccsa_pallas(
        x_nchw.reshape(B, C, H * W),            # free reshape, no HBM pass
        jnp.transpose(params["w1"]),            # (mid, C)
        params["b1"].reshape(mid, 1),
        jnp.transpose(params["w2"]),            # (C, mid)
        params["b2"].reshape(C, 1),
        w1f, s1, t1, w2f, s2, t2, H=H, W=W)
    return out_cn.reshape(B, C, H, W)           # free reshape back to NCHW


# ---------------------------------------------------------------------------
# Pure-JAX reference (for correctness check)
# ---------------------------------------------------------------------------
def ref_forward(x_nchw, params):
    B, C, H, W = x_nchw.shape
    x = jnp.transpose(x_nchw, (0, 2, 3, 1))
    att = jnp.maximum(x.reshape(-1, C) @ params["w1"] + params["b1"], 0.0)
    att = att @ params["w2"] + params["b2"]
    xc = x * att.reshape(B, H, W, C)

    s1, t1 = _fuse_bn(params["cb1"], params["bn1_gamma"], params["bn1_beta"],
                      params["bn1_mean"], params["bn1_var"])
    s2, t2 = _fuse_bn(params["cb2"], params["bn2_gamma"], params["bn2_beta"],
                      params["bn2_mean"], params["bn2_var"])

    dn = ("NHWC", "HWIO", "NHWC")
    y = lax.conv_general_dilated(xc, params["cw1"], (1, 1), ((3, 3), (3, 3)),
                                 dimension_numbers=dn)
    y = jnp.maximum(y * s1.reshape(1, 1, 1, -1) + t1.reshape(1, 1, 1, -1), 0.0)
    y = lax.conv_general_dilated(y, params["cw2"], (1, 1), ((3, 3), (3, 3)),
                                 dimension_numbers=dn)
    y = y * s2.reshape(1, 1, 1, -1) + t2.reshape(1, 1, 1, -1)
    out = xc * jax.nn.sigmoid(y)
    return jnp.transpose(out, (0, 3, 1, 2))


if __name__ == "__main__":
    B, C, H, W = 2, 32, 16, 16          # in_channels = out_channels = 32, rate = 4
    key = jax.random.PRNGKey(0)
    kx, kp = jax.random.split(key)
    x = jax.random.normal(kx, (B, C, H, W), jnp.float32)
    params = make_params(kp, in_channels=C, out_channels=C, rate=4)

    out = sccsa_forward(x, params)
    jax.block_until_ready(out)

    ref = ref_forward(x, params)
    np.testing.assert_allclose(np.asarray(out), np.asarray(ref), rtol=1e-3, atol=2e-3)

    print("KERNEL_OK")
</pallas_src>

<mosaic_0001>
module attributes {stable_mosaic.version = 11 : i64} {
  func.func @_sccsa_kernel(%arg0: i32, %arg1: memref<1x32x256xf32, #tpu.memory_space<vmem>>, %arg2: memref<8x32xf32, #tpu.memory_space<vmem>>, %arg3: memref<8x1xf32, #tpu.memory_space<vmem>>, %arg4: memref<32x8xf32, #tpu.memory_space<vmem>>, %arg5: memref<32x1xf32, #tpu.memory_space<vmem>>, %arg6: memref<224x56xf32, #tpu.memory_space<vmem>>, %arg7: memref<1x8xf32, #tpu.memory_space<vmem>>, %arg8: memref<1x8xf32, #tpu.memory_space<vmem>>, %arg9: memref<56x224xf32, #tpu.memory_space<vmem>>, %arg10: memref<1x32xf32, #tpu.memory_space<vmem>>, %arg11: memref<1x32xf32, #tpu.memory_space<vmem>>, %arg12: memref<1x32x256xf32, #tpu.memory_space<vmem>>, %arg13: memref<22x22x32xf32, #tpu.memory_space<vmem>>, %arg14: memref<22x22x8xf32, #tpu.memory_space<vmem>>) attributes {dimension_semantics = [#tpu.dimension_semantics<parallel>], iteration_bounds = array<i64: 2>, scalar_prefetch = 0 : i64, scratch_operands = 2 : i64, tpu.core_type = #tpu.core_type<tc>, window_params = [{transform_indices = @transform_0, window_bounds = array<i64: 1, 32, 256>}, {pipeline_mode = #tpu.pipeline_mode<synchronous>, transform_indices = @transform_1, window_bounds = array<i64: 8, 32>}, {pipeline_mode = #tpu.pipeline_mode<synchronous>, transform_indices = @transform_2, window_bounds = array<i64: 8, 1>}, {pipeline_mode = #tpu.pipeline_mode<synchronous>, transform_indices = @transform_3, window_bounds = array<i64: 32, 8>}, {pipeline_mode = #tpu.pipeline_mode<synchronous>, transform_indices = @transform_4, window_bounds = array<i64: 32, 1>}, {pipeline_mode = #tpu.pipeline_mode<synchronous>, transform_indices = @transform_5, window_bounds = array<i64: 224, 56>}, {pipeline_mode = #tpu.pipeline_mode<synchronous>, transform_indices = @transform_6, window_bounds = array<i64: 1, 8>}, {pipeline_mode = #tpu.pipeline_mode<synchronous>, transform_indices = @transform_7, window_bounds = array<i64: 1, 8>}, {pipeline_mode = #tpu.pipeline_mode<synchronous>, transform_indices = @transform_8, window_bounds = array<i64: 56, 224>}, {pipeline_mode = #tpu.pipeline_mode<synchronous>, transform_indices = @transform_9, window_bounds = array<i64: 1, 32>}, {pipeline_mode = #tpu.pipeline_mode<synchronous>, transform_indices = @transform_10, window_bounds = array<i64: 1, 32>}, {transform_indices = @transform_11, window_bounds = array<i64: 1, 32, 256>}]} {
    %cst = arith.constant 0.000000e+00 : f32
    %0 = vector.broadcast %cst : f32 to vector<3x22x32xf32>
    %cst_0 = arith.constant 0.000000e+00 : f32
    %1 = vector.broadcast %cst_0 : f32 to vector<22x3x32xf32>
    %c0 = arith.constant 0 : index
    %c0_1 = arith.constant 0 : index
    %c0_2 = arith.constant 0 : index
    %2 = vector.load %arg13[%c0, %c0_1, %c0_2] : memref<22x22x32xf32, #tpu.memory_space<vmem>>, vector<3x22x32xf32>
    tpu.vector_store %arg13[%c0, %c0_1, %c0_2], %0 {strides = array<i32>} : memref<22x22x32xf32, #tpu.memory_space<vmem>>, vector<3x22x32xf32>,
    %c19 = arith.constant 19 : index
    %c0_3 = arith.constant 0 : index
    %c0_4 = arith.constant 0 : index
    %3 = vector.load %arg13[%c19, %c0_3, %c0_4] : memref<22x22x32xf32, #tpu.memory_space<vmem>>, vector<3x22x32xf32>
    tpu.vector_store %arg13[%c19, %c0_3, %c0_4], %0 {strides = array<i32>} : memref<22x22x32xf32, #tpu.memory_space<vmem>>, vector<3x22x32xf32>,
    %c0_5 = arith.constant 0 : index
    %c0_6 = arith.constant 0 : index
    %c0_7 = arith.constant 0 : index
    %4 = vector.load %arg13[%c0_5, %c0_6, %c0_7] : memref<22x22x32xf32, #tpu.memory_space<vmem>>, vector<22x3x32xf32>
    tpu.vector_store %arg13[%c0_5, %c0_6, %c0_7], %1 {strides = array<i32>} : memref<22x22x32xf32, #tpu.memory_space<vmem>>, vector<22x3x32xf32>,
    %c0_8 = arith.constant 0 : index
    %c19_9 = arith.constant 19 : index
    %c0_10 = arith.constant 0 : index
    %5 = vector.load %arg13[%c0_8, %c19_9, %c0_10] : memref<22x22x32xf32, #tpu.memory_space<vmem>>, vector<22x3x32xf32>
    tpu.vector_store %arg13[%c0_8, %c19_9, %c0_10], %1 {strides = array<i32>} : memref<22x22x32xf32, #tpu.memory_space<vmem>>, vector<22x3x32xf32>,
    %cst_11 = arith.constant 0.000000e+00 : f32
    %6 = vector.broadcast %cst_11 : f32 to vector<3x22x8xf32>
    %cst_12 = arith.constant 0.000000e+00 : f32
    %7 = vector.broadcast %cst_12 : f32 to vector<22x3x8xf32>
    %c0_13 = arith.constant 0 : index
    %c0_14 = arith.constant 0 : index
    %c0_15 = arith.constant 0 : index
    %8 = vector.load %arg14[%c0_13, %c0_14, %c0_15] : memref<22x22x8xf32, #tpu.memory_space<vmem>>, vector<3x22x8xf32>
    tpu.vector_store %arg14[%c0_13, %c0_14, %c0_15], %6 {strides = array<i32>} : memref<22x22x8xf32, #tpu.memory_space<vmem>>, vector<3x22x8xf32>,
    %c19_16 = arith.constant 19 : index
    %c0_17 = arith.constant 0 : index
    %c0_18 = arith.constant 0 : index
    %9 = vector.load %arg14[%c19_16, %c0_17, %c0_18] : memref<22x22x8xf32, #tpu.memory_space<vmem>>, vector<3x22x8xf32>
    tpu.vector_store %arg14[%c19_16, %c0_17, %c0_18], %6 {strides = array<i32>} : memref<22x22x8xf32, #tpu.memory_space<vmem>>, vector<3x22x8xf32>,
    %c0_19 = arith.constant 0 : index
    %c0_20 = arith.constant 0 : index
    %c0_21 = arith.constant 0 : index
    %10 = vector.load %arg14[%c0_19, %c0_20, %c0_21] : memref<22x22x8xf32, #tpu.memory_space<vmem>>, vector<22x3x8xf32>
    tpu.vector_store %arg14[%c0_19, %c0_20, %c0_21], %7 {strides = array<i32>} : memref<22x22x8xf32, #tpu.memory_space<vmem>>, vector<22x3x8xf32>,
    %c0_22 = arith.constant 0 : index
    %c19_23 = arith.constant 19 : index
    %c0_24 = arith.constant 0 : index
    %11 = vector.load %arg14[%c0_22, %c19_23, %c0_24] : memref<22x22x8xf32, #tpu.memory_space<vmem>>, vector<22x3x8xf32>
    tpu.vector_store %arg14[%c0_22, %c19_23, %c0_24], %7 {strides = array<i32>} : memref<22x22x8xf32, #tpu.memory_space<vmem>>, vector<22x3x8xf32>,
    %c0_25 = arith.constant 0 : index
    %c0_26 = arith.constant 0 : index
    %c0_27 = arith.constant 0 : index
    %12 = vector.load %arg1[%c0_25, %c0_26, %c0_27] : memref<1x32x256xf32, #tpu.memory_space<vmem>>, vector<1x32x256xf32>
    %13 = vector.shape_cast %12 : vector<1x32x256xf32> to vector<32x256xf32>
    %c0_28 = arith.constant 0 : index
    %c0_29 = arith.constant 0 : index
    %14 = vector.load %arg2[%c0_28, %c0_29] : memref<8x32xf32, #tpu.memory_space<vmem>>, vector<8x32xf32>
    %cst_30 = arith.constant dense<0.000000e+00> : vector<8x256xf32>
    %15 = tpu.matmul %14, %13, %cst_30 {dimension_numbers = #tpu.dot_dimension_numbers<[1], [0], [0], [1], [0, 0, 1, 1], [], []>} : vector<8x32xf32>, vector<32x256xf32>, vector<8x256xf32> -> vector<8x256xf32>
    %c0_31 = arith.constant 0 : index
    %c0_32 = arith.constant 0 : index
    %16 = vector.load %arg3[%c0_31, %c0_32] : memref<8x1xf32, #tpu.memory_space<vmem>>, vector<8x1xf32>
    %17 = vector.broadcast %16 : vector<8x1xf32> to vector<8x256xf32>
    %18 = arith.addf %15, %17 : vector<8x256xf32>
    %cst_33 = arith.constant 0.000000e+00 : f32
    %19 = vector.broadcast %cst_33 : f32 to vector<8x256xf32>
    %20 = arith.maximumf %18, %19 : vector<8x256xf32>
    %c0_34 = arith.constant 0 : index
    %c0_35 = arith.constant 0 : index
    %21 = vector.load %arg4[%c0_34, %c0_35] : memref<32x8xf32, #tpu.memory_space<vmem>>, vector<32x8xf32>
    %cst_36 = arith.constant dense<0.000000e+00> : vector<32x256xf32>
    %22 = tpu.matmul %21, %20, %cst_36 {dimension_numbers = #tpu.dot_dimension_numbers<[1], [0], [0], [1], [0, 0, 1, 1], [], []>} : vector<32x8xf32>, vector<8x256xf32>, vector<32x256xf32> -> vector<32x256xf32>
    %c0_37 = arith.constant 0 : index
    %c0_38 = arith.constant 0 : index
    %23 = vector.load %arg5[%c0_37, %c0_38] : memref<32x1xf32, #tpu.memory_space<vmem>>, vector<32x1xf32>
    %24 = vector.broadcast %23 : vector<32x1xf32> to vector<32x256xf32>
    %25 = arith.addf %22, %24 : vector<32x256xf32>
    %26 = arith.mulf %13, %25 : vector<32x256xf32>
    %27 = tpu.transpose %26, [1, 0] : vector<32x256xf32> -> vector<256x32xf32>
    %28 = vector.shape_cast %27 : vector<256x32xf32> to vector<16x16x32xf32>
    %c3 = arith.constant 3 : index
    %c3_39 = arith.constant 3 : index
    %c0_40 = arith.constant 0 : index
    %29 = vector.load %arg13[%c3, %c3_39, %c0_40] : memref<22x22x32xf32, #tpu.memory_space<vmem>>, vector<16x16x32xf32>
    tpu.vector_store %arg13[%c3, %c3_39, %c0_40], %28 {strides = array<i32>} : memref<22x22x32xf32, #tpu.memory_space<vmem>>, vector<16x16x32xf32>,
    %c0_41 = arith.constant 0 : index
    %c0_42 = arith.constant 0 : index
    %c0_43 = arith.constant 0 : index
    %30 = vector.load %arg13[%c0_41, %c0_42, %c0_43] : memref<22x22x32xf32, #tpu.memory_space<vmem>>, vector<22x22x32xf32>
    %31 = vector.extract_strided_slice %30 {offsets = [0, 0, 0], sizes = [22, 16, 32], strides = [1, 1, 1]} : vector<22x22x32xf32> to vector<22x16x32xf32>
    %32 = vector.extract_strided_slice %30 {offsets = [0, 1, 0], sizes = [22, 16, 32], strides = [1, 1, 1]} : vector<22x22x32xf32> to vector<22x16x32xf32>
    %33 = vector.extract_strided_slice %30 {offsets = [0, 2, 0], sizes = [22, 16, 32], strides = [1, 1, 1]} : vector<22x22x32xf32> to vector<22x16x32xf32>
    %34 = vector.extract_strided_slice %30 {offsets = [0, 3, 0], sizes = [22, 16, 32], strides = [1, 1, 1]} : vector<22x22x32xf32> to vector<22x16x32xf32>
    %35 = vector.extract_strided_slice %30 {offsets = [0, 4, 0], sizes = [22, 16, 32], strides = [1, 1, 1]} : vector<22x22x32xf32> to vector<22x16x32xf32>
    %36 = vector.extract_strided_slice %30 {offsets = [0, 5, 0], sizes = [22, 16, 32], strides = [1, 1, 1]} : vector<22x22x32xf32> to vector<22x16x32xf32>
    %37 = vector.extract_strided_slice %30 {offsets = [0, 6, 0], sizes = [22, 16, 32], strides = [1, 1, 1]} : vector<22x22x32xf32> to vector<22x16x32xf32>
    %38 = tpu.concatenate %31, %32, %33, %34, %35, %36, %37 in 2 : vector<22x16x32xf32>, vector<22x16x32xf32>, vector<22x16x32xf32>, vector<22x16x32xf32>, vector<22x16x32xf32>, vector<22x16x32xf32>, vector<22x16x32xf32> -> vector<22x16x224xf32>
    %39 = vector.shape_cast %38 : vector<22x16x224xf32> to vector<352x224xf32>
    %c0_44 = arith.constant 0 : index
    %c0_45 = arith.constant 0 : index
    %40 = vector.load %arg6[%c0_44, %c0_45] : memref<224x56xf32, #tpu.memory_space<vmem>>, vector<224x56xf32>
    %cst_46 = arith.constant dense<0.000000e+00> : vector<352x56xf32>
    %41 = tpu.matmul %39, %40, %cst_46 {dimension_numbers = #tpu.dot_dimension_numbers<[1], [0], [0], [1], [0, 0, 1, 1], [], []>} : vector<352x224xf32>, vector<224x56xf32>, vector<352x56xf32> -> vector<352x56xf32>
    %42 = vector.shape_cast %41 : vector<352x56xf32> to vector<22x16x56xf32>
    %43 = vector.extract_strided_slice %42 {offsets = [0, 0, 0], sizes = [16, 16, 8], strides = [1, 1, 1]} : vector<22x16x56xf32> to vector<16x16x8xf32>
    %44 = vector.extract_strided_slice %42 {offsets = [1, 0, 8], sizes = [16, 16, 8], strides = [1, 1, 1]} : vector<22x16x56xf32> to vector<16x16x8xf32>
    %45 = arith.addf %43, %44 : vector<16x16x8xf32>
    %46 = vector.extract_strided_slice %42 {offsets = [2, 0, 16], sizes = [16, 16, 8], strides = [1, 1, 1]} : vector<22x16x56xf32> to vector<16x16x8xf32>
    %47 = arith.addf %45, %46 : vector<16x16x8xf32>
    %48 = vector.extract_strided_slice %42 {offsets = [3, 0, 24], sizes = [16, 16, 8], strides = [1, 1, 1]} : vector<22x16x56xf32> to vector<16x16x8xf32>
    %49 = arith.addf %47, %48 : vector<16x16x8xf32>
    %50 = vector.extract_strided_slice %42 {offsets = [4, 0, 32], sizes = [16, 16, 8], strides = [1, 1, 1]} : vector<22x16x56xf32> to vector<16x16x8xf32>
    %51 = arith.addf %49, %50 : vector<16x16x8xf32>
    %52 = vector.extract_strided_slice %42 {offsets = [5, 0, 40], sizes = [16, 16, 8], strides = [1, 1, 1]} : vector<22x16x56xf32> to vector<16x16x8xf32>
    %53 = arith.addf %51, %52 : vector<16x16x8xf32>
    %54 = vector.extract_strided_slice %42 {offsets = [6, 0, 48], sizes = [16, 16, 8], strides = [1, 1, 1]} : vector<22x16x56xf32> to vector<16x16x8xf32>
    %55 = arith.addf %53, %54 : vector<16x16x8xf32>
    %c0_47 = arith.constant 0 : index
    %c0_48 = arith.constant 0 : index
    %56 = vector.load %arg7[%c0_47, %c0_48] : memref<1x8xf32, #tpu.memory_space<vmem>>, vector<1x8xf32>
    %57 = vector.shape_cast %56 : vector<1x8xf32> to vector<1x1x8xf32>
    %58 = vector.broadcast %57 : vector<1x1x8xf32> to vector<16x16x8xf32>
    %59 = arith.mulf %55, %58 : vector<16x16x8xf32>
    %c0_49 = arith.constant 0 : index
    %c0_50 = arith.constant 0 : index
    %60 = vector.load %arg8[%c0_49, %c0_50] : memref<1x8xf32, #tpu.memory_space<vmem>>, vector<1x8xf32>
    %61 = vector.shape_cast %60 : vector<1x8xf32> to vector<1x1x8xf32>
    %62 = vector.broadcast %61 : vector<1x1x8xf32> to vector<16x16x8xf32>
    %63 = arith.addf %59, %62 : vector<16x16x8xf32>
    %cst_51 = arith.constant 0.000000e+00 : f32
    %64 = vector.broadcast %cst_51 : f32 to vector<16x16x8xf32>
    %65 = arith.maximumf %63, %64 : vector<16x16x8xf32>
    %c3_52 = arith.constant 3 : index
    %c3_53 = arith.constant 3 : index
    %c0_54 = arith.constant 0 : index
    %66 = vector.load %arg14[%c3_52, %c3_53, %c0_54] : memref<22x22x8xf32, #tpu.memory_space<vmem>>, vector<16x16x8xf32>
    tpu.vector_store %arg14[%c3_52, %c3_53, %c0_54], %65 {strides = array<i32>} : memref<22x22x8xf32, #tpu.memory_space<vmem>>, vector<16x16x8xf32>,
    %c0_55 = arith.constant 0 : index
    %c0_56 = arith.constant 0 : index
    %c0_57 = arith.constant 0 : index
    %67 = vector.load %arg14[%c0_55, %c0_56, %c0_57] : memref<22x22x8xf32, #tpu.memory_space<vmem>>, vector<22x22x8xf32>
    %68 = vector.extract_strided_slice %67 {offsets = [0, 0, 0], sizes = [22, 16, 8], strides = [1, 1, 1]} : vector<22x22x8xf32> to vector<22x16x8xf32>
    %69 = vector.extract_strided_slice %67 {offsets = [0, 1, 0], sizes = [22, 16, 8], strides = [1, 1, 1]} : vector<22x22x8xf32> to vector<22x16x8xf32>
    %70 = vector.extract_strided_slice %67 {offsets = [0, 2, 0], sizes = [22, 16, 8], strides = [1, 1, 1]} : vector<22x22x8xf32> to vector<22x16x8xf32>
    %71 = vector.extract_strided_slice %67 {offsets = [0, 3, 0], sizes = [22, 16, 8], strides = [1, 1, 1]} : vector<22x22x8xf32> to vector<22x16x8xf32>
    %72 = vector.extract_strided_slice %67 {offsets = [0, 4, 0], sizes = [22, 16, 8], strides = [1, 1, 1]} : vector<22x22x8xf32> to vector<22x16x8xf32>
    %73 = vector.extract_strided_slice %67 {offsets = [0, 5, 0], sizes = [22, 16, 8], strides = [1, 1, 1]} : vector<22x22x8xf32> to vector<22x16x8xf32>
    %74 = vector.extract_strided_slice %67 {offsets = [0, 6, 0], sizes = [22, 16, 8], strides = [1, 1, 1]} : vector<22x22x8xf32> to vector<22x16x8xf32>
    %75 = tpu.concatenate %68, %69, %70, %71, %72, %73, %74 in 2 : vector<22x16x8xf32>, vector<22x16x8xf32>, vector<22x16x8xf32>, vector<22x16x8xf32>, vector<22x16x8xf32>, vector<22x16x8xf32>, vector<22x16x8xf32> -> vector<22x16x56xf32>
    %76 = vector.shape_cast %75 : vector<22x16x56xf32> to vector<352x56xf32>
    %c0_58 = arith.constant 0 : index
    %c0_59 = arith.constant 0 : index
    %77 = vector.load %arg9[%c0_58, %c0_59] : memref<56x224xf32, #tpu.memory_space<vmem>>, vector<56x224xf32>
    %cst_60 = arith.constant dense<0.000000e+00> : vector<352x224xf32>
    %78 = tpu.matmul %76, %77, %cst_60 {dimension_numbers = #tpu.dot_dimension_numbers<[1], [0], [0], [1], [0, 0, 1, 1], [], []>} : vector<352x56xf32>, vector<56x224xf32>, vector<352x224xf32> -> vector<352x224xf32>
    %79 = vector.shape_cast %78 : vector<352x224xf32> to vector<22x16x224xf32>
    %80 = vector.extract_strided_slice %79 {offsets = [0, 0, 0], sizes = [16, 16, 32], strides = [1, 1, 1]} : vector<22x16x224xf32> to vector<16x16x32xf32>
    %81 = vector.extract_strided_slice %79 {offsets = [1, 0, 32], sizes = [16, 16, 32], strides = [1, 1, 1]} : vector<22x16x224xf32> to vector<16x16x32xf32>
    %82 = arith.addf %80, %81 : vector<16x16x32xf32>
    %83 = vector.extract_strided_slice %79 {offsets = [2, 0, 64], sizes = [16, 16, 32], strides = [1, 1, 1]} : vector<22x16x224xf32> to vector<16x16x32xf32>
    %84 = arith.addf %82, %83 : vector<16x16x32xf32>
    %85 = vector.extract_strided_slice %79 {offsets = [3, 0, 96], sizes = [16, 16, 32], strides = [1, 1, 1]} : vector<22x16x224xf32> to vector<16x16x32xf32>
    %86 = arith.addf %84, %85 : vector<16x16x32xf32>
    %87 = vector.extract_strided_slice %79 {offsets = [4, 0, 128], sizes = [16, 16, 32], strides = [1, 1, 1]} : vector<22x16x224xf32> to vector<16x16x32xf32>
    %88 = arith.addf %86, %87 : vector<16x16x32xf32>
    %89 = vector.extract_strided_slice %79 {offsets = [5, 0, 160], sizes = [16, 16, 32], strides = [1, 1, 1]} : vector<22x16x224xf32> to vector<16x16x32xf32>
    %90 = arith.addf %88, %89 : vector<16x16x32xf32>
    %91 = vector.extract_strided_slice %79 {offsets = [6, 0, 192], sizes = [16, 16, 32], strides = [1, 1, 1]} : vector<22x16x224xf32> to vector<16x16x32xf32>
    %92 = arith.addf %90, %91 : vector<16x16x32xf32>
    %c0_61 = arith.constant 0 : index
    %c0_62 = arith.constant 0 : index
    %93 = vector.load %arg10[%c0_61, %c0_62] : memref<1x32xf32, #tpu.memory_space<vmem>>, vector<1x32xf32>
    %94 = vector.shape_cast %93 : vector<1x32xf32> to vector<1x1x32xf32>
    %95 = vector.broadcast %94 : vector<1x1x32xf32> to vector<16x16x32xf32>
    %96 = arith.mulf %92, %95 : vector<16x16x32xf32>
    %c0_63 = arith.constant 0 : index
    %c0_64 = arith.constant 0 : index
    %97 = vector.load %arg11[%c0_63, %c0_64] : memref<1x32xf32, #tpu.memory_space<vmem>>, vector<1x32xf32>
    %98 = vector.shape_cast %97 : vector<1x32xf32> to vector<1x1x32xf32>
    %99 = vector.broadcast %98 : vector<1x1x32xf32> to vector<16x16x32xf32>
    %100 = arith.addf %96, %99 : vector<16x16x32xf32>
    %101 = arith.negf %100 : vector<16x16x32xf32>
    %102 = math.exp %101 : vector<16x16x32xf32>
    %cst_65 = arith.constant 1.000000e+00 : f32
    %103 = vector.broadcast %cst_65 : f32 to vector<16x16x32xf32>
    %104 = arith.addf %103, %102 : vector<16x16x32xf32>
    %105 = arith.divf %103, %104 : vector<16x16x32xf32>
    %106 = arith.mulf %28, %105 : vector<16x16x32xf32>
    %107 = vector.shape_cast %106 : vector<16x16x32xf32> to vector<256x32xf32>
    %108 = tpu.transpose %107, [1, 0] : vector<256x32xf32> -> vector<32x256xf32>
    %c0_66 = arith.constant 0 : index
    %c0_67 = arith.constant 0 : index
    %c0_68 = arith.constant 0 : index
    %109 = vector.load %arg12[%c0_66, %c0_67, %c0_68] : memref<1x32x256xf32, #tpu.memory_space<vmem>>, vector<1x32x256xf32>
    %110 = vector.shape_cast %109 : vector<1x32x256xf32> to vector<32x256xf32>
    %111 = vector.shape_cast %108 : vector<32x256xf32> to vector<1x32x256xf32>
    tpu.vector_store %arg12[%c0_66, %c0_67, %c0_68], %111 {strides = array<i32>} : memref<1x32x256xf32, #tpu.memory_space<vmem>>, vector<1x32x256xf32>,
    return
  }
  func.func @transform_0(%arg0: i32) -> (i32, i32, i32) {
    %c0_i32 = arith.constant 0 : i32
    %c0_i32_0 = arith.constant 0 : i32
    %c0_i32_1 = arith.constant 0 : i32
    return %arg0, %c0_i32, %c0_i32_0 : i32, i32, i32
  }
  func.func @transform_1(%arg0: i32) -> (i32, i32) {
    %c0_i32 = arith.constant 0 : i32
    %c0_i32_0 = arith.constant 0 : i32
    %c0_i32_1 = arith.constant 0 : i32
    return %c0_i32, %c0_i32_0 : i32, i32
  }
  func.func @transform_2(%arg0: i32) -> (i32, i32) {
    %c0_i32 = arith.constant 0 : i32
    %c0_i32_0 = arith.constant 0 : i32
    %c0_i32_1 = arith.constant 0 : i32
    return %c0_i32, %c0_i32_0 : i32, i32
  }
  func.func @transform_3(%arg0: i32) -> (i32, i32) {
    %c0_i32 = arith.constant 0 : i32
    %c0_i32_0 = arith.constant 0 : i32
    %c0_i32_1 = arith.constant 0 : i32
    return %c0_i32, %c0_i32_0 : i32, i32
  }
  func.func @transform_4(%arg0: i32) -> (i32, i32) {
    %c0_i32 = arith.constant 0 : i32
    %c0_i32_0 = arith.constant 0 : i32
    %c0_i32_1 = arith.constant 0 : i32
    return %c0_i32, %c0_i32_0 : i32, i32
  }
  func.func @transform_5(%arg0: i32) -> (i32, i32) {
    %c0_i32 = arith.constant 0 : i32
    %c0_i32_0 = arith.constant 0 : i32
    %c0_i32_1 = arith.constant 0 : i32
    return %c0_i32, %c0_i32_0 : i32, i32
  }
  func.func @transform_6(%arg0: i32) -> (i32, i32) {
    %c0_i32 = arith.constant 0 : i32
    %c0_i32_0 = arith.constant 0 : i32
    %c0_i32_1 = arith.constant 0 : i32
    return %c0_i32, %c0_i32_0 : i32, i32
  }
  func.func @transform_7(%arg0: i32) -> (i32, i32) {
    %c0_i32 = arith.constant 0 : i32
    %c0_i32_0 = arith.constant 0 : i32
    %c0_i32_1 = arith.constant 0 : i32
    return %c0_i32, %c0_i32_0 : i32, i32
  }
  func.func @transform_8(%arg0: i32) -> (i32, i32) {
    %c0_i32 = arith.constant 0 : i32
    %c0_i32_0 = arith.constant 0 : i32
    %c0_i32_1 = arith.constant 0 : i32
    return %c0_i32, %c0_i32_0 : i32, i32
  }
  func.func @transform_9(%arg0: i32) -> (i32, i32) {
    %c0_i32 = arith.constant 0 : i32
    %c0_i32_0 = arith.constant 0 : i32
    %c0_i32_1 = arith.constant 0 : i32
    return %c0_i32, %c0_i32_0 : i32, i32
  }
  func.func @transform_10(%arg0: i32) -> (i32, i32) {
    %c0_i32 = arith.constant 0 : i32
    %c0_i32_0 = arith.constant 0 : i32
    %c0_i32_1 = arith.constant 0 : i32
    return %c0_i32, %c0_i32_0 : i32, i32
  }
  func.func @transform_11(%arg0: i32) -> (i32, i32, i32) {
    %c0_i32 = arith.constant 0 : i32
    %c0_i32_0 = arith.constant 0 : i32
    %c0_i32_1 = arith.constant 0 : i32
    return %arg0, %c0_i32, %c0_i32_0 : i32, i32, i32
  }
}

</mosaic_0001>

<llo_original>
// kernel: sccsa_forward.1
$region0: #{sccsa_forward.1}
  #allocation0 [shape = 'u32[]', space=smem, size = 0x4, offset = 0x4, fixed_abs, tag = 'smem constant byte address 0x4 - core index']
  #allocation1 [shape = 'u32[72,128]{1,0:T(1,128)}', space=vmem, size = 0x9000, scoped, tag = 'internal scratch']
  #allocation2 [shape = 'f32[22,22,32]{2,1,0:T(8,128)}', space=vmem, size = 0x42000, scoped, tag = 'scratch operand']
  #allocation3 [shape = 'f32[22,22,8]{2,1,0:T(8,128)}', space=vmem, size = 0x42000, scoped, tag = 'scratch operand']
  %s0 = inlined_call_operand.vmem [shape: f32[2,32,256], index: 0, kind: input, shape index: {}]
  %s1 = inlined_call_operand.vmem [shape: f32[8,32], index: 1, kind: input, shape index: {}]
  %s2 = inlined_call_operand.vmem [shape: f32[8,1], index: 2, kind: input, shape index: {}]
  %s3 = inlined_call_operand.vmem [shape: f32[32,8], index: 3, kind: input, shape index: {}]
  %s4 = inlined_call_operand.vmem [shape: f32[32,1], index: 4, kind: input, shape index: {}]
  %s5 = inlined_call_operand.vmem [shape: f32[224,56], index: 5, kind: input, shape index: {}]
  %s6 = inlined_call_operand.vmem [shape: f32[1,8], index: 6, kind: input, shape index: {}]
  %s7 = inlined_call_operand.vmem [shape: f32[1,8], index: 7, kind: input, shape index: {}]
  %s8 = inlined_call_operand.vmem [shape: f32[56,224], index: 8, kind: input, shape index: {}]
  %s9 = inlined_call_operand.vmem [shape: f32[1,32], index: 9, kind: input, shape index: {}]
  %s10 = inlined_call_operand.vmem [shape: f32[1,32], index: 10, kind: input, shape index: {}]
  %s11 = inlined_call_operand.vmem [shape: f32[2,32,256], index: 11, kind: output, shape index: {}]
  %s12 = sld [smem:[#allocation0]]
  $region77: #{sccsa_forward.1} parent=0
    _
  %s14 = ssub.s32 1, %s12
  %s15 = scalar_select 0, %s14, %s12
  loop: start=0, step=1, limit=4
  $region2: #{sccsa_forward.1} parent=0 // loop_pre_header
    _
  $region3: #{sccsa_forward.1} parent=0 // loop_header
    %s17 = sphi 0, %s21
    %p18 = scmp.ge.s32.totalorder %s17, 4
    %s27 = sphi 0, %s29
    %s30 = sphi 0, %s27
    %s31 = sphi 0, %s30
    %s47 = sphi 0, %s31
    %s51 = sphi 0, %s51
    %s53 = sphi 0, %s51
    %s54 = sphi 0, %s53
    %s68 = sphi 0, %s54
    %s72 = sphi 0, %s72
    %s74 = sphi 0, %s72
    %s75 = sphi 0, %s74
    %s89 = sphi 0, %s75
    %s93 = sphi 0, %s93
    %s95 = sphi 0, %s93
    %s96 = sphi 0, %s95
    %s110 = sphi 0, %s96
    %s114 = sphi 0, %s114
    %s116 = sphi 0, %s114
    %s117 = sphi 0, %s116
    %s131 = sphi 0, %s117
    %s135 = sphi 0, %s135
    %s137 = sphi 0, %s135
    %s138 = sphi 0, %s137
    %s152 = sphi 0, %s138
    %s156 = sphi 0, %s156
    %s158 = sphi 0, %s156
    %s159 = sphi 0, %s158
    %s173 = sphi 0, %s159
    %s177 = sphi 0, %s177
    %s179 = sphi 0, %s177
    %s180 = sphi 0, %s179
    %s194 = sphi 0, %s180
    %s198 = sphi 0, %s198
    %s200 = sphi 0, %s198
    %s201 = sphi 0, %s200
    %s215 = sphi 0, %s201
    %s219 = sphi 0, %s219
    %s221 = sphi 0, %s219
    %s222 = sphi 0, %s221
    %s236 = sphi 0, %s222
    %s240 = sphi 0, %s240
    %s242 = sphi 0, %s240
    %s243 = sphi 0, %s242
    %s257 = sphi 0, %s243
    %s263 = sphi 0, %s265
    %s266 = sphi 0, %s263
    %s267 = sphi 0, %s266
    %s283 = sphi 0, %s267
  $region4: #{sccsa_forward.1} parent=0 // loop_header_branch
    %20 = sbr.rel (%p18) target = $region8
  $region5: #{sccsa_forward.1} parent=0 // loop_body
    %s22 = ssub.s32 %s17, 1
    %s23 = ssub.s32 %s17, 2
    %s24 = sadd.s32 %s17, 1
    %s25 = ssub.s32 %s17, %s24
    %p26 = scmp.eq.s32.totalorder %s25, 0
    %s28 = sadd.s32 %s27, 1
    %s29 = scalar_select %p26, %s27, %s28
    %p32 = pneg %p26
    %p33 = scmp.eq.s32.totalorder %s17, 1
    %p34 = por %p32, %p33
    %p35 = scmp.ne.s32.totalorder %s27, %s30
    %p36 = scmp.eq.s32.totalorder %s17, 0
    %p37 = por %p35, %p36
    %p38 = scmp.ne.s32.totalorder %s27, %s30
    %p39 = scmp.eq.s32.totalorder %s22, 1
    %p40 = por %p38, %p39
    %p41 = scmp.ne.s32.totalorder %s30, %s31
    %p42 = scmp.eq.s32.totalorder %s22, 0
    %p43 = por %p41, %p42
    %p44 = scmp.ne.s32.totalorder %s30, %s31
    %p45 = scmp.eq.s32.totalorder %s23, 1
    %p46 = por %p44, %p45
    %p48 = scmp.ne.s32.totalorder %s31, %s47
    %p49 = scmp.eq.s32.totalorder %s23, 0
    %p50 = por %p48, %p49
    %s52 = sadd.s32 %s51, 1
    %p55 = scmp.eq.s32.totalorder %s17, 1
    %p56 = scmp.ne.s32.totalorder %s51, %s53
    %p57 = scmp.eq.s32.totalorder %s17, 0
    %p58 = por %p56, %p57
    %p59 = scmp.ne.s32.totalorder %s51, %s53
    %p60 = scmp.eq.s32.totalorder %s22, 1
    %p61 = por %p59, %p60
    %p62 = scmp.ne.s32.totalorder %s53, %s54
    %p63 = scmp.eq.s32.totalorder %s22, 0
    %p64 = por %p62, %p63
    %p65 = scmp.ne.s32.totalorder %s53, %s54
    %p66 = scmp.eq.s32.totalorder %s23, 1
    %p67 = por %p65, %p66
    %p69 = scmp.ne.s32.totalorder %s54, %s68
    %p70 = scmp.eq.s32.totalorder %s23, 0
    %p71 = por %p69, %p70
    %s73 = sadd.s32 %s72, 1
    %p76 = scmp.eq.s32.totalorder %s17, 1
    %p77 = scmp.ne.s32.totalorder %s72, %s74
    %p78 = scmp.eq.s32.totalorder %s17, 0
    %p79 = por %p77, %p78
    %p80 = scmp.ne.s32.totalorder %s72, %s74
    %p81 = scmp.eq.s32.totalorder %s22, 1
    %p82 = por %p80, %p81
    %p83 = scmp.ne.s32.totalorder %s74, %s75
    %p84 = scmp.eq.s32.totalorder %s22, 0
    %p85 = por %p83, %p84
    %p86 = scmp.ne.s32.totalorder %s74, %s75
    %p87 = scmp.eq.s32.totalorder %s23, 1
    %p88 = por %p86, %p87
    %p90 = scmp.ne.s32.totalorder %s75, %s89
    %p91 = scmp.eq.s32.totalorder %s23, 0
    %p92 = por %p90, %p91
    %s94 = sadd.s32 %s93, 1
    %p97 = scmp.eq.s32.totalorder %s17, 1
    %p98 = scmp.ne.s32.totalorder %s93, %s95
    %p99 = scmp.eq.s32.totalorder %s17, 0
    %p100 = por %p98, %p99
    %p101 = scmp.ne.s32.totalorder %s93, %s95
    %p102 = scmp.eq.s32.totalorder %s22, 1
    %p103 = por %p101, %p102
    %p104 = scmp.ne.s32.totalorder %s95, %s96
    %p105 = scmp.eq.s32.totalorder %s22, 0
    %p106 = por %p104, %p105
    %p107 = scmp.ne.s32.totalorder %s95, %s96
    %p108 = scmp.eq.s32.totalorder %s23, 1
    %p109 = por %p107, %p108
    %p111 = scmp.ne.s32.totalorder %s96, %s110
    %p112 = scmp.eq.s32.totalorder %s23, 0
    %p113 = por %p111, %p112
    %s115 = sadd.s32 %s114, 1
    %p118 = scmp.eq.s32.totalorder %s17, 1
    %p119 = scmp.ne.s32.totalorder %s114, %s116
    %p120 = scmp.eq.s32.totalorder %s17, 0
    %p121 = por %p119, %p120
    %p122 = scmp.ne.s32.totalorder %s114, %s116
    %p123 = scmp.eq.s32.totalorder %s22, 1
    %p124 = por %p122, %p123
    %p125 = scmp.ne.s32.totalorder %s116, %s117
    %p126 = scmp.eq.s32.totalorder %s22, 0
    %p127 = por %p125, %p126
    %p128 = scmp.ne.s32.totalorder %s116, %s117
    %p129 = scmp.eq.s32.totalorder %s23, 1
    %p130 = por %p128, %p129
    %p132 = scmp.ne.s32.totalorder %s117, %s131
    %p133 = scmp.eq.s32.totalorder %s23, 0
    %p134 = por %p132, %p133
    %s136 = sadd.s32 %s135, 1
    %p139 = scmp.eq.s32.totalorder %s17, 1
    %p140 = scmp.ne.s32.totalorder %s135, %s137
    %p141 = scmp.eq.s32.totalorder %s17, 0
    %p142 = por %p140, %p141
    %p143 = scmp.ne.s32.totalorder %s135, %s137
    %p144 = scmp.eq.s32.totalorder %s22, 1
    %p145 = por %p143, %p144
    %p146 = scmp.ne.s32.totalorder %s137, %s138
    %p147 = scmp.eq.s32.totalorder %s22, 0
    %p148 = por %p146, %p147
    %p149 = scmp.ne.s32.totalorder %s137, %s138
    %p150 = scmp.eq.s32.totalorder %s23, 1
    %p151 = por %p149, %p150
    %p153 = scmp.ne.s32.totalorder %s138, %s152
    %p154 = scmp.eq.s32.totalorder %s23, 0
    %p155 = por %p153, %p154
    %s157 = sadd.s32 %s156, 1
    %p160 = scmp.eq.s32.totalorder %s17, 1
    %p161 = scmp.ne.s32.totalorder %s156, %s158
    %p162 = scmp.eq.s32.totalorder %s17, 0
    %p163 = por %p161, %p162
    %p164 = scmp.ne.s32.totalorder %s156, %s158
    %p165 = scmp.eq.s32.totalorder %s22, 1
    %p166 = por %p164, %p165
    %p167 = scmp.ne.s32.totalorder %s158, %s159
    %p168 = scmp.eq.s32.totalorder %s22, 0
    %p169 = por %p167, %p168
    %p170 = scmp.ne.s32.totalorder %s158, %s159
    %p171 = scmp.eq.s32.totalorder %s23, 1
    %p172 = por %p170, %p171
    %p174 = scmp.ne.s32.totalorder %s159, %s173
    %p175 = scmp.eq.s32.totalorder %s23, 0
    %p176 = por %p174, %p175
    %s178 = sadd.s32 %s177, 1
    %p181 = scmp.eq.s32.totalorder %s17, 1
    %p182 = scmp.ne.s32.totalorder %s177, %s179
    %p183 = scmp.eq.s32.totalorder %s17, 0
    %p184 = por %p182, %p183
    %p185 = scmp.ne.s32.totalorder %s177, %s179
    %p186 = scmp.eq.s32.totalorder %s22, 1
    %p187 = por %p185, %p186
    %p188 = scmp.ne.s32.totalorder %s179, %s180
    %p189 = scmp.eq.s32.totalorder %s22, 0
    %p190 = por %p188, %p189
    %p191 = scmp.ne.s32.totalorder %s179, %s180
    %p192 = scmp.eq.s32.totalorder %s23, 1
    %p193 = por %p191, %p192
    %p195 = scmp.ne.s32.totalorder %s180, %s194
    %p196 = scmp.eq.s32.totalorder %s23, 0
    %p197 = por %p195, %p196
    %s199 = sadd.s32 %s198, 1
    %p202 = scmp.eq.s32.totalorder %s17, 1
    %p203 = scmp.ne.s32.totalorder %s198, %s200
    %p204 = scmp.eq.s32.totalorder %s17, 0
    %p205 = por %p203, %p204
    %p206 = scmp.ne.s32.totalorder %s198, %s200
    %p207 = scmp.eq.s32.totalorder %s22, 1
    %p208 = por %p206, %p207
    %p209 = scmp.ne.s32.totalorder %s200, %s201
    %p210 = scmp.eq.s32.totalorder %s22, 0
    %p211 = por %p209, %p210
    %p212 = scmp.ne.s32.totalorder %s200, %s201
    %p213 = scmp.eq.s32.totalorder %s23, 1
    %p214 = por %p212, %p213
    %p216 = scmp.ne.s32.totalorder %s201, %s215
    %p217 = scmp.eq.s32.totalorder %s23, 0
    %p218 = por %p216, %p217
    %s220 = sadd.s32 %s219, 1
    %p223 = scmp.eq.s32.totalorder %s17, 1
    %p224 = scmp.ne.s32.totalorder %s219, %s221
    %p225 = scmp.eq.s32.totalorder %s17, 0
    %p226 = por %p224, %p225
    %p227 = scmp.ne.s32.totalorder %s219, %s221
    %p228 = scmp.eq.s32.totalorder %s22, 1
    %p229 = por %p227, %p228
    %p230 = scmp.ne.s32.totalorder %s221, %s222
    %p231 = scmp.eq.s32.totalorder %s22, 0
    %p232 = por %p230, %p231
    %p233 = scmp.ne.s32.totalorder %s221, %s222
    %p234 = scmp.eq.s32.totalorder %s23, 1
    %p235 = por %p233, %p234
    %p237 = scmp.ne.s32.totalorder %s222, %s236
    %p238 = scmp.eq.s32.totalorder %s23, 0
    %p239 = por %p237, %p238
    %s241 = sadd.s32 %s240, 1
    %p244 = scmp.eq.s32.totalorder %s17, 1
    %p245 = scmp.ne.s32.totalorder %s240, %s242
    %p246 = scmp.eq.s32.totalorder %s17, 0
    %p247 = por %p245, %p246
    %p248 = scmp.ne.s32.totalorder %s240, %s242
    %p249 = scmp.eq.s32.totalorder %s22, 1
    %p250 = por %p248, %p249
    %p251 = scmp.ne.s32.totalorder %s242, %s243
    %p252 = scmp.eq.s32.totalorder %s22, 0
    %p253 = por %p251, %p252
    %p254 = scmp.ne.s32.totalorder %s242, %s243
    %p255 = scmp.eq.s32.totalorder %s23, 1
    %p256 = por %p254, %p255
    %p258 = scmp.ne.s32.totalorder %s243, %s257
    %p259 = scmp.eq.s32.totalorder %s23, 0
    %p260 = por %p258, %p259
    %s261 = ssub.s32 %s17, %s24
    %p262 = scmp.eq.s32.totalorder %s261, 0
    %s264 = sadd.s32 %s263, 1
    %s265 = scalar_select %p262, %s263, %s264
    %p268 = pneg %p262
    %p269 = scmp.eq.s32.totalorder %s17, 1
    %p270 = por %p268, %p269
    %p271 = scmp.ne.s32.totalorder %s263, %s266
    %p272 = scmp.eq.s32.totalorder %s17, 0
    %p273 = por %p271, %p272
    %p274 = scmp.ne.s32.totalorder %s263, %s266
    %p275 = scmp.eq.s32.totalorder %s22, 1
    %p276 = por %p274, %p275
    %p277 = scmp.ne.s32.totalorder %s266, %s267
    %p278 = scmp.eq.s32.totalorder %s22, 0
    %p279 = por %p277, %p278
    %p280 = scmp.ne.s32.totalorder %s266, %s267
    %p281 = scmp.eq.s32.totalorder %s23, 1
    %p282 = por %p280, %p281
    %p284 = scmp.ne.s32.totalorder %s267, %s283
    %p285 = scmp.eq.s32.totalorder %s23, 0
    %p286 = por %p284, %p285
    %p287 = scmp.le.s32.totalorder 1, %s17
    %p288 = scmp.lt.s32.totalorder %s17, 3
    %p289 = pnand %p287, %p288
    %p290 = pneg %p289
    // Predicated region
    $region9: #{sccsa_forward.1} parent=5 // pred_check
      _
    $region10: #{sccsa_forward.1} parent=5 // pred_check_branch
      %292 = sbr.rel (%p289) target = $region12
    $region11: #{sccsa_forward.1} parent=5 // pred_region
      %s293 = ssub.s32 %s17, 1
      // Predicated region
      $region13: #{sccsa_forward.1} parent=11 // pred_check
        %p294 = pneg %p64
      $region14: #{sccsa_forward.1} parent=11 // pred_check_branch
        %296 = sbr.rel (%p294) target = $region16
      $region15: #{sccsa_forward.1} parent=11 // pred_region
        _
      $region16: #{sccsa_forward.1} parent=11 // pred_fallthru
        _
      // Predicated region
      $region17: #{sccsa_forward.1} parent=11 // pred_check
        %p297 = pneg %p85
      $region18: #{sccsa_forward.1} parent=11 // pred_check_branch
        %299 = sbr.rel (%p297) target = $region20
      $region19: #{sccsa_forward.1} parent=11 // pred_region
        _
      $region20: #{sccsa_forward.1} parent=11 // pred_fallthru
        _
      // Predicated region
      $region21: #{sccsa_forward.1} parent=11 // pred_check
        %p300 = pneg %p106
      $region22: #{sccsa_forward.1} parent=11 // pred_check_branch
        %302 = sbr.rel (%p300) target = $region24
      $region23: #{sccsa_forward.1} parent=11 // pred_region
        _
      $region24: #{sccsa_forward.1} parent=11 // pred_fallthru
        _
      // Predicated region
      $region25: #{sccsa_forward.1} parent=11 // pred_check
        %p303 = pneg %p127
      $region26: #{sccsa_forward.1} parent=11 // pred_check_branch
        %305 = sbr.rel (%p303) target = $region28
      $region27: #{sccsa_forward.1} parent=11 // pred_region
        _
      $region28: #{sccsa_forward.1} parent=11 // pred_fallthru
        _
      // Predicated region
      $region29: #{sccsa_forward.1} parent=11 // pred_check
        %p306 = pneg %p148
      $region30: #{sccsa_forward.1} parent=11 // pred_check_branch
        %308 = sbr.rel (%p306) target = $region32
      $region31: #{sccsa_forward.1} parent=11 // pred_region
        _
      $region32: #{sccsa_forward.1} parent=11 // pred_fallthru
        _
      // Predicated region
      $region33: #{sccsa_forward.1} parent=11 // pred_check
        %p309 = pneg %p169
      $region34: #{sccsa_forward.1} parent=11 // pred_check_branch
        %311 = sbr.rel (%p309) target = $region36
      $region35: #{sccsa_forward.1} parent=11 // pred_region
        _
      $region36: #{sccsa_forward.1} parent=11 // pred_fallthru
        _
      // Predicated region
      $region37: #{sccsa_forward.1} parent=11 // pred_check
        %p312 = pneg %p190
      $region38: #{sccsa_forward.1} parent=11 // pred_check_branch
        %314 = sbr.rel (%p312) target = $region40
      $region39: #{sccsa_forward.1} parent=11 // pred_region
        _
      $region40: #{sccsa_forward.1} parent=11 // pred_fallthru
        _
      // Predicated region
      $region41: #{sccsa_forward.1} parent=11 // pred_check
        %p315 = pneg %p211
      $region42: #{sccsa_forward.1} parent=11 // pred_check_branch
        %317 = sbr.rel (%p315) target = $region44
      $region43: #{sccsa_forward.1} parent=11 // pred_region
        _
      $region44: #{sccsa_forward.1} parent=11 // pred_fallthru
        _
      // Predicated region
      $region45: #{sccsa_forward.1} parent=11 // pred_check
        %p318 = pneg %p232
      $region46: #{sccsa_forward.1} parent=11 // pred_check_branch
        %320 = sbr.rel (%p318) target = $region48
      $region47: #{sccsa_forward.1} parent=11 // pred_region
        _
      $region48: #{sccsa_forward.1} parent=11 // pred_fallthru
        _
      // Predicated region
      $region49: #{sccsa_forward.1} parent=11 // pred_check
        %p321 = pneg %p253
      $region50: #{sccsa_forward.1} parent=11 // pred_check_branch
        %323 = sbr.rel (%p321) target = $region52
      $region51: #{sccsa_forward.1} parent=11 // pred_region
        _
      $region52: #{sccsa_forward.1} parent=11 // pred_fallthru
        _
    $region12: #{sccsa_forward.1} parent=5 // pred_fallthru
      _
    %p324 = scmp.lt.s32.totalorder %s17, 2
    // Predicated region
    $region53: #{sccsa_forward.1} parent=5 // pred_check
      %p325 = pneg %p324
    $region54: #{sccsa_forward.1} parent=5 // pred_check_branch
      %327 = sbr.rel (%p325) target = $region56
    $region55: #{sccsa_forward.1} parent=5 // pred_region
      // Predicated region
      $region57: #{sccsa_forward.1} parent=55 // pred_check
        %p328 = pneg %p37
      $region58: #{sccsa_forward.1} parent=55 // pred_check_branch
        %330 = sbr.rel (%p328) target = $region60
      $region59: #{sccsa_forward.1} parent=55 // pred_region
        %p331 = scmp.lt.s32.totalorder %s17, 1
        %s332 = scalar_select %p331, %s17, 1
        %s333 = smul.addr %s332, 8
        %s334 = smul.addr %s333, 8
        %s335 = scalar_lea.vmem %s0, %s334
      $region60: #{sccsa_forward.1} parent=55 // pred_fallthru
        _
    $region56: #{sccsa_forward.1} parent=5 // pred_fallthru
      _
    %p336 = scmp.le.s32.totalorder 1, %s17
    %p337 = scmp.lt.s32.totalorder %s17, 3
    %p338 = pnand %p336, %p337
    %p339 = pneg %p338
    // Predicated region
    $region61: #{sccsa_forward.1} parent=5 // pred_check
      _
    $region62: #{sccsa_forward.1} parent=5 // pred_check_branch
      %341 = sbr.rel (%p338) target = $region64
    $region63: #{sccsa_forward.1} parent=5 // pred_region
      %s342 = ssub.s32 %s17, 1
      %p343 = scmp.lt.s32.totalorder %s22, 1
      %s344 = scalar_select %p343, %s22, 1
      %s345 = smul.addr %s344, 8
      %s346 = smul.addr %s345, 8
      %s347 = scalar_lea.vmem %s0, %s346
      %p348 = pneg %p43
      %p349 = pneg %p40
      %p350 = pneg %p64
      %p351 = pneg %p61
      %p352 = pneg %p85
      %p353 = pneg %p82
      %p354 = pneg %p106
      %p355 = pneg %p103
      %p356 = pneg %p127
      %p357 = pneg %p124
      %p358 = pneg %p148
      %p359 = pneg %p145
      %p360 = pneg %p169
      %p361 = pneg %p166
      %p362 = pneg %p190
      %p363 = pneg %p187
      %p364 = pneg %p211
      %p365 = pneg %p208
      %p366 = pneg %p232
      %p367 = pneg %p229
      %p368 = pneg %p253
      %p369 = pneg %p250
      %p370 = pneg %p279
      %p371 = pneg %p276
      %p372 = scmp.lt.s32.totalorder %s22, 1
      %s373 = scalar_select %p372, %s22, 1
      %s374 = smul.addr %s373, 8
      %s375 = smul.addr %s374, 8
      %s376 = scalar_lea.vmem %s11, %s375
      %p377 = scmp.lt.s32.totalorder %s22, 1
      %s378 = scalar_select %p377, %s22, 1
      %s379 = smul.addr %s378, 8
      %s380 = smul.addr %s379, 8
      %s381 = scalar_lea.vmem %s0, %s380
      %p382 = scmp.lt.s32.totalorder %s22, 1
      %s383 = scalar_select %p382, %s22, 1
      %s384 = smul.addr %s383, 8
      %s385 = smul.addr %s384, 8
      %s386 = scalar_lea.vmem %s11, %s385
      %vm387 = vcmask 261120
      %388 = vst.msk [vmem:[#allocation2] sm:$0xff] %vm387, 0.0
      %389 = vst.msk [vmem:[#allocation2 + $0x8] sm:$0xff] %vm387, 0.0
      %vm390 = vcmask 259072
      %391 = vst.msk [vmem:[#allocation2 + $0x10] sm:$0x3f] %vm390, 0.0
      %392 = vst.msk [vmem:[#allocation2 + $0x18] sm:$0xff] %vm387, 0.0
      %393 = vst.msk [vmem:[#allocation2 + $0x20] sm:$0xff] %vm387, 0.0
      %394 = vst.msk [vmem:[#allocation2 + $0x28] sm:$0x3f] %vm390, 0.0
      %395 = vst.msk [vmem:[#allocation2 + $0x30] sm:$0xff] %vm387, 0.0
      %396 = vst.msk [vmem:[#allocation2 + $0x38] sm:$0xff] %vm387, 0.0
      %397 = vst.msk [vmem:[#allocation2 + $0x40] sm:$0x3f] %vm390, 0.0
      %s398 = scalar_lea.vmem [#allocation2], 456
      %399 = vst.msk [vmem:[%s398] sm:$0xff] %vm387, 0.0
      %400 = vst.msk [vmem:[%s398 + $0x8] sm:$0xff] %vm387, 0.0
      %401 = vst.msk [vmem:[%s398 + $0x10] sm:$0x3f] %vm390, 0.0
      %402 = vst.msk [vmem:[%s398 + $0x18] sm:$0xff] %vm387, 0.0
      %403 = vst.msk [vmem:[%s398 + $0x20] sm:$0xff] %vm387, 0.0
      %404 = vst.msk [vmem:[%s398 + $0x28] sm:$0x3f] %vm390, 0.0
      %405 = vst.msk [vmem:[%s398 + $0x30] sm:$0xff] %vm387, 0.0
      %406 = vst.msk [vmem:[%s398 + $0x38] sm:$0xff] %vm387, 0.0
      %407 = vst.msk [vmem:[%s398 + $0x40] sm:$0x3f] %vm390, 0.0
      %vm408 = vcmask 256000
      %409 = vst.msk [vmem:[#allocation2] sm:$0x7] %vm408, 0.0
      %410 = vst.msk [vmem:[#allocation2 + $0x18] sm:$0x7] %vm408, 0.0
      %411 = vst.msk [vmem:[#allocation2 + $0x30] sm:$0x7] %vm408, 0.0
      %412 = vst.msk [vmem:[#allocation2 + $0x48] sm:$0x7] %vm408, 0.0
      %413 = vst.msk [vmem:[#allocation2 + $0x60] sm:$0x7] %vm408, 0.0
      %414 = vst.msk [vmem:[#allocation2 + $0x78] sm:$0x7] %vm408, 0.0
      %415 = vst.msk [vmem:[#allocation2 + $0x90] sm:$0x7] %vm408, 0.0
      %416 = vst.msk [vmem:[#allocation2 + $0xa8] sm:$0x7] %vm408, 0.0
      %417 = vst.msk [vmem:[#allocation2 + $0xc0] sm:$0x7] %vm408, 0.0
      %418 = vst.msk [vmem:[#allocation2 + $0xd8] sm:$0x7] %vm408, 0.0
      %419 = vst.msk [vmem:[#allocation2 + $0xf0] sm:$0x7] %vm408, 0.0
      %420 = vst.msk [vmem:[#allocation2 + $0x108] sm:$0x7] %vm408, 0.0
      %421 = vst.msk [vmem:[#allocation2 + $0x120] sm:$0x7] %vm408, 0.0
      %422 = vst.msk [vmem:[#allocation2 + $0x138] sm:$0x7] %vm408, 0.0
      %423 = vst.msk [vmem:[#allocation2 + $0x150] sm:$0x7] %vm408, 0.0
      %424 = vst.msk [vmem:[#allocation2 + $0x168] sm:$0x7] %vm408, 0.0
      %425 = vst.msk [vmem:[#allocation2 + $0x180] sm:$0x7] %vm408, 0.0
      %426 = vst.msk [vmem:[#allocation2 + $0x198] sm:$0x7] %vm408, 0.0
      %427 = vst.msk [vmem:[#allocation2 + $0x1b0] sm:$0x7] %vm408, 0.0
      %428 = vst.msk [vmem:[#allocation2 + $0x1c8] sm:$0x7] %vm408, 0.0
      %429 = vst.msk [vmem:[#allocation2 + $0x1e0] sm:$0x7] %vm408, 0.0
      %430 = vst.msk [vmem:[#allocation2 + $0x1f8] sm:$0x7] %vm408, 0.0
      %431 = vst.msk [vmem:[#allocation2 + $0x13] sm:$0x7] %vm408, 0.0
      %432 = vst.msk [vmem:[#allocation2 + $0x2b] sm:$0x7] %vm408, 0.0
      %433 = vst.msk [vmem:[#allocation2 + $0x43] sm:$0x7] %vm408, 0.0
      %434 = vst.msk [vmem:[#allocation2 + $0x5b] sm:$0x7] %vm408, 0.0
      %435 = vst.msk [vmem:[#allocation2 + $0x73] sm:$0x7] %vm408, 0.0
      %436 = vst.msk [vmem:[#allocation2 + $0x8b] sm:$0x7] %vm408, 0.0
      %437 = vst.msk [vmem:[#allocation2 + $0xa3] sm:$0x7] %vm408, 0.0
      %438 = vst.msk [vmem:[#allocation2 + $0xbb] sm:$0x7] %vm408, 0.0
      %439 = vst.msk [vmem:[#allocation2 + $0xd3] sm:$0x7] %vm408, 0.0
      %440 = vst.msk [vmem:[#allocation2 + $0xeb] sm:$0x7] %vm408, 0.0
      %441 = vst.msk [vmem:[#allocation2 + $0x103] sm:$0x7] %vm408, 0.0
      %442 = vst.msk [vmem:[#allocation2 + $0x11b] sm:$0x7] %vm408, 0.0
      %443 = vst.msk [vmem:[#allocation2 + $0x133] sm:$0x7] %vm408, 0.0
      %444 = vst.msk [vmem:[#allocation2 + $0x14b] sm:$0x7] %vm408, 0.0
      %445 = vst.msk [vmem:[#allocation2 + $0x163] sm:$0x7] %vm408, 0.0
      %446 = vst.msk [vmem:[#allocation2 + $0x17b] sm:$0x7] %vm408, 0.0
      %447 = vst.msk [vmem:[#allocation2 + $0x193] sm:$0x7] %vm408, 0.0
      %448 = vst.msk [vmem:[#allocation2 + $0x1ab] sm:$0x7] %vm408, 0.0
      %449 = vst.msk [vmem:[#allocation2 + $0x1c3] sm:$0x7] %vm408, 0.0
      %450 = vst.msk [vmem:[#allocation2 + $0x1db] sm:$0x7] %vm408, 0.0
      %451 = vst.msk [vmem:[#allocation2 + $0x1f3] sm:$0x7] %vm408, 0.0
      %452 = vst.msk [vmem:[#allocation2 + $0x20b] sm:$0x7] %vm408, 0.0
      %vm453 = vcmask 64512
      %454 = vst.msk [vmem:[#allocation3] sm:$0xff] %vm453, 0.0
      %455 = vst.msk [vmem:[#allocation3 + $0x8] sm:$0xff] %vm453, 0.0
      %vm456 = vcmask 62464
      %457 = vst.msk [vmem:[#allocation3 + $0x10] sm:$0x3f] %vm456, 0.0
      %458 = vst.msk [vmem:[#allocation3 + $0x18] sm:$0xff] %vm453, 0.0
      %459 = vst.msk [vmem:[#allocation3 + $0x20] sm:$0xff] %vm453, 0.0
      %460 = vst.msk [vmem:[#allocation3 + $0x28] sm:$0x3f] %vm456, 0.0
      %461 = vst.msk [vmem:[#allocation3 + $0x30] sm:$0xff] %vm453, 0.0
      %462 = vst.msk [vmem:[#allocation3 + $0x38] sm:$0xff] %vm453, 0.0
      %463 = vst.msk [vmem:[#allocation3 + $0x40] sm:$0x3f] %vm456, 0.0
      %s464 = scalar_lea.vmem [#allocation3], 456
      %465 = vst.msk [vmem:[%s464] sm:$0xff] %vm453, 0.0
      %466 = vst.msk [vmem:[%s464 + $0x8] sm:$0xff] %vm453, 0.0
      %467 = vst.msk [vmem:[%s464 + $0x10] sm:$0x3f] %vm456, 0.0
      %468 = vst.msk [vmem:[%s464 + $0x18] sm:$0xff] %vm453, 0.0
      %469 = vst.msk [vmem:[%s464 + $0x20] sm:$0xff] %vm453, 0.0
      %470 = vst.msk [vmem:[%s464 + $0x28] sm:$0x3f] %vm456, 0.0
      %471 = vst.msk [vmem:[%s464 + $0x30] sm:$0xff] %vm453, 0.0
      %472 = vst.msk [vmem:[%s464 + $0x38] sm:$0xff] %vm453, 0.0
      %473 = vst.msk [vmem:[%s464 + $0x40] sm:$0x3f] %vm456, 0.0
      %vm474 = vcmask 59392
      %475 = vst.msk [vmem:[#allocation3] sm:$0x7] %vm474, 0.0
      %476 = vst.msk [vmem:[#allocation3 + $0x18] sm:$0x7] %vm474, 0.0
      %477 = vst.msk [vmem:[#allocation3 + $0x30] sm:$0x7] %vm474, 0.0
      %478 = vst.msk [vmem:[#allocation3 + $0x48] sm:$0x7] %vm474, 0.0
      %479 = vst.msk [vmem:[#allocation3 + $0x60] sm:$0x7] %vm474, 0.0
      %480 = vst.msk [vmem:[#allocation3 + $0x78] sm:$0x7] %vm474, 0.0
      %481 = vst.msk [vmem:[#allocation3 + $0x90] sm:$0x7] %vm474, 0.0
      %482 = vst.msk [vmem:[#allocation3 + $0xa8] sm:$0x7] %vm474, 0.0
      %483 = vst.msk [vmem:[#allocation3 + $0xc0] sm:$0x7] %vm474, 0.0
      %484 = vst.msk [vmem:[#allocation3 + $0xd8] sm:$0x7] %vm474, 0.0
      %485 = vst.msk [vmem:[#allocation3 + $0xf0] sm:$0x7] %vm474, 0.0
      %486 = vst.msk [vmem:[#allocation3 + $0x108] sm:$0x7] %vm474, 0.0
      %487 = vst.msk [vmem:[#allocation3 + $0x120] sm:$0x7] %vm474, 0.0
      %488 = vst.msk [vmem:[#allocation3 + $0x138] sm:$0x7] %vm474, 0.0
      %489 = vst.msk [vmem:[#allocation3 + $0x150] sm:$0x7] %vm474, 0.0
      %490 = vst.msk [vmem:[#allocation3 + $0x168] sm:$0x7] %vm474, 0.0
      %491 = vst.msk [vmem:[#allocation3 + $0x180] sm:$0x7] %vm474, 0.0
      %492 = vst.msk [vmem:[#allocation3 + $0x198] sm:$0x7] %vm474, 0.0
      %493 = vst.msk [vmem:[#allocation3 + $0x1b0] sm:$0x7] %vm474, 0.0
      %494 = vst.msk [vmem:[#allocation3 + $0x1c8] sm:$0x7] %vm474, 0.0
      %495 = vst.msk [vmem:[#allocation3 + $0x1e0] sm:$0x7] %vm474, 0.0
      %496 = vst.msk [vmem:[#allocation3 + $0x1f8] sm:$0x7] %vm474, 0.0
      %497 = vst.msk [vmem:[#allocation3 + $0x13] sm:$0x7] %vm474, 0.0
      %498 = vst.msk [vmem:[#allocation3 + $0x2b] sm:$0x7] %vm474, 0.0
      %499 = vst.msk [vmem:[#allocation3 + $0x43] sm:$0x7] %vm474, 0.0
      %500 = vst.msk [vmem:[#allocation3 + $0x5b] sm:$0x7] %vm474, 0.0
      %501 = vst.msk [vmem:[#allocation3 + $0x73] sm:$0x7] %vm474, 0.0
      %502 = vst.msk [vmem:[#allocation3 + $0x8b] sm:$0x7] %vm474, 0.0
      %503 = vst.msk [vmem:[#allocation3 + $0xa3] sm:$0x7] %vm474, 0.0
      %504 = vst.msk [vmem:[#allocation3 + $0xbb] sm:$0x7] %vm474, 0.0
      %505 = vst.msk [vmem:[#allocation3 + $0xd3] sm:$0x7] %vm474, 0.0
      %506 = vst.msk [vmem:[#allocation3 + $0xeb] sm:$0x7] %vm474, 0.0
      %507 = vst.msk [vmem:[#allocation3 + $0x103] sm:$0x7] %vm474, 0.0
      %508 = vst.msk [vmem:[#allocation3 + $0x11b] sm:$0x7] %vm474, 0.0
      %509 = vst.msk [vmem:[#allocation3 + $0x133] sm:$0x7] %vm474, 0.0
      %510 = vst.msk [vmem:[#allocation3 + $0x14b] sm:$0x7] %vm474, 0.0
      %511 = vst.msk [vmem:[#allocation3 + $0x163] sm:$0x7] %vm474, 0.0
      %512 = vst.msk [vmem:[#allocation3 + $0x17b] sm:$0x7] %vm474, 0.0
      %513 = vst.msk [vmem:[#allocation3 + $0x193] sm:$0x7] %vm474, 0.0
      %514 = vst.msk [vmem:[#allocation3 + $0x1ab] sm:$0x7] %vm474, 0.0
      %515 = vst.msk [vmem:[#allocation3 + $0x1c3] sm:$0x7] %vm474, 0.0
      %516 = vst.msk [vmem:[#allocation3 + $0x1db] sm:$0x7] %vm474, 0.0
      %517 = vst.msk [vmem:[#allocation3 + $0x1f3] sm:$0x7] %vm474, 0.0
      %518 = vst.msk [vmem:[#allocation3 + $0x20b] sm:$0x7] %vm474, 0.0
      %v519 = vld [vmem:[%s381] sm:$0xff]
      %v520 = vld [vmem:[%s381 + $0x8] sm:$0xff]
      %v521 = vld [vmem:[%s381 + $0x10] sm:$0xff]
      %v522 = vld [vmem:[%s381 + $0x18] sm:$0xff]
      %v523 = vld [vmem:[%s381 + $0x20] sm:$0xff]
      %v524 = vld [vmem:[%s381 + $0x28] sm:$0xff]
      %v525 = vld [vmem:[%s381 + $0x30] sm:$0xff]
      %v526 = vld [vmem:[%s381 + $0x38] sm:$0xff]
      %v527 = vld [vmem:[%s1] sm:$0xff]
      %v528 = vld [vmem:[%s2] sm:$0xff]
      %530 = vset.pattern.permute.xlu0 0
      %531 = vperm.xlu0 %530, %v528
      %v532 = vpop.permute.xlu0 %531
      %v535 = vsel %vm387, %v527, 0
      %537 = vmatpush.msra.mxu0 0.0
      %538 = vmatpush.msra.mxu0 0.0
      %539 = vmatpush.msra.mxu0 0.0
      %540 = vmatpush.msra.mxu0 0.0
      %541 = vmatpush.msra.mxu0 0.0
      %542 = vmatpush.msra.mxu0 0.0
      %543 = vmatpush.msra.mxu0 0.0
      %544 = vmatpush.msra.mxu0 0.0
      %545 = vmatpush.msra.mxu0 0.0
      %546 = vmatpush.msra.mxu0 0.0
      %547 = vmatpush.msra.mxu0 0.0
      %548 = vmatpush.msra.mxu0 0.0
      %549 = vmatpush.msra.mxu0 %v525
      %550 = vmatpush.msra.mxu0 %v523
      %551 = vmatpush.msra.mxu0 %v521
      %552 = vmatpush.msra.mxu0 %v519
      %553 = vmatmul.f32.gmra.mxu0 %v535
      %v554 = vpop.f32.mrf.mxu0
      %v555 = vadd.f32 %v532, %v554
      %556 = vdwg.mxu0
      %557 = vmatpush.msra.mxu0 0.0
      %558 = vmatpush.msra.mxu0 0.0
      %559 = vmatpush.msra.mxu0 0.0
      %560 = vmatpush.msra.mxu0 0.0
      %561 = vmatpush.msra.mxu0 0.0
      %562 = vmatpush.msra.mxu0 0.0
      %563 = vmatpush.msra.mxu0 0.0
      %564 = vmatpush.msra.mxu0 0.0
      %565 = vmatpush.msra.mxu0 0.0
      %566 = vmatpush.msra.mxu0 0.0
      %567 = vmatpush.msra.mxu0 0.0
      %568 = vmatpush.msra.mxu0 0.0
      %569 = vmatpush.msra.mxu0 %v526
      %570 = vmatpush.msra.mxu0 %v524
      %571 = vmatpush.msra.mxu0 %v522
      %572 = vmatpush.msra.mxu0 %v520
      %573 = vmatmul.f32.gmra.mxu0 %v535
      %v574 = vpop.f32.mrf.mxu0
      %v575 = vadd.f32 %v532, %v574
      %576 = vdwg.mxu0
      %v577 = vmax.f32 %v555, 0.0
      %v578 = vmax.f32 %v575, 0.0
      %v579 = vld [vmem:[%s3] sm:$0xff]
      %v580 = vld [vmem:[%s3 + $0x8] sm:$0xff]
      %v581 = vld [vmem:[%s3 + $0x10] sm:$0xff]
      %v582 = vld [vmem:[%s3 + $0x18] sm:$0xff]
      %v583 = vld [vmem:[%s4] sm:$0xff]
      %v584 = vld [vmem:[%s4 + $0x8] sm:$0xff]
      %v585 = vld [vmem:[%s4 + $0x10] sm:$0xff]
      %v586 = vld [vmem:[%s4 + $0x18] sm:$0xff]
      %588 = vset.pattern.permute.xlu0 0
      %589 = vperm.xlu0 %588, %v583
      %v590 = vpop.permute.xlu0 %589
      %593 = vset.pattern.permute.xlu0 0
      %594 = vperm.xlu0 %593, %v584
      %v595 = vpop.permute.xlu0 %594
      %598 = vset.pattern.permute.xlu0 0
      %599 = vperm.xlu0 %598, %v585
      %v600 = vpop.permute.xlu0 %599
      %603 = vset.pattern.permute.xlu0 0
      %604 = vperm.xlu0 %603, %v586
      %v605 = vpop.permute.xlu0 %604
      %v608 = vsel %vm453, %v579, 0
      %v611 = vsel %vm453, %v580, 0
      %v614 = vsel %vm453, %v581, 0
      %v617 = vsel %vm453, %v582, 0
      %619 = vmatpush.msra.mxu0 0.0
      %620 = vmatpush.msra.mxu0 0.0
      %621 = vmatpush.msra.mxu0 0.0
      %622 = vmatpush.msra.mxu0 0.0
      %623 = vmatpush.msra.mxu0 0.0
      %624 = vmatpush.msra.mxu0 0.0
      %625 = vmatpush.msra.mxu0 0.0
      %626 = vmatpush.msra.mxu0 0.0
      %627 = vmatpush.msra.mxu0 0.0
      %628 = vmatpush.msra.mxu0 0.0
      %629 = vmatpush.msra.mxu0 0.0
      %630 = vmatpush.msra.mxu0 0.0
      %631 = vmatpush.msra.mxu0 0.0
      %632 = vmatpush.msra.mxu0 0.0
      %633 = vmatpush.msra.mxu0 0.0
      %634 = vmatpush.msra.mxu0 %v577
      %635 = vmatmul.f32.gmra.mxu0 %v608
      %v636 = vpop.f32.mrf.mxu0
      %v637 = vadd.f32 %v590, %v636
      %638 = vmatmul.f32.gmra.mxu0 %v611
      %v639 = vpop.f32.mrf.mxu0
      %v640 = vadd.f32 %v595, %v639
      %641 = vmatmul.f32.gmra.mxu0 %v614
      %v642 = vpop.f32.mrf.mxu0
      %v643 = vadd.f32 %v600, %v642
      %644 = vmatmul.f32.gmra.mxu0 %v617
      %v645 = vpop.f32.mrf.mxu0
      %v646 = vadd.f32 %v605, %v645
      %647 = vdwg.mxu0
      %648 = vmatpush.msra.mxu0 0.0
      %649 = vmatpush.msra.mxu0 0.0
      %650 = vmatpush.msra.mxu0 0.0
      %651 = vmatpush.msra.mxu0 0.0
      %652 = vmatpush.msra.mxu0 0.0
      %653 = vmatpush.msra.mxu0 0.0
      %654 = vmatpush.msra.mxu0 0.0
      %655 = vmatpush.msra.mxu0 0.0
      %656 = vmatpush.msra.mxu0 0.0
      %657 = vmatpush.msra.mxu0 0.0
      %658 = vmatpush.msra.mxu0 0.0
      %659 = vmatpush.msra.mxu0 0.0
      %660 = vmatpush.msra.mxu0 0.0
      %661 = vmatpush.msra.mxu0 0.0
      %662 = vmatpush.msra.mxu0 0.0
      %663 = vmatpush.msra.mxu0 %v578
      %664 = vmatmul.f32.gmra.mxu0 %v608
      %v665 = vpop.f32.mrf.mxu0
      %v666 = vadd.f32 %v590, %v665
      %667 = vmatmul.f32.gmra.mxu0 %v611
      %v668 = vpop.f32.mrf.mxu0
      %v669 = vadd.f32 %v595, %v668
      %670 = vmatmul.f32.gmra.mxu0 %v614
      %v671 = vpop.f32.mrf.mxu0
      %v672 = vadd.f32 %v600, %v671
      %673 = vmatmul.f32.gmra.mxu0 %v617
      %v674 = vpop.f32.mrf.mxu0
      %v675 = vadd.f32 %v605, %v674
      %676 = vdwg.mxu0
      %v677 = vmul.f32 %v519, %v637
      %v678 = vmul.f32 %v520, %v666
      %v679 = vmul.f32 %v521, %v640
      %v680 = vmul.f32 %v522, %v669
      %v681 = vmul.f32 %v523, %v643
      %v682 = vmul.f32 %v524, %v672
      %v683 = vmul.f32 %v525, %v646
      %v684 = vmul.f32 %v526, %v675
      %685 = vxpose.xlu0.b32.start [1/16] %v677, 128
      %686 = vxpose.xlu0.b32.cont [2/16] %v679, 128
      %687 = vxpose.xlu0.b32.cont [3/16] %v681, 128
      %688 = vxpose.xlu0.b32.cont [4/16] %v683, 128
      %689 = vxpose.xlu0.b32.cont [5/16] 0.0, 128
      %690 = vxpose.xlu0.b32.cont [6/16] 0.0, 128
      %691 = vxpose.xlu0.b32.cont [7/16] 0.0, 128
      %692 = vxpose.xlu0.b32.cont [8/16] 0.0, 128
      %693 = vxpose.xlu0.b32.cont [9/16] 0.0, 128
      %694 = vxpose.xlu0.b32.cont [10/16] 0.0, 128
      %695 = vxpose.xlu0.b32.cont [11/16] 0.0, 128
      %696 = vxpose.xlu0.b32.cont [12/16] 0.0, 128
      %697 = vxpose.xlu0.b32.cont [13/16] 0.0, 128
      %698 = vxpose.xlu0.b32.cont [14/16] 0.0, 128
      %699 = vxpose.xlu0.b32.cont [15/16] 0.0, 128
      %700 = vxpose.xlu0.b32.end [16/16] 0.0, 128
      %v701 = vpop.trf.xlu0
      %v702 = vpop.trf.xlu0
      %v703 = vpop.trf.xlu0
      %v704 = vpop.trf.xlu0
      %v705 = vpop.trf.xlu0
      %v706 = vpop.trf.xlu0
      %v707 = vpop.trf.xlu0
      %v708 = vpop.trf.xlu0
      %v709 = vpop.trf.xlu0
      %v710 = vpop.trf.xlu0
      %v711 = vpop.trf.xlu0
      %v712 = vpop.trf.xlu0
      %v713 = vpop.trf.xlu0
      %v714 = vpop.trf.xlu0
      %v715 = vpop.trf.xlu0
      %v716 = vpop.trf.xlu0
      %717 = vxpose.xlu0.b32.start [1/16] %v678, 128
      %718 = vxpose.xlu0.b32.cont [2/16] %v680, 128
      %719 = vxpose.xlu0.b32.cont [3/16] %v682, 128
      %720 = vxpose.xlu0.b32.cont [4/16] %v684, 128
      %721 = vxpose.xlu0.b32.cont [5/16] 0.0, 128
      %722 = vxpose.xlu0.b32.cont [6/16] 0.0, 128
      %723 = vxpose.xlu0.b32.cont [7/16] 0.0, 128
      %724 = vxpose.xlu0.b32.cont [8/16] 0.0, 128
      %725 = vxpose.xlu0.b32.cont [9/16] 0.0, 128
      %726 = vxpose.xlu0.b32.cont [10/16] 0.0, 128
      %727 = vxpose.xlu0.b32.cont [11/16] 0.0, 128
      %728 = vxpose.xlu0.b32.cont [12/16] 0.0, 128
      %729 = vxpose.xlu0.b32.cont [13/16] 0.0, 128
      %730 = vxpose.xlu0.b32.cont [14/16] 0.0, 128
      %731 = vxpose.xlu0.b32.cont [15/16] 0.0, 128
      %732 = vxpose.xlu0.b32.end [16/16] 0.0, 128
      %v733 = vpop.trf.xlu0
      %v734 = vpop.trf.xlu0
      %v735 = vpop.trf.xlu0
      %v736 = vpop.trf.xlu0
      %v737 = vpop.trf.xlu0
      %v738 = vpop.trf.xlu0
      %v739 = vpop.trf.xlu0
      %v740 = vpop.trf.xlu0
      %v741 = vpop.trf.xlu0
      %v742 = vpop.trf.xlu0
      %v743 = vpop.trf.xlu0
      %v744 = vpop.trf.xlu0
      %v745 = vpop.trf.xlu0
      %v746 = vpop.trf.xlu0
      %v747 = vpop.trf.xlu0
      %v748 = vpop.trf.xlu0
      %s749 = scalar_lea.vmem [#allocation2], 72
      %750 = vst.msk [vmem:[%s749 + $0x3] sm:$0xff] %vm387, %v701
      %751 = vst.msk [vmem:[%s749 + $0xb] sm:$0xff] %vm387, %v702
      %752 = vst.msk [vmem:[%s749 + $0x1b] sm:$0xff] %vm387, %v703
      %753 = vst.msk [vmem:[%s749 + $0x23] sm:$0xff] %vm387, %v704
      %754 = vst.msk [vmem:[%s749 + $0x33] sm:$0xff] %vm387, %v705
      %755 = vst.msk [vmem:[%s749 + $0x3b] sm:$0xff] %vm387, %v706
      %756 = vst.msk [vmem:[%s749 + $0x4b] sm:$0xff] %vm387, %v707
      %757 = vst.msk [vmem:[%s749 + $0x53] sm:$0xff] %vm387, %v708
      %758 = vst.msk [vmem:[%s749 + $0x63] sm:$0xff] %vm387, %v709
      %759 = vst.msk [vmem:[%s749 + $0x6b] sm:$0xff] %vm387, %v710
      %760 = vst.msk [vmem:[%s749 + $0x7b] sm:$0xff] %vm387, %v711
      %761 = vst.msk [vmem:[%s749 + $0x83] sm:$0xff] %vm387, %v712
      %762 = vst.msk [vmem:[%s749 + $0x93] sm:$0xff] %vm387, %v713
      %763 = vst.msk [vmem:[%s749 + $0x9b] sm:$0xff] %vm387, %v714
      %764 = vst.msk [vmem:[%s749 + $0xab] sm:$0xff] %vm387, %v715
      %765 = vst.msk [vmem:[%s749 + $0xb3] sm:$0xff] %vm387, %v716
      %766 = vst.msk [vmem:[%s749 + $0xc3] sm:$0xff] %vm387, %v733
      %767 = vst.msk [vmem:[%s749 + $0xcb] sm:$0xff] %vm387, %v734
      %768 = vst.msk [vmem:[%s749 + $0xdb] sm:$0xff] %vm387, %v735
      %769 = vst.msk [vmem:[%s749 + $0xe3] sm:$0xff] %vm387, %v736
      %770 = vst.msk [vmem:[%s749 + $0xf3] sm:$0xff] %vm387, %v737
      %771 = vst.msk [vmem:[%s749 + $0xfb] sm:$0xff] %vm387, %v738
      %772 = vst.msk [vmem:[%s749 + $0x10b] sm:$0xff] %vm387, %v739
      %773 = vst.msk [vmem:[%s749 + $0x113] sm:$0xff] %vm387, %v740
      %774 = vst.msk [vmem:[%s749 + $0x123] sm:$0xff] %vm387, %v741
      %775 = vst.msk [vmem:[%s749 + $0x12b] sm:$0xff] %vm387, %v742
      %776 = vst.msk [vmem:[%s749 + $0x13b] sm:$0xff] %vm387, %v743
      %777 = vst.msk [vmem:[%s749 + $0x143] sm:$0xff] %vm387, %v744
      %778 = vst.msk [vmem:[%s749 + $0x153] sm:$0xff] %vm387, %v745
      %779 = vst.msk [vmem:[%s749 + $0x15b] sm:$0xff] %vm387, %v746
      %780 = vst.msk [vmem:[%s749 + $0x16b] sm:$0xff] %vm387, %v747
      %781 = vst.msk [vmem:[%s749 + $0x173] sm:$0xff] %vm387, %v748
      %v782 = vld [vmem:[#allocation2] sm:$0xff]
      %v783 = vld [vmem:[#allocation2 + $0x8] sm:$0xff]
      %v784 = vld [vmem:[#allocation2 + $0x10] sm:$0x3f]
      %v785 = vld [vmem:[#allocation2 + $0x18] sm:$0xff]
      %v786 = vld [vmem:[#allocation2 + $0x20] sm:$0xff]
      %v787 = vld [vmem:[#allocation2 + $0x28] sm:$0x3f]
      %v788 = vld [vmem:[#allocation2 + $0x30] sm:$0xff]
      %v789 = vld [vmem:[#allocation2 + $0x38] sm:$0xff]
      %v790 = vld [vmem:[#allocation2 + $0x40] sm:$0x3f]
      %v791 = vld [vmem:[#allocation2 + $0x48] sm:$0xff]
      %v792 = vld [vmem:[#allocation2 + $0x50] sm:$0xff]
      %v793 = vld [vmem:[#allocation2 + $0x58] sm:$0x3f]
      %v794 = vld [vmem:[#allocation2 + $0x60] sm:$0xff]
      %v795 = vld [vmem:[#allocation2 + $0x68] sm:$0xff]
      %v796 = vld [vmem:[#allocation2 + $0x70] sm:$0x3f]
      %v797 = vld [vmem:[#allocation2 + $0x78] sm:$0xff]
      %v798 = vld [vmem:[#allocation2 + $0x80] sm:$0xff]
      %v799 = vld [vmem:[#allocation2 + $0x88] sm:$0x3f]
      %v800 = vld [vmem:[#allocation2 + $0x90] sm:$0xff]
      %v801 = vld [vmem:[#allocation2 + $0x98] sm:$0xff]
      %v802 = vld [vmem:[#allocation2 + $0xa0] sm:$0x3f]
      %v803 = vld [vmem:[#allocation2 + $0xa8] sm:$0xff]
      %v804 = vld [vmem:[#allocation2 + $0xb0] sm:$0xff]
      %v805 = vld [vmem:[#allocation2 + $0xb8] sm:$0x3f]
      %v806 = vld [vmem:[#allocation2 + $0xc0] sm:$0xff]
      %v807 = vld [vmem:[#allocation2 + $0xc8] sm:$0xff]
      %v808 = vld [vmem:[#allocation2 + $0xd0] sm:$0x3f]
      %v809 = vld [vmem:[#allocation2 + $0xd8] sm:$0xff]
      %v810 = vld [vmem:[#allocation2 + $0xe0] sm:$0xff]
      %v811 = vld [vmem:[#allocation2 + $0xe8] sm:$0x3f]
      %v812 = vld [vmem:[#allocation2 + $0xf0] sm:$0xff]
      %v813 = vld [vmem:[#allocation2 + $0xf8] sm:$0xff]
      %v814 = vld [vmem:[#allocation2 + $0x100] sm:$0x3f]
      %v815 = vld [vmem:[#allocation2 + $0x108] sm:$0xff]
      %v816 = vld [vmem:[#allocation2 + $0x110] sm:$0xff]
      %v817 = vld [vmem:[#allocation2 + $0x118] sm:$0x3f]
      %v818 = vld [vmem:[#allocation2 + $0x120] sm:$0xff]
      %v819 = vld [vmem:[#allocation2 + $0x128] sm:$0xff]
      %v820 = vld [vmem:[#allocation2 + $0x130] sm:$0x3f]
      %v821 = vld [vmem:[#allocation2 + $0x138] sm:$0xff]
      %v822 = vld [vmem:[#allocation2 + $0x140] sm:$0xff]
      %v823 = vld [vmem:[#allocation2 + $0x148] sm:$0x3f]
      %v824 = vld [vmem:[#allocation2 + $0x150] sm:$0xff]
      %v825 = vld [vmem:[#allocation2 + $0x158] sm:$0xff]
      %v826 = vld [vmem:[#allocation2 + $0x160] sm:$0x3f]
      %v827 = vld [vmem:[#allocation2 + $0x168] sm:$0xff]
      %v828 = vld [vmem:[#allocation2 + $0x170] sm:$0xff]
      %v829 = vld [vmem:[#allocation2 + $0x178] sm:$0x3f]
      %v830 = vld [vmem:[#allocation2 + $0x180] sm:$0xff]
      %v831 = vld [vmem:[#allocation2 + $0x188] sm:$0xff]
      %v832 = vld [vmem:[#allocation2 + $0x190] sm:$0x3f]
      %v833 = vld [vmem:[#allocation2 + $0x198] sm:$0xff]
      %v834 = vld [vmem:[#allocation2 + $0x1a0] sm:$0xff]
      %v835 = vld [vmem:[#allocation2 + $0x1a8] sm:$0x3f]
      %v836 = vld [vmem:[#allocation2 + $0x1b0] sm:$0xff]
      %v837 = vld [vmem:[#allocation2 + $0x1b8] sm:$0xff]
      %v838 = vld [vmem:[#allocation2 + $0x1c0] sm:$0x3f]
      %v839 = vld [vmem:[#allocation2 + $0x1c8] sm:$0xff]
      %v840 = vld [vmem:[#allocation2 + $0x1d0] sm:$0xff]
      %v841 = vld [vmem:[#allocation2 + $0x1d8] sm:$0x3f]
      %v842 = vld [vmem:[#allocation2 + $0x1e0] sm:$0xff]
      %v843 = vld [vmem:[#allocation2 + $0x1e8] sm:$0xff]
      %v844 = vld [vmem:[#allocation2 + $0x1f0] sm:$0x3f]
      %v845 = vld [vmem:[#allocation2 + $0x1f8] sm:$0xff]
      %v846 = vld [vmem:[#allocation2 + $0x200] sm:$0xff]
      %v847 = vld [vmem:[#allocation2 + $0x208] sm:$0x3f]
      %vm914 = vcmask 1046528
      %v915 = vrot.slane %v782, 1
      %v916 = vrot.slane %v783, 1
      %v917 = vsel %vm914, %v915, %v916
      %v918 = vrot.slane %v784, 1
      %v919 = vsel %vm914, %v916, %v918
      %v920 = vrot.slane %v785, 1
      %v921 = vrot.slane %v786, 1
      %v922 = vsel %vm914, %v920, %v921
      %v923 = vrot.slane %v787, 1
      %v924 = vsel %vm914, %v921, %v923
      %v925 = vrot.slane %v788, 1
      %v926 = vrot.slane %v789, 1
      %v927 = vsel %vm914, %v925, %v926
      %v928 = vrot.slane %v790, 1
      %v929 = vsel %vm914, %v926, %v928
      %v930 = vrot.slane %v791, 1
      %v931 = vrot.slane %v792, 1
      %v932 = vsel %vm914, %v930, %v931
      %v933 = vrot.slane %v793, 1
      %v934 = vsel %vm914, %v931, %v933
      %v935 = vrot.slane %v794, 1
      %v936 = vrot.slane %v795, 1
      %v937 = vsel %vm914, %v935, %v936
      %v938 = vrot.slane %v796, 1
      %v939 = vsel %vm914, %v936, %v938
      %v940 = vrot.slane %v797, 1
      %v941 = vrot.slane %v798, 1
      %v942 = vsel %vm914, %v940, %v941
      %v943 = vrot.slane %v799, 1
      %v944 = vsel %vm914, %v941, %v943
      %v945 = vrot.slane %v800, 1
      %v946 = vrot.slane %v801, 1
      %v947 = vsel %vm914, %v945, %v946
      %v948 = vrot.slane %v802, 1
      %v949 = vsel %vm914, %v946, %v948
      %v950 = vrot.slane %v803, 1
      %v951 = vrot.slane %v804, 1
      %v952 = vsel %vm914, %v950, %v951
      %v953 = vrot.slane %v805, 1
      %v954 = vsel %vm914, %v951, %v953
      %v955 = vrot.slane %v806, 1
      %v956 = vrot.slane %v807, 1
      %v957 = vsel %vm914, %v955, %v956
      %v958 = vrot.slane %v808, 1
      %v959 = vsel %vm914, %v956, %v958
      %v960 = vrot.slane %v809, 1
      %v961 = vrot.slane %v810, 1
      %v962 = vsel %vm914, %v960, %v961
      %v963 = vrot.slane %v811, 1
      %v964 = vsel %vm914, %v961, %v963
      %v965 = vrot.slane %v812, 1
      %v966 = vrot.slane %v813, 1
      %v967 = vsel %vm914, %v965, %v966
      %v968 = vrot.slane %v814, 1
      %v969 = vsel %vm914, %v966, %v968
      %v970 = vrot.slane %v815, 1
      %v971 = vrot.slane %v816, 1
      %v972 = vsel %vm914, %v970, %v971
      %v973 = vrot.slane %v817, 1
      %v974 = vsel %vm914, %v971, %v973
      %v975 = vrot.slane %v818, 1
      %v976 = vrot.slane %v819, 1
      %v977 = vsel %vm914, %v975, %v976
      %v978 = vrot.slane %v820, 1
      %v979 = vsel %vm914, %v976, %v978
      %v980 = vrot.slane %v821, 1
      %v981 = vrot.slane %v822, 1
      %v982 = vsel %vm914, %v980, %v981
      %v983 = vrot.slane %v823, 1
      %v984 = vsel %vm914, %v981, %v983
      %v985 = vrot.slane %v824, 1
      %v986 = vrot.slane %v825, 1
      %v987 = vsel %vm914, %v985, %v986
      %v988 = vrot.slane %v826, 1
      %v989 = vsel %vm914, %v986, %v988
      %v990 = vrot.slane %v827, 1
      %v991 = vrot.slane %v828, 1
      %v992 = vsel %vm914, %v990, %v991
      %v993 = vrot.slane %v829, 1
      %v994 = vsel %vm914, %v991, %v993
      %v995 = vrot.slane %v830, 1
      %v996 = vrot.slane %v831, 1
      %v997 = vsel %vm914, %v995, %v996
      %v998 = vrot.slane %v832, 1
      %v999 = vsel %vm914, %v996, %v998
      %v1000 = vrot.slane %v833, 1
      %v1001 = vrot.slane %v834, 1
      %v1002 = vsel %vm914, %v1000, %v1001
      %v1003 = vrot.slane %v835, 1
      %v1004 = vsel %vm914, %v1001, %v1003
      %v1005 = vrot.slane %v836, 1
      %v1006 = vrot.slane %v837, 1
      %v1007 = vsel %vm914, %v1005, %v1006
      %v1008 = vrot.slane %v838, 1
      %v1009 = vsel %vm914, %v1006, %v1008
      %v1010 = vrot.slane %v839, 1
      %v1011 = vrot.slane %v840, 1
      %v1012 = vsel %vm914, %v1010, %v1011
      %v1013 = vrot.slane %v841, 1
      %v1014 = vsel %vm914, %v1011, %v1013
      %v1015 = vrot.slane %v842, 1
      %v1016 = vrot.slane %v843, 1
      %v1017 = vsel %vm914, %v1015, %v1016
      %v1018 = vrot.slane %v844, 1
      %v1019 = vsel %vm914, %v1016, %v1018
      %v1020 = vrot.slane %v845, 1
      %v1021 = vrot.slane %v846, 1
      %v1022 = vsel %vm914, %v1020, %v1021
      %v1023 = vrot.slane %v847, 1
      %v1024 = vsel %vm914, %v1021, %v1023
      %1025 = vrot.lane.b32.xlu0 %v917, 32
      %v1026 = vpop.permute.xlu0 %1025
      %1027 = vrot.lane.b32.xlu0 %v919, 32
      %v1028 = vpop.permute.xlu0 %1027
      %1029 = vrot.lane.b32.xlu0 %v922, 32
      %v1030 = vpop.permute.xlu0 %1029
      %1031 = vrot.lane.b32.xlu0 %v924, 32
      %v1032 = vpop.permute.xlu0 %1031
      %1033 = vrot.lane.b32.xlu0 %v927, 32
      %v1034 = vpop.permute.xlu0 %1033
      %1035 = vrot.lane.b32.xlu0 %v929, 32
      %v1036 = vpop.permute.xlu0 %1035
      %1037 = vrot.lane.b32.xlu0 %v932, 32
      %v1038 = vpop.permute.xlu0 %1037
      %1039 = vrot.lane.b32.xlu0 %v934, 32
      %v1040 = vpop.permute.xlu0 %1039
      %1041 = vrot.lane.b32.xlu0 %v937, 32
      %v1042 = vpop.permute.xlu0 %1041
      %1043 = vrot.lane.b32.xlu0 %v939, 32
      %v1044 = vpop.permute.xlu0 %1043
      %1045 = vrot.lane.b32.xlu0 %v942, 32
      %v1046 = vpop.permute.xlu0 %1045
      %1047 = vrot.lane.b32.xlu0 %v944, 32
      %v1048 = vpop.permute.xlu0 %1047
      %1049 = vrot.lane.b32.xlu0 %v947, 32
      %v1050 = vpop.permute.xlu0 %1049
      %1051 = vrot.lane.b32.xlu0 %v949, 32
      %v1052 = vpop.permute.xlu0 %1051
      %1053 = vrot.lane.b32.xlu0 %v952, 32
      %v1054 = vpop.permute.xlu0 %1053
      %1055 = vrot.lane.b32.xlu0 %v954, 32
      %v1056 = vpop.permute.xlu0 %1055
      %1057 = vrot.lane.b32.xlu0 %v957, 32
      %v1058 = vpop.permute.xlu0 %1057
      %1059 = vrot.lane.b32.xlu0 %v959, 32
      %v1060 = vpop.permute.xlu0 %1059
      %1061 = vrot.lane.b32.xlu0 %v962, 32
      %v1062 = vpop.permute.xlu0 %1061
      %1063 = vrot.lane.b32.xlu0 %v964, 32
      %v1064 = vpop.permute.xlu0 %1063
      %1065 = vrot.lane.b32.xlu0 %v967, 32
      %v1066 = vpop.permute.xlu0 %1065
      %1067 = vrot.lane.b32.xlu0 %v969, 32
      %v1068 = vpop.permute.xlu0 %1067
      %1069 = vrot.lane.b32.xlu0 %v972, 32
      %v1070 = vpop.permute.xlu0 %1069
      %1071 = vrot.lane.b32.xlu0 %v974, 32
      %v1072 = vpop.permute.xlu0 %1071
      %1073 = vrot.lane.b32.xlu0 %v977, 32
      %v1074 = vpop.permute.xlu0 %1073
      %1075 = vrot.lane.b32.xlu0 %v979, 32
      %v1076 = vpop.permute.xlu0 %1075
      %1077 = vrot.lane.b32.xlu0 %v982, 32
      %v1078 = vpop.permute.xlu0 %1077
      %1079 = vrot.lane.b32.xlu0 %v984, 32
      %v1080 = vpop.permute.xlu0 %1079
      %1081 = vrot.lane.b32.xlu0 %v987, 32
      %v1082 = vpop.permute.xlu0 %1081
      %1083 = vrot.lane.b32.xlu0 %v989, 32
      %v1084 = vpop.permute.xlu0 %1083
      %1085 = vrot.lane.b32.xlu0 %v992, 32
      %v1086 = vpop.permute.xlu0 %1085
      %1087 = vrot.lane.b32.xlu0 %v994, 32
      %v1088 = vpop.permute.xlu0 %1087
      %1089 = vrot.lane.b32.xlu0 %v997, 32
      %v1090 = vpop.permute.xlu0 %1089
      %1091 = vrot.lane.b32.xlu0 %v999, 32
      %v1092 = vpop.permute.xlu0 %1091
      %1093 = vrot.lane.b32.xlu0 %v1002, 32
      %v1094 = vpop.permute.xlu0 %1093
      %1095 = vrot.lane.b32.xlu0 %v1004, 32
      %v1096 = vpop.permute.xlu0 %1095
      %1097 = vrot.lane.b32.xlu0 %v1007, 32
      %v1098 = vpop.permute.xlu0 %1097
      %1099 = vrot.lane.b32.xlu0 %v1009, 32
      %v1100 = vpop.permute.xlu0 %1099
      %1101 = vrot.lane.b32.xlu0 %v1012, 32
      %v1102 = vpop.permute.xlu0 %1101
      %1103 = vrot.lane.b32.xlu0 %v1014, 32
      %v1104 = vpop.permute.xlu0 %1103
      %1105 = vrot.lane.b32.xlu0 %v1017, 32
      %v1106 = vpop.permute.xlu0 %1105
      %1107 = vrot.lane.b32.xlu0 %v1019, 32
      %v1108 = vpop.permute.xlu0 %1107
      %1109 = vrot.lane.b32.xlu0 %v1022, 32
      %v1110 = vpop.permute.xlu0 %1109
      %1111 = vrot.lane.b32.xlu0 %v1024, 32
      %v1112 = vpop.permute.xlu0 %1111
      %vm1157 = vcmask 1045504
      %v1158 = vrot.slane %v782, 2
      %v1159 = vrot.slane %v783, 2
      %v1160 = vsel %vm1157, %v1158, %v1159
      %v1161 = vrot.slane %v784, 2
      %v1162 = vsel %vm1157, %v1159, %v1161
      %v1163 = vrot.slane %v785, 2
      %v1164 = vrot.slane %v786, 2
      %v1165 = vsel %vm1157, %v1163, %v1164
      %v1166 = vrot.slane %v787, 2
      %v1167 = vsel %vm1157, %v1164, %v1166
      %v1168 = vrot.slane %v788, 2
      %v1169 = vrot.slane %v789, 2
      %v1170 = vsel %vm1157, %v1168, %v1169
      %v1171 = vrot.slane %v790, 2
      %v1172 = vsel %vm1157, %v1169, %v1171
      %v1173 = vrot.slane %v791, 2
      %v1174 = vrot.slane %v792, 2
      %v1175 = vsel %vm1157, %v1173, %v1174
      %v1176 = vrot.slane %v793, 2
      %v1177 = vsel %vm1157, %v1174, %v1176
      %v1178 = vrot.slane %v794, 2
      %v1179 = vrot.slane %v795, 2
      %v1180 = vsel %vm1157, %v1178, %v1179
      %v1181 = vrot.slane %v796, 2
      %v1182 = vsel %vm1157, %v1179, %v1181
      %v1183 = vrot.slane %v797, 2
      %v1184 = vrot.slane %v798, 2
      %v1185 = vsel %vm1157, %v1183, %v1184
      %v1186 = vrot.slane %v799, 2
      %v1187 = vsel %vm1157, %v1184, %v1186
      %v1188 = vrot.slane %v800, 2
      %v1189 = vrot.slane %v801, 2
      %v1190 = vsel %vm1157, %v1188, %v1189
      %v1191 = vrot.slane %v802, 2
      %v1192 = vsel %vm1157, %v1189, %v1191
      %v1193 = vrot.slane %v803, 2
      %v1194 = vrot.slane %v804, 2
      %v1195 = vsel %vm1157, %v1193, %v1194
      %v1196 = vrot.slane %v805, 2
      %v1197 = vsel %vm1157, %v1194, %v1196
      %v1198 = vrot.slane %v806, 2
      %v1199 = vrot.slane %v807, 2
      %v1200 = vsel %vm1157, %v1198, %v1199
      %v1201 = vrot.slane %v808, 2
      %v1202 = vsel %vm1157, %v1199, %v1201
      %v1203 = vrot.slane %v809, 2
      %v1204 = vrot.slane %v810, 2
      %v1205 = vsel %vm1157, %v1203, %v1204
      %v1206 = vrot.slane %v811, 2
      %v1207 = vsel %vm1157, %v1204, %v1206
      %v1208 = vrot.slane %v812, 2
      %v1209 = vrot.slane %v813, 2
      %v1210 = vsel %vm1157, %v1208, %v1209
      %v1211 = vrot.slane %v814, 2
      %v1212 = vsel %vm1157, %v1209, %v1211
      %v1213 = vrot.slane %v815, 2
      %v1214 = vrot.slane %v816, 2
      %v1215 = vsel %vm1157, %v1213, %v1214
      %v1216 = vrot.slane %v817, 2
      %v1217 = vsel %vm1157, %v1214, %v1216
      %v1218 = vrot.slane %v818, 2
      %v1219 = vrot.slane %v819, 2
      %v1220 = vsel %vm1157, %v1218, %v1219
      %v1221 = vrot.slane %v820, 2
      %v1222 = vsel %vm1157, %v1219, %v1221
      %v1223 = vrot.slane %v821, 2
      %v1224 = vrot.slane %v822, 2
      %v1225 = vsel %vm1157, %v1223, %v1224
      %v1226 = vrot.slane %v823, 2
      %v1227 = vsel %vm1157, %v1224, %v1226
      %v1228 = vrot.slane %v824, 2
      %v1229 = vrot.slane %v825, 2
      %v1230 = vsel %vm1157, %v1228, %v1229
      %v1231 = vrot.slane %v826, 2
      %v1232 = vsel %vm1157, %v1229, %v1231
      %v1233 = vrot.slane %v827, 2
      %v1234 = vrot.slane %v828, 2
      %v1235 = vsel %vm1157, %v1233, %v1234
      %v1236 = vrot.slane %v829, 2
      %v1237 = vsel %vm1157, %v1234, %v1236
      %v1238 = vrot.slane %v830, 2
      %v1239 = vrot.slane %v831, 2
      %v1240 = vsel %vm1157, %v1238, %v1239
      %v1241 = vrot.slane %v832, 2
      %v1242 = vsel %vm1157, %v1239, %v1241
      %v1243 = vrot.slane %v833, 2
      %v1244 = vrot.slane %v834, 2
      %v1245 = vsel %vm1157, %v1243, %v1244
      %v1246 = vrot.slane %v835, 2
      %v1247 = vsel %vm1157, %v1244, %v1246
      %v1248 = vrot.slane %v836, 2
      %v1249 = vrot.slane %v837, 2
      %v1250 = vsel %vm1157, %v1248, %v1249
      %v1251 = vrot.slane %v838, 2
      %v1252 = vsel %vm1157, %v1249, %v1251
      %v1253 = vrot.slane %v839, 2
      %v1254 = vrot.slane %v840, 2
      %v1255 = vsel %vm1157, %v1253, %v1254
      %v1256 = vrot.slane %v841, 2
      %v1257 = vsel %vm1157, %v1254, %v1256
      %v1258 = vrot.slane %v842, 2
      %v1259 = vrot.slane %v843, 2
      %v1260 = vsel %vm1157, %v1258, %v1259
      %v1261 = vrot.slane %v844, 2
      %v1262 = vsel %vm1157, %v1259, %v1261
      %v1263 = vrot.slane %v845, 2
      %v1264 = vrot.slane %v846, 2
      %v1265 = vsel %vm1157, %v1263, %v1264
      %v1266 = vrot.slane %v847, 2
      %v1267 = vsel %vm1157, %v1264, %v1266
      %1268 = vrot.lane.b32.xlu0 %v1160, 64
      %v1269 = vpop.permute.xlu0 %1268
      %1270 = vrot.lane.b32.xlu0 %v1162, 64
      %v1271 = vpop.permute.xlu0 %1270
      %1272 = vrot.lane.b32.xlu0 %v1165, 64
      %v1273 = vpop.permute.xlu0 %1272
      %1274 = vrot.lane.b32.xlu0 %v1167, 64
      %v1275 = vpop.permute.xlu0 %1274
      %1276 = vrot.lane.b32.xlu0 %v1170, 64
      %v1277 = vpop.permute.xlu0 %1276
      %1278 = vrot.lane.b32.xlu0 %v1172, 64
      %v1279 = vpop.permute.xlu0 %1278
      %1280 = vrot.lane.b32.xlu0 %v1175, 64
      %v1281 = vpop.permute.xlu0 %1280
      %1282 = vrot.lane.b32.xlu0 %v1177, 64
      %v1283 = vpop.permute.xlu0 %1282
      %1284 = vrot.lane.b32.xlu0 %v1180, 64
      %v1285 = vpop.permute.xlu0 %1284
      %1286 = vrot.lane.b32.xlu0 %v1182, 64
      %v1287 = vpop.permute.xlu0 %1286
      %1288 = vrot.lane.b32.xlu0 %v1185, 64
      %v1289 = vpop.permute.xlu0 %1288
      %1290 = vrot.lane.b32.xlu0 %v1187, 64
      %v1291 = vpop.permute.xlu0 %1290
      %1292 = vrot.lane.b32.xlu0 %v1190, 64
      %v1293 = vpop.permute.xlu0 %1292
      %1294 = vrot.lane.b32.xlu0 %v1192, 64
      %v1295 = vpop.permute.xlu0 %1294
      %1296 = vrot.lane.b32.xlu0 %v1195, 64
      %v1297 = vpop.permute.xlu0 %1296
      %1298 = vrot.lane.b32.xlu0 %v1197, 64
      %v1299 = vpop.permute.xlu0 %1298
      %1300 = vrot.lane.b32.xlu0 %v1200, 64
      %v1301 = vpop.permute.xlu0 %1300
      %1302 = vrot.lane.b32.xlu0 %v1202, 64
      %v1303 = vpop.permute.xlu0 %1302
      %1304 = vrot.lane.b32.xlu0 %v1205, 64
      %v1305 = vpop.permute.xlu0 %1304
      %1306 = vrot.lane.b32.xlu0 %v1207, 64
      %v1307 = vpop.permute.xlu0 %1306
      %1308 = vrot.lane.b32.xlu0 %v1210, 64
      %v1309 = vpop.permute.xlu0 %1308
      %1310 = vrot.lane.b32.xlu0 %v1212, 64
      %v1311 = vpop.permute.xlu0 %1310
      %1312 = vrot.lane.b32.xlu0 %v1215, 64
      %v1313 = vpop.permute.xlu0 %1312
      %1314 = vrot.lane.b32.xlu0 %v1217, 64
      %v1315 = vpop.permute.xlu0 %1314
      %1316 = vrot.lane.b32.xlu0 %v1220, 64
      %v1317 = vpop.permute.xlu0 %1316
      %1318 = vrot.lane.b32.xlu0 %v1222, 64
      %v1319 = vpop.permute.xlu0 %1318
      %1320 = vrot.lane.b32.xlu0 %v1225, 64
      %v1321 = vpop.permute.xlu0 %1320
      %1322 = vrot.lane.b32.xlu0 %v1227, 64
      %v1323 = vpop.permute.xlu0 %1322
      %1324 = vrot.lane.b32.xlu0 %v1230, 64
      %v1325 = vpop.permute.xlu0 %1324
      %1326 = vrot.lane.b32.xlu0 %v1232, 64
      %v1327 = vpop.permute.xlu0 %1326
      %1328 = vrot.lane.b32.xlu0 %v1235, 64
      %v1329 = vpop.permute.xlu0 %1328
      %1330 = vrot.lane.b32.xlu0 %v1237, 64
      %v1331 = vpop.permute.xlu0 %1330
      %1332 = vrot.lane.b32.xlu0 %v1240, 64
      %v1333 = vpop.permute.xlu0 %1332
      %1334 = vrot.lane.b32.xlu0 %v1242, 64
      %v1335 = vpop.permute.xlu0 %1334
      %1336 = vrot.lane.b32.xlu0 %v1245, 64
      %v1337 = vpop.permute.xlu0 %1336
      %1338 = vrot.lane.b32.xlu0 %v1247, 64
      %v1339 = vpop.permute.xlu0 %1338
      %1340 = vrot.lane.b32.xlu0 %v1250, 64
      %v1341 = vpop.permute.xlu0 %1340
      %1342 = vrot.lane.b32.xlu0 %v1252, 64
      %v1343 = vpop.permute.xlu0 %1342
      %1344 = vrot.lane.b32.xlu0 %v1255, 64
      %v1345 = vpop.permute.xlu0 %1344
      %1346 = vrot.lane.b32.xlu0 %v1257, 64
      %v1347 = vpop.permute.xlu0 %1346
      %1348 = vrot.lane.b32.xlu0 %v1260, 64
      %v1349 = vpop.permute.xlu0 %1348
      %1350 = vrot.lane.b32.xlu0 %v1262, 64
      %v1351 = vpop.permute.xlu0 %1350
      %1352 = vrot.lane.b32.xlu0 %v1265, 64
      %v1353 = vpop.permute.xlu0 %1352
      %1354 = vrot.lane.b32.xlu0 %v1267, 64
      %v1355 = vpop.permute.xlu0 %1354
      %vm1400 = vcmask 1044480
      %v1401 = vrot.slane %v782, 3
      %v1402 = vrot.slane %v783, 3
      %v1403 = vsel %vm1400, %v1401, %v1402
      %v1404 = vrot.slane %v784, 3
      %v1405 = vsel %vm1400, %v1402, %v1404
      %v1406 = vrot.slane %v785, 3
      %v1407 = vrot.slane %v786, 3
      %v1408 = vsel %vm1400, %v1406, %v1407
      %v1409 = vrot.slane %v787, 3
      %v1410 = vsel %vm1400, %v1407, %v1409
      %v1411 = vrot.slane %v788, 3
      %v1412 = vrot.slane %v789, 3
      %v1413 = vsel %vm1400, %v1411, %v1412
      %v1414 = vrot.slane %v790, 3
      %v1415 = vsel %vm1400, %v1412, %v1414
      %v1416 = vrot.slane %v791, 3
      %v1417 = vrot.slane %v792, 3
      %v1418 = vsel %vm1400, %v1416, %v1417
      %v1419 = vrot.slane %v793, 3
      %v1420 = vsel %vm1400, %v1417, %v1419
      %v1421 = vrot.slane %v794, 3
      %v1422 = vrot.slane %v795, 3
      %v1423 = vsel %vm1400, %v1421, %v1422
      %v1424 = vrot.slane %v796, 3
      %v1425 = vsel %vm1400, %v1422, %v1424
      %v1426 = vrot.slane %v797, 3
      %v1427 = vrot.slane %v798, 3
      %v1428 = vsel %vm1400, %v1426, %v1427
      %v1429 = vrot.slane %v799, 3
      %v1430 = vsel %vm1400, %v1427, %v1429
      %v1431 = vrot.slane %v800, 3
      %v1432 = vrot.slane %v801, 3
      %v1433 = vsel %vm1400, %v1431, %v1432
      %v1434 = vrot.slane %v802, 3
      %v1435 = vsel %vm1400, %v1432, %v1434
      %v1436 = vrot.slane %v803, 3
      %v1437 = vrot.slane %v804, 3
      %v1438 = vsel %vm1400, %v1436, %v1437
      %v1439 = vrot.slane %v805, 3
      %v1440 = vsel %vm1400, %v1437, %v1439
      %v1441 = vrot.slane %v806, 3
      %v1442 = vrot.slane %v807, 3
      %v1443 = vsel %vm1400, %v1441, %v1442
      %v1444 = vrot.slane %v808, 3
      %v1445 = vsel %vm1400, %v1442, %v1444
      %v1446 = vrot.slane %v809, 3
      %v1447 = vrot.slane %v810, 3
      %v1448 = vsel %vm1400, %v1446, %v1447
      %v1449 = vrot.slane %v811, 3
      %v1450 = vsel %vm1400, %v1447, %v1449
      %v1451 = vrot.slane %v812, 3
      %v1452 = vrot.slane %v813, 3
      %v1453 = vsel %vm1400, %v1451, %v1452
      %v1454 = vrot.slane %v814, 3
      %v1455 = vsel %vm1400, %v1452, %v1454
      %v1456 = vrot.slane %v815, 3
      %v1457 = vrot.slane %v816, 3
      %v1458 = vsel %vm1400, %v1456, %v1457
      %v1459 = vrot.slane %v817, 3
      %v1460 = vsel %vm1400, %v1457, %v1459
      %v1461 = vrot.slane %v818, 3
      %v1462 = vrot.slane %v819, 3
      %v1463 = vsel %vm1400, %v1461, %v1462
      %v1464 = vrot.slane %v820, 3
      %v1465 = vsel %vm1400, %v1462, %v1464
      %v1466 = vrot.slane %v821, 3
      %v1467 = vrot.slane %v822, 3
      %v1468 = vsel %vm1400, %v1466, %v1467
      %v1469 = vrot.slane %v823, 3
      %v1470 = vsel %vm1400, %v1467, %v1469
      %v1471 = vrot.slane %v824, 3
      %v1472 = vrot.slane %v825, 3
      %v1473 = vsel %vm1400, %v1471, %v1472
      %v1474 = vrot.slane %v826, 3
      %v1475 = vsel %vm1400, %v1472, %v1474
      %v1476 = vrot.slane %v827, 3
      %v1477 = vrot.slane %v828, 3
      %v1478 = vsel %vm1400, %v1476, %v1477
      %v1479 = vrot.slane %v829, 3
      %v1480 = vsel %vm1400, %v1477, %v1479
      %v1481 = vrot.slane %v830, 3
      %v1482 = vrot.slane %v831, 3
      %v1483 = vsel %vm1400, %v1481, %v1482
      %v1484 = vrot.slane %v832, 3
      %v1485 = vsel %vm1400, %v1482, %v1484
      %v1486 = vrot.slane %v833, 3
      %v1487 = vrot.slane %v834, 3
      %v1488 = vsel %vm1400, %v1486, %v1487
      %v1489 = vrot.slane %v835, 3
      %v1490 = vsel %vm1400, %v1487, %v1489
      %v1491 = vrot.slane %v836, 3
      %v1492 = vrot.slane %v837, 3
      %v1493 = vsel %vm1400, %v1491, %v1492
      %v1494 = vrot.slane %v838, 3
      %v1495 = vsel %vm1400, %v1492, %v1494
      %v1496 = vrot.slane %v839, 3
      %v1497 = vrot.slane %v840, 3
      %v1498 = vsel %vm1400, %v1496, %v1497
      %v1499 = vrot.slane %v841, 3
      %v1500 = vsel %vm1400, %v1497, %v1499
      %v1501 = vrot.slane %v842, 3
      %v1502 = vrot.slane %v843, 3
      %v1503 = vsel %vm1400, %v1501, %v1502
      %v1504 = vrot.slane %v844, 3
      %v1505 = vsel %vm1400, %v1502, %v1504
      %v1506 = vrot.slane %v845, 3
      %v1507 = vrot.slane %v846, 3
      %v1508 = vsel %vm1400, %v1506, %v1507
      %v1509 = vrot.slane %v847, 3
      %v1510 = vsel %vm1400, %v1507, %v1509
      %1511 = vrot.lane.b32.xlu0 %v1403, 96
      %v1512 = vpop.permute.xlu0 %1511
      %1513 = vrot.lane.b32.xlu0 %v1405, 96
      %v1514 = vpop.permute.xlu0 %1513
      %1515 = vrot.lane.b32.xlu0 %v1408, 96
      %v1516 = vpop.permute.xlu0 %1515
      %1517 = vrot.lane.b32.xlu0 %v1410, 96
      %v1518 = vpop.permute.xlu0 %1517
      %1519 = vrot.lane.b32.xlu0 %v1413, 96
      %v1520 = vpop.permute.xlu0 %1519
      %1521 = vrot.lane.b32.xlu0 %v1415, 96
      %v1522 = vpop.permute.xlu0 %1521
      %1523 = vrot.lane.b32.xlu0 %v1418, 96
      %v1524 = vpop.permute.xlu0 %1523
      %1525 = vrot.lane.b32.xlu0 %v1420, 96
      %v1526 = vpop.permute.xlu0 %1525
      %1527 = vrot.lane.b32.xlu0 %v1423, 96
      %v1528 = vpop.permute.xlu0 %1527
      %1529 = vrot.lane.b32.xlu0 %v1425, 96
      %v1530 = vpop.permute.xlu0 %1529
      %1531 = vrot.lane.b32.xlu0 %v1428, 96
      %v1532 = vpop.permute.xlu0 %1531
      %1533 = vrot.lane.b32.xlu0 %v1430, 96
      %v1534 = vpop.permute.xlu0 %1533
      %1535 = vrot.lane.b32.xlu0 %v1433, 96
      %v1536 = vpop.permute.xlu0 %1535
      %1537 = vrot.lane.b32.xlu0 %v1435, 96
      %v1538 = vpop.permute.xlu0 %1537
      %1539 = vrot.lane.b32.xlu0 %v1438, 96
      %v1540 = vpop.permute.xlu0 %1539
      %1541 = vrot.lane.b32.xlu0 %v1440, 96
      %v1542 = vpop.permute.xlu0 %1541
      %1543 = vrot.lane.b32.xlu0 %v1443, 96
      %v1544 = vpop.permute.xlu0 %1543
      %1545 = vrot.lane.b32.xlu0 %v1445, 96
      %v1546 = vpop.permute.xlu0 %1545
      %1547 = vrot.lane.b32.xlu0 %v1448, 96
      %v1548 = vpop.permute.xlu0 %1547
      %1549 = vrot.lane.b32.xlu0 %v1450, 96
      %v1550 = vpop.permute.xlu0 %1549
      %1551 = vrot.lane.b32.xlu0 %v1453, 96
      %v1552 = vpop.permute.xlu0 %1551
      %1553 = vrot.lane.b32.xlu0 %v1455, 96
      %v1554 = vpop.permute.xlu0 %1553
      %1555 = vrot.lane.b32.xlu0 %v1458, 96
      %v1556 = vpop.permute.xlu0 %1555
      %1557 = vrot.lane.b32.xlu0 %v1460, 96
      %v1558 = vpop.permute.xlu0 %1557
      %1559 = vrot.lane.b32.xlu0 %v1463, 96
      %v1560 = vpop.permute.xlu0 %1559
      %1561 = vrot.lane.b32.xlu0 %v1465, 96
      %v1562 = vpop.permute.xlu0 %1561
      %1563 = vrot.lane.b32.xlu0 %v1468, 96
      %v1564 = vpop.permute.xlu0 %1563
      %1565 = vrot.lane.b32.xlu0 %v1470, 96
      %v1566 = vpop.permute.xlu0 %1565
      %1567 = vrot.lane.b32.xlu0 %v1473, 96
      %v1568 = vpop.permute.xlu0 %1567
      %1569 = vrot.lane.b32.xlu0 %v1475, 96
      %v1570 = vpop.permute.xlu0 %1569
      %1571 = vrot.lane.b32.xlu0 %v1478, 96
      %v1572 = vpop.permute.xlu0 %1571
      %1573 = vrot.lane.b32.xlu0 %v1480, 96
      %v1574 = vpop.permute.xlu0 %1573
      %1575 = vrot.lane.b32.xlu0 %v1483, 96
      %v1576 = vpop.permute.xlu0 %1575
      %1577 = vrot.lane.b32.xlu0 %v1485, 96
      %v1578 = vpop.permute.xlu0 %1577
      %1579 = vrot.lane.b32.xlu0 %v1488, 96
      %v1580 = vpop.permute.xlu0 %1579
      %1581 = vrot.lane.b32.xlu0 %v1490, 96
      %v1582 = vpop.permute.xlu0 %1581
      %1583 = vrot.lane.b32.xlu0 %v1493, 96
      %v1584 = vpop.permute.xlu0 %1583
      %1585 = vrot.lane.b32.xlu0 %v1495, 96
      %v1586 = vpop.permute.xlu0 %1585
      %1587 = vrot.lane.b32.xlu0 %v1498, 96
      %v1588 = vpop.permute.xlu0 %1587
      %1589 = vrot.lane.b32.xlu0 %v1500, 96
      %v1590 = vpop.permute.xlu0 %1589
      %1591 = vrot.lane.b32.xlu0 %v1503, 96
      %v1592 = vpop.permute.xlu0 %1591
      %1593 = vrot.lane.b32.xlu0 %v1505, 96
      %v1594 = vpop.permute.xlu0 %1593
      %1595 = vrot.lane.b32.xlu0 %v1508, 96
      %v1596 = vpop.permute.xlu0 %1595
      %1597 = vrot.lane.b32.xlu0 %v1510, 96
      %v1598 = vpop.permute.xlu0 %1597
      %vm1643 = vcmask 1043456
      %v1644 = vrot.slane %v782, 4
      %v1645 = vrot.slane %v783, 4
      %v1646 = vsel %vm1643, %v1644, %v1645
      %v1647 = vrot.slane %v784, 4
      %v1648 = vsel %vm1643, %v1645, %v1647
      %v1649 = vrot.slane %v785, 4
      %v1650 = vrot.slane %v786, 4
      %v1651 = vsel %vm1643, %v1649, %v1650
      %v1652 = vrot.slane %v787, 4
      %v1653 = vsel %vm1643, %v1650, %v1652
      %v1654 = vrot.slane %v788, 4
      %v1655 = vrot.slane %v789, 4
      %v1656 = vsel %vm1643, %v1654, %v1655
      %v1657 = vrot.slane %v790, 4
      %v1658 = vsel %vm1643, %v1655, %v1657
      %v1659 = vrot.slane %v791, 4
      %v1660 = vrot.slane %v792, 4
      %v1661 = vsel %vm1643, %v1659, %v1660
      %v1662 = vrot.slane %v793, 4
      %v1663 = vsel %vm1643, %v1660, %v1662
      %v1664 = vrot.slane %v794, 4
      %v1665 = vrot.slane %v795, 4
      %v1666 = vsel %vm1643, %v1664, %v1665
      %v1667 = vrot.slane %v796, 4
      %v1668 = vsel %vm1643, %v1665, %v1667
      %v1669 = vrot.slane %v797, 4
      %v1670 = vrot.slane %v798, 4
      %v1671 = vsel %vm1643, %v1669, %v1670
      %v1672 = vrot.slane %v799, 4
      %v1673 = vsel %vm1643, %v1670, %v1672
      %v1674 = vrot.slane %v800, 4
      %v1675 = vrot.slane %v801, 4
      %v1676 = vsel %vm1643, %v1674, %v1675
      %v1677 = vrot.slane %v802, 4
      %v1678 = vsel %vm1643, %v1675, %v1677
      %v1679 = vrot.slane %v803, 4
      %v1680 = vrot.slane %v804, 4
      %v1681 = vsel %vm1643, %v1679, %v1680
      %v1682 = vrot.slane %v805, 4
      %v1683 = vsel %vm1643, %v1680, %v1682
      %v1684 = vrot.slane %v806, 4
      %v1685 = vrot.slane %v807, 4
      %v1686 = vsel %vm1643, %v1684, %v1685
      %v1687 = vrot.slane %v808, 4
      %v1688 = vsel %vm1643, %v1685, %v1687
      %v1689 = vrot.slane %v809, 4
      %v1690 = vrot.slane %v810, 4
      %v1691 = vsel %vm1643, %v1689, %v1690
      %v1692 = vrot.slane %v811, 4
      %v1693 = vsel %vm1643, %v1690, %v1692
      %v1694 = vrot.slane %v812, 4
      %v1695 = vrot.slane %v813, 4
      %v1696 = vsel %vm1643, %v1694, %v1695
      %v1697 = vrot.slane %v814, 4
      %v1698 = vsel %vm1643, %v1695, %v1697
      %v1699 = vrot.slane %v815, 4
      %v1700 = vrot.slane %v816, 4
      %v1701 = vsel %vm1643, %v1699, %v1700
      %v1702 = vrot.slane %v817, 4
      %v1703 = vsel %vm1643, %v1700, %v1702
      %v1704 = vrot.slane %v818, 4
      %v1705 = vrot.slane %v819, 4
      %v1706 = vsel %vm1643, %v1704, %v1705
      %v1707 = vrot.slane %v820, 4
      %v1708 = vsel %vm1643, %v1705, %v1707
      %v1709 = vrot.slane %v821, 4
      %v1710 = vrot.slane %v822, 4
      %v1711 = vsel %vm1643, %v1709, %v1710
      %v1712 = vrot.slane %v823, 4
      %v1713 = vsel %vm1643, %v1710, %v1712
      %v1714 = vrot.slane %v824, 4
      %v1715 = vrot.slane %v825, 4
      %v1716 = vsel %vm1643, %v1714, %v1715
      %v1717 = vrot.slane %v826, 4
      %v1718 = vsel %vm1643, %v1715, %v1717
      %v1719 = vrot.slane %v827, 4
      %v1720 = vrot.slane %v828, 4
      %v1721 = vsel %vm1643, %v1719, %v1720
      %v1722 = vrot.slane %v829, 4
      %v1723 = vsel %vm1643, %v1720, %v1722
      %v1724 = vrot.slane %v830, 4
      %v1725 = vrot.slane %v831, 4
      %v1726 = vsel %vm1643, %v1724, %v1725
      %v1727 = vrot.slane %v832, 4
      %v1728 = vsel %vm1643, %v1725, %v1727
      %v1729 = vrot.slane %v833, 4
      %v1730 = vrot.slane %v834, 4
      %v1731 = vsel %vm1643, %v1729, %v1730
      %v1732 = vrot.slane %v835, 4
      %v1733 = vsel %vm1643, %v1730, %v1732
      %v1734 = vrot.slane %v836, 4
      %v1735 = vrot.slane %v837, 4
      %v1736 = vsel %vm1643, %v1734, %v1735
      %v1737 = vrot.slane %v838, 4
      %v1738 = vsel %vm1643, %v1735, %v1737
      %v1739 = vrot.slane %v839, 4
      %v1740 = vrot.slane %v840, 4
      %v1741 = vsel %vm1643, %v1739, %v1740
      %v1742 = vrot.slane %v841, 4
      %v1743 = vsel %vm1643, %v1740, %v1742
      %v1744 = vrot.slane %v842, 4
      %v1745 = vrot.slane %v843, 4
      %v1746 = vsel %vm1643, %v1744, %v1745
      %v1747 = vrot.slane %v844, 4
      %v1748 = vsel %vm1643, %v1745, %v1747
      %v1749 = vrot.slane %v845, 4
      %v1750 = vrot.slane %v846, 4
      %v1751 = vsel %vm1643, %v1749, %v1750
      %v1752 = vrot.slane %v847, 4
      %v1753 = vsel %vm1643, %v1750, %v1752
      %vm1798 = vcmask 1042432
      %v1799 = vrot.slane %v782, 5
      %v1800 = vrot.slane %v783, 5
      %v1801 = vsel %vm1798, %v1799, %v1800
      %v1802 = vrot.slane %v784, 5
      %v1803 = vsel %vm1798, %v1800, %v1802
      %v1804 = vrot.slane %v785, 5
      %v1805 = vrot.slane %v786, 5
      %v1806 = vsel %vm1798, %v1804, %v1805
      %v1807 = vrot.slane %v787, 5
      %v1808 = vsel %vm1798, %v1805, %v1807
      %v1809 = vrot.slane %v788, 5
      %v1810 = vrot.slane %v789, 5
      %v1811 = vsel %vm1798, %v1809, %v1810
      %v1812 = vrot.slane %v790, 5
      %v1813 = vsel %vm1798, %v1810, %v1812
      %v1814 = vrot.slane %v791, 5
      %v1815 = vrot.slane %v792, 5
      %v1816 = vsel %vm1798, %v1814, %v1815
      %v1817 = vrot.slane %v793, 5
      %v1818 = vsel %vm1798, %v1815, %v1817
      %v1819 = vrot.slane %v794, 5
      %v1820 = vrot.slane %v795, 5
      %v1821 = vsel %vm1798, %v1819, %v1820
      %v1822 = vrot.slane %v796, 5
      %v1823 = vsel %vm1798, %v1820, %v1822
      %v1824 = vrot.slane %v797, 5
      %v1825 = vrot.slane %v798, 5
      %v1826 = vsel %vm1798, %v1824, %v1825
      %v1827 = vrot.slane %v799, 5
      %v1828 = vsel %vm1798, %v1825, %v1827
      %v1829 = vrot.slane %v800, 5
      %v1830 = vrot.slane %v801, 5
      %v1831 = vsel %vm1798, %v1829, %v1830
      %v1832 = vrot.slane %v802, 5
      %v1833 = vsel %vm1798, %v1830, %v1832
      %v1834 = vrot.slane %v803, 5
      %v1835 = vrot.slane %v804, 5
      %v1836 = vsel %vm1798, %v1834, %v1835
      %v1837 = vrot.slane %v805, 5
      %v1838 = vsel %vm1798, %v1835, %v1837
      %v1839 = vrot.slane %v806, 5
      %v1840 = vrot.slane %v807, 5
      %v1841 = vsel %vm1798, %v1839, %v1840
      %v1842 = vrot.slane %v808, 5
      %v1843 = vsel %vm1798, %v1840, %v1842
      %v1844 = vrot.slane %v809, 5
      %v1845 = vrot.slane %v810, 5
      %v1846 = vsel %vm1798, %v1844, %v1845
      %v1847 = vrot.slane %v811, 5
      %v1848 = vsel %vm1798, %v1845, %v1847
      %v1849 = vrot.slane %v812, 5
      %v1850 = vrot.slane %v813, 5
      %v1851 = vsel %vm1798, %v1849, %v1850
      %v1852 = vrot.slane %v814, 5
      %v1853 = vsel %vm1798, %v1850, %v1852
      %v1854 = vrot.slane %v815, 5
      %v1855 = vrot.slane %v816, 5
      %v1856 = vsel %vm1798, %v1854, %v1855
      %v1857 = vrot.slane %v817, 5
      %v1858 = vsel %vm1798, %v1855, %v1857
      %v1859 = vrot.slane %v818, 5
      %v1860 = vrot.slane %v819, 5
      %v1861 = vsel %vm1798, %v1859, %v1860
      %v1862 = vrot.slane %v820, 5
      %v1863 = vsel %vm1798, %v1860, %v1862
      %v1864 = vrot.slane %v821, 5
      %v1865 = vrot.slane %v822, 5
      %v1866 = vsel %vm1798, %v1864, %v1865
      %v1867 = vrot.slane %v823, 5
      %v1868 = vsel %vm1798, %v1865, %v1867
      %v1869 = vrot.slane %v824, 5
      %v1870 = vrot.slane %v825, 5
      %v1871 = vsel %vm1798, %v1869, %v1870
      %v1872 = vrot.slane %v826, 5
      %v1873 = vsel %vm1798, %v1870, %v1872
      %v1874 = vrot.slane %v827, 5
      %v1875 = vrot.slane %v828, 5
      %v1876 = vsel %vm1798, %v1874, %v1875
      %v1877 = vrot.slane %v829, 5
      %v1878 = vsel %vm1798, %v1875, %v1877
      %v1879 = vrot.slane %v830, 5
      %v1880 = vrot.slane %v831, 5
      %v1881 = vsel %vm1798, %v1879, %v1880
      %v1882 = vrot.slane %v832, 5
      %v1883 = vsel %vm1798, %v1880, %v1882
      %v1884 = vrot.slane %v833, 5
      %v1885 = vrot.slane %v834, 5
      %v1886 = vsel %vm1798, %v1884, %v1885
      %v1887 = vrot.slane %v835, 5
      %v1888 = vsel %vm1798, %v1885, %v1887
      %v1889 = vrot.slane %v836, 5
      %v1890 = vrot.slane %v837, 5
      %v1891 = vsel %vm1798, %v1889, %v1890
      %v1892 = vrot.slane %v838, 5
      %v1893 = vsel %vm1798, %v1890, %v1892
      %v1894 = vrot.slane %v839, 5
      %v1895 = vrot.slane %v840, 5
      %v1896 = vsel %vm1798, %v1894, %v1895
      %v1897 = vrot.slane %v841, 5
      %v1898 = vsel %vm1798, %v1895, %v1897
      %v1899 = vrot.slane %v842, 5
      %v1900 = vrot.slane %v843, 5
      %v1901 = vsel %vm1798, %v1899, %v1900
      %v1902 = vrot.slane %v844, 5
      %v1903 = vsel %vm1798, %v1900, %v1902
      %v1904 = vrot.slane %v845, 5
      %v1905 = vrot.slane %v846, 5
      %v1906 = vsel %vm1798, %v1904, %v1905
      %v1907 = vrot.slane %v847, 5
      %v1908 = vsel %vm1798, %v1905, %v1907
      %1909 = vrot.lane.b32.xlu0 %v1801, 32
      %v1910 = vpop.permute.xlu0 %1909
      %1911 = vrot.lane.b32.xlu0 %v1803, 32
      %v1912 = vpop.permute.xlu0 %1911
      %1913 = vrot.lane.b32.xlu0 %v1806, 32
      %v1914 = vpop.permute.xlu0 %1913
      %1915 = vrot.lane.b32.xlu0 %v1808, 32
      %v1916 = vpop.permute.xlu0 %1915
      %1917 = vrot.lane.b32.xlu0 %v1811, 32
      %v1918 = vpop.permute.xlu0 %1917
      %1919 = vrot.lane.b32.xlu0 %v1813, 32
      %v1920 = vpop.permute.xlu0 %1919
      %1921 = vrot.lane.b32.xlu0 %v1816, 32
      %v1922 = vpop.permute.xlu0 %1921
      %1923 = vrot.lane.b32.xlu0 %v1818, 32
      %v1924 = vpop.permute.xlu0 %1923
      %1925 = vrot.lane.b32.xlu0 %v1821, 32
      %v1926 = vpop.permute.xlu0 %1925
      %1927 = vrot.lane.b32.xlu0 %v1823, 32
      %v1928 = vpop.permute.xlu0 %1927
      %1929 = vrot.lane.b32.xlu0 %v1826, 32
      %v1930 = vpop.permute.xlu0 %1929
      %1931 = vrot.lane.b32.xlu0 %v1828, 32
      %v1932 = vpop.permute.xlu0 %1931
      %1933 = vrot.lane.b32.xlu0 %v1831, 32
      %v1934 = vpop.permute.xlu0 %1933
      %1935 = vrot.lane.b32.xlu0 %v1833, 32
      %v1936 = vpop.permute.xlu0 %1935
      %1937 = vrot.lane.b32.xlu0 %v1836, 32
      %v1938 = vpop.permute.xlu0 %1937
      %1939 = vrot.lane.b32.xlu0 %v1838, 32
      %v1940 = vpop.permute.xlu0 %1939
      %1941 = vrot.lane.b32.xlu0 %v1841, 32
      %v1942 = vpop.permute.xlu0 %1941
      %1943 = vrot.lane.b32.xlu0 %v1843, 32
      %v1944 = vpop.permute.xlu0 %1943
      %1945 = vrot.lane.b32.xlu0 %v1846, 32
      %v1946 = vpop.permute.xlu0 %1945
      %1947 = vrot.lane.b32.xlu0 %v1848, 32
      %v1948 = vpop.permute.xlu0 %1947
      %1949 = vrot.lane.b32.xlu0 %v1851, 32
      %v1950 = vpop.permute.xlu0 %1949
      %1951 = vrot.lane.b32.xlu0 %v1853, 32
      %v1952 = vpop.permute.xlu0 %1951
      %1953 = vrot.lane.b32.xlu0 %v1856, 32
      %v1954 = vpop.permute.xlu0 %1953
      %1955 = vrot.lane.b32.xlu0 %v1858, 32
      %v1956 = vpop.permute.xlu0 %1955
      %1957 = vrot.lane.b32.xlu0 %v1861, 32
      %v1958 = vpop.permute.xlu0 %1957
      %1959 = vrot.lane.b32.xlu0 %v1863, 32
      %v1960 = vpop.permute.xlu0 %1959
      %1961 = vrot.lane.b32.xlu0 %v1866, 32
      %v1962 = vpop.permute.xlu0 %1961
      %1963 = vrot.lane.b32.xlu0 %v1868, 32
      %v1964 = vpop.permute.xlu0 %1963
      %1965 = vrot.lane.b32.xlu0 %v1871, 32
      %v1966 = vpop.permute.xlu0 %1965
      %1967 = vrot.lane.b32.xlu0 %v1873, 32
      %v1968 = vpop.permute.xlu0 %1967
      %1969 = vrot.lane.b32.xlu0 %v1876, 32
      %v1970 = vpop.permute.xlu0 %1969
      %1971 = vrot.lane.b32.xlu0 %v1878, 32
      %v1972 = vpop.permute.xlu0 %1971
      %1973 = vrot.lane.b32.xlu0 %v1881, 32
      %v1974 = vpop.permute.xlu0 %1973
      %1975 = vrot.lane.b32.xlu0 %v1883, 32
      %v1976 = vpop.permute.xlu0 %1975
      %1977 = vrot.lane.b32.xlu0 %v1886, 32
      %v1978 = vpop.permute.xlu0 %1977
      %1979 = vrot.lane.b32.xlu0 %v1888, 32
      %v1980 = vpop.permute.xlu0 %1979
      %1981 = vrot.lane.b32.xlu0 %v1891, 32
      %v1982 = vpop.permute.xlu0 %1981
      %1983 = vrot.lane.b32.xlu0 %v1893, 32
      %v1984 = vpop.permute.xlu0 %1983
      %1985 = vrot.lane.b32.xlu0 %v1896, 32
      %v1986 = vpop.permute.xlu0 %1985
      %1987 = vrot.lane.b32.xlu0 %v1898, 32
      %v1988 = vpop.permute.xlu0 %1987
      %1989 = vrot.lane.b32.xlu0 %v1901, 32
      %v1990 = vpop.permute.xlu0 %1989
      %1991 = vrot.lane.b32.xlu0 %v1903, 32
      %v1992 = vpop.permute.xlu0 %1991
      %1993 = vrot.lane.b32.xlu0 %v1906, 32
      %v1994 = vpop.permute.xlu0 %1993
      %1995 = vrot.lane.b32.xlu0 %v1908, 32
      %v1996 = vpop.permute.xlu0 %1995
      %vm2041 = vcmask 1041408
      %v2042 = vrot.slane %v782, 6
      %v2043 = vrot.slane %v783, 6
      %v2044 = vsel %vm2041, %v2042, %v2043
      %v2045 = vrot.slane %v784, 6
      %v2046 = vsel %vm2041, %v2043, %v2045
      %v2047 = vrot.slane %v785, 6
      %v2048 = vrot.slane %v786, 6
      %v2049 = vsel %vm2041, %v2047, %v2048
      %v2050 = vrot.slane %v787, 6
      %v2051 = vsel %vm2041, %v2048, %v2050
      %v2052 = vrot.slane %v788, 6
      %v2053 = vrot.slane %v789, 6
      %v2054 = vsel %vm2041, %v2052, %v2053
      %v2055 = vrot.slane %v790, 6
      %v2056 = vsel %vm2041, %v2053, %v2055
      %v2057 = vrot.slane %v791, 6
      %v2058 = vrot.slane %v792, 6
      %v2059 = vsel %vm2041, %v2057, %v2058
      %v2060 = vrot.slane %v793, 6
      %v2061 = vsel %vm2041, %v2058, %v2060
      %v2062 = vrot.slane %v794, 6
      %v2063 = vrot.slane %v795, 6
      %v2064 = vsel %vm2041, %v2062, %v2063
      %v2065 = vrot.slane %v796, 6
      %v2066 = vsel %vm2041, %v2063, %v2065
      %v2067 = vrot.slane %v797, 6
      %v2068 = vrot.slane %v798, 6
      %v2069 = vsel %vm2041, %v2067, %v2068
      %v2070 = vrot.slane %v799, 6
      %v2071 = vsel %vm2041, %v2068, %v2070
      %v2072 = vrot.slane %v800, 6
      %v2073 = vrot.slane %v801, 6
      %v2074 = vsel %vm2041, %v2072, %v2073
      %v2075 = vrot.slane %v802, 6
      %v2076 = vsel %vm2041, %v2073, %v2075
      %v2077 = vrot.slane %v803, 6
      %v2078 = vrot.slane %v804, 6
      %v2079 = vsel %vm2041, %v2077, %v2078
      %v2080 = vrot.slane %v805, 6
      %v2081 = vsel %vm2041, %v2078, %v2080
      %v2082 = vrot.slane %v806, 6
      %v2083 = vrot.slane %v807, 6
      %v2084 = vsel %vm2041, %v2082, %v2083
      %v2085 = vrot.slane %v808, 6
      %v2086 = vsel %vm2041, %v2083, %v2085
      %v2087 = vrot.slane %v809, 6
      %v2088 = vrot.slane %v810, 6
      %v2089 = vsel %vm2041, %v2087, %v2088
      %v2090 = vrot.slane %v811, 6
      %v2091 = vsel %vm2041, %v2088, %v2090
      %v2092 = vrot.slane %v812, 6
      %v2093 = vrot.slane %v813, 6
      %v2094 = vsel %vm2041, %v2092, %v2093
      %v2095 = vrot.slane %v814, 6
      %v2096 = vsel %vm2041, %v2093, %v2095
      %v2097 = vrot.slane %v815, 6
      %v2098 = vrot.slane %v816, 6
      %v2099 = vsel %vm2041, %v2097, %v2098
      %v2100 = vrot.slane %v817, 6
      %v2101 = vsel %vm2041, %v2098, %v2100
      %v2102 = vrot.slane %v818, 6
      %v2103 = vrot.slane %v819, 6
      %v2104 = vsel %vm2041, %v2102, %v2103
      %v2105 = vrot.slane %v820, 6
      %v2106 = vsel %vm2041, %v2103, %v2105
      %v2107 = vrot.slane %v821, 6
      %v2108 = vrot.slane %v822, 6
      %v2109 = vsel %vm2041, %v2107, %v2108
      %v2110 = vrot.slane %v823, 6
      %v2111 = vsel %vm2041, %v2108, %v2110
      %v2112 = vrot.slane %v824, 6
      %v2113 = vrot.slane %v825, 6
      %v2114 = vsel %vm2041, %v2112, %v2113
      %v2115 = vrot.slane %v826, 6
      %v2116 = vsel %vm2041, %v2113, %v2115
      %v2117 = vrot.slane %v827, 6
      %v2118 = vrot.slane %v828, 6
      %v2119 = vsel %vm2041, %v2117, %v2118
      %v2120 = vrot.slane %v829, 6
      %v2121 = vsel %vm2041, %v2118, %v2120
      %v2122 = vrot.slane %v830, 6
      %v2123 = vrot.slane %v831, 6
      %v2124 = vsel %vm2041, %v2122, %v2123
      %v2125 = vrot.slane %v832, 6
      %v2126 = vsel %vm2041, %v2123, %v2125
      %v2127 = vrot.slane %v833, 6
      %v2128 = vrot.slane %v834, 6
      %v2129 = vsel %vm2041, %v2127, %v2128
      %v2130 = vrot.slane %v835, 6
      %v2131 = vsel %vm2041, %v2128, %v2130
      %v2132 = vrot.slane %v836, 6
      %v2133 = vrot.slane %v837, 6
      %v2134 = vsel %vm2041, %v2132, %v2133
      %v2135 = vrot.slane %v838, 6
      %v2136 = vsel %vm2041, %v2133, %v2135
      %v2137 = vrot.slane %v839, 6
      %v2138 = vrot.slane %v840, 6
      %v2139 = vsel %vm2041, %v2137, %v2138
      %v2140 = vrot.slane %v841, 6
      %v2141 = vsel %vm2041, %v2138, %v2140
      %v2142 = vrot.slane %v842, 6
      %v2143 = vrot.slane %v843, 6
      %v2144 = vsel %vm2041, %v2142, %v2143
      %v2145 = vrot.slane %v844, 6
      %v2146 = vsel %vm2041, %v2143, %v2145
      %v2147 = vrot.slane %v845, 6
      %v2148 = vrot.slane %v846, 6
      %v2149 = vsel %vm2041, %v2147, %v2148
      %v2150 = vrot.slane %v847, 6
      %v2151 = vsel %vm2041, %v2148, %v2150
      %2152 = vrot.lane.b32.xlu0 %v2044, 64
      %v2153 = vpop.permute.xlu0 %2152
      %2154 = vrot.lane.b32.xlu0 %v2046, 64
      %v2155 = vpop.permute.xlu0 %2154
      %2156 = vrot.lane.b32.xlu0 %v2049, 64
      %v2157 = vpop.permute.xlu0 %2156
      %2158 = vrot.lane.b32.xlu0 %v2051, 64
      %v2159 = vpop.permute.xlu0 %2158
      %2160 = vrot.lane.b32.xlu0 %v2054, 64
      %v2161 = vpop.permute.xlu0 %2160
      %2162 = vrot.lane.b32.xlu0 %v2056, 64
      %v2163 = vpop.permute.xlu0 %2162
      %2164 = vrot.lane.b32.xlu0 %v2059, 64
      %v2165 = vpop.permute.xlu0 %2164
      %2166 = vrot.lane.b32.xlu0 %v2061, 64
      %v2167 = vpop.permute.xlu0 %2166
      %2168 = vrot.lane.b32.xlu0 %v2064, 64
      %v2169 = vpop.permute.xlu0 %2168
      %2170 = vrot.lane.b32.xlu0 %v2066, 64
      %v2171 = vpop.permute.xlu0 %2170
      %2172 = vrot.lane.b32.xlu0 %v2069, 64
      %v2173 = vpop.permute.xlu0 %2172
      %2174 = vrot.lane.b32.xlu0 %v2071, 64
      %v2175 = vpop.permute.xlu0 %2174
      %2176 = vrot.lane.b32.xlu0 %v2074, 64
      %v2177 = vpop.permute.xlu0 %2176
      %2178 = vrot.lane.b32.xlu0 %v2076, 64
      %v2179 = vpop.permute.xlu0 %2178
      %2180 = vrot.lane.b32.xlu0 %v2079, 64
      %v2181 = vpop.permute.xlu0 %2180
      %2182 = vrot.lane.b32.xlu0 %v2081, 64
      %v2183 = vpop.permute.xlu0 %2182
      %2184 = vrot.lane.b32.xlu0 %v2084, 64
      %v2185 = vpop.permute.xlu0 %2184
      %2186 = vrot.lane.b32.xlu0 %v2086, 64
      %v2187 = vpop.permute.xlu0 %2186
      %2188 = vrot.lane.b32.xlu0 %v2089, 64
      %v2189 = vpop.permute.xlu0 %2188
      %2190 = vrot.lane.b32.xlu0 %v2091, 64
      %v2191 = vpop.permute.xlu0 %2190
      %2192 = vrot.lane.b32.xlu0 %v2094, 64
      %v2193 = vpop.permute.xlu0 %2192
      %2194 = vrot.lane.b32.xlu0 %v2096, 64
      %v2195 = vpop.permute.xlu0 %2194
      %2196 = vrot.lane.b32.xlu0 %v2099, 64
      %v2197 = vpop.permute.xlu0 %2196
      %2198 = vrot.lane.b32.xlu0 %v2101, 64
      %v2199 = vpop.permute.xlu0 %2198
      %2200 = vrot.lane.b32.xlu0 %v2104, 64
      %v2201 = vpop.permute.xlu0 %2200
      %2202 = vrot.lane.b32.xlu0 %v2106, 64
      %v2203 = vpop.permute.xlu0 %2202
      %2204 = vrot.lane.b32.xlu0 %v2109, 64
      %v2205 = vpop.permute.xlu0 %2204
      %2206 = vrot.lane.b32.xlu0 %v2111, 64
      %v2207 = vpop.permute.xlu0 %2206
      %2208 = vrot.lane.b32.xlu0 %v2114, 64
      %v2209 = vpop.permute.xlu0 %2208
      %2210 = vrot.lane.b32.xlu0 %v2116, 64
      %v2211 = vpop.permute.xlu0 %2210
      %2212 = vrot.lane.b32.xlu0 %v2119, 64
      %v2213 = vpop.permute.xlu0 %2212
      %2214 = vrot.lane.b32.xlu0 %v2121, 64
      %v2215 = vpop.permute.xlu0 %2214
      %2216 = vrot.lane.b32.xlu0 %v2124, 64
      %v2217 = vpop.permute.xlu0 %2216
      %2218 = vrot.lane.b32.xlu0 %v2126, 64
      %v2219 = vpop.permute.xlu0 %2218
      %2220 = vrot.lane.b32.xlu0 %v2129, 64
      %v2221 = vpop.permute.xlu0 %2220
      %2222 = vrot.lane.b32.xlu0 %v2131, 64
      %v2223 = vpop.permute.xlu0 %2222
      %2224 = vrot.lane.b32.xlu0 %v2134, 64
      %v2225 = vpop.permute.xlu0 %2224
      %2226 = vrot.lane.b32.xlu0 %v2136, 64
      %v2227 = vpop.permute.xlu0 %2226
      %2228 = vrot.lane.b32.xlu0 %v2139, 64
      %v2229 = vpop.permute.xlu0 %2228
      %2230 = vrot.lane.b32.xlu0 %v2141, 64
      %v2231 = vpop.permute.xlu0 %2230
      %2232 = vrot.lane.b32.xlu0 %v2144, 64
      %v2233 = vpop.permute.xlu0 %2232
      %2234 = vrot.lane.b32.xlu0 %v2146, 64
      %v2235 = vpop.permute.xlu0 %2234
      %2236 = vrot.lane.b32.xlu0 %v2149, 64
      %v2237 = vpop.permute.xlu0 %2236
      %2238 = vrot.lane.b32.xlu0 %v2151, 64
      %v2239 = vpop.permute.xlu0 %2238
      %v2284 = vsel %vm387, %v782, %v1026
      %v2285 = vsel %vm387, %v783, %v1028
      %v2286 = vsel %vm387, %v785, %v1030
      %v2287 = vsel %vm387, %v786, %v1032
      %v2288 = vsel %vm387, %v788, %v1034
      %v2289 = vsel %vm387, %v789, %v1036
      %v2290 = vsel %vm387, %v791, %v1038
      %v2291 = vsel %vm387, %v792, %v1040
      %v2292 = vsel %vm387, %v794, %v1042
      %v2293 = vsel %vm387, %v795, %v1044
      %v2294 = vsel %vm387, %v797, %v1046
      %v2295 = vsel %vm387, %v798, %v1048
      %v2296 = vsel %vm387, %v800, %v1050
      %v2297 = vsel %vm387, %v801, %v1052
      %v2298 = vsel %vm387, %v803, %v1054
      %v2299 = vsel %vm387, %v804, %v1056
      %v2300 = vsel %vm387, %v806, %v1058
      %v2301 = vsel %vm387, %v807, %v1060
      %v2302 = vsel %vm387, %v809, %v1062
      %v2303 = vsel %vm387, %v810, %v1064
      %v2304 = vsel %vm387, %v812, %v1066
      %v2305 = vsel %vm387, %v813, %v1068
      %v2306 = vsel %vm387, %v815, %v1070
      %v2307 = vsel %vm387, %v816, %v1072
      %v2308 = vsel %vm387, %v818, %v1074
      %v2309 = vsel %vm387, %v819, %v1076
      %v2310 = vsel %vm387, %v821, %v1078
      %v2311 = vsel %vm387, %v822, %v1080
      %v2312 = vsel %vm387, %v824, %v1082
      %v2313 = vsel %vm387, %v825, %v1084
      %v2314 = vsel %vm387, %v827, %v1086
      %v2315 = vsel %vm387, %v828, %v1088
      %v2316 = vsel %vm387, %v830, %v1090
      %v2317 = vsel %vm387, %v831, %v1092
      %v2318 = vsel %vm387, %v833, %v1094
      %v2319 = vsel %vm387, %v834, %v1096
      %v2320 = vsel %vm387, %v836, %v1098
      %v2321 = vsel %vm387, %v837, %v1100
      %v2322 = vsel %vm387, %v839, %v1102
      %v2323 = vsel %vm387, %v840, %v1104
      %v2324 = vsel %vm387, %v842, %v1106
      %v2325 = vsel %vm387, %v843, %v1108
      %v2326 = vsel %vm387, %v845, %v1110
      %v2327 = vsel %vm387, %v846, %v1112
      %vm2328 = vcmask 523264
      %v2329 = vsel %vm2328, %v2284, %v1269
      %v2330 = vsel %vm2328, %v2285, %v1271
      %v2331 = vsel %vm2328, %v2286, %v1273
      %v2332 = vsel %vm2328, %v2287, %v1275
      %v2333 = vsel %vm2328, %v2288, %v1277
      %v2334 = vsel %vm2328, %v2289, %v1279
      %v2335 = vsel %vm2328, %v2290, %v1281
      %v2336 = vsel %vm2328, %v2291, %v1283
      %v2337 = vsel %vm2328, %v2292, %v1285
      %v2338 = vsel %vm2328, %v2293, %v1287
      %v2339 = vsel %vm2328, %v2294, %v1289
      %v2340 = vsel %vm2328, %v2295, %v1291
      %v2341 = vsel %vm2328, %v2296, %v1293
      %v2342 = vsel %vm2328, %v2297, %v1295
      %v2343 = vsel %vm2328, %v2298, %v1297
      %v2344 = vsel %vm2328, %v2299, %v1299
      %v2345 = vsel %vm2328, %v2300, %v1301
      %v2346 = vsel %vm2328, %v2301, %v1303
      %v2347 = vsel %vm2328, %v2302, %v1305
      %v2348 = vsel %vm2328, %v2303, %v1307
      %v2349 = vsel %vm2328, %v2304, %v1309
      %v2350 = vsel %vm2328, %v2305, %v1311
      %v2351 = vsel %vm2328, %v2306, %v1313
      %v2352 = vsel %vm2328, %v2307, %v1315
      %v2353 = vsel %vm2328, %v2308, %v1317
      %v2354 = vsel %vm2328, %v2309, %v1319
      %v2355 = vsel %vm2328, %v2310, %v1321
      %v2356 = vsel %vm2328, %v2311, %v1323
      %v2357 = vsel %vm2328, %v2312, %v1325
      %v2358 = vsel %vm2328, %v2313, %v1327
      %v2359 = vsel %vm2328, %v2314, %v1329
      %v2360 = vsel %vm2328, %v2315, %v1331
      %v2361 = vsel %vm2328, %v2316, %v1333
      %v2362 = vsel %vm2328, %v2317, %v1335
      %v2363 = vsel %vm2328, %v2318, %v1337
      %v2364 = vsel %vm2328, %v2319, %v1339
      %v2365 = vsel %vm2328, %v2320, %v1341
      %v2366 = vsel %vm2328, %v2321, %v1343
      %v2367 = vsel %vm2328, %v2322, %v1345
      %v2368 = vsel %vm2328, %v2323, %v1347
      %v2369 = vsel %vm2328, %v2324, %v1349
      %v2370 = vsel %vm2328, %v2325, %v1351
      %v2371 = vsel %vm2328, %v2326, %v1353
      %v2372 = vsel %vm2328, %v2327, %v1355
      %vm2373 = vcmask 785408
      %v2374 = vsel %vm2373, %v2329, %v1512
      %v2375 = vsel %vm2373, %v2330, %v1514
      %v2376 = vsel %vm2373, %v2331, %v1516
      %v2377 = vsel %vm2373, %v2332, %v1518
      %v2378 = vsel %vm2373, %v2333, %v1520
      %v2379 = vsel %vm2373, %v2334, %v1522
      %v2380 = vsel %vm2373, %v2335, %v1524
      %v2381 = vsel %vm2373, %v2336, %v1526
      %v2382 = vsel %vm2373, %v2337, %v1528
      %v2383 = vsel %vm2373, %v2338, %v1530
      %v2384 = vsel %vm2373, %v2339, %v1532
      %v2385 = vsel %vm2373, %v2340, %v1534
      %v2386 = vsel %vm2373, %v2341, %v1536
      %v2387 = vsel %vm2373, %v2342, %v1538
      %v2388 = vsel %vm2373, %v2343, %v1540
      %v2389 = vsel %vm2373, %v2344, %v1542
      %v2390 = vsel %vm2373, %v2345, %v1544
      %v2391 = vsel %vm2373, %v2346, %v1546
      %v2392 = vsel %vm2373, %v2347, %v1548
      %v2393 = vsel %vm2373, %v2348, %v1550
      %v2394 = vsel %vm2373, %v2349, %v1552
      %v2395 = vsel %vm2373, %v2350, %v1554
      %v2396 = vsel %vm2373, %v2351, %v1556
      %v2397 = vsel %vm2373, %v2352, %v1558
      %v2398 = vsel %vm2373, %v2353, %v1560
      %v2399 = vsel %vm2373, %v2354, %v1562
      %v2400 = vsel %vm2373, %v2355, %v1564
      %v2401 = vsel %vm2373, %v2356, %v1566
      %v2402 = vsel %vm2373, %v2357, %v1568
      %v2403 = vsel %vm2373, %v2358, %v1570
      %v2404 = vsel %vm2373, %v2359, %v1572
      %v2405 = vsel %vm2373, %v2360, %v1574
      %v2406 = vsel %vm2373, %v2361, %v1576
      %v2407 = vsel %vm2373, %v2362, %v1578
      %v2408 = vsel %vm2373, %v2363, %v1580
      %v2409 = vsel %vm2373, %v2364, %v1582
      %v2410 = vsel %vm2373, %v2365, %v1584
      %v2411 = vsel %vm2373, %v2366, %v1586
      %v2412 = vsel %vm2373, %v2367, %v1588
      %v2413 = vsel %vm2373, %v2368, %v1590
      %v2414 = vsel %vm2373, %v2369, %v1592
      %v2415 = vsel %vm2373, %v2370, %v1594
      %v2416 = vsel %vm2373, %v2371, %v1596
      %v2417 = vsel %vm2373, %v2372, %v1598
      %v2418 = vsel %vm387, %v1646, %v1910
      %v2419 = vsel %vm387, %v1648, %v1912
      %v2420 = vsel %vm387, %v1651, %v1914
      %v2421 = vsel %vm387, %v1653, %v1916
      %v2422 = vsel %vm387, %v1656, %v1918
      %v2423 = vsel %vm387, %v1658, %v1920
      %v2424 = vsel %vm387, %v1661, %v1922
      %v2425 = vsel %vm387, %v1663, %v1924
      %v2426 = vsel %vm387, %v1666, %v1926
      %v2427 = vsel %vm387, %v1668, %v1928
      %v2428 = vsel %vm387, %v1671, %v1930
      %v2429 = vsel %vm387, %v1673, %v1932
      %v2430 = vsel %vm387, %v1676, %v1934
      %v2431 = vsel %vm387, %v1678, %v1936
      %v2432 = vsel %vm387, %v1681, %v1938
      %v2433 = vsel %vm387, %v1683, %v1940
      %v2434 = vsel %vm387, %v1686, %v1942
      %v2435 = vsel %vm387, %v1688, %v1944
      %v2436 = vsel %vm387, %v1691, %v1946
      %v2437 = vsel %vm387, %v1693, %v1948
      %v2438 = vsel %vm387, %v1696, %v1950
      %v2439 = vsel %vm387, %v1698, %v1952
      %v2440 = vsel %vm387, %v1701, %v1954
      %v2441 = vsel %vm387, %v1703, %v1956
      %v2442 = vsel %vm387, %v1706, %v1958
      %v2443 = vsel %vm387, %v1708, %v1960
      %v2444 = vsel %vm387, %v1711, %v1962
      %v2445 = vsel %vm387, %v1713, %v1964
      %v2446 = vsel %vm387, %v1716, %v1966
      %v2447 = vsel %vm387, %v1718, %v1968
      %v2448 = vsel %vm387, %v1721, %v1970
      %v2449 = vsel %vm387, %v1723, %v1972
      %v2450 = vsel %vm387, %v1726, %v1974
      %v2451 = vsel %vm387, %v1728, %v1976
      %v2452 = vsel %vm387, %v1731, %v1978
      %v2453 = vsel %vm387, %v1733, %v1980
      %v2454 = vsel %vm387, %v1736, %v1982
      %v2455 = vsel %vm387, %v1738, %v1984
      %v2456 = vsel %vm387, %v1741, %v1986
      %v2457 = vsel %vm387, %v1743, %v1988
      %v2458 = vsel %vm387, %v1746, %v1990
      %v2459 = vsel %vm387, %v1748, %v1992
      %v2460 = vsel %vm387, %v1751, %v1994
      %v2461 = vsel %vm387, %v1753, %v1996
      %v2462 = vsel %vm2328, %v2418, %v2153
      %v2463 = vsel %vm2328, %v2419, %v2155
      %v2464 = vsel %vm2328, %v2420, %v2157
      %v2465 = vsel %vm2328, %v2421, %v2159
      %v2466 = vsel %vm2328, %v2422, %v2161
      %v2467 = vsel %vm2328, %v2423, %v2163
      %v2468 = vsel %vm2328, %v2424, %v2165
      %v2469 = vsel %vm2328, %v2425, %v2167
      %v2470 = vsel %vm2328, %v2426, %v2169
      %v2471 = vsel %vm2328, %v2427, %v2171
      %v2472 = vsel %vm2328, %v2428, %v2173
      %v2473 = vsel %vm2328, %v2429, %v2175
      %v2474 = vsel %vm2328, %v2430, %v2177
      %v2475 = vsel %vm2328, %v2431, %v2179
      %v2476 = vsel %vm2328, %v2432, %v2181
      %v2477 = vsel %vm2328, %v2433, %v2183
      %v2478 = vsel %vm2328, %v2434, %v2185
      %v2479 = vsel %vm2328, %v2435, %v2187
      %v2480 = vsel %vm2328, %v2436, %v2189
      %v2481 = vsel %vm2328, %v2437, %v2191
      %v2482 = vsel %vm2328, %v2438, %v2193
      %v2483 = vsel %vm2328, %v2439, %v2195
      %v2484 = vsel %vm2328, %v2440, %v2197
      %v2485 = vsel %vm2328, %v2441, %v2199
      %v2486 = vsel %vm2328, %v2442, %v2201
      %v2487 = vsel %vm2328, %v2443, %v2203
      %v2488 = vsel %vm2328, %v2444, %v2205
      %v2489 = vsel %vm2328, %v2445, %v2207
      %v2490 = vsel %vm2328, %v2446, %v2209
      %v2491 = vsel %vm2328, %v2447, %v2211
      %v2492 = vsel %vm2328, %v2448, %v2213
      %v2493 = vsel %vm2328, %v2449, %v2215
      %v2494 = vsel %vm2328, %v2450, %v2217
      %v2495 = vsel %vm2328, %v2451, %v2219
      %v2496 = vsel %vm2328, %v2452, %v2221
      %v2497 = vsel %vm2328, %v2453, %v2223
      %v2498 = vsel %vm2328, %v2454, %v2225
      %v2499 = vsel %vm2328, %v2455, %v2227
      %v2500 = vsel %vm2328, %v2456, %v2229
      %v2501 = vsel %vm2328, %v2457, %v2231
      %v2502 = vsel %vm2328, %v2458, %v2233
      %v2503 = vsel %vm2328, %v2459, %v2235
      %v2504 = vsel %vm2328, %v2460, %v2237
      %v2505 = vsel %vm2328, %v2461, %v2239
      %v2506 = vld [vmem:[%s5] sm:$0xff]
      %v2507 = vld [vmem:[%s5 + $0x8] sm:$0xff]
      %v2508 = vld [vmem:[%s5 + $0x10] sm:$0xff]
      %v2509 = vld [vmem:[%s5 + $0x18] sm:$0xff]
      %v2510 = vld [vmem:[%s5 + $0x20] sm:$0xff]
      %v2511 = vld [vmem:[%s5 + $0x28] sm:$0xff]
      %v2512 = vld [vmem:[%s5 + $0x30] sm:$0xff]
      %v2513 = vld [vmem:[%s5 + $0x38] sm:$0xff]
      %v2514 = vld [vmem:[%s5 + $0x40] sm:$0xff]
      %v2515 = vld [vmem:[%s5 + $0x48] sm:$0xff]
      %v2516 = vld [vmem:[%s5 + $0x50] sm:$0xff]
      %v2517 = vld [vmem:[%s5 + $0x58] sm:$0xff]
      %v2518 = vld [vmem:[%s5 + $0x60] sm:$0xff]
      %v2519 = vld [vmem:[%s5 + $0x68] sm:$0xff]
      %v2520 = vld [vmem:[%s5 + $0x70] sm:$0xff]
      %v2521 = vld [vmem:[%s5 + $0x78] sm:$0xff]
      %v2522 = vld [vmem:[%s5 + $0x80] sm:$0xff]
      %v2523 = vld [vmem:[%s5 + $0x88] sm:$0xff]
      %v2524 = vld [vmem:[%s5 + $0x90] sm:$0xff]
      %v2525 = vld [vmem:[%s5 + $0x98] sm:$0xff]
      %v2526 = vld [vmem:[%s5 + $0xa0] sm:$0xff]
      %v2527 = vld [vmem:[%s5 + $0xa8] sm:$0xff]
      %v2528 = vld [vmem:[%s5 + $0xb0] sm:$0xff]
      %v2529 = vld [vmem:[%s5 + $0xb8] sm:$0xff]
      %v2530 = vld [vmem:[%s5 + $0xc0] sm:$0xff]
      %v2531 = vld [vmem:[%s5 + $0xc8] sm:$0xff]
      %v2532 = vld [vmem:[%s5 + $0xd0] sm:$0xff]
      %v2533 = vld [vmem:[%s5 + $0xd8] sm:$0xff]
      %v2535 = vsel %vm2373, %v2462, 0
      %v2538 = vsel %vm2373, %v2463, 0
      %v2541 = vsel %vm2373, %v2464, 0
      %v2544 = vsel %vm2373, %v2465, 0
      %v2547 = vsel %vm2373, %v2466, 0
      %v2550 = vsel %vm2373, %v2467, 0
      %v2553 = vsel %vm2373, %v2468, 0
      %v2556 = vsel %vm2373, %v2469, 0
      %v2559 = vsel %vm2373, %v2470, 0
      %v2562 = vsel %vm2373, %v2471, 0
      %v2565 = vsel %vm2373, %v2472, 0
      %v2568 = vsel %vm2373, %v2473, 0
      %v2571 = vsel %vm2373, %v2474, 0
      %v2574 = vsel %vm2373, %v2475, 0
      %v2577 = vsel %vm2373, %v2476, 0
      %v2580 = vsel %vm2373, %v2477, 0
      %v2583 = vsel %vm2373, %v2478, 0
      %v2586 = vsel %vm2373, %v2479, 0
      %v2589 = vsel %vm2373, %v2480, 0
      %v2592 = vsel %vm2373, %v2481, 0
      %v2595 = vsel %vm2373, %v2482, 0
      %v2598 = vsel %vm2373, %v2483, 0
      %v2601 = vsel %vm2373, %v2484, 0
      %v2604 = vsel %vm2373, %v2485, 0
      %v2607 = vsel %vm2373, %v2486, 0
      %v2610 = vsel %vm2373, %v2487, 0
      %v2613 = vsel %vm2373, %v2488, 0
      %v2616 = vsel %vm2373, %v2489, 0
      %v2619 = vsel %vm2373, %v2490, 0
      %v2622 = vsel %vm2373, %v2491, 0
      %v2625 = vsel %vm2373, %v2492, 0
      %v2628 = vsel %vm2373, %v2493, 0
      %v2631 = vsel %vm2373, %v2494, 0
      %v2634 = vsel %vm2373, %v2495, 0
      %v2637 = vsel %vm2373, %v2496, 0
      %v2640 = vsel %vm2373, %v2497, 0
      %v2643 = vsel %vm2373, %v2498, 0
      %v2646 = vsel %vm2373, %v2499, 0
      %v2649 = vsel %vm2373, %v2500, 0
      %v2652 = vsel %vm2373, %v2501, 0
      %v2655 = vsel %vm2373, %v2502, 0
      %v2658 = vsel %vm2373, %v2503, 0
      %v2661 = vsel %vm2373, %v2504, 0
      %v2664 = vsel %vm2373, %v2505, 0
      %2666 = vmatpush.msra.mxu0 %v2521
      %2667 = vmatpush.msra.mxu0 %v2520
      %2668 = vmatpush.msra.mxu0 %v2519
      %2669 = vmatpush.msra.mxu0 %v2518
      %2670 = vmatpush.msra.mxu0 %v2517
      %2671 = vmatpush.msra.mxu0 %v2516
      %2672 = vmatpush.msra.mxu0 %v2515
      %2673 = vmatpush.msra.mxu0 %v2514
      %2674 = vmatpush.msra.mxu0 %v2513
      %2675 = vmatpush.msra.mxu0 %v2512
      %2676 = vmatpush.msra.mxu0 %v2511
      %2677 = vmatpush.msra.mxu0 %v2510
      %2678 = vmatpush.msra.mxu0 %v2509
      %2679 = vmatpush.msra.mxu0 %v2508
      %2680 = vmatpush.msra.mxu0 %v2507
      %2681 = vmatpush.msra.mxu0 %v2506
      %2682 = vmatmul.f32.gmra.mxu0 %v2374
      %v2683 = vpop.f32.mrf.mxu0
      %v2684 = vadd.f32 0.0, %v2683
      %2685 = vmatmul.f32.gmra.mxu0 %v2375
      %v2686 = vpop.f32.mrf.mxu0
      %v2687 = vadd.f32 0.0, %v2686
      %2688 = vmatmul.f32.gmra.mxu0 %v2376
      %v2689 = vpop.f32.mrf.mxu0
      %v2690 = vadd.f32 0.0, %v2689
      %2691 = vmatmul.f32.gmra.mxu0 %v2377
      %v2692 = vpop.f32.mrf.mxu0
      %v2693 = vadd.f32 0.0, %v2692
      %2694 = vmatmul.f32.gmra.mxu0 %v2378
      %v2695 = vpop.f32.mrf.mxu0
      %v2696 = vadd.f32 0.0, %v2695
      %2697 = vmatmul.f32.gmra.mxu0 %v2379
      %v2698 = vpop.f32.mrf.mxu0
      %v2699 = vadd.f32 0.0, %v2698
      %2700 = vmatmul.f32.gmra.mxu0 %v2380
      %v2701 = vpop.f32.mrf.mxu0
      %v2702 = vadd.f32 0.0, %v2701
      %2703 = vmatmul.f32.gmra.mxu0 %v2381
      %v2704 = vpop.f32.mrf.mxu0
      %v2705 = vadd.f32 0.0, %v2704
      %2706 = vmatmul.f32.gmra.mxu0 %v2382
      %v2707 = vpop.f32.mrf.mxu0
      %v2708 = vadd.f32 0.0, %v2707
      %2709 = vmatmul.f32.gmra.mxu0 %v2383
      %v2710 = vpop.f32.mrf.mxu0
      %v2711 = vadd.f32 0.0, %v2710
      %2712 = vmatmul.f32.gmra.mxu0 %v2384
      %v2713 = vpop.f32.mrf.mxu0
      %v2714 = vadd.f32 0.0, %v2713
      %2715 = vmatmul.f32.gmra.mxu0 %v2385
      %v2716 = vpop.f32.mrf.mxu0
      %v2717 = vadd.f32 0.0, %v2716
      %2718 = vmatmul.f32.gmra.mxu0 %v2386
      %v2719 = vpop.f32.mrf.mxu0
      %v2720 = vadd.f32 0.0, %v2719
      %2721 = vmatmul.f32.gmra.mxu0 %v2387
      %v2722 = vpop.f32.mrf.mxu0
      %v2723 = vadd.f32 0.0, %v2722
      %2724 = vmatmul.f32.gmra.mxu0 %v2388
      %v2725 = vpop.f32.mrf.mxu0
      %v2726 = vadd.f32 0.0, %v2725
      %2727 = vmatmul.f32.gmra.mxu0 %v2389
      %v2728 = vpop.f32.mrf.mxu0
      %v2729 = vadd.f32 0.0, %v2728
      %2730 = vmatmul.f32.gmra.mxu0 %v2390
      %v2731 = vpop.f32.mrf.mxu0
      %v2732 = vadd.f32 0.0, %v2731
      %2733 = vmatmul.f32.gmra.mxu0 %v2391
      %v2734 = vpop.f32.mrf.mxu0
      %v2735 = vadd.f32 0.0, %v2734
      %2736 = vmatmul.f32.gmra.mxu0 %v2392
      %v2737 = vpop.f32.mrf.mxu0
      %v2738 = vadd.f32 0.0, %v2737
      %2739 = vmatmul.f32.gmra.mxu0 %v2393
      %v2740 = vpop.f32.mrf.mxu0
      %v2741 = vadd.f32 0.0, %v2740
      %2742 = vmatmul.f32.gmra.mxu0 %v2394
      %v2743 = vpop.f32.mrf.mxu0
      %v2744 = vadd.f32 0.0, %v2743
      %2745 = vmatmul.f32.gmra.mxu0 %v2395
      %v2746 = vpop.f32.mrf.mxu0
      %v2747 = vadd.f32 0.0, %v2746
      %2748 = vmatmul.f32.gmra.mxu0 %v2396
      %v2749 = vpop.f32.mrf.mxu0
      %v2750 = vadd.f32 0.0, %v2749
      %2751 = vmatmul.f32.gmra.mxu0 %v2397
      %v2752 = vpop.f32.mrf.mxu0
      %v2753 = vadd.f32 0.0, %v2752
      %2754 = vmatmul.f32.gmra.mxu0 %v2398
      %v2755 = vpop.f32.mrf.mxu0
      %v2756 = vadd.f32 0.0, %v2755
      %2757 = vmatmul.f32.gmra.mxu0 %v2399
      %v2758 = vpop.f32.mrf.mxu0
      %v2759 = vadd.f32 0.0, %v2758
      %2760 = vmatmul.f32.gmra.mxu0 %v2400
      %v2761 = vpop.f32.mrf.mxu0
      %v2762 = vadd.f32 0.0, %v2761
      %2763 = vmatmul.f32.gmra.mxu0 %v2401
      %v2764 = vpop.f32.mrf.mxu0
      %v2765 = vadd.f32 0.0, %v2764
      %2766 = vmatmul.f32.gmra.mxu0 %v2402
      %v2767 = vpop.f32.mrf.mxu0
      %v2768 = vadd.f32 0.0, %v2767
      %2769 = vmatmul.f32.gmra.mxu0 %v2403
      %v2770 = vpop.f32.mrf.mxu0
      %v2771 = vadd.f32 0.0, %v2770
      %2772 = vmatmul.f32.gmra.mxu0 %v2404
      %v2773 = vpop.f32.mrf.mxu0
      %v2774 = vadd.f32 0.0, %v2773
      %2775 = vmatmul.f32.gmra.mxu0 %v2405
      %v2776 = vpop.f32.mrf.mxu0
      %v2777 = vadd.f32 0.0, %v2776
      %2778 = vmatmul.f32.gmra.mxu0 %v2406
      %v2779 = vpop.f32.mrf.mxu0
      %v2780 = vadd.f32 0.0, %v2779
      %2781 = vmatmul.f32.gmra.mxu0 %v2407
      %v2782 = vpop.f32.mrf.mxu0
      %v2783 = vadd.f32 0.0, %v2782
      %2784 = vmatmul.f32.gmra.mxu0 %v2408
      %v2785 = vpop.f32.mrf.mxu0
      %v2786 = vadd.f32 0.0, %v2785
      %2787 = vmatmul.f32.gmra.mxu0 %v2409
      %v2788 = vpop.f32.mrf.mxu0
      %v2789 = vadd.f32 0.0, %v2788
      %2790 = vmatmul.f32.gmra.mxu0 %v2410
      %v2791 = vpop.f32.mrf.mxu0
      %v2792 = vadd.f32 0.0, %v2791
      %2793 = vmatmul.f32.gmra.mxu0 %v2411
      %v2794 = vpop.f32.mrf.mxu0
      %v2795 = vadd.f32 0.0, %v2794
      %2796 = vmatmul.f32.gmra.mxu0 %v2412
      %v2797 = vpop.f32.mrf.mxu0
      %v2798 = vadd.f32 0.0, %v2797
      %2799 = vmatmul.f32.gmra.mxu0 %v2413
      %v2800 = vpop.f32.mrf.mxu0
      %v2801 = vadd.f32 0.0, %v2800
      %2802 = vmatmul.f32.gmra.mxu0 %v2414
      %v2803 = vpop.f32.mrf.mxu0
      %v2804 = vadd.f32 0.0, %v2803
      %2805 = vmatmul.f32.gmra.mxu0 %v2415
      %v2806 = vpop.f32.mrf.mxu0
      %v2807 = vadd.f32 0.0, %v2806
      %2808 = vmatmul.f32.gmra.mxu0 %v2416
      %v2809 = vpop.f32.mrf.mxu0
      %v2810 = vadd.f32 0.0, %v2809
      %2811 = vmatmul.f32.gmra.mxu0 %v2417
      %v2812 = vpop.f32.mrf.mxu0
      %v2813 = vadd.f32 0.0, %v2812
      %2814 = vdwg.mxu0
      %2815 = vmatpush.msra.mxu0 0.0
      %2816 = vmatpush.msra.mxu0 0.0
      %2817 = vmatpush.msra.mxu0 0.0
      %2818 = vmatpush.msra.mxu0 0.0
      %2819 = vmatpush.msra.mxu0 %v2533
      %2820 = vmatpush.msra.mxu0 %v2532
      %2821 = vmatpush.msra.mxu0 %v2531
      %2822 = vmatpush.msra.mxu0 %v2530
      %2823 = vmatpush.msra.mxu0 %v2529
      %2824 = vmatpush.msra.mxu0 %v2528
      %2825 = vmatpush.msra.mxu0 %v2527
      %2826 = vmatpush.msra.mxu0 %v2526
      %2827 = vmatpush.msra.mxu0 %v2525
      %2828 = vmatpush.msra.mxu0 %v2524
      %2829 = vmatpush.msra.mxu0 %v2523
      %2830 = vmatpush.msra.mxu0 %v2522
      %2831 = vmatmul.f32.gmra.mxu0 %v2535
      %v2832 = vpop.f32.mrf.mxu0
      %v2833 = vadd.f32 %v2684, %v2832
      %2834 = vmatmul.f32.gmra.mxu0 %v2538
      %v2835 = vpop.f32.mrf.mxu0
      %v2836 = vadd.f32 %v2687, %v2835
      %2837 = vmatmul.f32.gmra.mxu0 %v2541
      %v2838 = vpop.f32.mrf.mxu0
      %v2839 = vadd.f32 %v2690, %v2838
      %2840 = vmatmul.f32.gmra.mxu0 %v2544
      %v2841 = vpop.f32.mrf.mxu0
      %v2842 = vadd.f32 %v2693, %v2841
      %2843 = vmatmul.f32.gmra.mxu0 %v2547
      %v2844 = vpop.f32.mrf.mxu0
      %v2845 = vadd.f32 %v2696, %v2844
      %2846 = vmatmul.f32.gmra.mxu0 %v2550
      %v2847 = vpop.f32.mrf.mxu0
      %v2848 = vadd.f32 %v2699, %v2847
      %2849 = vmatmul.f32.gmra.mxu0 %v2553
      %v2850 = vpop.f32.mrf.mxu0
      %v2851 = vadd.f32 %v2702, %v2850
      %2852 = vmatmul.f32.gmra.mxu0 %v2556
      %v2853 = vpop.f32.mrf.mxu0
      %v2854 = vadd.f32 %v2705, %v2853
      %2855 = vmatmul.f32.gmra.mxu0 %v2559
      %v2856 = vpop.f32.mrf.mxu0
      %v2857 = vadd.f32 %v2708, %v2856
      %2858 = vmatmul.f32.gmra.mxu0 %v2562
      %v2859 = vpop.f32.mrf.mxu0
      %v2860 = vadd.f32 %v2711, %v2859
      %2861 = vmatmul.f32.gmra.mxu0 %v2565
      %v2862 = vpop.f32.mrf.mxu0
      %v2863 = vadd.f32 %v2714, %v2862
      %2864 = vmatmul.f32.gmra.mxu0 %v2568
      %v2865 = vpop.f32.mrf.mxu0
      %v2866 = vadd.f32 %v2717, %v2865
      %2867 = vmatmul.f32.gmra.mxu0 %v2571
      %v2868 = vpop.f32.mrf.mxu0
      %v2869 = vadd.f32 %v2720, %v2868
      %2870 = vmatmul.f32.gmra.mxu0 %v2574
      %v2871 = vpop.f32.mrf.mxu0
      %v2872 = vadd.f32 %v2723, %v2871
      %2873 = vmatmul.f32.gmra.mxu0 %v2577
      %v2874 = vpop.f32.mrf.mxu0
      %v2875 = vadd.f32 %v2726, %v2874
      %2876 = vmatmul.f32.gmra.mxu0 %v2580
      %v2877 = vpop.f32.mrf.mxu0
      %v2878 = vadd.f32 %v2729, %v2877
      %2879 = vmatmul.f32.gmra.mxu0 %v2583
      %v2880 = vpop.f32.mrf.mxu0
      %v2881 = vadd.f32 %v2732, %v2880
      %2882 = vmatmul.f32.gmra.mxu0 %v2586
      %v2883 = vpop.f32.mrf.mxu0
      %v2884 = vadd.f32 %v2735, %v2883
      %2885 = vmatmul.f32.gmra.mxu0 %v2589
      %v2886 = vpop.f32.mrf.mxu0
      %v2887 = vadd.f32 %v2738, %v2886
      %2888 = vmatmul.f32.gmra.mxu0 %v2592
      %v2889 = vpop.f32.mrf.mxu0
      %v2890 = vadd.f32 %v2741, %v2889
      %2891 = vmatmul.f32.gmra.mxu0 %v2595
      %v2892 = vpop.f32.mrf.mxu0
      %v2893 = vadd.f32 %v2744, %v2892
      %2894 = vmatmul.f32.gmra.mxu0 %v2598
      %v2895 = vpop.f32.mrf.mxu0
      %v2896 = vadd.f32 %v2747, %v2895
      %2897 = vmatmul.f32.gmra.mxu0 %v2601
      %v2898 = vpop.f32.mrf.mxu0
      %v2899 = vadd.f32 %v2750, %v2898
      %2900 = vmatmul.f32.gmra.mxu0 %v2604
      %v2901 = vpop.f32.mrf.mxu0
      %v2902 = vadd.f32 %v2753, %v2901
      %2903 = vmatmul.f32.gmra.mxu0 %v2607
      %v2904 = vpop.f32.mrf.mxu0
      %v2905 = vadd.f32 %v2756, %v2904
      %2906 = vmatmul.f32.gmra.mxu0 %v2610
      %v2907 = vpop.f32.mrf.mxu0
      %v2908 = vadd.f32 %v2759, %v2907
      %2909 = vmatmul.f32.gmra.mxu0 %v2613
      %v2910 = vpop.f32.mrf.mxu0
      %v2911 = vadd.f32 %v2762, %v2910
      %2912 = vmatmul.f32.gmra.mxu0 %v2616
      %v2913 = vpop.f32.mrf.mxu0
      %v2914 = vadd.f32 %v2765, %v2913
      %2915 = vmatmul.f32.gmra.mxu0 %v2619
      %v2916 = vpop.f32.mrf.mxu0
      %v2917 = vadd.f32 %v2768, %v2916
      %2918 = vmatmul.f32.gmra.mxu0 %v2622
      %v2919 = vpop.f32.mrf.mxu0
      %v2920 = vadd.f32 %v2771, %v2919
      %2921 = vmatmul.f32.gmra.mxu0 %v2625
      %v2922 = vpop.f32.mrf.mxu0
      %v2923 = vadd.f32 %v2774, %v2922
      %2924 = vmatmul.f32.gmra.mxu0 %v2628
      %v2925 = vpop.f32.mrf.mxu0
      %v2926 = vadd.f32 %v2777, %v2925
      %2927 = vmatmul.f32.gmra.mxu0 %v2631
      %v2928 = vpop.f32.mrf.mxu0
      %v2929 = vadd.f32 %v2780, %v2928
      %2930 = vmatmul.f32.gmra.mxu0 %v2634
      %v2931 = vpop.f32.mrf.mxu0
      %v2932 = vadd.f32 %v2783, %v2931
      %2933 = vmatmul.f32.gmra.mxu0 %v2637
      %v2934 = vpop.f32.mrf.mxu0
      %v2935 = vadd.f32 %v2786, %v2934
      %2936 = vmatmul.f32.gmra.mxu0 %v2640
      %v2937 = vpop.f32.mrf.mxu0
      %v2938 = vadd.f32 %v2789, %v2937
      %2939 = vmatmul.f32.gmra.mxu0 %v2643
      %v2940 = vpop.f32.mrf.mxu0
      %v2941 = vadd.f32 %v2792, %v2940
      %2942 = vmatmul.f32.gmra.mxu0 %v2646
      %v2943 = vpop.f32.mrf.mxu0
      %v2944 = vadd.f32 %v2795, %v2943
      %2945 = vmatmul.f32.gmra.mxu0 %v2649
      %v2946 = vpop.f32.mrf.mxu0
      %v2947 = vadd.f32 %v2798, %v2946
      %2948 = vmatmul.f32.gmra.mxu0 %v2652
      %v2949 = vpop.f32.mrf.mxu0
      %v2950 = vadd.f32 %v2801, %v2949
      %2951 = vmatmul.f32.gmra.mxu0 %v2655
      %v2952 = vpop.f32.mrf.mxu0
      %v2953 = vadd.f32 %v2804, %v2952
      %2954 = vmatmul.f32.gmra.mxu0 %v2658
      %v2955 = vpop.f32.mrf.mxu0
      %v2956 = vadd.f32 %v2807, %v2955
      %2957 = vmatmul.f32.gmra.mxu0 %v2661
      %v2958 = vpop.f32.mrf.mxu0
      %v2959 = vadd.f32 %v2810, %v2958
      %2960 = vmatmul.f32.gmra.mxu0 %v2664
      %v2961 = vpop.f32.mrf.mxu0
      %v2962 = vadd.f32 %v2813, %v2961
      %2963 = vdwg.mxu0
      %2996 = vrot.lane.b32.xlu0 %v2839, 120
      %v2997 = vpop.permute.xlu0 %2996
      %2998 = vrot.lane.b32.xlu0 %v2842, 120
      %v2999 = vpop.permute.xlu0 %2998
      %3000 = vrot.lane.b32.xlu0 %v2845, 120
      %v3001 = vpop.permute.xlu0 %3000
      %3002 = vrot.lane.b32.xlu0 %v2848, 120
      %v3003 = vpop.permute.xlu0 %3002
      %3004 = vrot.lane.b32.xlu0 %v2851, 120
      %v3005 = vpop.permute.xlu0 %3004
      %3006 = vrot.lane.b32.xlu0 %v2854, 120
      %v3007 = vpop.permute.xlu0 %3006
      %3008 = vrot.lane.b32.xlu0 %v2857, 120
      %v3009 = vpop.permute.xlu0 %3008
      %3010 = vrot.lane.b32.xlu0 %v2860, 120
      %v3011 = vpop.permute.xlu0 %3010
      %3012 = vrot.lane.b32.xlu0 %v2863, 120
      %v3013 = vpop.permute.xlu0 %3012
      %3014 = vrot.lane.b32.xlu0 %v2866, 120
      %v3015 = vpop.permute.xlu0 %3014
      %3016 = vrot.lane.b32.xlu0 %v2869, 120
      %v3017 = vpop.permute.xlu0 %3016
      %3018 = vrot.lane.b32.xlu0 %v2872, 120
      %v3019 = vpop.permute.xlu0 %3018
      %3020 = vrot.lane.b32.xlu0 %v2875, 120
      %v3021 = vpop.permute.xlu0 %3020
      %3022 = vrot.lane.b32.xlu0 %v2878, 120
      %v3023 = vpop.permute.xlu0 %3022
      %3024 = vrot.lane.b32.xlu0 %v2881, 120
      %v3025 = vpop.permute.xlu0 %3024
      %3026 = vrot.lane.b32.xlu0 %v2884, 120
      %v3027 = vpop.permute.xlu0 %3026
      %3028 = vrot.lane.b32.xlu0 %v2887, 120
      %v3029 = vpop.permute.xlu0 %3028
      %3030 = vrot.lane.b32.xlu0 %v2890, 120
      %v3031 = vpop.permute.xlu0 %3030
      %3032 = vrot.lane.b32.xlu0 %v2893, 120
      %v3033 = vpop.permute.xlu0 %3032
      %3034 = vrot.lane.b32.xlu0 %v2896, 120
      %v3035 = vpop.permute.xlu0 %3034
      %3036 = vrot.lane.b32.xlu0 %v2899, 120
      %v3037 = vpop.permute.xlu0 %3036
      %3038 = vrot.lane.b32.xlu0 %v2902, 120
      %v3039 = vpop.permute.xlu0 %3038
      %3040 = vrot.lane.b32.xlu0 %v2905, 120
      %v3041 = vpop.permute.xlu0 %3040
      %3042 = vrot.lane.b32.xlu0 %v2908, 120
      %v3043 = vpop.permute.xlu0 %3042
      %3044 = vrot.lane.b32.xlu0 %v2911, 120
      %v3045 = vpop.permute.xlu0 %3044
      %3046 = vrot.lane.b32.xlu0 %v2914, 120
      %v3047 = vpop.permute.xlu0 %3046
      %3048 = vrot.lane.b32.xlu0 %v2917, 120
      %v3049 = vpop.permute.xlu0 %3048
      %3050 = vrot.lane.b32.xlu0 %v2920, 120
      %v3051 = vpop.permute.xlu0 %3050
      %3052 = vrot.lane.b32.xlu0 %v2923, 120
      %v3053 = vpop.permute.xlu0 %3052
      %3054 = vrot.lane.b32.xlu0 %v2926, 120
      %v3055 = vpop.permute.xlu0 %3054
      %3056 = vrot.lane.b32.xlu0 %v2929, 120
      %v3057 = vpop.permute.xlu0 %3056
      %3058 = vrot.lane.b32.xlu0 %v2932, 120
      %v3059 = vpop.permute.xlu0 %3058
      %v3092 = vadd.f32 %v2833, %v2997
      %v3093 = vadd.f32 %v2836, %v2999
      %v3094 = vadd.f32 %v2839, %v3001
      %v3095 = vadd.f32 %v2842, %v3003
      %v3096 = vadd.f32 %v2845, %v3005
      %v3097 = vadd.f32 %v2848, %v3007
      %v3098 = vadd.f32 %v2851, %v3009
      %v3099 = vadd.f32 %v2854, %v3011
      %v3100 = vadd.f32 %v2857, %v3013
      %v3101 = vadd.f32 %v2860, %v3015
      %v3102 = vadd.f32 %v2863, %v3017
      %v3103 = vadd.f32 %v2866, %v3019
      %v3104 = vadd.f32 %v2869, %v3021
      %v3105 = vadd.f32 %v2872, %v3023
      %v3106 = vadd.f32 %v2875, %v3025
      %v3107 = vadd.f32 %v2878, %v3027
      %v3108 = vadd.f32 %v2881, %v3029
      %v3109 = vadd.f32 %v2884, %v3031
      %v3110 = vadd.f32 %v2887, %v3033
      %v3111 = vadd.f32 %v2890, %v3035
      %v3112 = vadd.f32 %v2893, %v3037
      %v3113 = vadd.f32 %v2896, %v3039
      %v3114 = vadd.f32 %v2899, %v3041
      %v3115 = vadd.f32 %v2902, %v3043
      %v3116 = vadd.f32 %v2905, %v3045
      %v3117 = vadd.f32 %v2908, %v3047
      %v3118 = vadd.f32 %v2911, %v3049
      %v3119 = vadd.f32 %v2914, %v3051
      %v3120 = vadd.f32 %v2917, %v3053
      %v3121 = vadd.f32 %v2920, %v3055
      %v3122 = vadd.f32 %v2923, %v3057
      %v3123 = vadd.f32 %v2926, %v3059
      %3126 = vrot.lane.b32.xlu0 %v2845, 112
      %v3127 = vpop.permute.xlu0 %3126
      %3128 = vrot.lane.b32.xlu0 %v2848, 112
      %v3129 = vpop.permute.xlu0 %3128
      %3130 = vrot.lane.b32.xlu0 %v2851, 112
      %v3131 = vpop.permute.xlu0 %3130
      %3132 = vrot.lane.b32.xlu0 %v2854, 112
      %v3133 = vpop.permute.xlu0 %3132
      %3134 = vrot.lane.b32.xlu0 %v2857, 112
      %v3135 = vpop.permute.xlu0 %3134
      %3136 = vrot.lane.b32.xlu0 %v2860, 112
      %v3137 = vpop.permute.xlu0 %3136
      %3138 = vrot.lane.b32.xlu0 %v2863, 112
      %v3139 = vpop.permute.xlu0 %3138
      %3140 = vrot.lane.b32.xlu0 %v2866, 112
      %v3141 = vpop.permute.xlu0 %3140
      %3142 = vrot.lane.b32.xlu0 %v2869, 112
      %v3143 = vpop.permute.xlu0 %3142
      %3144 = vrot.lane.b32.xlu0 %v2872, 112
      %v3145 = vpop.permute.xlu0 %3144
      %3146 = vrot.lane.b32.xlu0 %v2875, 112
      %v3147 = vpop.permute.xlu0 %3146
      %3148 = vrot.lane.b32.xlu0 %v2878, 112
      %v3149 = vpop.permute.xlu0 %3148
      %3150 = vrot.lane.b32.xlu0 %v2881, 112
      %v3151 = vpop.permute.xlu0 %3150
      %3152 = vrot.lane.b32.xlu0 %v2884, 112
      %v3153 = vpop.permute.xlu0 %3152
      %3154 = vrot.lane.b32.xlu0 %v2887, 112
      %v3155 = vpop.permute.xlu0 %3154
      %3156 = vrot.lane.b32.xlu0 %v2890, 112
      %v3157 = vpop.permute.xlu0 %3156
      %3158 = vrot.lane.b32.xlu0 %v2893, 112
      %v3159 = vpop.permute.xlu0 %3158
      %3160 = vrot.lane.b32.xlu0 %v2896, 112
      %v3161 = vpop.permute.xlu0 %3160
      %3162 = vrot.lane.b32.xlu0 %v2899, 112
      %v3163 = vpop.permute.xlu0 %3162
      %3164 = vrot.lane.b32.xlu0 %v2902, 112
      %v3165 = vpop.permute.xlu0 %3164
      %3166 = vrot.lane.b32.xlu0 %v2905, 112
      %v3167 = vpop.permute.xlu0 %3166
      %3168 = vrot.lane.b32.xlu0 %v2908, 112
      %v3169 = vpop.permute.xlu0 %3168
      %3170 = vrot.lane.b32.xlu0 %v2911, 112
      %v3171 = vpop.permute.xlu0 %3170
      %3172 = vrot.lane.b32.xlu0 %v2914, 112
      %v3173 = vpop.permute.xlu0 %3172
      %3174 = vrot.lane.b32.xlu0 %v2917, 112
      %v3175 = vpop.permute.xlu0 %3174
      %3176 = vrot.lane.b32.xlu0 %v2920, 112
      %v3177 = vpop.permute.xlu0 %3176
      %3178 = vrot.lane.b32.xlu0 %v2923, 112
      %v3179 = vpop.permute.xlu0 %3178
      %3180 = vrot.lane.b32.xlu0 %v2926, 112
      %v3181 = vpop.permute.xlu0 %3180
      %3182 = vrot.lane.b32.xlu0 %v2929, 112
      %v3183 = vpop.permute.xlu0 %3182
      %3184 = vrot.lane.b32.xlu0 %v2932, 112
      %v3185 = vpop.permute.xlu0 %3184
      %3186 = vrot.lane.b32.xlu0 %v2935, 112
      %v3187 = vpop.permute.xlu0 %3186
      %3188 = vrot.lane.b32.xlu0 %v2938, 112
      %v3189 = vpop.permute.xlu0 %3188
      %v3222 = vadd.f32 %v3092, %v3127
      %v3223 = vadd.f32 %v3093, %v3129
      %v3224 = vadd.f32 %v3094, %v3131
      %v3225 = vadd.f32 %v3095, %v3133
      %v3226 = vadd.f32 %v3096, %v3135
      %v3227 = vadd.f32 %v3097, %v3137
      %v3228 = vadd.f32 %v3098, %v3139
      %v3229 = vadd.f32 %v3099, %v3141
      %v3230 = vadd.f32 %v3100, %v3143
      %v3231 = vadd.f32 %v3101, %v3145
      %v3232 = vadd.f32 %v3102, %v3147
      %v3233 = vadd.f32 %v3103, %v3149
      %v3234 = vadd.f32 %v3104, %v3151
      %v3235 = vadd.f32 %v3105, %v3153
      %v3236 = vadd.f32 %v3106, %v3155
      %v3237 = vadd.f32 %v3107, %v3157
      %v3238 = vadd.f32 %v3108, %v3159
      %v3239 = vadd.f32 %v3109, %v3161
      %v3240 = vadd.f32 %v3110, %v3163
      %v3241 = vadd.f32 %v3111, %v3165
      %v3242 = vadd.f32 %v3112, %v3167
      %v3243 = vadd.f32 %v3113, %v3169
      %v3244 = vadd.f32 %v3114, %v3171
      %v3245 = vadd.f32 %v3115, %v3173
      %v3246 = vadd.f32 %v3116, %v3175
      %v3247 = vadd.f32 %v3117, %v3177
      %v3248 = vadd.f32 %v3118, %v3179
      %v3249 = vadd.f32 %v3119, %v3181
      %v3250 = vadd.f32 %v3120, %v3183
      %v3251 = vadd.f32 %v3121, %v3185
      %v3252 = vadd.f32 %v3122, %v3187
      %v3253 = vadd.f32 %v3123, %v3189
      %3256 = vrot.lane.b32.xlu0 %v2851, 104
      %v3257 = vpop.permute.xlu0 %3256
      %3258 = vrot.lane.b32.xlu0 %v2854, 104
      %v3259 = vpop.permute.xlu0 %3258
      %3260 = vrot.lane.b32.xlu0 %v2857, 104
      %v3261 = vpop.permute.xlu0 %3260
      %3262 = vrot.lane.b32.xlu0 %v2860, 104
      %v3263 = vpop.permute.xlu0 %3262
      %3264 = vrot.lane.b32.xlu0 %v2863, 104
      %v3265 = vpop.permute.xlu0 %3264
      %3266 = vrot.lane.b32.xlu0 %v2866, 104
      %v3267 = vpop.permute.xlu0 %3266
      %3268 = vrot.lane.b32.xlu0 %v2869, 104
      %v3269 = vpop.permute.xlu0 %3268
      %3270 = vrot.lane.b32.xlu0 %v2872, 104
      %v3271 = vpop.permute.xlu0 %3270
      %3272 = vrot.lane.b32.xlu0 %v2875, 104
      %v3273 = vpop.permute.xlu0 %3272
      %3274 = vrot.lane.b32.xlu0 %v2878, 104
      %v3275 = vpop.permute.xlu0 %3274
      %3276 = vrot.lane.b32.xlu0 %v2881, 104
      %v3277 = vpop.permute.xlu0 %3276
      %3278 = vrot.lane.b32.xlu0 %v2884, 104
      %v3279 = vpop.permute.xlu0 %3278
      %3280 = vrot.lane.b32.xlu0 %v2887, 104
      %v3281 = vpop.permute.xlu0 %3280
      %3282 = vrot.lane.b32.xlu0 %v2890, 104
      %v3283 = vpop.permute.xlu0 %3282
      %3284 = vrot.lane.b32.xlu0 %v2893, 104
      %v3285 = vpop.permute.xlu0 %3284
      %3286 = vrot.lane.b32.xlu0 %v2896, 104
      %v3287 = vpop.permute.xlu0 %3286
      %3288 = vrot.lane.b32.xlu0 %v2899, 104
      %v3289 = vpop.permute.xlu0 %3288
      %3290 = vrot.lane.b32.xlu0 %v2902, 104
      %v3291 = vpop.permute.xlu0 %3290
      %3292 = vrot.lane.b32.xlu0 %v2905, 104
      %v3293 = vpop.permute.xlu0 %3292
      %3294 = vrot.lane.b32.xlu0 %v2908, 104
      %v3295 = vpop.permute.xlu0 %3294
      %3296 = vrot.lane.b32.xlu0 %v2911, 104
      %v3297 = vpop.permute.xlu0 %3296
      %3298 = vrot.lane.b32.xlu0 %v2914, 104
      %v3299 = vpop.permute.xlu0 %3298
      %3300 = vrot.lane.b32.xlu0 %v2917, 104
      %v3301 = vpop.permute.xlu0 %3300
      %3302 = vrot.lane.b32.xlu0 %v2920, 104
      %v3303 = vpop.permute.xlu0 %3302
      %3304 = vrot.lane.b32.xlu0 %v2923, 104
      %v3305 = vpop.permute.xlu0 %3304
      %3306 = vrot.lane.b32.xlu0 %v2926, 104
      %v3307 = vpop.permute.xlu0 %3306
      %3308 = vrot.lane.b32.xlu0 %v2929, 104
      %v3309 = vpop.permute.xlu0 %3308
      %3310 = vrot.lane.b32.xlu0 %v2932, 104
      %v3311 = vpop.permute.xlu0 %3310
      %3312 = vrot.lane.b32.xlu0 %v2935, 104
      %v3313 = vpop.permute.xlu0 %3312
      %3314 = vrot.lane.b32.xlu0 %v2938, 104
      %v3315 = vpop.permute.xlu0 %3314
      %3316 = vrot.lane.b32.xlu0 %v2941, 104
      %v3317 = vpop.permute.xlu0 %3316
      %3318 = vrot.lane.b32.xlu0 %v2944, 104
      %v3319 = vpop.permute.xlu0 %3318
      %v3352 = vadd.f32 %v3222, %v3257
      %v3353 = vadd.f32 %v3223, %v3259
      %v3354 = vadd.f32 %v3224, %v3261
      %v3355 = vadd.f32 %v3225, %v3263
      %v3356 = vadd.f32 %v3226, %v3265
      %v3357 = vadd.f32 %v3227, %v3267
      %v3358 = vadd.f32 %v3228, %v3269
      %v3359 = vadd.f32 %v3229, %v3271
      %v3360 = vadd.f32 %v3230, %v3273
      %v3361 = vadd.f32 %v3231, %v3275
      %v3362 = vadd.f32 %v3232, %v3277
      %v3363 = vadd.f32 %v3233, %v3279
      %v3364 = vadd.f32 %v3234, %v3281
      %v3365 = vadd.f32 %v3235, %v3283
      %v3366 = vadd.f32 %v3236, %v3285
      %v3367 = vadd.f32 %v3237, %v3287
      %v3368 = vadd.f32 %v3238, %v3289
      %v3369 = vadd.f32 %v3239, %v3291
      %v3370 = vadd.f32 %v3240, %v3293
      %v3371 = vadd.f32 %v3241, %v3295
      %v3372 = vadd.f32 %v3242, %v3297
      %v3373 = vadd.f32 %v3243, %v3299
      %v3374 = vadd.f32 %v3244, %v3301
      %v3375 = vadd.f32 %v3245, %v3303
      %v3376 = vadd.f32 %v3246, %v3305
      %v3377 = vadd.f32 %v3247, %v3307
      %v3378 = vadd.f32 %v3248, %v3309
      %v3379 = vadd.f32 %v3249, %v3311
      %v3380 = vadd.f32 %v3250, %v3313
      %v3381 = vadd.f32 %v3251, %v3315
      %v3382 = vadd.f32 %v3252, %v3317
      %v3383 = vadd.f32 %v3253, %v3319
      %3386 = vrot.lane.b32.xlu0 %v2857, 96
      %v3387 = vpop.permute.xlu0 %3386
      %3388 = vrot.lane.b32.xlu0 %v2860, 96
      %v3389 = vpop.permute.xlu0 %3388
      %3390 = vrot.lane.b32.xlu0 %v2863, 96
      %v3391 = vpop.permute.xlu0 %3390
      %3392 = vrot.lane.b32.xlu0 %v2866, 96
      %v3393 = vpop.permute.xlu0 %3392
      %3394 = vrot.lane.b32.xlu0 %v2869, 96
      %v3395 = vpop.permute.xlu0 %3394
      %3396 = vrot.lane.b32.xlu0 %v2872, 96
      %v3397 = vpop.permute.xlu0 %3396
      %3398 = vrot.lane.b32.xlu0 %v2875, 96
      %v3399 = vpop.permute.xlu0 %3398
      %3400 = vrot.lane.b32.xlu0 %v2878, 96
      %v3401 = vpop.permute.xlu0 %3400
      %3402 = vrot.lane.b32.xlu0 %v2881, 96
      %v3403 = vpop.permute.xlu0 %3402
      %3404 = vrot.lane.b32.xlu0 %v2884, 96
      %v3405 = vpop.permute.xlu0 %3404
      %3406 = vrot.lane.b32.xlu0 %v2887, 96
      %v3407 = vpop.permute.xlu0 %3406
      %3408 = vrot.lane.b32.xlu0 %v2890, 96
      %v3409 = vpop.permute.xlu0 %3408
      %3410 = vrot.lane.b32.xlu0 %v2893, 96
      %v3411 = vpop.permute.xlu0 %3410
      %3412 = vrot.lane.b32.xlu0 %v2896, 96
      %v3413 = vpop.permute.xlu0 %3412
      %3414 = vrot.lane.b32.xlu0 %v2899, 96
      %v3415 = vpop.permute.xlu0 %3414
      %3416 = vrot.lane.b32.xlu0 %v2902, 96
      %v3417 = vpop.permute.xlu0 %3416
      %3418 = vrot.lane.b32.xlu0 %v2905, 96
      %v3419 = vpop.permute.xlu0 %3418
      %3420 = vrot.lane.b32.xlu0 %v2908, 96
      %v3421 = vpop.permute.xlu0 %3420
      %3422 = vrot.lane.b32.xlu0 %v2911, 96
      %v3423 = vpop.permute.xlu0 %3422
      %3424 = vrot.lane.b32.xlu0 %v2914, 96
      %v3425 = vpop.permute.xlu0 %3424
      %3426 = vrot.lane.b32.xlu0 %v2917, 96
      %v3427 = vpop.permute.xlu0 %3426
      %3428 = vrot.lane.b32.xlu0 %v2920, 96
      %v3429 = vpop.permute.xlu0 %3428
      %3430 = vrot.lane.b32.xlu0 %v2923, 96
      %v3431 = vpop.permute.xlu0 %3430
      %3432 = vrot.lane.b32.xlu0 %v2926, 96
      %v3433 = vpop.permute.xlu0 %3432
      %3434 = vrot.lane.b32.xlu0 %v2929, 96
      %v3435 = vpop.permute.xlu0 %3434
      %3436 = vrot.lane.b32.xlu0 %v2932, 96
      %v3437 = vpop.permute.xlu0 %3436
      %3438 = vrot.lane.b32.xlu0 %v2935, 96
      %v3439 = vpop.permute.xlu0 %3438
      %3440 = vrot.lane.b32.xlu0 %v2938, 96
      %v3441 = vpop.permute.xlu0 %3440
      %3442 = vrot.lane.b32.xlu0 %v2941, 96
      %v3443 = vpop.permute.xlu0 %3442
      %3444 = vrot.lane.b32.xlu0 %v2944, 96
      %v3445 = vpop.permute.xlu0 %3444
      %3446 = vrot.lane.b32.xlu0 %v2947, 96
      %v3447 = vpop.permute.xlu0 %3446
      %3448 = vrot.lane.b32.xlu0 %v2950, 96
      %v3449 = vpop.permute.xlu0 %3448
      %v3482 = vadd.f32 %v3352, %v3387
      %v3483 = vadd.f32 %v3353, %v3389
      %v3484 = vadd.f32 %v3354, %v3391
      %v3485 = vadd.f32 %v3355, %v3393
      %v3486 = vadd.f32 %v3356, %v3395
      %v3487 = vadd.f32 %v3357, %v3397
      %v3488 = vadd.f32 %v3358, %v3399
      %v3489 = vadd.f32 %v3359, %v3401
      %v3490 = vadd.f32 %v3360, %v3403
      %v3491 = vadd.f32 %v3361, %v3405
      %v3492 = vadd.f32 %v3362, %v3407
      %v3493 = vadd.f32 %v3363, %v3409
      %v3494 = vadd.f32 %v3364, %v3411
      %v3495 = vadd.f32 %v3365, %v3413
      %v3496 = vadd.f32 %v3366, %v3415
      %v3497 = vadd.f32 %v3367, %v3417
      %v3498 = vadd.f32 %v3368, %v3419
      %v3499 = vadd.f32 %v3369, %v3421
      %v3500 = vadd.f32 %v3370, %v3423
      %v3501 = vadd.f32 %v3371, %v3425
      %v3502 = vadd.f32 %v3372, %v3427
      %v3503 = vadd.f32 %v3373, %v3429
      %v3504 = vadd.f32 %v3374, %v3431
      %v3505 = vadd.f32 %v3375, %v3433
      %v3506 = vadd.f32 %v3376, %v3435
      %v3507 = vadd.f32 %v3377, %v3437
      %v3508 = vadd.f32 %v3378, %v3439
      %v3509 = vadd.f32 %v3379, %v3441
      %v3510 = vadd.f32 %v3380, %v3443
      %v3511 = vadd.f32 %v3381, %v3445
      %v3512 = vadd.f32 %v3382, %v3447
      %v3513 = vadd.f32 %v3383, %v3449
      %3516 = vrot.lane.b32.xlu0 %v2863, 88
      %v3517 = vpop.permute.xlu0 %3516
      %3518 = vrot.lane.b32.xlu0 %v2866, 88
      %v3519 = vpop.permute.xlu0 %3518
      %3520 = vrot.lane.b32.xlu0 %v2869, 88
      %v3521 = vpop.permute.xlu0 %3520
      %3522 = vrot.lane.b32.xlu0 %v2872, 88
      %v3523 = vpop.permute.xlu0 %3522
      %3524 = vrot.lane.b32.xlu0 %v2875, 88
      %v3525 = vpop.permute.xlu0 %3524
      %3526 = vrot.lane.b32.xlu0 %v2878, 88
      %v3527 = vpop.permute.xlu0 %3526
      %3528 = vrot.lane.b32.xlu0 %v2881, 88
      %v3529 = vpop.permute.xlu0 %3528
      %3530 = vrot.lane.b32.xlu0 %v2884, 88
      %v3531 = vpop.permute.xlu0 %3530
      %3532 = vrot.lane.b32.xlu0 %v2887, 88
      %v3533 = vpop.permute.xlu0 %3532
      %3534 = vrot.lane.b32.xlu0 %v2890, 88
      %v3535 = vpop.permute.xlu0 %3534
      %3536 = vrot.lane.b32.xlu0 %v2893, 88
      %v3537 = vpop.permute.xlu0 %3536
      %3538 = vrot.lane.b32.xlu0 %v2896, 88
      %v3539 = vpop.permute.xlu0 %3538
      %3540 = vrot.lane.b32.xlu0 %v2899, 88
      %v3541 = vpop.permute.xlu0 %3540
      %3542 = vrot.lane.b32.xlu0 %v2902, 88
      %v3543 = vpop.permute.xlu0 %3542
      %3544 = vrot.lane.b32.xlu0 %v2905, 88
      %v3545 = vpop.permute.xlu0 %3544
      %3546 = vrot.lane.b32.xlu0 %v2908, 88
      %v3547 = vpop.permute.xlu0 %3546
      %3548 = vrot.lane.b32.xlu0 %v2911, 88
      %v3549 = vpop.permute.xlu0 %3548
      %3550 = vrot.lane.b32.xlu0 %v2914, 88
      %v3551 = vpop.permute.xlu0 %3550
      %3552 = vrot.lane.b32.xlu0 %v2917, 88
      %v3553 = vpop.permute.xlu0 %3552
      %3554 = vrot.lane.b32.xlu0 %v2920, 88
      %v3555 = vpop.permute.xlu0 %3554
      %3556 = vrot.lane.b32.xlu0 %v2923, 88
      %v3557 = vpop.permute.xlu0 %3556
      %3558 = vrot.lane.b32.xlu0 %v2926, 88
      %v3559 = vpop.permute.xlu0 %3558
      %3560 = vrot.lane.b32.xlu0 %v2929, 88
      %v3561 = vpop.permute.xlu0 %3560
      %3562 = vrot.lane.b32.xlu0 %v2932, 88
      %v3563 = vpop.permute.xlu0 %3562
      %3564 = vrot.lane.b32.xlu0 %v2935, 88
      %v3565 = vpop.permute.xlu0 %3564
      %3566 = vrot.lane.b32.xlu0 %v2938, 88
      %v3567 = vpop.permute.xlu0 %3566
      %3568 = vrot.lane.b32.xlu0 %v2941, 88
      %v3569 = vpop.permute.xlu0 %3568
      %3570 = vrot.lane.b32.xlu0 %v2944, 88
      %v3571 = vpop.permute.xlu0 %3570
      %3572 = vrot.lane.b32.xlu0 %v2947, 88
      %v3573 = vpop.permute.xlu0 %3572
      %3574 = vrot.lane.b32.xlu0 %v2950, 88
      %v3575 = vpop.permute.xlu0 %3574
      %3576 = vrot.lane.b32.xlu0 %v2953, 88
      %v3577 = vpop.permute.xlu0 %3576
      %3578 = vrot.lane.b32.xlu0 %v2956, 88
      %v3579 = vpop.permute.xlu0 %3578
      %v3612 = vadd.f32 %v3482, %v3517
      %v3613 = vadd.f32 %v3483, %v3519
      %v3614 = vadd.f32 %v3484, %v3521
      %v3615 = vadd.f32 %v3485, %v3523
      %v3616 = vadd.f32 %v3486, %v3525
      %v3617 = vadd.f32 %v3487, %v3527
      %v3618 = vadd.f32 %v3488, %v3529
      %v3619 = vadd.f32 %v3489, %v3531
      %v3620 = vadd.f32 %v3490, %v3533
      %v3621 = vadd.f32 %v3491, %v3535
      %v3622 = vadd.f32 %v3492, %v3537
      %v3623 = vadd.f32 %v3493, %v3539
      %v3624 = vadd.f32 %v3494, %v3541
      %v3625 = vadd.f32 %v3495, %v3543
      %v3626 = vadd.f32 %v3496, %v3545
      %v3627 = vadd.f32 %v3497, %v3547
      %v3628 = vadd.f32 %v3498, %v3549
      %v3629 = vadd.f32 %v3499, %v3551
      %v3630 = vadd.f32 %v3500, %v3553
      %v3631 = vadd.f32 %v3501, %v3555
      %v3632 = vadd.f32 %v3502, %v3557
      %v3633 = vadd.f32 %v3503, %v3559
      %v3634 = vadd.f32 %v3504, %v3561
      %v3635 = vadd.f32 %v3505, %v3563
      %v3636 = vadd.f32 %v3506, %v3565
      %v3637 = vadd.f32 %v3507, %v3567
      %v3638 = vadd.f32 %v3508, %v3569
      %v3639 = vadd.f32 %v3509, %v3571
      %v3640 = vadd.f32 %v3510, %v3573
      %v3641 = vadd.f32 %v3511, %v3575
      %v3642 = vadd.f32 %v3512, %v3577
      %v3643 = vadd.f32 %v3513, %v3579
      %3646 = vrot.lane.b32.xlu0 %v2869, 80
      %v3647 = vpop.permute.xlu0 %3646
      %3648 = vrot.lane.b32.xlu0 %v2872, 80
      %v3649 = vpop.permute.xlu0 %3648
      %3650 = vrot.lane.b32.xlu0 %v2875, 80
      %v3651 = vpop.permute.xlu0 %3650
      %3652 = vrot.lane.b32.xlu0 %v2878, 80
      %v3653 = vpop.permute.xlu0 %3652
      %3654 = vrot.lane.b32.xlu0 %v2881, 80
      %v3655 = vpop.permute.xlu0 %3654
      %3656 = vrot.lane.b32.xlu0 %v2884, 80
      %v3657 = vpop.permute.xlu0 %3656
      %3658 = vrot.lane.b32.xlu0 %v2887, 80
      %v3659 = vpop.permute.xlu0 %3658
      %3660 = vrot.lane.b32.xlu0 %v2890, 80
      %v3661 = vpop.permute.xlu0 %3660
      %3662 = vrot.lane.b32.xlu0 %v2893, 80
      %v3663 = vpop.permute.xlu0 %3662
      %3664 = vrot.lane.b32.xlu0 %v2896, 80
      %v3665 = vpop.permute.xlu0 %3664
      %3666 = vrot.lane.b32.xlu0 %v2899, 80
      %v3667 = vpop.permute.xlu0 %3666
      %3668 = vrot.lane.b32.xlu0 %v2902, 80
      %v3669 = vpop.permute.xlu0 %3668
      %3670 = vrot.lane.b32.xlu0 %v2905, 80
      %v3671 = vpop.permute.xlu0 %3670
      %3672 = vrot.lane.b32.xlu0 %v2908, 80
      %v3673 = vpop.permute.xlu0 %3672
      %3674 = vrot.lane.b32.xlu0 %v2911, 80
      %v3675 = vpop.permute.xlu0 %3674
      %3676 = vrot.lane.b32.xlu0 %v2914, 80
      %v3677 = vpop.permute.xlu0 %3676
      %3678 = vrot.lane.b32.xlu0 %v2917, 80
      %v3679 = vpop.permute.xlu0 %3678
      %3680 = vrot.lane.b32.xlu0 %v2920, 80
      %v3681 = vpop.permute.xlu0 %3680
      %3682 = vrot.lane.b32.xlu0 %v2923, 80
      %v3683 = vpop.permute.xlu0 %3682
      %3684 = vrot.lane.b32.xlu0 %v2926, 80
      %v3685 = vpop.permute.xlu0 %3684
      %3686 = vrot.lane.b32.xlu0 %v2929, 80
      %v3687 = vpop.permute.xlu0 %3686
      %3688 = vrot.lane.b32.xlu0 %v2932, 80
      %v3689 = vpop.permute.xlu0 %3688
      %3690 = vrot.lane.b32.xlu0 %v2935, 80
      %v3691 = vpop.permute.xlu0 %3690
      %3692 = vrot.lane.b32.xlu0 %v2938, 80
      %v3693 = vpop.permute.xlu0 %3692
      %3694 = vrot.lane.b32.xlu0 %v2941, 80
      %v3695 = vpop.permute.xlu0 %3694
      %3696 = vrot.lane.b32.xlu0 %v2944, 80
      %v3697 = vpop.permute.xlu0 %3696
      %3698 = vrot.lane.b32.xlu0 %v2947, 80
      %v3699 = vpop.permute.xlu0 %3698
      %3700 = vrot.lane.b32.xlu0 %v2950, 80
      %v3701 = vpop.permute.xlu0 %3700
      %3702 = vrot.lane.b32.xlu0 %v2953, 80
      %v3703 = vpop.permute.xlu0 %3702
      %3704 = vrot.lane.b32.xlu0 %v2956, 80
      %v3705 = vpop.permute.xlu0 %3704
      %3706 = vrot.lane.b32.xlu0 %v2959, 80
      %v3707 = vpop.permute.xlu0 %3706
      %3708 = vrot.lane.b32.xlu0 %v2962, 80
      %v3709 = vpop.permute.xlu0 %3708
      %v3742 = vadd.f32 %v3612, %v3647
      %v3743 = vadd.f32 %v3613, %v3649
      %v3744 = vadd.f32 %v3614, %v3651
      %v3745 = vadd.f32 %v3615, %v3653
      %v3746 = vadd.f32 %v3616, %v3655
      %v3747 = vadd.f32 %v3617, %v3657
      %v3748 = vadd.f32 %v3618, %v3659
      %v3749 = vadd.f32 %v3619, %v3661
      %v3750 = vadd.f32 %v3620, %v3663
      %v3751 = vadd.f32 %v3621, %v3665
      %v3752 = vadd.f32 %v3622, %v3667
      %v3753 = vadd.f32 %v3623, %v3669
      %v3754 = vadd.f32 %v3624, %v3671
      %v3755 = vadd.f32 %v3625, %v3673
      %v3756 = vadd.f32 %v3626, %v3675
      %v3757 = vadd.f32 %v3627, %v3677
      %v3758 = vadd.f32 %v3628, %v3679
      %v3759 = vadd.f32 %v3629, %v3681
      %v3760 = vadd.f32 %v3630, %v3683
      %v3761 = vadd.f32 %v3631, %v3685
      %v3762 = vadd.f32 %v3632, %v3687
      %v3763 = vadd.f32 %v3633, %v3689
      %v3764 = vadd.f32 %v3634, %v3691
      %v3765 = vadd.f32 %v3635, %v3693
      %v3766 = vadd.f32 %v3636, %v3695
      %v3767 = vadd.f32 %v3637, %v3697
      %v3768 = vadd.f32 %v3638, %v3699
      %v3769 = vadd.f32 %v3639, %v3701
      %v3770 = vadd.f32 %v3640, %v3703
      %v3771 = vadd.f32 %v3641, %v3705
      %v3772 = vadd.f32 %v3642, %v3707
      %v3773 = vadd.f32 %v3643, %v3709
      %v3774 = vld [vmem:[%s6] sm:$0x1]
      %v3776 = vperm.slane %v3774, 0
      %v3778 = vmul.f32 %v3742, %v3776
      %v3779 = vmul.f32 %v3743, %v3776
      %v3780 = vmul.f32 %v3744, %v3776
      %v3781 = vmul.f32 %v3745, %v3776
      %v3782 = vmul.f32 %v3746, %v3776
      %v3783 = vmul.f32 %v3747, %v3776
      %v3784 = vmul.f32 %v3748, %v3776
      %v3785 = vmul.f32 %v3749, %v3776
      %v3786 = vmul.f32 %v3750, %v3776
      %v3787 = vmul.f32 %v3751, %v3776
      %v3788 = vmul.f32 %v3752, %v3776
      %v3789 = vmul.f32 %v3753, %v3776
      %v3790 = vmul.f32 %v3754, %v3776
      %v3791 = vmul.f32 %v3755, %v3776
      %v3792 = vmul.f32 %v3756, %v3776
      %v3793 = vmul.f32 %v3757, %v3776
      %v3794 = vmul.f32 %v3758, %v3776
      %v3795 = vmul.f32 %v3759, %v3776
      %v3796 = vmul.f32 %v3760, %v3776
      %v3797 = vmul.f32 %v3761, %v3776
      %v3798 = vmul.f32 %v3762, %v3776
      %v3799 = vmul.f32 %v3763, %v3776
      %v3800 = vmul.f32 %v3764, %v3776
      %v3801 = vmul.f32 %v3765, %v3776
      %v3802 = vmul.f32 %v3766, %v3776
      %v3803 = vmul.f32 %v3767, %v3776
      %v3804 = vmul.f32 %v3768, %v3776
      %v3805 = vmul.f32 %v3769, %v3776
      %v3806 = vmul.f32 %v3770, %v3776
      %v3807 = vmul.f32 %v3771, %v3776
      %v3808 = vmul.f32 %v3772, %v3776
      %v3809 = vmul.f32 %v3773, %v3776
      %v3810 = vld [vmem:[%s7] sm:$0x1]
      %v3812 = vperm.slane %v3810, 0
      %v3814 = vadd.f32 %v3778, %v3812
      %v3815 = vadd.f32 %v3779, %v3812
      %v3816 = vadd.f32 %v3780, %v3812
      %v3817 = vadd.f32 %v3781, %v3812
      %v3818 = vadd.f32 %v3782, %v3812
      %v3819 = vadd.f32 %v3783, %v3812
      %v3820 = vadd.f32 %v3784, %v3812
      %v3821 = vadd.f32 %v3785, %v3812
      %v3822 = vadd.f32 %v3786, %v3812
      %v3823 = vadd.f32 %v3787, %v3812
      %v3824 = vadd.f32 %v3788, %v3812
      %v3825 = vadd.f32 %v3789, %v3812
      %v3826 = vadd.f32 %v3790, %v3812
      %v3827 = vadd.f32 %v3791, %v3812
      %v3828 = vadd.f32 %v3792, %v3812
      %v3829 = vadd.f32 %v3793, %v3812
      %v3830 = vadd.f32 %v3794, %v3812
      %v3831 = vadd.f32 %v3795, %v3812
      %v3832 = vadd.f32 %v3796, %v3812
      %v3833 = vadd.f32 %v3797, %v3812
      %v3834 = vadd.f32 %v3798, %v3812
      %v3835 = vadd.f32 %v3799, %v3812
      %v3836 = vadd.f32 %v3800, %v3812
      %v3837 = vadd.f32 %v3801, %v3812
      %v3838 = vadd.f32 %v3802, %v3812
      %v3839 = vadd.f32 %v3803, %v3812
      %v3840 = vadd.f32 %v3804, %v3812
      %v3841 = vadd.f32 %v3805, %v3812
      %v3842 = vadd.f32 %v3806, %v3812
      %v3843 = vadd.f32 %v3807, %v3812
      %v3844 = vadd.f32 %v3808, %v3812
      %v3845 = vadd.f32 %v3809, %v3812
      %v3846 = vmax.f32 %v3814, 0.0
      %v3847 = vmax.f32 %v3815, 0.0
      %v3848 = vmax.f32 %v3816, 0.0
      %v3849 = vmax.f32 %v3817, 0.0
      %v3850 = vmax.f32 %v3818, 0.0
      %v3851 = vmax.f32 %v3819, 0.0
      %v3852 = vmax.f32 %v3820, 0.0
      %v3853 = vmax.f32 %v3821, 0.0
      %v3854 = vmax.f32 %v3822, 0.0
      %v3855 = vmax.f32 %v3823, 0.0
      %v3856 = vmax.f32 %v3824, 0.0
      %v3857 = vmax.f32 %v3825, 0.0
      %v3858 = vmax.f32 %v3826, 0.0
      %v3859 = vmax.f32 %v3827, 0.0
      %v3860 = vmax.f32 %v3828, 0.0
      %v3861 = vmax.f32 %v3829, 0.0
      %v3862 = vmax.f32 %v3830, 0.0
      %v3863 = vmax.f32 %v3831, 0.0
      %v3864 = vmax.f32 %v3832, 0.0
      %v3865 = vmax.f32 %v3833, 0.0
      %v3866 = vmax.f32 %v3834, 0.0
      %v3867 = vmax.f32 %v3835, 0.0
      %v3868 = vmax.f32 %v3836, 0.0
      %v3869 = vmax.f32 %v3837, 0.0
      %v3870 = vmax.f32 %v3838, 0.0
      %v3871 = vmax.f32 %v3839, 0.0
      %v3872 = vmax.f32 %v3840, 0.0
      %v3873 = vmax.f32 %v3841, 0.0
      %v3874 = vmax.f32 %v3842, 0.0
      %v3875 = vmax.f32 %v3843, 0.0
      %v3876 = vmax.f32 %v3844, 0.0
      %v3877 = vmax.f32 %v3845, 0.0
      %s3878 = scalar_lea.vmem [#allocation3], 72
      %3879 = vst.msk [vmem:[%s3878 + $0x3] sm:$0xff] %vm453, %v3846
      %3880 = vst.msk [vmem:[%s3878 + $0xb] sm:$0xff] %vm453, %v3847
      %3881 = vst.msk [vmem:[%s3878 + $0x1b] sm:$0xff] %vm453, %v3848
      %3882 = vst.msk [vmem:[%s3878 + $0x23] sm:$0xff] %vm453, %v3849
      %3883 = vst.msk [vmem:[%s3878 + $0x33] sm:$0xff] %vm453, %v3850
      %3884 = vst.msk [vmem:[%s3878 + $0x3b] sm:$0xff] %vm453, %v3851
      %3885 = vst.msk [vmem:[%s3878 + $0x4b] sm:$0xff] %vm453, %v3852
      %3886 = vst.msk [vmem:[%s3878 + $0x53] sm:$0xff] %vm453, %v3853
      %3887 = vst.msk [vmem:[%s3878 + $0x63] sm:$0xff] %vm453, %v3854
      %3888 = vst.msk [vmem:[%s3878 + $0x6b] sm:$0xff] %vm453, %v3855
      %3889 = vst.msk [vmem:[%s3878 + $0x7b] sm:$0xff] %vm453, %v3856
      %3890 = vst.msk [vmem:[%s3878 + $0x83] sm:$0xff] %vm453, %v3857
      %3891 = vst.msk [vmem:[%s3878 + $0x93] sm:$0xff] %vm453, %v3858
      %3892 = vst.msk [vmem:[%s3878 + $0x9b] sm:$0xff] %vm453, %v3859
      %3893 = vst.msk [vmem:[%s3878 + $0xab] sm:$0xff] %vm453, %v3860
      %3894 = vst.msk [vmem:[%s3878 + $0xb3] sm:$0xff] %vm453, %v3861
      %3895 = vst.msk [vmem:[%s3878 + $0xc3] sm:$0xff] %vm453, %v3862
      %3896 = vst.msk [vmem:[%s3878 + $0xcb] sm:$0xff] %vm453, %v3863
      %3897 = vst.msk [vmem:[%s3878 + $0xdb] sm:$0xff] %vm453, %v3864
      %3898 = vst.msk [vmem:[%s3878 + $0xe3] sm:$0xff] %vm453, %v3865
      %3899 = vst.msk [vmem:[%s3878 + $0xf3] sm:$0xff] %vm453, %v3866
      %3900 = vst.msk [vmem:[%s3878 + $0xfb] sm:$0xff] %vm453, %v3867
      %3901 = vst.msk [vmem:[%s3878 + $0x10b] sm:$0xff] %vm453, %v3868
      %3902 = vst.msk [vmem:[%s3878 + $0x113] sm:$0xff] %vm453, %v3869
      %3903 = vst.msk [vmem:[%s3878 + $0x123] sm:$0xff] %vm453, %v3870
      %3904 = vst.msk [vmem:[%s3878 + $0x12b] sm:$0xff] %vm453, %v3871
      %3905 = vst.msk [vmem:[%s3878 + $0x13b] sm:$0xff] %vm453, %v3872
      %3906 = vst.msk [vmem:[%s3878 + $0x143] sm:$0xff] %vm453, %v3873
      %3907 = vst.msk [vmem:[%s3878 + $0x153] sm:$0xff] %vm453, %v3874
      %3908 = vst.msk [vmem:[%s3878 + $0x15b] sm:$0xff] %vm453, %v3875
      %3909 = vst.msk [vmem:[%s3878 + $0x16b] sm:$0xff] %vm453, %v3876
      %3910 = vst.msk [vmem:[%s3878 + $0x173] sm:$0xff] %vm453, %v3877
      %v3911 = vld [vmem:[#allocation3] sm:$0xff]
      %v3912 = vld [vmem:[#allocation3 + $0x8] sm:$0xff]
      %v3913 = vld [vmem:[#allocation3 + $0x10] sm:$0x3f]
      %v3914 = vld [vmem:[#allocation3 + $0x18] sm:$0xff]
      %v3915 = vld [vmem:[#allocation3 + $0x20] sm:$0xff]
      %v3916 = vld [vmem:[#allocation3 + $0x28] sm:$0x3f]
      %v3917 = vld [vmem:[#allocation3 + $0x30] sm:$0xff]
      %v3918 = vld [vmem:[#allocation3 + $0x38] sm:$0xff]
      %v3919 = vld [vmem:[#allocation3 + $0x40] sm:$0x3f]
      %v3920 = vld [vmem:[#allocation3 + $0x48] sm:$0xff]
      %v3921 = vld [vmem:[#allocation3 + $0x50] sm:$0xff]
      %v3922 = vld [vmem:[#allocation3 + $0x58] sm:$0x3f]
      %v3923 = vld [vmem:[#allocation3 + $0x60] sm:$0xff]
      %v3924 = vld [vmem:[#allocation3 + $0x68] sm:$0xff]
      %v3925 = vld [vmem:[#allocation3 + $0x70] sm:$0x3f]
      %v3926 = vld [vmem:[#allocation3 + $0x78] sm:$0xff]
      %v3927 = vld [vmem:[#allocation3 + $0x80] sm:$0xff]
      %v3928 = vld [vmem:[#allocation3 + $0x88] sm:$0x3f]
      %v3929 = vld [vmem:[#allocation3 + $0x90] sm:$0xff]
      %v3930 = vld [vmem:[#allocation3 + $0x98] sm:$0xff]
      %v3931 = vld [vmem:[#allocation3 + $0xa0] sm:$0x3f]
      %v3932 = vld [vmem:[#allocation3 + $0xa8] sm:$0xff]
      %v3933 = vld [vmem:[#allocation3 + $0xb0] sm:$0xff]
      %v3934 = vld [vmem:[#allocation3 + $0xb8] sm:$0x3f]
      %v3935 = vld [vmem:[#allocation3 + $0xc0] sm:$0xff]
      %v3936 = vld [vmem:[#allocation3 + $0xc8] sm:$0xff]
      %v3937 = vld [vmem:[#allocation3 + $0xd0] sm:$0x3f]
      %v3938 = vld [vmem:[#allocation3 + $0xd8] sm:$0xff]
      %v3939 = vld [vmem:[#allocation3 + $0xe0] sm:$0xff]
      %v3940 = vld [vmem:[#allocation3 + $0xe8] sm:$0x3f]
      %v3941 = vld [vmem:[#allocation3 + $0xf0] sm:$0xff]
      %v3942 = vld [vmem:[#allocation3 + $0xf8] sm:$0xff]
      %v3943 = vld [vmem:[#allocation3 + $0x100] sm:$0x3f]
      %v3944 = vld [vmem:[#allocation3 + $0x108] sm:$0xff]
      %v3945 = vld [vmem:[#allocation3 + $0x110] sm:$0xff]
      %v3946 = vld [vmem:[#allocation3 + $0x118] sm:$0x3f]
      %v3947 = vld [vmem:[#allocation3 + $0x120] sm:$0xff]
      %v3948 = vld [vmem:[#allocation3 + $0x128] sm:$0xff]
      %v3949 = vld [vmem:[#allocation3 + $0x130] sm:$0x3f]
      %v3950 = vld [vmem:[#allocation3 + $0x138] sm:$0xff]
      %v3951 = vld [vmem:[#allocation3 + $0x140] sm:$0xff]
      %v3952 = vld [vmem:[#allocation3 + $0x148] sm:$0x3f]
      %v3953 = vld [vmem:[#allocation3 + $0x150] sm:$0xff]
      %v3954 = vld [vmem:[#allocation3 + $0x158] sm:$0xff]
      %v3955 = vld [vmem:[#allocation3 + $0x160] sm:$0x3f]
      %v3956 = vld [vmem:[#allocation3 + $0x168] sm:$0xff]
      %v3957 = vld [vmem:[#allocation3 + $0x170] sm:$0xff]
      %v3958 = vld [vmem:[#allocation3 + $0x178] sm:$0x3f]
      %v3959 = vld [vmem:[#allocation3 + $0x180] sm:$0xff]
      %v3960 = vld [vmem:[#allocation3 + $0x188] sm:$0xff]
      %v3961 = vld [vmem:[#allocation3 + $0x190] sm:$0x3f]
      %v3962 = vld [vmem:[#allocation3 + $0x198] sm:$0xff]
      %v3963 = vld [vmem:[#allocation3 + $0x1a0] sm:$0xff]
      %v3964 = vld [vmem:[#allocation3 + $0x1a8] sm:$0x3f]
      %v3965 = vld [vmem:[#allocation3 + $0x1b0] sm:$0xff]
      %v3966 = vld [vmem:[#allocation3 + $0x1b8] sm:$0xff]
      %v3967 = vld [vmem:[#allocation3 + $0x1c0] sm:$0x3f]
      %v3968 = vld [vmem:[#allocation3 + $0x1c8] sm:$0xff]
      %v3969 = vld [vmem:[#allocation3 + $0x1d0] sm:$0xff]
      %v3970 = vld [vmem:[#allocation3 + $0x1d8] sm:$0x3f]
      %v3971 = vld [vmem:[#allocation3 + $0x1e0] sm:$0xff]
      %v3972 = vld [vmem:[#allocation3 + $0x1e8] sm:$0xff]
      %v3973 = vld [vmem:[#allocation3 + $0x1f0] sm:$0x3f]
      %v3974 = vld [vmem:[#allocation3 + $0x1f8] sm:$0xff]
      %v3975 = vld [vmem:[#allocation3 + $0x200] sm:$0xff]
      %v3976 = vld [vmem:[#allocation3 + $0x208] sm:$0x3f]
      %v4043 = vrot.slane %v3911, 1
      %v4044 = vrot.slane %v3912, 1
      %v4045 = vsel %vm914, %v4043, %v4044
      %v4046 = vrot.slane %v3913, 1
      %v4047 = vsel %vm914, %v4044, %v4046
      %v4048 = vrot.slane %v3914, 1
      %v4049 = vrot.slane %v3915, 1
      %v4050 = vsel %vm914, %v4048, %v4049
      %v4051 = vrot.slane %v3916, 1
      %v4052 = vsel %vm914, %v4049, %v4051
      %v4053 = vrot.slane %v3917, 1
      %v4054 = vrot.slane %v3918, 1
      %v4055 = vsel %vm914, %v4053, %v4054
      %v4056 = vrot.slane %v3919, 1
      %v4057 = vsel %vm914, %v4054, %v4056
      %v4058 = vrot.slane %v3920, 1
      %v4059 = vrot.slane %v3921, 1
      %v4060 = vsel %vm914, %v4058, %v4059
      %v4061 = vrot.slane %v3922, 1
      %v4062 = vsel %vm914, %v4059, %v4061
      %v4063 = vrot.slane %v3923, 1
      %v4064 = vrot.slane %v3924, 1
      %v4065 = vsel %vm914, %v4063, %v4064
      %v4066 = vrot.slane %v3925, 1
      %v4067 = vsel %vm914, %v4064, %v4066
      %v4068 = vrot.slane %v3926, 1
      %v4069 = vrot.slane %v3927, 1
      %v4070 = vsel %vm914, %v4068, %v4069
      %v4071 = vrot.slane %v3928, 1
      %v4072 = vsel %vm914, %v4069, %v4071
      %v4073 = vrot.slane %v3929, 1
      %v4074 = vrot.slane %v3930, 1
      %v4075 = vsel %vm914, %v4073, %v4074
      %v4076 = vrot.slane %v3931, 1
      %v4077 = vsel %vm914, %v4074, %v4076
      %v4078 = vrot.slane %v3932, 1
      %v4079 = vrot.slane %v3933, 1
      %v4080 = vsel %vm914, %v4078, %v4079
      %v4081 = vrot.slane %v3934, 1
      %v4082 = vsel %vm914, %v4079, %v4081
      %v4083 = vrot.slane %v3935, 1
      %v4084 = vrot.slane %v3936, 1
      %v4085 = vsel %vm914, %v4083, %v4084
      %v4086 = vrot.slane %v3937, 1
      %v4087 = vsel %vm914, %v4084, %v4086
      %v4088 = vrot.slane %v3938, 1
      %v4089 = vrot.slane %v3939, 1
      %v4090 = vsel %vm914, %v4088, %v4089
      %v4091 = vrot.slane %v3940, 1
      %v4092 = vsel %vm914, %v4089, %v4091
      %v4093 = vrot.slane %v3941, 1
      %v4094 = vrot.slane %v3942, 1
      %v4095 = vsel %vm914, %v4093, %v4094
      %v4096 = vrot.slane %v3943, 1
      %v4097 = vsel %vm914, %v4094, %v4096
      %v4098 = vrot.slane %v3944, 1
      %v4099 = vrot.slane %v3945, 1
      %v4100 = vsel %vm914, %v4098, %v4099
      %v4101 = vrot.slane %v3946, 1
      %v4102 = vsel %vm914, %v4099, %v4101
      %v4103 = vrot.slane %v3947, 1
      %v4104 = vrot.slane %v3948, 1
      %v4105 = vsel %vm914, %v4103, %v4104
      %v4106 = vrot.slane %v3949, 1
      %v4107 = vsel %vm914, %v4104, %v4106
      %v4108 = vrot.slane %v3950, 1
      %v4109 = vrot.slane %v3951, 1
      %v4110 = vsel %vm914, %v4108, %v4109
      %v4111 = vrot.slane %v3952, 1
      %v4112 = vsel %vm914, %v4109, %v4111
      %v4113 = vrot.slane %v3953, 1
      %v4114 = vrot.slane %v3954, 1
      %v4115 = vsel %vm914, %v4113, %v4114
      %v4116 = vrot.slane %v3955, 1
      %v4117 = vsel %vm914, %v4114, %v4116
      %v4118 = vrot.slane %v3956, 1
      %v4119 = vrot.slane %v3957, 1
      %v4120 = vsel %vm914, %v4118, %v4119
      %v4121 = vrot.slane %v3958, 1
      %v4122 = vsel %vm914, %v4119, %v4121
      %v4123 = vrot.slane %v3959, 1
      %v4124 = vrot.slane %v3960, 1
      %v4125 = vsel %vm914, %v4123, %v4124
      %v4126 = vrot.slane %v3961, 1
      %v4127 = vsel %vm914, %v4124, %v4126
      %v4128 = vrot.slane %v3962, 1
      %v4129 = vrot.slane %v3963, 1
      %v4130 = vsel %vm914, %v4128, %v4129
      %v4131 = vrot.slane %v3964, 1
      %v4132 = vsel %vm914, %v4129, %v4131
      %v4133 = vrot.slane %v3965, 1
      %v4134 = vrot.slane %v3966, 1
      %v4135 = vsel %vm914, %v4133, %v4134
      %v4136 = vrot.slane %v3967, 1
      %v4137 = vsel %vm914, %v4134, %v4136
      %v4138 = vrot.slane %v3968, 1
      %v4139 = vrot.slane %v3969, 1
      %v4140 = vsel %vm914, %v4138, %v4139
      %v4141 = vrot.slane %v3970, 1
      %v4142 = vsel %vm914, %v4139, %v4141
      %v4143 = vrot.slane %v3971, 1
      %v4144 = vrot.slane %v3972, 1
      %v4145 = vsel %vm914, %v4143, %v4144
      %v4146 = vrot.slane %v3973, 1
      %v4147 = vsel %vm914, %v4144, %v4146
      %v4148 = vrot.slane %v3974, 1
      %v4149 = vrot.slane %v3975, 1
      %v4150 = vsel %vm914, %v4148, %v4149
      %v4151 = vrot.slane %v3976, 1
      %v4152 = vsel %vm914, %v4149, %v4151
      %4153 = vrot.lane.b32.xlu0 %v4045, 8
      %v4154 = vpop.permute.xlu0 %4153
      %4155 = vrot.lane.b32.xlu0 %v4047, 8
      %v4156 = vpop.permute.xlu0 %4155
      %4157 = vrot.lane.b32.xlu0 %v4050, 8
      %v4158 = vpop.permute.xlu0 %4157
      %4159 = vrot.lane.b32.xlu0 %v4052, 8
      %v4160 = vpop.permute.xlu0 %4159
      %4161 = vrot.lane.b32.xlu0 %v4055, 8
      %v4162 = vpop.permute.xlu0 %4161
      %4163 = vrot.lane.b32.xlu0 %v4057, 8
      %v4164 = vpop.permute.xlu0 %4163
      %4165 = vrot.lane.b32.xlu0 %v4060, 8
      %v4166 = vpop.permute.xlu0 %4165
      %4167 = vrot.lane.b32.xlu0 %v4062, 8
      %v4168 = vpop.permute.xlu0 %4167
      %4169 = vrot.lane.b32.xlu0 %v4065, 8
      %v4170 = vpop.permute.xlu0 %4169
      %4171 = vrot.lane.b32.xlu0 %v4067, 8
      %v4172 = vpop.permute.xlu0 %4171
      %4173 = vrot.lane.b32.xlu0 %v4070, 8
      %v4174 = vpop.permute.xlu0 %4173
      %4175 = vrot.lane.b32.xlu0 %v4072, 8
      %v4176 = vpop.permute.xlu0 %4175
      %4177 = vrot.lane.b32.xlu0 %v4075, 8
      %v4178 = vpop.permute.xlu0 %4177
      %4179 = vrot.lane.b32.xlu0 %v4077, 8
      %v4180 = vpop.permute.xlu0 %4179
      %4181 = vrot.lane.b32.xlu0 %v4080, 8
      %v4182 = vpop.permute.xlu0 %4181
      %4183 = vrot.lane.b32.xlu0 %v4082, 8
      %v4184 = vpop.permute.xlu0 %4183
      %4185 = vrot.lane.b32.xlu0 %v4085, 8
      %v4186 = vpop.permute.xlu0 %4185
      %4187 = vrot.lane.b32.xlu0 %v4087, 8
      %v4188 = vpop.permute.xlu0 %4187
      %4189 = vrot.lane.b32.xlu0 %v4090, 8
      %v4190 = vpop.permute.xlu0 %4189
      %4191 = vrot.lane.b32.xlu0 %v4092, 8
      %v4192 = vpop.permute.xlu0 %4191
      %4193 = vrot.lane.b32.xlu0 %v4095, 8
      %v4194 = vpop.permute.xlu0 %4193
      %4195 = vrot.lane.b32.xlu0 %v4097, 8
      %v4196 = vpop.permute.xlu0 %4195
      %4197 = vrot.lane.b32.xlu0 %v4100, 8
      %v4198 = vpop.permute.xlu0 %4197
      %4199 = vrot.lane.b32.xlu0 %v4102, 8
      %v4200 = vpop.permute.xlu0 %4199
      %4201 = vrot.lane.b32.xlu0 %v4105, 8
      %v4202 = vpop.permute.xlu0 %4201
      %4203 = vrot.lane.b32.xlu0 %v4107, 8
      %v4204 = vpop.permute.xlu0 %4203
      %4205 = vrot.lane.b32.xlu0 %v4110, 8
      %v4206 = vpop.permute.xlu0 %4205
      %4207 = vrot.lane.b32.xlu0 %v4112, 8
      %v4208 = vpop.permute.xlu0 %4207
      %4209 = vrot.lane.b32.xlu0 %v4115, 8
      %v4210 = vpop.permute.xlu0 %4209
      %4211 = vrot.lane.b32.xlu0 %v4117, 8
      %v4212 = vpop.permute.xlu0 %4211
      %4213 = vrot.lane.b32.xlu0 %v4120, 8
      %v4214 = vpop.permute.xlu0 %4213
      %4215 = vrot.lane.b32.xlu0 %v4122, 8
      %v4216 = vpop.permute.xlu0 %4215
      %4217 = vrot.lane.b32.xlu0 %v4125, 8
      %v4218 = vpop.permute.xlu0 %4217
      %4219 = vrot.lane.b32.xlu0 %v4127, 8
      %v4220 = vpop.permute.xlu0 %4219
      %4221 = vrot.lane.b32.xlu0 %v4130, 8
      %v4222 = vpop.permute.xlu0 %4221
      %4223 = vrot.lane.b32.xlu0 %v4132, 8
      %v4224 = vpop.permute.xlu0 %4223
      %4225 = vrot.lane.b32.xlu0 %v4135, 8
      %v4226 = vpop.permute.xlu0 %4225
      %4227 = vrot.lane.b32.xlu0 %v4137, 8
      %v4228 = vpop.permute.xlu0 %4227
      %4229 = vrot.lane.b32.xlu0 %v4140, 8
      %v4230 = vpop.permute.xlu0 %4229
      %4231 = vrot.lane.b32.xlu0 %v4142, 8
      %v4232 = vpop.permute.xlu0 %4231
      %4233 = vrot.lane.b32.xlu0 %v4145, 8
      %v4234 = vpop.permute.xlu0 %4233
      %4235 = vrot.lane.b32.xlu0 %v4147, 8
      %v4236 = vpop.permute.xlu0 %4235
      %4237 = vrot.lane.b32.xlu0 %v4150, 8
      %v4238 = vpop.permute.xlu0 %4237
      %4239 = vrot.lane.b32.xlu0 %v4152, 8
      %v4240 = vpop.permute.xlu0 %4239
      %v4285 = vrot.slane %v3911, 2
      %v4286 = vrot.slane %v3912, 2
      %v4287 = vsel %vm1157, %v4285, %v4286
      %v4288 = vrot.slane %v3913, 2
      %v4289 = vsel %vm1157, %v4286, %v4288
      %v4290 = vrot.slane %v3914, 2
      %v4291 = vrot.slane %v3915, 2
      %v4292 = vsel %vm1157, %v4290, %v4291
      %v4293 = vrot.slane %v3916, 2
      %v4294 = vsel %vm1157, %v4291, %v4293
      %v4295 = vrot.slane %v3917, 2
      %v4296 = vrot.slane %v3918, 2
      %v4297 = vsel %vm1157, %v4295, %v4296
      %v4298 = vrot.slane %v3919, 2
      %v4299 = vsel %vm1157, %v4296, %v4298
      %v4300 = vrot.slane %v3920, 2
      %v4301 = vrot.slane %v3921, 2
      %v4302 = vsel %vm1157, %v4300, %v4301
      %v4303 = vrot.slane %v3922, 2
      %v4304 = vsel %vm1157, %v4301, %v4303
      %v4305 = vrot.slane %v3923, 2
      %v4306 = vrot.slane %v3924, 2
      %v4307 = vsel %vm1157, %v4305, %v4306
      %v4308 = vrot.slane %v3925, 2
      %v4309 = vsel %vm1157, %v4306, %v4308
      %v4310 = vrot.slane %v3926, 2
      %v4311 = vrot.slane %v3927, 2
      %v4312 = vsel %vm1157, %v4310, %v4311
      %v4313 = vrot.slane %v3928, 2
      %v4314 = vsel %vm1157, %v4311, %v4313
      %v4315 = vrot.slane %v3929, 2
      %v4316 = vrot.slane %v3930, 2
      %v4317 = vsel %vm1157, %v4315, %v4316
      %v4318 = vrot.slane %v3931, 2
      %v4319 = vsel %vm1157, %v4316, %v4318
      %v4320 = vrot.slane %v3932, 2
      %v4321 = vrot.slane %v3933, 2
      %v4322 = vsel %vm1157, %v4320, %v4321
      %v4323 = vrot.slane %v3934, 2
      %v4324 = vsel %vm1157, %v4321, %v4323
      %v4325 = vrot.slane %v3935, 2
      %v4326 = vrot.slane %v3936, 2
      %v4327 = vsel %vm1157, %v4325, %v4326
      %v4328 = vrot.slane %v3937, 2
      %v4329 = vsel %vm1157, %v4326, %v4328
      %v4330 = vrot.slane %v3938, 2
      %v4331 = vrot.slane %v3939, 2
      %v4332 = vsel %vm1157, %v4330, %v4331
      %v4333 = vrot.slane %v3940, 2
      %v4334 = vsel %vm1157, %v4331, %v4333
      %v4335 = vrot.slane %v3941, 2
      %v4336 = vrot.slane %v3942, 2
      %v4337 = vsel %vm1157, %v4335, %v4336
      %v4338 = vrot.slane %v3943, 2
      %v4339 = vsel %vm1157, %v4336, %v4338
      %v4340 = vrot.slane %v3944, 2
      %v4341 = vrot.slane %v3945, 2
      %v4342 = vsel %vm1157, %v4340, %v4341
      %v4343 = vrot.slane %v3946, 2
      %v4344 = vsel %vm1157, %v4341, %v4343
      %v4345 = vrot.slane %v3947, 2
      %v4346 = vrot.slane %v3948, 2
      %v4347 = vsel %vm1157, %v4345, %v4346
      %v4348 = vrot.slane %v3949, 2
      %v4349 = vsel %vm1157, %v4346, %v4348
      %v4350 = vrot.slane %v3950, 2
      %v4351 = vrot.slane %v3951, 2
      %v4352 = vsel %vm1157, %v4350, %v4351
      %v4353 = vrot.slane %v3952, 2
      %v4354 = vsel %vm1157, %v4351, %v4353
      %v4355 = vrot.slane %v3953, 2
      %v4356 = vrot.slane %v3954, 2
      %v4357 = vsel %vm1157, %v4355, %v4356
      %v4358 = vrot.slane %v3955, 2
      %v4359 = vsel %vm1157, %v4356, %v4358
      %v4360 = vrot.slane %v3956, 2
      %v4361 = vrot.slane %v3957, 2
      %v4362 = vsel %vm1157, %v4360, %v4361
      %v4363 = vrot.slane %v3958, 2
      %v4364 = vsel %vm1157, %v4361, %v4363
      %v4365 = vrot.slane %v3959, 2
      %v4366 = vrot.slane %v3960, 2
      %v4367 = vsel %vm1157, %v4365, %v4366
      %v4368 = vrot.slane %v3961, 2
      %v4369 = vsel %vm1157, %v4366, %v4368
      %v4370 = vrot.slane %v3962, 2
      %v4371 = vrot.slane %v3963, 2
      %v4372 = vsel %vm1157, %v4370, %v4371
      %v4373 = vrot.slane %v3964, 2
      %v4374 = vsel %vm1157, %v4371, %v4373
      %v4375 = vrot.slane %v3965, 2
      %v4376 = vrot.slane %v3966, 2
      %v4377 = vsel %vm1157, %v4375, %v4376
      %v4378 = vrot.slane %v3967, 2
      %v4379 = vsel %vm1157, %v4376, %v4378
      %v4380 = vrot.slane %v3968, 2
      %v4381 = vrot.slane %v3969, 2
      %v4382 = vsel %vm1157, %v4380, %v4381
      %v4383 = vrot.slane %v3970, 2
      %v4384 = vsel %vm1157, %v4381, %v4383
      %v4385 = vrot.slane %v3971, 2
      %v4386 = vrot.slane %v3972, 2
      %v4387 = vsel %vm1157, %v4385, %v4386
      %v4388 = vrot.slane %v3973, 2
      %v4389 = vsel %vm1157, %v4386, %v4388
      %v4390 = vrot.slane %v3974, 2
      %v4391 = vrot.slane %v3975, 2
      %v4392 = vsel %vm1157, %v4390, %v4391
      %v4393 = vrot.slane %v3976, 2
      %v4394 = vsel %vm1157, %v4391, %v4393
      %4395 = vrot.lane.b32.xlu0 %v4287, 16
      %v4396 = vpop.permute.xlu0 %4395
      %4397 = vrot.lane.b32.xlu0 %v4289, 16
      %v4398 = vpop.permute.xlu0 %4397
      %4399 = vrot.lane.b32.xlu0 %v4292, 16
      %v4400 = vpop.permute.xlu0 %4399
      %4401 = vrot.lane.b32.xlu0 %v4294, 16
      %v4402 = vpop.permute.xlu0 %4401
      %4403 = vrot.lane.b32.xlu0 %v4297, 16
      %v4404 = vpop.permute.xlu0 %4403
      %4405 = vrot.lane.b32.xlu0 %v4299, 16
      %v4406 = vpop.permute.xlu0 %4405
      %4407 = vrot.lane.b32.xlu0 %v4302, 16
      %v4408 = vpop.permute.xlu0 %4407
      %4409 = vrot.lane.b32.xlu0 %v4304, 16
      %v4410 = vpop.permute.xlu0 %4409
      %4411 = vrot.lane.b32.xlu0 %v4307, 16
      %v4412 = vpop.permute.xlu0 %4411
      %4413 = vrot.lane.b32.xlu0 %v4309, 16
      %v4414 = vpop.permute.xlu0 %4413
      %4415 = vrot.lane.b32.xlu0 %v4312, 16
      %v4416 = vpop.permute.xlu0 %4415
      %4417 = vrot.lane.b32.xlu0 %v4314, 16
      %v4418 = vpop.permute.xlu0 %4417
      %4419 = vrot.lane.b32.xlu0 %v4317, 16
      %v4420 = vpop.permute.xlu0 %4419
      %4421 = vrot.lane.b32.xlu0 %v4319, 16
      %v4422 = vpop.permute.xlu0 %4421
      %4423 = vrot.lane.b32.xlu0 %v4322, 16
      %v4424 = vpop.permute.xlu0 %4423
      %4425 = vrot.lane.b32.xlu0 %v4324, 16
      %v4426 = vpop.permute.xlu0 %4425
      %4427 = vrot.lane.b32.xlu0 %v4327, 16
      %v4428 = vpop.permute.xlu0 %4427
      %4429 = vrot.lane.b32.xlu0 %v4329, 16
      %v4430 = vpop.permute.xlu0 %4429
      %4431 = vrot.lane.b32.xlu0 %v4332, 16
      %v4432 = vpop.permute.xlu0 %4431
      %4433 = vrot.lane.b32.xlu0 %v4334, 16
      %v4434 = vpop.permute.xlu0 %4433
      %4435 = vrot.lane.b32.xlu0 %v4337, 16
      %v4436 = vpop.permute.xlu0 %4435
      %4437 = vrot.lane.b32.xlu0 %v4339, 16
      %v4438 = vpop.permute.xlu0 %4437
      %4439 = vrot.lane.b32.xlu0 %v4342, 16
      %v4440 = vpop.permute.xlu0 %4439
      %4441 = vrot.lane.b32.xlu0 %v4344, 16
      %v4442 = vpop.permute.xlu0 %4441
      %4443 = vrot.lane.b32.xlu0 %v4347, 16
      %v4444 = vpop.permute.xlu0 %4443
      %4445 = vrot.lane.b32.xlu0 %v4349, 16
      %v4446 = vpop.permute.xlu0 %4445
      %4447 = vrot.lane.b32.xlu0 %v4352, 16
      %v4448 = vpop.permute.xlu0 %4447
      %4449 = vrot.lane.b32.xlu0 %v4354, 16
      %v4450 = vpop.permute.xlu0 %4449
      %4451 = vrot.lane.b32.xlu0 %v4357, 16
      %v4452 = vpop.permute.xlu0 %4451
      %4453 = vrot.lane.b32.xlu0 %v4359, 16
      %v4454 = vpop.permute.xlu0 %4453
      %4455 = vrot.lane.b32.xlu0 %v4362, 16
      %v4456 = vpop.permute.xlu0 %4455
      %4457 = vrot.lane.b32.xlu0 %v4364, 16
      %v4458 = vpop.permute.xlu0 %4457
      %4459 = vrot.lane.b32.xlu0 %v4367, 16
      %v4460 = vpop.permute.xlu0 %4459
      %4461 = vrot.lane.b32.xlu0 %v4369, 16
      %v4462 = vpop.permute.xlu0 %4461
      %4463 = vrot.lane.b32.xlu0 %v4372, 16
      %v4464 = vpop.permute.xlu0 %4463
      %4465 = vrot.lane.b32.xlu0 %v4374, 16
      %v4466 = vpop.permute.xlu0 %4465
      %4467 = vrot.lane.b32.xlu0 %v4377, 16
      %v4468 = vpop.permute.xlu0 %4467
      %4469 = vrot.lane.b32.xlu0 %v4379, 16
      %v4470 = vpop.permute.xlu0 %4469
      %4471 = vrot.lane.b32.xlu0 %v4382, 16
      %v4472 = vpop.permute.xlu0 %4471
      %4473 = vrot.lane.b32.xlu0 %v4384, 16
      %v4474 = vpop.permute.xlu0 %4473
      %4475 = vrot.lane.b32.xlu0 %v4387, 16
      %v4476 = vpop.permute.xlu0 %4475
      %4477 = vrot.lane.b32.xlu0 %v4389, 16
      %v4478 = vpop.permute.xlu0 %4477
      %4479 = vrot.lane.b32.xlu0 %v4392, 16
      %v4480 = vpop.permute.xlu0 %4479
      %4481 = vrot.lane.b32.xlu0 %v4394, 16
      %v4482 = vpop.permute.xlu0 %4481
      %v4527 = vrot.slane %v3911, 3
      %v4528 = vrot.slane %v3912, 3
      %v4529 = vsel %vm1400, %v4527, %v4528
      %v4530 = vrot.slane %v3913, 3
      %v4531 = vsel %vm1400, %v4528, %v4530
      %v4532 = vrot.slane %v3914, 3
      %v4533 = vrot.slane %v3915, 3
      %v4534 = vsel %vm1400, %v4532, %v4533
      %v4535 = vrot.slane %v3916, 3
      %v4536 = vsel %vm1400, %v4533, %v4535
      %v4537 = vrot.slane %v3917, 3
      %v4538 = vrot.slane %v3918, 3
      %v4539 = vsel %vm1400, %v4537, %v4538
      %v4540 = vrot.slane %v3919, 3
      %v4541 = vsel %vm1400, %v4538, %v4540
      %v4542 = vrot.slane %v3920, 3
      %v4543 = vrot.slane %v3921, 3
      %v4544 = vsel %vm1400, %v4542, %v4543
      %v4545 = vrot.slane %v3922, 3
      %v4546 = vsel %vm1400, %v4543, %v4545
      %v4547 = vrot.slane %v3923, 3
      %v4548 = vrot.slane %v3924, 3
      %v4549 = vsel %vm1400, %v4547, %v4548
      %v4550 = vrot.slane %v3925, 3
      %v4551 = vsel %vm1400, %v4548, %v4550
      %v4552 = vrot.slane %v3926, 3
      %v4553 = vrot.slane %v3927, 3
      %v4554 = vsel %vm1400, %v4552, %v4553
      %v4555 = vrot.slane %v3928, 3
      %v4556 = vsel %vm1400, %v4553, %v4555
      %v4557 = vrot.slane %v3929, 3
      %v4558 = vrot.slane %v3930, 3
      %v4559 = vsel %vm1400, %v4557, %v4558
      %v4560 = vrot.slane %v3931, 3
      %v4561 = vsel %vm1400, %v4558, %v4560
      %v4562 = vrot.slane %v3932, 3
      %v4563 = vrot.slane %v3933, 3
      %v4564 = vsel %vm1400, %v4562, %v4563
      %v4565 = vrot.slane %v3934, 3
      %v4566 = vsel %vm1400, %v4563, %v4565
      %v4567 = vrot.slane %v3935, 3
      %v4568 = vrot.slane %v3936, 3
      %v4569 = vsel %vm1400, %v4567, %v4568
      %v4570 = vrot.slane %v3937, 3
      %v4571 = vsel %vm1400, %v4568, %v4570
      %v4572 = vrot.slane %v3938, 3
      %v4573 = vrot.slane %v3939, 3
      %v4574 = vsel %vm1400, %v4572, %v4573
      %v4575 = vrot.slane %v3940, 3
      %v4576 = vsel %vm1400, %v4573, %v4575
      %v4577 = vrot.slane %v3941, 3
      %v4578 = vrot.slane %v3942, 3
      %v4579 = vsel %vm1400, %v4577, %v4578
      %v4580 = vrot.slane %v3943, 3
      %v4581 = vsel %vm1400, %v4578, %v4580
      %v4582 = vrot.slane %v3944, 3
      %v4583 = vrot.slane %v3945, 3
      %v4584 = vsel %vm1400, %v4582, %v4583
      %v4585 = vrot.slane %v3946, 3
      %v4586 = vsel %vm1400, %v4583, %v4585
      %v4587 = vrot.slane %v3947, 3
      %v4588 = vrot.slane %v3948, 3
      %v4589 = vsel %vm1400, %v4587, %v4588
      %v4590 = vrot.slane %v3949, 3
      %v4591 = vsel %vm1400, %v4588, %v4590
      %v4592 = vrot.slane %v3950, 3
      %v4593 = vrot.slane %v3951, 3
      %v4594 = vsel %vm1400, %v4592, %v4593
      %v4595 = vrot.slane %v3952, 3
      %v4596 = vsel %vm1400, %v4593, %v4595
      %v4597 = vrot.slane %v3953, 3
      %v4598 = vrot.slane %v3954, 3
      %v4599 = vsel %vm1400, %v4597, %v4598
      %v4600 = vrot.slane %v3955, 3
      %v4601 = vsel %vm1400, %v4598, %v4600
      %v4602 = vrot.slane %v3956, 3
      %v4603 = vrot.slane %v3957, 3
      %v4604 = vsel %vm1400, %v4602, %v4603
      %v4605 = vrot.slane %v3958, 3
      %v4606 = vsel %vm1400, %v4603, %v4605
      %v4607 = vrot.slane %v3959, 3
      %v4608 = vrot.slane %v3960, 3
      %v4609 = vsel %vm1400, %v4607, %v4608
      %v4610 = vrot.slane %v3961, 3
      %v4611 = vsel %vm1400, %v4608, %v4610
      %v4612 = vrot.slane %v3962, 3
      %v4613 = vrot.slane %v3963, 3
      %v4614 = vsel %vm1400, %v4612, %v4613
      %v4615 = vrot.slane %v3964, 3
      %v4616 = vsel %vm1400, %v4613, %v4615
      %v4617 = vrot.slane %v3965, 3
      %v4618 = vrot.slane %v3966, 3
      %v4619 = vsel %vm1400, %v4617, %v4618
      %v4620 = vrot.slane %v3967, 3
      %v4621 = vsel %vm1400, %v4618, %v4620
      %v4622 = vrot.slane %v3968, 3
      %v4623 = vrot.slane %v3969, 3
      %v4624 = vsel %vm1400, %v4622, %v4623
      %v4625 = vrot.slane %v3970, 3
      %v4626 = vsel %vm1400, %v4623, %v4625
      %v4627 = vrot.slane %v3971, 3
      %v4628 = vrot.slane %v3972, 3
      %v4629 = vsel %vm1400, %v4627, %v4628
      %v4630 = vrot.slane %v3973, 3
      %v4631 = vsel %vm1400, %v4628, %v4630
      %v4632 = vrot.slane %v3974, 3
      %v4633 = vrot.slane %v3975, 3
      %v4634 = vsel %vm1400, %v4632, %v4633
      %v4635 = vrot.slane %v3976, 3
      %v4636 = vsel %vm1400, %v4633, %v4635
      %4637 = vrot.lane.b32.xlu0 %v4529, 24
      %v4638 = vpop.permute.xlu0 %4637
      %4639 = vrot.lane.b32.xlu0 %v4531, 24
      %v4640 = vpop.permute.xlu0 %4639
      %4641 = vrot.lane.b32.xlu0 %v4534, 24
      %v4642 = vpop.permute.xlu0 %4641
      %4643 = vrot.lane.b32.xlu0 %v4536, 24
      %v4644 = vpop.permute.xlu0 %4643
      %4645 = vrot.lane.b32.xlu0 %v4539, 24
      %v4646 = vpop.permute.xlu0 %4645
      %4647 = vrot.lane.b32.xlu0 %v4541, 24
      %v4648 = vpop.permute.xlu0 %4647
      %4649 = vrot.lane.b32.xlu0 %v4544, 24
      %v4650 = vpop.permute.xlu0 %4649
      %4651 = vrot.lane.b32.xlu0 %v4546, 24
      %v4652 = vpop.permute.xlu0 %4651
      %4653 = vrot.lane.b32.xlu0 %v4549, 24
      %v4654 = vpop.permute.xlu0 %4653
      %4655 = vrot.lane.b32.xlu0 %v4551, 24
      %v4656 = vpop.permute.xlu0 %4655
      %4657 = vrot.lane.b32.xlu0 %v4554, 24
      %v4658 = vpop.permute.xlu0 %4657
      %4659 = vrot.lane.b32.xlu0 %v4556, 24
      %v4660 = vpop.permute.xlu0 %4659
      %4661 = vrot.lane.b32.xlu0 %v4559, 24
      %v4662 = vpop.permute.xlu0 %4661
      %4663 = vrot.lane.b32.xlu0 %v4561, 24
      %v4664 = vpop.permute.xlu0 %4663
      %4665 = vrot.lane.b32.xlu0 %v4564, 24
      %v4666 = vpop.permute.xlu0 %4665
      %4667 = vrot.lane.b32.xlu0 %v4566, 24
      %v4668 = vpop.permute.xlu0 %4667
      %4669 = vrot.lane.b32.xlu0 %v4569, 24
      %v4670 = vpop.permute.xlu0 %4669
      %4671 = vrot.lane.b32.xlu0 %v4571, 24
      %v4672 = vpop.permute.xlu0 %4671
      %4673 = vrot.lane.b32.xlu0 %v4574, 24
      %v4674 = vpop.permute.xlu0 %4673
      %4675 = vrot.lane.b32.xlu0 %v4576, 24
      %v4676 = vpop.permute.xlu0 %4675
      %4677 = vrot.lane.b32.xlu0 %v4579, 24
      %v4678 = vpop.permute.xlu0 %4677
      %4679 = vrot.lane.b32.xlu0 %v4581, 24
      %v4680 = vpop.permute.xlu0 %4679
      %4681 = vrot.lane.b32.xlu0 %v4584, 24
      %v4682 = vpop.permute.xlu0 %4681
      %4683 = vrot.lane.b32.xlu0 %v4586, 24
      %v4684 = vpop.permute.xlu0 %4683
      %4685 = vrot.lane.b32.xlu0 %v4589, 24
      %v4686 = vpop.permute.xlu0 %4685
      %4687 = vrot.lane.b32.xlu0 %v4591, 24
      %v4688 = vpop.permute.xlu0 %4687
      %4689 = vrot.lane.b32.xlu0 %v4594, 24
      %v4690 = vpop.permute.xlu0 %4689
      %4691 = vrot.lane.b32.xlu0 %v4596, 24
      %v4692 = vpop.permute.xlu0 %4691
      %4693 = vrot.lane.b32.xlu0 %v4599, 24
      %v4694 = vpop.permute.xlu0 %4693
      %4695 = vrot.lane.b32.xlu0 %v4601, 24
      %v4696 = vpop.permute.xlu0 %4695
      %4697 = vrot.lane.b32.xlu0 %v4604, 24
      %v4698 = vpop.permute.xlu0 %4697
      %4699 = vrot.lane.b32.xlu0 %v4606, 24
      %v4700 = vpop.permute.xlu0 %4699
      %4701 = vrot.lane.b32.xlu0 %v4609, 24
      %v4702 = vpop.permute.xlu0 %4701
      %4703 = vrot.lane.b32.xlu0 %v4611, 24
      %v4704 = vpop.permute.xlu0 %4703
      %4705 = vrot.lane.b32.xlu0 %v4614, 24
      %v4706 = vpop.permute.xlu0 %4705
      %4707 = vrot.lane.b32.xlu0 %v4616, 24
      %v4708 = vpop.permute.xlu0 %4707
      %4709 = vrot.lane.b32.xlu0 %v4619, 24
      %v4710 = vpop.permute.xlu0 %4709
      %4711 = vrot.lane.b32.xlu0 %v4621, 24
      %v4712 = vpop.permute.xlu0 %4711
      %4713 = vrot.lane.b32.xlu0 %v4624, 24
      %v4714 = vpop.permute.xlu0 %4713
      %4715 = vrot.lane.b32.xlu0 %v4626, 24
      %v4716 = vpop.permute.xlu0 %4715
      %4717 = vrot.lane.b32.xlu0 %v4629, 24
      %v4718 = vpop.permute.xlu0 %4717
      %4719 = vrot.lane.b32.xlu0 %v4631, 24
      %v4720 = vpop.permute.xlu0 %4719
      %4721 = vrot.lane.b32.xlu0 %v4634, 24
      %v4722 = vpop.permute.xlu0 %4721
      %4723 = vrot.lane.b32.xlu0 %v4636, 24
      %v4724 = vpop.permute.xlu0 %4723
      %v4769 = vrot.slane %v3911, 4
      %v4770 = vrot.slane %v3912, 4
      %v4771 = vsel %vm1643, %v4769, %v4770
      %v4772 = vrot.slane %v3913, 4
      %v4773 = vsel %vm1643, %v4770, %v4772
      %v4774 = vrot.slane %v3914, 4
      %v4775 = vrot.slane %v3915, 4
      %v4776 = vsel %vm1643, %v4774, %v4775
      %v4777 = vrot.slane %v3916, 4
      %v4778 = vsel %vm1643, %v4775, %v4777
      %v4779 = vrot.slane %v3917, 4
      %v4780 = vrot.slane %v3918, 4
      %v4781 = vsel %vm1643, %v4779, %v4780
      %v4782 = vrot.slane %v3919, 4
      %v4783 = vsel %vm1643, %v4780, %v4782
      %v4784 = vrot.slane %v3920, 4
      %v4785 = vrot.slane %v3921, 4
      %v4786 = vsel %vm1643, %v4784, %v4785
      %v4787 = vrot.slane %v3922, 4
      %v4788 = vsel %vm1643, %v4785, %v4787
      %v4789 = vrot.slane %v3923, 4
      %v4790 = vrot.slane %v3924, 4
      %v4791 = vsel %vm1643, %v4789, %v4790
      %v4792 = vrot.slane %v3925, 4
      %v4793 = vsel %vm1643, %v4790, %v4792
      %v4794 = vrot.slane %v3926, 4
      %v4795 = vrot.slane %v3927, 4
      %v4796 = vsel %vm1643, %v4794, %v4795
      %v4797 = vrot.slane %v3928, 4
      %v4798 = vsel %vm1643, %v4795, %v4797
      %v4799 = vrot.slane %v3929, 4
      %v4800 = vrot.slane %v3930, 4
      %v4801 = vsel %vm1643, %v4799, %v4800
      %v4802 = vrot.slane %v3931, 4
      %v4803 = vsel %vm1643, %v4800, %v4802
      %v4804 = vrot.slane %v3932, 4
      %v4805 = vrot.slane %v3933, 4
      %v4806 = vsel %vm1643, %v4804, %v4805
      %v4807 = vrot.slane %v3934, 4
      %v4808 = vsel %vm1643, %v4805, %v4807
      %v4809 = vrot.slane %v3935, 4
      %v4810 = vrot.slane %v3936, 4
      %v4811 = vsel %vm1643, %v4809, %v4810
      %v4812 = vrot.slane %v3937, 4
      %v4813 = vsel %vm1643, %v4810, %v4812
      %v4814 = vrot.slane %v3938, 4
      %v4815 = vrot.slane %v3939, 4
      %v4816 = vsel %vm1643, %v4814, %v4815
      %v4817 = vrot.slane %v3940, 4
      %v4818 = vsel %vm1643, %v4815, %v4817
      %v4819 = vrot.slane %v3941, 4
      %v4820 = vrot.slane %v3942, 4
      %v4821 = vsel %vm1643, %v4819, %v4820
      %v4822 = vrot.slane %v3943, 4
      %v4823 = vsel %vm1643, %v4820, %v4822
      %v4824 = vrot.slane %v3944, 4
      %v4825 = vrot.slane %v3945, 4
      %v4826 = vsel %vm1643, %v4824, %v4825
      %v4827 = vrot.slane %v3946, 4
      %v4828 = vsel %vm1643, %v4825, %v4827
      %v4829 = vrot.slane %v3947, 4
      %v4830 = vrot.slane %v3948, 4
      %v4831 = vsel %vm1643, %v4829, %v4830
      %v4832 = vrot.slane %v3949, 4
      %v4833 = vsel %vm1643, %v4830, %v4832
      %v4834 = vrot.slane %v3950, 4
      %v4835 = vrot.slane %v3951, 4
      %v4836 = vsel %vm1643, %v4834, %v4835
      %v4837 = vrot.slane %v3952, 4
      %v4838 = vsel %vm1643, %v4835, %v4837
      %v4839 = vrot.slane %v3953, 4
      %v4840 = vrot.slane %v3954, 4
      %v4841 = vsel %vm1643, %v4839, %v4840
      %v4842 = vrot.slane %v3955, 4
      %v4843 = vsel %vm1643, %v4840, %v4842
      %v4844 = vrot.slane %v3956, 4
      %v4845 = vrot.slane %v3957, 4
      %v4846 = vsel %vm1643, %v4844, %v4845
      %v4847 = vrot.slane %v3958, 4
      %v4848 = vsel %vm1643, %v4845, %v4847
      %v4849 = vrot.slane %v3959, 4
      %v4850 = vrot.slane %v3960, 4
      %v4851 = vsel %vm1643, %v4849, %v4850
      %v4852 = vrot.slane %v3961, 4
      %v4853 = vsel %vm1643, %v4850, %v4852
      %v4854 = vrot.slane %v3962, 4
      %v4855 = vrot.slane %v3963, 4
      %v4856 = vsel %vm1643, %v4854, %v4855
      %v4857 = vrot.slane %v3964, 4
      %v4858 = vsel %vm1643, %v4855, %v4857
      %v4859 = vrot.slane %v3965, 4
      %v4860 = vrot.slane %v3966, 4
      %v4861 = vsel %vm1643, %v4859, %v4860
      %v4862 = vrot.slane %v3967, 4
      %v4863 = vsel %vm1643, %v4860, %v4862
      %v4864 = vrot.slane %v3968, 4
      %v4865 = vrot.slane %v3969, 4
      %v4866 = vsel %vm1643, %v4864, %v4865
      %v4867 = vrot.slane %v3970, 4
      %v4868 = vsel %vm1643, %v4865, %v4867
      %v4869 = vrot.slane %v3971, 4
      %v4870 = vrot.slane %v3972, 4
      %v4871 = vsel %vm1643, %v4869, %v4870
      %v4872 = vrot.slane %v3973, 4
      %v4873 = vsel %vm1643, %v4870, %v4872
      %v4874 = vrot.slane %v3974, 4
      %v4875 = vrot.slane %v3975, 4
      %v4876 = vsel %vm1643, %v4874, %v4875
      %v4877 = vrot.slane %v3976, 4
      %v4878 = vsel %vm1643, %v4875, %v4877
      %4879 = vrot.lane.b32.xlu0 %v4771, 32
      %v4880 = vpop.permute.xlu0 %4879
      %4881 = vrot.lane.b32.xlu0 %v4773, 32
      %v4882 = vpop.permute.xlu0 %4881
      %4883 = vrot.lane.b32.xlu0 %v4776, 32
      %v4884 = vpop.permute.xlu0 %4883
      %4885 = vrot.lane.b32.xlu0 %v4778, 32
      %v4886 = vpop.permute.xlu0 %4885
      %4887 = vrot.lane.b32.xlu0 %v4781, 32
      %v4888 = vpop.permute.xlu0 %4887
      %4889 = vrot.lane.b32.xlu0 %v4783, 32
      %v4890 = vpop.permute.xlu0 %4889
      %4891 = vrot.lane.b32.xlu0 %v4786, 32
      %v4892 = vpop.permute.xlu0 %4891
      %4893 = vrot.lane.b32.xlu0 %v4788, 32
      %v4894 = vpop.permute.xlu0 %4893
      %4895 = vrot.lane.b32.xlu0 %v4791, 32
      %v4896 = vpop.permute.xlu0 %4895
      %4897 = vrot.lane.b32.xlu0 %v4793, 32
      %v4898 = vpop.permute.xlu0 %4897
      %4899 = vrot.lane.b32.xlu0 %v4796, 32
      %v4900 = vpop.permute.xlu0 %4899
      %4901 = vrot.lane.b32.xlu0 %v4798, 32
      %v4902 = vpop.permute.xlu0 %4901
      %4903 = vrot.lane.b32.xlu0 %v4801, 32
      %v4904 = vpop.permute.xlu0 %4903
      %4905 = vrot.lane.b32.xlu0 %v4803, 32
      %v4906 = vpop.permute.xlu0 %4905
      %4907 = vrot.lane.b32.xlu0 %v4806, 32
      %v4908 = vpop.permute.xlu0 %4907
      %4909 = vrot.lane.b32.xlu0 %v4808, 32
      %v4910 = vpop.permute.xlu0 %4909
      %4911 = vrot.lane.b32.xlu0 %v4811, 32
      %v4912 = vpop.permute.xlu0 %4911
      %4913 = vrot.lane.b32.xlu0 %v4813, 32
      %v4914 = vpop.permute.xlu0 %4913
      %4915 = vrot.lane.b32.xlu0 %v4816, 32
      %v4916 = vpop.permute.xlu0 %4915
      %4917 = vrot.lane.b32.xlu0 %v4818, 32
      %v4918 = vpop.permute.xlu0 %4917
      %4919 = vrot.lane.b32.xlu0 %v4821, 32
      %v4920 = vpop.permute.xlu0 %4919
      %4921 = vrot.lane.b32.xlu0 %v4823, 32
      %v4922 = vpop.permute.xlu0 %4921
      %4923 = vrot.lane.b32.xlu0 %v4826, 32
      %v4924 = vpop.permute.xlu0 %4923
      %4925 = vrot.lane.b32.xlu0 %v4828, 32
      %v4926 = vpop.permute.xlu0 %4925
      %4927 = vrot.lane.b32.xlu0 %v4831, 32
      %v4928 = vpop.permute.xlu0 %4927
      %4929 = vrot.lane.b32.xlu0 %v4833, 32
      %v4930 = vpop.permute.xlu0 %4929
      %4931 = vrot.lane.b32.xlu0 %v4836, 32
      %v4932 = vpop.permute.xlu0 %4931
      %4933 = vrot.lane.b32.xlu0 %v4838, 32
      %v4934 = vpop.permute.xlu0 %4933
      %4935 = vrot.lane.b32.xlu0 %v4841, 32
      %v4936 = vpop.permute.xlu0 %4935
      %4937 = vrot.lane.b32.xlu0 %v4843, 32
      %v4938 = vpop.permute.xlu0 %4937
      %4939 = vrot.lane.b32.xlu0 %v4846, 32
      %v4940 = vpop.permute.xlu0 %4939
      %4941 = vrot.lane.b32.xlu0 %v4848, 32
      %v4942 = vpop.permute.xlu0 %4941
      %4943 = vrot.lane.b32.xlu0 %v4851, 32
      %v4944 = vpop.permute.xlu0 %4943
      %4945 = vrot.lane.b32.xlu0 %v4853, 32
      %v4946 = vpop.permute.xlu0 %4945
      %4947 = vrot.lane.b32.xlu0 %v4856, 32
      %v4948 = vpop.permute.xlu0 %4947
      %4949 = vrot.lane.b32.xlu0 %v4858, 32
      %v4950 = vpop.permute.xlu0 %4949
      %4951 = vrot.lane.b32.xlu0 %v4861, 32
      %v4952 = vpop.permute.xlu0 %4951
      %4953 = vrot.lane.b32.xlu0 %v4863, 32
      %v4954 = vpop.permute.xlu0 %4953
      %4955 = vrot.lane.b32.xlu0 %v4866, 32
      %v4956 = vpop.permute.xlu0 %4955
      %4957 = vrot.lane.b32.xlu0 %v4868, 32
      %v4958 = vpop.permute.xlu0 %4957
      %4959 = vrot.lane.b32.xlu0 %v4871, 32
      %v4960 = vpop.permute.xlu0 %4959
      %4961 = vrot.lane.b32.xlu0 %v4873, 32
      %v4962 = vpop.permute.xlu0 %4961
      %4963 = vrot.lane.b32.xlu0 %v4876, 32
      %v4964 = vpop.permute.xlu0 %4963
      %4965 = vrot.lane.b32.xlu0 %v4878, 32
      %v4966 = vpop.permute.xlu0 %4965
      %v5011 = vrot.slane %v3911, 5
      %v5012 = vrot.slane %v3912, 5
      %v5013 = vsel %vm1798, %v5011, %v5012
      %v5014 = vrot.slane %v3913, 5
      %v5015 = vsel %vm1798, %v5012, %v5014
      %v5016 = vrot.slane %v3914, 5
      %v5017 = vrot.slane %v3915, 5
      %v5018 = vsel %vm1798, %v5016, %v5017
      %v5019 = vrot.slane %v3916, 5
      %v5020 = vsel %vm1798, %v5017, %v5019
      %v5021 = vrot.slane %v3917, 5
      %v5022 = vrot.slane %v3918, 5
      %v5023 = vsel %vm1798, %v5021, %v5022
      %v5024 = vrot.slane %v3919, 5
      %v5025 = vsel %vm1798, %v5022, %v5024
      %v5026 = vrot.slane %v3920, 5
      %v5027 = vrot.slane %v3921, 5
      %v5028 = vsel %vm1798, %v5026, %v5027
      %v5029 = vrot.slane %v3922, 5
      %v5030 = vsel %vm1798, %v5027, %v5029
      %v5031 = vrot.slane %v3923, 5
      %v5032 = vrot.slane %v3924, 5
      %v5033 = vsel %vm1798, %v5031, %v5032
      %v5034 = vrot.slane %v3925, 5
      %v5035 = vsel %vm1798, %v5032, %v5034
      %v5036 = vrot.slane %v3926, 5
      %v5037 = vrot.slane %v3927, 5
      %v5038 = vsel %vm1798, %v5036, %v5037
      %v5039 = vrot.slane %v3928, 5
      %v5040 = vsel %vm1798, %v5037, %v5039
      %v5041 = vrot.slane %v3929, 5
      %v5042 = vrot.slane %v3930, 5
      %v5043 = vsel %vm1798, %v5041, %v5042
      %v5044 = vrot.slane %v3931, 5
      %v5045 = vsel %vm1798, %v5042, %v5044
      %v5046 = vrot.slane %v3932, 5
      %v5047 = vrot.slane %v3933, 5
      %v5048 = vsel %vm1798, %v5046, %v5047
      %v5049 = vrot.slane %v3934, 5
      %v5050 = vsel %vm1798, %v5047, %v5049
      %v5051 = vrot.slane %v3935, 5
      %v5052 = vrot.slane %v3936, 5
      %v5053 = vsel %vm1798, %v5051, %v5052
      %v5054 = vrot.slane %v3937, 5
      %v5055 = vsel %vm1798, %v5052, %v5054
      %v5056 = vrot.slane %v3938, 5
      %v5057 = vrot.slane %v3939, 5
      %v5058 = vsel %vm1798, %v5056, %v5057
      %v5059 = vrot.slane %v3940, 5
      %v5060 = vsel %vm1798, %v5057, %v5059
      %v5061 = vrot.slane %v3941, 5
      %v5062 = vrot.slane %v3942, 5
      %v5063 = vsel %vm1798, %v5061, %v5062
      %v5064 = vrot.slane %v3943, 5
      %v5065 = vsel %vm1798, %v5062, %v5064
      %v5066 = vrot.slane %v3944, 5
      %v5067 = vrot.slane %v3945, 5
      %v5068 = vsel %vm1798, %v5066, %v5067
      %v5069 = vrot.slane %v3946, 5
      %v5070 = vsel %vm1798, %v5067, %v5069
      %v5071 = vrot.slane %v3947, 5
      %v5072 = vrot.slane %v3948, 5
      %v5073 = vsel %vm1798, %v5071, %v5072
      %v5074 = vrot.slane %v3949, 5
      %v5075 = vsel %vm1798, %v5072, %v5074
      %v5076 = vrot.slane %v3950, 5
      %v5077 = vrot.slane %v3951, 5
      %v5078 = vsel %vm1798, %v5076, %v5077
      %v5079 = vrot.slane %v3952, 5
      %v5080 = vsel %vm1798, %v5077, %v5079
      %v5081 = vrot.slane %v3953, 5
      %v5082 = vrot.slane %v3954, 5
      %v5083 = vsel %vm1798, %v5081, %v5082
      %v5084 = vrot.slane %v3955, 5
      %v5085 = vsel %vm1798, %v5082, %v5084
      %v5086 = vrot.slane %v3956, 5
      %v5087 = vrot.slane %v3957, 5
      %v5088 = vsel %vm1798, %v5086, %v5087
      %v5089 = vrot.slane %v3958, 5
      %v5090 = vsel %vm1798, %v5087, %v5089
      %v5091 = vrot.slane %v3959, 5
      %v5092 = vrot.slane %v3960, 5
      %v5093 = vsel %vm1798, %v5091, %v5092
      %v5094 = vrot.slane %v3961, 5
      %v5095 = vsel %vm1798, %v5092, %v5094
      %v5096 = vrot.slane %v3962, 5
      %v5097 = vrot.slane %v3963, 5
      %v5098 = vsel %vm1798, %v5096, %v5097
      %v5099 = vrot.slane %v3964, 5
      %v5100 = vsel %vm1798, %v5097, %v5099
      %v5101 = vrot.slane %v3965, 5
      %v5102 = vrot.slane %v3966, 5
      %v5103 = vsel %vm1798, %v5101, %v5102
      %v5104 = vrot.slane %v3967, 5
      %v5105 = vsel %vm1798, %v5102, %v5104
      %v5106 = vrot.slane %v3968, 5
      %v5107 = vrot.slane %v3969, 5
      %v5108 = vsel %vm1798, %v5106, %v5107
      %v5109 = vrot.slane %v3970, 5
      %v5110 = vsel %vm1798, %v5107, %v5109
      %v5111 = vrot.slane %v3971, 5
      %v5112 = vrot.slane %v3972, 5
      %v5113 = vsel %vm1798, %v5111, %v5112
      %v5114 = vrot.slane %v3973, 5
      %v5115 = vsel %vm1798, %v5112, %v5114
      %v5116 = vrot.slane %v3974, 5
      %v5117 = vrot.slane %v3975, 5
      %v5118 = vsel %vm1798, %v5116, %v5117
      %v5119 = vrot.slane %v3976, 5
      %v5120 = vsel %vm1798, %v5117, %v5119
      %5121 = vrot.lane.b32.xlu0 %v5013, 40
      %v5122 = vpop.permute.xlu0 %5121
      %5123 = vrot.lane.b32.xlu0 %v5015, 40
      %v5124 = vpop.permute.xlu0 %5123
      %5125 = vrot.lane.b32.xlu0 %v5018, 40
      %v5126 = vpop.permute.xlu0 %5125
      %5127 = vrot.lane.b32.xlu0 %v5020, 40
      %v5128 = vpop.permute.xlu0 %5127
      %5129 = vrot.lane.b32.xlu0 %v5023, 40
      %v5130 = vpop.permute.xlu0 %5129
      %5131 = vrot.lane.b32.xlu0 %v5025, 40
      %v5132 = vpop.permute.xlu0 %5131
      %5133 = vrot.lane.b32.xlu0 %v5028, 40
      %v5134 = vpop.permute.xlu0 %5133
      %5135 = vrot.lane.b32.xlu0 %v5030, 40
      %v5136 = vpop.permute.xlu0 %5135
      %5137 = vrot.lane.b32.xlu0 %v5033, 40
      %v5138 = vpop.permute.xlu0 %5137
      %5139 = vrot.lane.b32.xlu0 %v5035, 40
      %v5140 = vpop.permute.xlu0 %5139
      %5141 = vrot.lane.b32.xlu0 %v5038, 40
      %v5142 = vpop.permute.xlu0 %5141
      %5143 = vrot.lane.b32.xlu0 %v5040, 40
      %v5144 = vpop.permute.xlu0 %5143
      %5145 = vrot.lane.b32.xlu0 %v5043, 40
      %v5146 = vpop.permute.xlu0 %5145
      %5147 = vrot.lane.b32.xlu0 %v5045, 40
      %v5148 = vpop.permute.xlu0 %5147
      %5149 = vrot.lane.b32.xlu0 %v5048, 40
      %v5150 = vpop.permute.xlu0 %5149
      %5151 = vrot.lane.b32.xlu0 %v5050, 40
      %v5152 = vpop.permute.xlu0 %5151
      %5153 = vrot.lane.b32.xlu0 %v5053, 40
      %v5154 = vpop.permute.xlu0 %5153
      %5155 = vrot.lane.b32.xlu0 %v5055, 40
      %v5156 = vpop.permute.xlu0 %5155
      %5157 = vrot.lane.b32.xlu0 %v5058, 40
      %v5158 = vpop.permute.xlu0 %5157
      %5159 = vrot.lane.b32.xlu0 %v5060, 40
      %v5160 = vpop.permute.xlu0 %5159
      %5161 = vrot.lane.b32.xlu0 %v5063, 40
      %v5162 = vpop.permute.xlu0 %5161
      %5163 = vrot.lane.b32.xlu0 %v5065, 40
      %v5164 = vpop.permute.xlu0 %5163
      %5165 = vrot.lane.b32.xlu0 %v5068, 40
      %v5166 = vpop.permute.xlu0 %5165
      %5167 = vrot.lane.b32.xlu0 %v5070, 40
      %v5168 = vpop.permute.xlu0 %5167
      %5169 = vrot.lane.b32.xlu0 %v5073, 40
      %v5170 = vpop.permute.xlu0 %5169
      %5171 = vrot.lane.b32.xlu0 %v5075, 40
      %v5172 = vpop.permute.xlu0 %5171
      %5173 = vrot.lane.b32.xlu0 %v5078, 40
      %v5174 = vpop.permute.xlu0 %5173
      %5175 = vrot.lane.b32.xlu0 %v5080, 40
      %v5176 = vpop.permute.xlu0 %5175
      %5177 = vrot.lane.b32.xlu0 %v5083, 40
      %v5178 = vpop.permute.xlu0 %5177
      %5179 = vrot.lane.b32.xlu0 %v5085, 40
      %v5180 = vpop.permute.xlu0 %5179
      %5181 = vrot.lane.b32.xlu0 %v5088, 40
      %v5182 = vpop.permute.xlu0 %5181
      %5183 = vrot.lane.b32.xlu0 %v5090, 40
      %v5184 = vpop.permute.xlu0 %5183
      %5185 = vrot.lane.b32.xlu0 %v5093, 40
      %v5186 = vpop.permute.xlu0 %5185
      %5187 = vrot.lane.b32.xlu0 %v5095, 40
      %v5188 = vpop.permute.xlu0 %5187
      %5189 = vrot.lane.b32.xlu0 %v5098, 40
      %v5190 = vpop.permute.xlu0 %5189
      %5191 = vrot.lane.b32.xlu0 %v5100, 40
      %v5192 = vpop.permute.xlu0 %5191
      %5193 = vrot.lane.b32.xlu0 %v5103, 40
      %v5194 = vpop.permute.xlu0 %5193
      %5195 = vrot.lane.b32.xlu0 %v5105, 40
      %v5196 = vpop.permute.xlu0 %5195
      %5197 = vrot.lane.b32.xlu0 %v5108, 40
      %v5198 = vpop.permute.xlu0 %5197
      %5199 = vrot.lane.b32.xlu0 %v5110, 40
      %v5200 = vpop.permute.xlu0 %5199
      %5201 = vrot.lane.b32.xlu0 %v5113, 40
      %v5202 = vpop.permute.xlu0 %5201
      %5203 = vrot.lane.b32.xlu0 %v5115, 40
      %v5204 = vpop.permute.xlu0 %5203
      %5205 = vrot.lane.b32.xlu0 %v5118, 40
      %v5206 = vpop.permute.xlu0 %5205
      %5207 = vrot.lane.b32.xlu0 %v5120, 40
      %v5208 = vpop.permute.xlu0 %5207
      %v5253 = vrot.slane %v3911, 6
      %v5254 = vrot.slane %v3912, 6
      %v5255 = vsel %vm2041, %v5253, %v5254
      %v5256 = vrot.slane %v3913, 6
      %v5257 = vsel %vm2041, %v5254, %v5256
      %v5258 = vrot.slane %v3914, 6
      %v5259 = vrot.slane %v3915, 6
      %v5260 = vsel %vm2041, %v5258, %v5259
      %v5261 = vrot.slane %v3916, 6
      %v5262 = vsel %vm2041, %v5259, %v5261
      %v5263 = vrot.slane %v3917, 6
      %v5264 = vrot.slane %v3918, 6
      %v5265 = vsel %vm2041, %v5263, %v5264
      %v5266 = vrot.slane %v3919, 6
      %v5267 = vsel %vm2041, %v5264, %v5266
      %v5268 = vrot.slane %v3920, 6
      %v5269 = vrot.slane %v3921, 6
      %v5270 = vsel %vm2041, %v5268, %v5269
      %v5271 = vrot.slane %v3922, 6
      %v5272 = vsel %vm2041, %v5269, %v5271
      %v5273 = vrot.slane %v3923, 6
      %v5274 = vrot.slane %v3924, 6
      %v5275 = vsel %vm2041, %v5273, %v5274
      %v5276 = vrot.slane %v3925, 6
      %v5277 = vsel %vm2041, %v5274, %v5276
      %v5278 = vrot.slane %v3926, 6
      %v5279 = vrot.slane %v3927, 6
      %v5280 = vsel %vm2041, %v5278, %v5279
      %v5281 = vrot.slane %v3928, 6
      %v5282 = vsel %vm2041, %v5279, %v5281
      %v5283 = vrot.slane %v3929, 6
      %v5284 = vrot.slane %v3930, 6
      %v5285 = vsel %vm2041, %v5283, %v5284
      %v5286 = vrot.slane %v3931, 6
      %v5287 = vsel %vm2041, %v5284, %v5286
      %v5288 = vrot.slane %v3932, 6
      %v5289 = vrot.slane %v3933, 6
      %v5290 = vsel %vm2041, %v5288, %v5289
      %v5291 = vrot.slane %v3934, 6
      %v5292 = vsel %vm2041, %v5289, %v5291
      %v5293 = vrot.slane %v3935, 6
      %v5294 = vrot.slane %v3936, 6
      %v5295 = vsel %vm2041, %v5293, %v5294
      %v5296 = vrot.slane %v3937, 6
      %v5297 = vsel %vm2041, %v5294, %v5296
      %v5298 = vrot.slane %v3938, 6
      %v5299 = vrot.slane %v3939, 6
      %v5300 = vsel %vm2041, %v5298, %v5299
      %v5301 = vrot.slane %v3940, 6
      %v5302 = vsel %vm2041, %v5299, %v5301
      %v5303 = vrot.slane %v3941, 6
      %v5304 = vrot.slane %v3942, 6
      %v5305 = vsel %vm2041, %v5303, %v5304
      %v5306 = vrot.slane %v3943, 6
      %v5307 = vsel %vm2041, %v5304, %v5306
      %v5308 = vrot.slane %v3944, 6
      %v5309 = vrot.slane %v3945, 6
      %v5310 = vsel %vm2041, %v5308, %v5309
      %v5311 = vrot.slane %v3946, 6
      %v5312 = vsel %vm2041, %v5309, %v5311
      %v5313 = vrot.slane %v3947, 6
      %v5314 = vrot.slane %v3948, 6
      %v5315 = vsel %vm2041, %v5313, %v5314
      %v5316 = vrot.slane %v3949, 6
      %v5317 = vsel %vm2041, %v5314, %v5316
      %v5318 = vrot.slane %v3950, 6
      %v5319 = vrot.slane %v3951, 6
      %v5320 = vsel %vm2041, %v5318, %v5319
      %v5321 = vrot.slane %v3952, 6
      %v5322 = vsel %vm2041, %v5319, %v5321
      %v5323 = vrot.slane %v3953, 6
      %v5324 = vrot.slane %v3954, 6
      %v5325 = vsel %vm2041, %v5323, %v5324
      %v5326 = vrot.slane %v3955, 6
      %v5327 = vsel %vm2041, %v5324, %v5326
      %v5328 = vrot.slane %v3956, 6
      %v5329 = vrot.slane %v3957, 6
      %v5330 = vsel %vm2041, %v5328, %v5329
      %v5331 = vrot.slane %v3958, 6
      %v5332 = vsel %vm2041, %v5329, %v5331
      %v5333 = vrot.slane %v3959, 6
      %v5334 = vrot.slane %v3960, 6
      %v5335 = vsel %vm2041, %v5333, %v5334
      %v5336 = vrot.slane %v3961, 6
      %v5337 = vsel %vm2041, %v5334, %v5336
      %v5338 = vrot.slane %v3962, 6
      %v5339 = vrot.slane %v3963, 6
      %v5340 = vsel %vm2041, %v5338, %v5339
      %v5341 = vrot.slane %v3964, 6
      %v5342 = vsel %vm2041, %v5339, %v5341
      %v5343 = vrot.slane %v3965, 6
      %v5344 = vrot.slane %v3966, 6
      %v5345 = vsel %vm2041, %v5343, %v5344
      %v5346 = vrot.slane %v3967, 6
      %v5347 = vsel %vm2041, %v5344, %v5346
      %v5348 = vrot.slane %v3968, 6
      %v5349 = vrot.slane %v3969, 6
      %v5350 = vsel %vm2041, %v5348, %v5349
      %v5351 = vrot.slane %v3970, 6
      %v5352 = vsel %vm2041, %v5349, %v5351
      %v5353 = vrot.slane %v3971, 6
      %v5354 = vrot.slane %v3972, 6
      %v5355 = vsel %vm2041, %v5353, %v5354
      %v5356 = vrot.slane %v3973, 6
      %v5357 = vsel %vm2041, %v5354, %v5356
      %v5358 = vrot.slane %v3974, 6
      %v5359 = vrot.slane %v3975, 6
      %v5360 = vsel %vm2041, %v5358, %v5359
      %v5361 = vrot.slane %v3976, 6
      %v5362 = vsel %vm2041, %v5359, %v5361
      %5363 = vrot.lane.b32.xlu0 %v5255, 48
      %v5364 = vpop.permute.xlu0 %5363
      %5365 = vrot.lane.b32.xlu0 %v5257, 48
      %v5366 = vpop.permute.xlu0 %5365
      %5367 = vrot.lane.b32.xlu0 %v5260, 48
      %v5368 = vpop.permute.xlu0 %5367
      %5369 = vrot.lane.b32.xlu0 %v5262, 48
      %v5370 = vpop.permute.xlu0 %5369
      %5371 = vrot.lane.b32.xlu0 %v5265, 48
      %v5372 = vpop.permute.xlu0 %5371
      %5373 = vrot.lane.b32.xlu0 %v5267, 48
      %v5374 = vpop.permute.xlu0 %5373
      %5375 = vrot.lane.b32.xlu0 %v5270, 48
      %v5376 = vpop.permute.xlu0 %5375
      %5377 = vrot.lane.b32.xlu0 %v5272, 48
      %v5378 = vpop.permute.xlu0 %5377
      %5379 = vrot.lane.b32.xlu0 %v5275, 48
      %v5380 = vpop.permute.xlu0 %5379
      %5381 = vrot.lane.b32.xlu0 %v5277, 48
      %v5382 = vpop.permute.xlu0 %5381
      %5383 = vrot.lane.b32.xlu0 %v5280, 48
      %v5384 = vpop.permute.xlu0 %5383
      %5385 = vrot.lane.b32.xlu0 %v5282, 48
      %v5386 = vpop.permute.xlu0 %5385
      %5387 = vrot.lane.b32.xlu0 %v5285, 48
      %v5388 = vpop.permute.xlu0 %5387
      %5389 = vrot.lane.b32.xlu0 %v5287, 48
      %v5390 = vpop.permute.xlu0 %5389
      %5391 = vrot.lane.b32.xlu0 %v5290, 48
      %v5392 = vpop.permute.xlu0 %5391
      %5393 = vrot.lane.b32.xlu0 %v5292, 48
      %v5394 = vpop.permute.xlu0 %5393
      %5395 = vrot.lane.b32.xlu0 %v5295, 48
      %v5396 = vpop.permute.xlu0 %5395
      %5397 = vrot.lane.b32.xlu0 %v5297, 48
      %v5398 = vpop.permute.xlu0 %5397
      %5399 = vrot.lane.b32.xlu0 %v5300, 48
      %v5400 = vpop.permute.xlu0 %5399
      %5401 = vrot.lane.b32.xlu0 %v5302, 48
      %v5402 = vpop.permute.xlu0 %5401
      %5403 = vrot.lane.b32.xlu0 %v5305, 48
      %v5404 = vpop.permute.xlu0 %5403
      %5405 = vrot.lane.b32.xlu0 %v5307, 48
      %v5406 = vpop.permute.xlu0 %5405
      %5407 = vrot.lane.b32.xlu0 %v5310, 48
      %v5408 = vpop.permute.xlu0 %5407
      %5409 = vrot.lane.b32.xlu0 %v5312, 48
      %v5410 = vpop.permute.xlu0 %5409
      %5411 = vrot.lane.b32.xlu0 %v5315, 48
      %v5412 = vpop.permute.xlu0 %5411
      %5413 = vrot.lane.b32.xlu0 %v5317, 48
      %v5414 = vpop.permute.xlu0 %5413
      %5415 = vrot.lane.b32.xlu0 %v5320, 48
      %v5416 = vpop.permute.xlu0 %5415
      %5417 = vrot.lane.b32.xlu0 %v5322, 48
      %v5418 = vpop.permute.xlu0 %5417
      %5419 = vrot.lane.b32.xlu0 %v5325, 48
      %v5420 = vpop.permute.xlu0 %5419
      %5421 = vrot.lane.b32.xlu0 %v5327, 48
      %v5422 = vpop.permute.xlu0 %5421
      %5423 = vrot.lane.b32.xlu0 %v5330, 48
      %v5424 = vpop.permute.xlu0 %5423
      %5425 = vrot.lane.b32.xlu0 %v5332, 48
      %v5426 = vpop.permute.xlu0 %5425
      %5427 = vrot.lane.b32.xlu0 %v5335, 48
      %v5428 = vpop.permute.xlu0 %5427
      %5429 = vrot.lane.b32.xlu0 %v5337, 48
      %v5430 = vpop.permute.xlu0 %5429
      %5431 = vrot.lane.b32.xlu0 %v5340, 48
      %v5432 = vpop.permute.xlu0 %5431
      %5433 = vrot.lane.b32.xlu0 %v5342, 48
      %v5434 = vpop.permute.xlu0 %5433
      %5435 = vrot.lane.b32.xlu0 %v5345, 48
      %v5436 = vpop.permute.xlu0 %5435
      %5437 = vrot.lane.b32.xlu0 %v5347, 48
      %v5438 = vpop.permute.xlu0 %5437
      %5439 = vrot.lane.b32.xlu0 %v5350, 48
      %v5440 = vpop.permute.xlu0 %5439
      %5441 = vrot.lane.b32.xlu0 %v5352, 48
      %v5442 = vpop.permute.xlu0 %5441
      %5443 = vrot.lane.b32.xlu0 %v5355, 48
      %v5444 = vpop.permute.xlu0 %5443
      %5445 = vrot.lane.b32.xlu0 %v5357, 48
      %v5446 = vpop.permute.xlu0 %5445
      %5447 = vrot.lane.b32.xlu0 %v5360, 48
      %v5448 = vpop.permute.xlu0 %5447
      %5449 = vrot.lane.b32.xlu0 %v5362, 48
      %v5450 = vpop.permute.xlu0 %5449
      %v5495 = vsel %vm453, %v3911, %v4154
      %v5496 = vsel %vm453, %v3912, %v4156
      %v5497 = vsel %vm453, %v3914, %v4158
      %v5498 = vsel %vm453, %v3915, %v4160
      %v5499 = vsel %vm453, %v3917, %v4162
      %v5500 = vsel %vm453, %v3918, %v4164
      %v5501 = vsel %vm453, %v3920, %v4166
      %v5502 = vsel %vm453, %v3921, %v4168
      %v5503 = vsel %vm453, %v3923, %v4170
      %v5504 = vsel %vm453, %v3924, %v4172
      %v5505 = vsel %vm453, %v3926, %v4174
      %v5506 = vsel %vm453, %v3927, %v4176
      %v5507 = vsel %vm453, %v3929, %v4178
      %v5508 = vsel %vm453, %v3930, %v4180
      %v5509 = vsel %vm453, %v3932, %v4182
      %v5510 = vsel %vm453, %v3933, %v4184
      %v5511 = vsel %vm453, %v3935, %v4186
      %v5512 = vsel %vm453, %v3936, %v4188
      %v5513 = vsel %vm453, %v3938, %v4190
      %v5514 = vsel %vm453, %v3939, %v4192
      %v5515 = vsel %vm453, %v3941, %v4194
      %v5516 = vsel %vm453, %v3942, %v4196
      %v5517 = vsel %vm453, %v3944, %v4198
      %v5518 = vsel %vm453, %v3945, %v4200
      %v5519 = vsel %vm453, %v3947, %v4202
      %v5520 = vsel %vm453, %v3948, %v4204
      %v5521 = vsel %vm453, %v3950, %v4206
      %v5522 = vsel %vm453, %v3951, %v4208
      %v5523 = vsel %vm453, %v3953, %v4210
      %v5524 = vsel %vm453, %v3954, %v4212
      %v5525 = vsel %vm453, %v3956, %v4214
      %v5526 = vsel %vm453, %v3957, %v4216
      %v5527 = vsel %vm453, %v3959, %v4218
      %v5528 = vsel %vm453, %v3960, %v4220
      %v5529 = vsel %vm453, %v3962, %v4222
      %v5530 = vsel %vm453, %v3963, %v4224
      %v5531 = vsel %vm453, %v3965, %v4226
      %v5532 = vsel %vm453, %v3966, %v4228
      %v5533 = vsel %vm453, %v3968, %v4230
      %v5534 = vsel %vm453, %v3969, %v4232
      %v5535 = vsel %vm453, %v3971, %v4234
      %v5536 = vsel %vm453, %v3972, %v4236
      %v5537 = vsel %vm453, %v3974, %v4238
      %v5538 = vsel %vm453, %v3975, %v4240
      %vm5539 = vcmask 130048
      %v5540 = vsel %vm5539, %v5495, %v4396
      %v5541 = vsel %vm5539, %v5496, %v4398
      %v5542 = vsel %vm5539, %v5497, %v4400
      %v5543 = vsel %vm5539, %v5498, %v4402
      %v5544 = vsel %vm5539, %v5499, %v4404
      %v5545 = vsel %vm5539, %v5500, %v4406
      %v5546 = vsel %vm5539, %v5501, %v4408
      %v5547 = vsel %vm5539, %v5502, %v4410
      %v5548 = vsel %vm5539, %v5503, %v4412
      %v5549 = vsel %vm5539, %v5504, %v4414
      %v5550 = vsel %vm5539, %v5505, %v4416
      %v5551 = vsel %vm5539, %v5506, %v4418
      %v5552 = vsel %vm5539, %v5507, %v4420
      %v5553 = vsel %vm5539, %v5508, %v4422
      %v5554 = vsel %vm5539, %v5509, %v4424
      %v5555 = vsel %vm5539, %v5510, %v4426
      %v5556 = vsel %vm5539, %v5511, %v4428
      %v5557 = vsel %vm5539, %v5512, %v4430
      %v5558 = vsel %vm5539, %v5513, %v4432
      %v5559 = vsel %vm5539, %v5514, %v4434
      %v5560 = vsel %vm5539, %v5515, %v4436
      %v5561 = vsel %vm5539, %v5516, %v4438
      %v5562 = vsel %vm5539, %v5517, %v4440
      %v5563 = vsel %vm5539, %v5518, %v4442
      %v5564 = vsel %vm5539, %v5519, %v4444
      %v5565 = vsel %vm5539, %v5520, %v4446
      %v5566 = vsel %vm5539, %v5521, %v4448
      %v5567 = vsel %vm5539, %v5522, %v4450
      %v5568 = vsel %vm5539, %v5523, %v4452
      %v5569 = vsel %vm5539, %v5524, %v4454
      %v5570 = vsel %vm5539, %v5525, %v4456
      %v5571 = vsel %vm5539, %v5526, %v4458
      %v5572 = vsel %vm5539, %v5527, %v4460
      %v5573 = vsel %vm5539, %v5528, %v4462
      %v5574 = vsel %vm5539, %v5529, %v4464
      %v5575 = vsel %vm5539, %v5530, %v4466
      %v5576 = vsel %vm5539, %v5531, %v4468
      %v5577 = vsel %vm5539, %v5532, %v4470
      %v5578 = vsel %vm5539, %v5533, %v4472
      %v5579 = vsel %vm5539, %v5534, %v4474
      %v5580 = vsel %vm5539, %v5535, %v4476
      %v5581 = vsel %vm5539, %v5536, %v4478
      %v5582 = vsel %vm5539, %v5537, %v4480
      %v5583 = vsel %vm5539, %v5538, %v4482
      %vm5584 = vcmask 195584
      %v5585 = vsel %vm5584, %v5540, %v4638
      %v5586 = vsel %vm5584, %v5541, %v4640
      %v5587 = vsel %vm5584, %v5542, %v4642
      %v5588 = vsel %vm5584, %v5543, %v4644
      %v5589 = vsel %vm5584, %v5544, %v4646
      %v5590 = vsel %vm5584, %v5545, %v4648
      %v5591 = vsel %vm5584, %v5546, %v4650
      %v5592 = vsel %vm5584, %v5547, %v4652
      %v5593 = vsel %vm5584, %v5548, %v4654
      %v5594 = vsel %vm5584, %v5549, %v4656
      %v5595 = vsel %vm5584, %v5550, %v4658
      %v5596 = vsel %vm5584, %v5551, %v4660
      %v5597 = vsel %vm5584, %v5552, %v4662
      %v5598 = vsel %vm5584, %v5553, %v4664
      %v5599 = vsel %vm5584, %v5554, %v4666
      %v5600 = vsel %vm5584, %v5555, %v4668
      %v5601 = vsel %vm5584, %v5556, %v4670
      %v5602 = vsel %vm5584, %v5557, %v4672
      %v5603 = vsel %vm5584, %v5558, %v4674
      %v5604 = vsel %vm5584, %v5559, %v4676
      %v5605 = vsel %vm5584, %v5560, %v4678
      %v5606 = vsel %vm5584, %v5561, %v4680
      %v5607 = vsel %vm5584, %v5562, %v4682
      %v5608 = vsel %vm5584, %v5563, %v4684
      %v5609 = vsel %vm5584, %v5564, %v4686
      %v5610 = vsel %vm5584, %v5565, %v4688
      %v5611 = vsel %vm5584, %v5566, %v4690
      %v5612 = vsel %vm5584, %v5567, %v4692
      %v5613 = vsel %vm5584, %v5568, %v4694
      %v5614 = vsel %vm5584, %v5569, %v4696
      %v5615 = vsel %vm5584, %v5570, %v4698
      %v5616 = vsel %vm5584, %v5571, %v4700
      %v5617 = vsel %vm5584, %v5572, %v4702
      %v5618 = vsel %vm5584, %v5573, %v4704
      %v5619 = vsel %vm5584, %v5574, %v4706
      %v5620 = vsel %vm5584, %v5575, %v4708
      %v5621 = vsel %vm5584, %v5576, %v4710
      %v5622 = vsel %vm5584, %v5577, %v4712
      %v5623 = vsel %vm5584, %v5578, %v4714
      %v5624 = vsel %vm5584, %v5579, %v4716
      %v5625 = vsel %vm5584, %v5580, %v4718
      %v5626 = vsel %vm5584, %v5581, %v4720
      %v5627 = vsel %vm5584, %v5582, %v4722
      %v5628 = vsel %vm5584, %v5583, %v4724
      %v5629 = vsel %vm387, %v5585, %v4880
      %v5630 = vsel %vm387, %v5586, %v4882
      %v5631 = vsel %vm387, %v5587, %v4884
      %v5632 = vsel %vm387, %v5588, %v4886
      %v5633 = vsel %vm387, %v5589, %v4888
      %v5634 = vsel %vm387, %v5590, %v4890
      %v5635 = vsel %vm387, %v5591, %v4892
      %v5636 = vsel %vm387, %v5592, %v4894
      %v5637 = vsel %vm387, %v5593, %v4896
      %v5638 = vsel %vm387, %v5594, %v4898
      %v5639 = vsel %vm387, %v5595, %v4900
      %v5640 = vsel %vm387, %v5596, %v4902
      %v5641 = vsel %vm387, %v5597, %v4904
      %v5642 = vsel %vm387, %v5598, %v4906
      %v5643 = vsel %vm387, %v5599, %v4908
      %v5644 = vsel %vm387, %v5600, %v4910
      %v5645 = vsel %vm387, %v5601, %v4912
      %v5646 = vsel %vm387, %v5602, %v4914
      %v5647 = vsel %vm387, %v5603, %v4916
      %v5648 = vsel %vm387, %v5604, %v4918
      %v5649 = vsel %vm387, %v5605, %v4920
      %v5650 = vsel %vm387, %v5606, %v4922
      %v5651 = vsel %vm387, %v5607, %v4924
      %v5652 = vsel %vm387, %v5608, %v4926
      %v5653 = vsel %vm387, %v5609, %v4928
      %v5654 = vsel %vm387, %v5610, %v4930
      %v5655 = vsel %vm387, %v5611, %v4932
      %v5656 = vsel %vm387, %v5612, %v4934
      %v5657 = vsel %vm387, %v5613, %v4936
      %v5658 = vsel %vm387, %v5614, %v4938
      %v5659 = vsel %vm387, %v5615, %v4940
      %v5660 = vsel %vm387, %v5616, %v4942
      %v5661 = vsel %vm387, %v5617, %v4944
      %v5662 = vsel %vm387, %v5618, %v4946
      %v5663 = vsel %vm387, %v5619, %v4948
      %v5664 = vsel %vm387, %v5620, %v4950
      %v5665 = vsel %vm387, %v5621, %v4952
      %v5666 = vsel %vm387, %v5622, %v4954
      %v5667 = vsel %vm387, %v5623, %v4956
      %v5668 = vsel %vm387, %v5624, %v4958
      %v5669 = vsel %vm387, %v5625, %v4960
      %v5670 = vsel %vm387, %v5626, %v4962
      %v5671 = vsel %vm387, %v5627, %v4964
      %v5672 = vsel %vm387, %v5628, %v4966
      %vm5673 = vcmask 326656
      %v5674 = vsel %vm5673, %v5629, %v5122
      %v5675 = vsel %vm5673, %v5630, %v5124
      %v5676 = vsel %vm5673, %v5631, %v5126
      %v5677 = vsel %vm5673, %v5632, %v5128
      %v5678 = vsel %vm5673, %v5633, %v5130
      %v5679 = vsel %vm5673, %v5634, %v5132
      %v5680 = vsel %vm5673, %v5635, %v5134
      %v5681 = vsel %vm5673, %v5636, %v5136
      %v5682 = vsel %vm5673, %v5637, %v5138
      %v5683 = vsel %vm5673, %v5638, %v5140
      %v5684 = vsel %vm5673, %v5639, %v5142
      %v5685 = vsel %vm5673, %v5640, %v5144
      %v5686 = vsel %vm5673, %v5641, %v5146
      %v5687 = vsel %vm5673, %v5642, %v5148
      %v5688 = vsel %vm5673, %v5643, %v5150
      %v5689 = vsel %vm5673, %v5644, %v5152
      %v5690 = vsel %vm5673, %v5645, %v5154
      %v5691 = vsel %vm5673, %v5646, %v5156
      %v5692 = vsel %vm5673, %v5647, %v5158
      %v5693 = vsel %vm5673, %v5648, %v5160
      %v5694 = vsel %vm5673, %v5649, %v5162
      %v5695 = vsel %vm5673, %v5650, %v5164
      %v5696 = vsel %vm5673, %v5651, %v5166
      %v5697 = vsel %vm5673, %v5652, %v5168
      %v5698 = vsel %vm5673, %v5653, %v5170
      %v5699 = vsel %vm5673, %v5654, %v5172
      %v5700 = vsel %vm5673, %v5655, %v5174
      %v5701 = vsel %vm5673, %v5656, %v5176
      %v5702 = vsel %vm5673, %v5657, %v5178
      %v5703 = vsel %vm5673, %v5658, %v5180
      %v5704 = vsel %vm5673, %v5659, %v5182
      %v5705 = vsel %vm5673, %v5660, %v5184
      %v5706 = vsel %vm5673, %v5661, %v5186
      %v5707 = vsel %vm5673, %v5662, %v5188
      %v5708 = vsel %vm5673, %v5663, %v5190
      %v5709 = vsel %vm5673, %v5664, %v5192
      %v5710 = vsel %vm5673, %v5665, %v5194
      %v5711 = vsel %vm5673, %v5666, %v5196
      %v5712 = vsel %vm5673, %v5667, %v5198
      %v5713 = vsel %vm5673, %v5668, %v5200
      %v5714 = vsel %vm5673, %v5669, %v5202
      %v5715 = vsel %vm5673, %v5670, %v5204
      %v5716 = vsel %vm5673, %v5671, %v5206
      %v5717 = vsel %vm5673, %v5672, %v5208
      %vm5718 = vcmask 392192
      %v5719 = vsel %vm5718, %v5674, %v5364
      %v5720 = vsel %vm5718, %v5675, %v5366
      %v5721 = vsel %vm5718, %v5676, %v5368
      %v5722 = vsel %vm5718, %v5677, %v5370
      %v5723 = vsel %vm5718, %v5678, %v5372
      %v5724 = vsel %vm5718, %v5679, %v5374
      %v5725 = vsel %vm5718, %v5680, %v5376
      %v5726 = vsel %vm5718, %v5681, %v5378
      %v5727 = vsel %vm5718, %v5682, %v5380
      %v5728 = vsel %vm5718, %v5683, %v5382
      %v5729 = vsel %vm5718, %v5684, %v5384
      %v5730 = vsel %vm5718, %v5685, %v5386
      %v5731 = vsel %vm5718, %v5686, %v5388
      %v5732 = vsel %vm5718, %v5687, %v5390
      %v5733 = vsel %vm5718, %v5688, %v5392
      %v5734 = vsel %vm5718, %v5689, %v5394
      %v5735 = vsel %vm5718, %v5690, %v5396
      %v5736 = vsel %vm5718, %v5691, %v5398
      %v5737 = vsel %vm5718, %v5692, %v5400
      %v5738 = vsel %vm5718, %v5693, %v5402
      %v5739 = vsel %vm5718, %v5694, %v5404
      %v5740 = vsel %vm5718, %v5695, %v5406
      %v5741 = vsel %vm5718, %v5696, %v5408
      %v5742 = vsel %vm5718, %v5697, %v5410
      %v5743 = vsel %vm5718, %v5698, %v5412
      %v5744 = vsel %vm5718, %v5699, %v5414
      %v5745 = vsel %vm5718, %v5700, %v5416
      %v5746 = vsel %vm5718, %v5701, %v5418
      %v5747 = vsel %vm5718, %v5702, %v5420
      %v5748 = vsel %vm5718, %v5703, %v5422
      %v5749 = vsel %vm5718, %v5704, %v5424
      %v5750 = vsel %vm5718, %v5705, %v5426
      %v5751 = vsel %vm5718, %v5706, %v5428
      %v5752 = vsel %vm5718, %v5707, %v5430
      %v5753 = vsel %vm5718, %v5708, %v5432
      %v5754 = vsel %vm5718, %v5709, %v5434
      %v5755 = vsel %vm5718, %v5710, %v5436
      %v5756 = vsel %vm5718, %v5711, %v5438
      %v5757 = vsel %vm5718, %v5712, %v5440
      %v5758 = vsel %vm5718, %v5713, %v5442
      %v5759 = vsel %vm5718, %v5714, %v5444
      %v5760 = vsel %vm5718, %v5715, %v5446
      %v5761 = vsel %vm5718, %v5716, %v5448
      %v5762 = vsel %vm5718, %v5717, %v5450
      %v5763 = vld [vmem:[%s8] sm:$0xff]
      %v5764 = vld [vmem:[%s8 + $0x8] sm:$0xff]
      %v5765 = vld [vmem:[%s8 + $0x10] sm:$0xff]
      %v5766 = vld [vmem:[%s8 + $0x18] sm:$0xff]
      %v5767 = vld [vmem:[%s8 + $0x20] sm:$0xff]
      %v5768 = vld [vmem:[%s8 + $0x28] sm:$0xff]
      %v5769 = vld [vmem:[%s8 + $0x30] sm:$0xff]
      %v5770 = vld [vmem:[%s8 + $0x38] sm:$0xff]
      %v5771 = vld [vmem:[%s8 + $0x40] sm:$0xff]
      %v5772 = vld [vmem:[%s8 + $0x48] sm:$0xff]
      %v5773 = vld [vmem:[%s8 + $0x50] sm:$0xff]
      %v5774 = vld [vmem:[%s8 + $0x58] sm:$0xff]
      %v5775 = vld [vmem:[%s8 + $0x60] sm:$0xff]
      %v5776 = vld [vmem:[%s8 + $0x68] sm:$0xff]
      %vm5777 = vcmask 457728
      %v5779 = vsel %vm5777, %v5719, 0
      %v5782 = vsel %vm5777, %v5720, 0
      %v5785 = vsel %vm5777, %v5721, 0
      %v5788 = vsel %vm5777, %v5722, 0
      %v5791 = vsel %vm5777, %v5723, 0
      %v5794 = vsel %vm5777, %v5724, 0
      %v5797 = vsel %vm5777, %v5725, 0
      %v5800 = vsel %vm5777, %v5726, 0
      %v5803 = vsel %vm5777, %v5727, 0
      %v5806 = vsel %vm5777, %v5728, 0
      %v5809 = vsel %vm5777, %v5729, 0
      %v5812 = vsel %vm5777, %v5730, 0
      %v5815 = vsel %vm5777, %v5731, 0
      %v5818 = vsel %vm5777, %v5732, 0
      %v5821 = vsel %vm5777, %v5733, 0
      %v5824 = vsel %vm5777, %v5734, 0
      %v5827 = vsel %vm5777, %v5735, 0
      %v5830 = vsel %vm5777, %v5736, 0
      %v5833 = vsel %vm5777, %v5737, 0
      %v5836 = vsel %vm5777, %v5738, 0
      %v5839 = vsel %vm5777, %v5739, 0
      %v5842 = vsel %vm5777, %v5740, 0
      %v5845 = vsel %vm5777, %v5741, 0
      %v5848 = vsel %vm5777, %v5742, 0
      %v5851 = vsel %vm5777, %v5743, 0
      %v5854 = vsel %vm5777, %v5744, 0
      %v5857 = vsel %vm5777, %v5745, 0
      %v5860 = vsel %vm5777, %v5746, 0
      %v5863 = vsel %vm5777, %v5747, 0
      %v5866 = vsel %vm5777, %v5748, 0
      %v5869 = vsel %vm5777, %v5749, 0
      %v5872 = vsel %vm5777, %v5750, 0
      %v5875 = vsel %vm5777, %v5751, 0
      %v5878 = vsel %vm5777, %v5752, 0
      %v5881 = vsel %vm5777, %v5753, 0
      %v5884 = vsel %vm5777, %v5754, 0
      %v5887 = vsel %vm5777, %v5755, 0
      %v5890 = vsel %vm5777, %v5756, 0
      %v5893 = vsel %vm5777, %v5757, 0
      %v5896 = vsel %vm5777, %v5758, 0
      %v5899 = vsel %vm5777, %v5759, 0
      %v5902 = vsel %vm5777, %v5760, 0
      %v5905 = vsel %vm5777, %v5761, 0
      %v5908 = vsel %vm5777, %v5762, 0
      %5910 = vmatpush.msra.mxu0 0.0
      %5911 = vmatpush.msra.mxu0 0.0
      %5912 = vmatpush.msra.mxu0 0.0
      %5913 = vmatpush.msra.mxu0 0.0
      %5914 = vmatpush.msra.mxu0 0.0
      %5915 = vmatpush.msra.mxu0 0.0
      %5916 = vmatpush.msra.mxu0 0.0
      %5917 = vmatpush.msra.mxu0 0.0
      %5918 = vmatpush.msra.mxu0 0.0
      %5919 = vmatpush.msra.mxu0 %v5775
      %5920 = vmatpush.msra.mxu0 %v5773
      %5921 = vmatpush.msra.mxu0 %v5771
      %5922 = vmatpush.msra.mxu0 %v5769
      %5923 = vmatpush.msra.mxu0 %v5767
      %5924 = vmatpush.msra.mxu0 %v5765
      %5925 = vmatpush.msra.mxu0 %v5763
      %5926 = vmatmul.f32.gmra.mxu0 %v5779
      %v5927 = vpop.f32.mrf.mxu0
      %v5928 = vadd.f32 0.0, %v5927
      %5929 = vmatmul.f32.gmra.mxu0 %v5782
      %v5930 = vpop.f32.mrf.mxu0
      %v5931 = vadd.f32 0.0, %v5930
      %5932 = vmatmul.f32.gmra.mxu0 %v5785
      %v5933 = vpop.f32.mrf.mxu0
      %v5934 = vadd.f32 0.0, %v5933
      %5935 = vmatmul.f32.gmra.mxu0 %v5788
      %v5936 = vpop.f32.mrf.mxu0
      %v5937 = vadd.f32 0.0, %v5936
      %5938 = vmatmul.f32.gmra.mxu0 %v5791
      %v5939 = vpop.f32.mrf.mxu0
      %v5940 = vadd.f32 0.0, %v5939
      %5941 = vmatmul.f32.gmra.mxu0 %v5794
      %v5942 = vpop.f32.mrf.mxu0
      %v5943 = vadd.f32 0.0, %v5942
      %5944 = vmatmul.f32.gmra.mxu0 %v5797
      %v5945 = vpop.f32.mrf.mxu0
      %v5946 = vadd.f32 0.0, %v5945
      %5947 = vmatmul.f32.gmra.mxu0 %v5800
      %v5948 = vpop.f32.mrf.mxu0
      %v5949 = vadd.f32 0.0, %v5948
      %5950 = vmatmul.f32.gmra.mxu0 %v5803
      %v5951 = vpop.f32.mrf.mxu0
      %v5952 = vadd.f32 0.0, %v5951
      %5953 = vmatmul.f32.gmra.mxu0 %v5806
      %v5954 = vpop.f32.mrf.mxu0
      %v5955 = vadd.f32 0.0, %v5954
      %5956 = vmatmul.f32.gmra.mxu0 %v5809
      %v5957 = vpop.f32.mrf.mxu0
      %v5958 = vadd.f32 0.0, %v5957
      %5959 = vmatmul.f32.gmra.mxu0 %v5812
      %v5960 = vpop.f32.mrf.mxu0
      %v5961 = vadd.f32 0.0, %v5960
      %5962 = vmatmul.f32.gmra.mxu0 %v5815
      %v5963 = vpop.f32.mrf.mxu0
      %v5964 = vadd.f32 0.0, %v5963
      %5965 = vmatmul.f32.gmra.mxu0 %v5818
      %v5966 = vpop.f32.mrf.mxu0
      %v5967 = vadd.f32 0.0, %v5966
      %5968 = vmatmul.f32.gmra.mxu0 %v5821
      %v5969 = vpop.f32.mrf.mxu0
      %v5970 = vadd.f32 0.0, %v5969
      %5971 = vmatmul.f32.gmra.mxu0 %v5824
      %v5972 = vpop.f32.mrf.mxu0
      %v5973 = vadd.f32 0.0, %v5972
      %5974 = vmatmul.f32.gmra.mxu0 %v5827
      %v5975 = vpop.f32.mrf.mxu0
      %v5976 = vadd.f32 0.0, %v5975
      %5977 = vmatmul.f32.gmra.mxu0 %v5830
      %v5978 = vpop.f32.mrf.mxu0
      %v5979 = vadd.f32 0.0, %v5978
      %5980 = vmatmul.f32.gmra.mxu0 %v5833
      %v5981 = vpop.f32.mrf.mxu0
      %v5982 = vadd.f32 0.0, %v5981
      %5983 = vmatmul.f32.gmra.mxu0 %v5836
      %v5984 = vpop.f32.mrf.mxu0
      %v5985 = vadd.f32 0.0, %v5984
      %5986 = vmatmul.f32.gmra.mxu0 %v5839
      %v5987 = vpop.f32.mrf.mxu0
      %v5988 = vadd.f32 0.0, %v5987
      %5989 = vmatmul.f32.gmra.mxu0 %v5842
      %v5990 = vpop.f32.mrf.mxu0
      %v5991 = vadd.f32 0.0, %v5990
      %5992 = vmatmul.f32.gmra.mxu0 %v5845
      %v5993 = vpop.f32.mrf.mxu0
      %v5994 = vadd.f32 0.0, %v5993
      %5995 = vmatmul.f32.gmra.mxu0 %v5848
      %v5996 = vpop.f32.mrf.mxu0
      %v5997 = vadd.f32 0.0, %v5996
      %5998 = vmatmul.f32.gmra.mxu0 %v5851
      %v5999 = vpop.f32.mrf.mxu0
      %v6000 = vadd.f32 0.0, %v5999
      %6001 = vmatmul.f32.gmra.mxu0 %v5854
      %v6002 = vpop.f32.mrf.mxu0
      %v6003 = vadd.f32 0.0, %v6002
      %6004 = vmatmul.f32.gmra.mxu0 %v5857
      %v6005 = vpop.f32.mrf.mxu0
      %v6006 = vadd.f32 0.0, %v6005
      %6007 = vmatmul.f32.gmra.mxu0 %v5860
      %v6008 = vpop.f32.mrf.mxu0
      %v6009 = vadd.f32 0.0, %v6008
      %6010 = vmatmul.f32.gmra.mxu0 %v5863
      %v6011 = vpop.f32.mrf.mxu0
      %v6012 = vadd.f32 0.0, %v6011
      %6013 = vmatmul.f32.gmra.mxu0 %v5866
      %v6014 = vpop.f32.mrf.mxu0
      %v6015 = vadd.f32 0.0, %v6014
      %6016 = vmatmul.f32.gmra.mxu0 %v5869
      %v6017 = vpop.f32.mrf.mxu0
      %v6018 = vadd.f32 0.0, %v6017
      %6019 = vmatmul.f32.gmra.mxu0 %v5872
      %v6020 = vpop.f32.mrf.mxu0
      %v6021 = vadd.f32 0.0, %v6020
      %6022 = vmatmul.f32.gmra.mxu0 %v5875
      %v6023 = vpop.f32.mrf.mxu0
      %v6024 = vadd.f32 0.0, %v6023
      %6025 = vmatmul.f32.gmra.mxu0 %v5878
      %v6026 = vpop.f32.mrf.mxu0
      %v6027 = vadd.f32 0.0, %v6026
      %6028 = vmatmul.f32.gmra.mxu0 %v5881
      %v6029 = vpop.f32.mrf.mxu0
      %v6030 = vadd.f32 0.0, %v6029
      %6031 = vmatmul.f32.gmra.mxu0 %v5884
      %v6032 = vpop.f32.mrf.mxu0
      %v6033 = vadd.f32 0.0, %v6032
      %6034 = vmatmul.f32.gmra.mxu0 %v5887
      %v6035 = vpop.f32.mrf.mxu0
      %v6036 = vadd.f32 0.0, %v6035
      %6037 = vmatmul.f32.gmra.mxu0 %v5890
      %v6038 = vpop.f32.mrf.mxu0
      %v6039 = vadd.f32 0.0, %v6038
      %6040 = vmatmul.f32.gmra.mxu0 %v5893
      %v6041 = vpop.f32.mrf.mxu0
      %6042 = vmatmul.f32.gmra.mxu0 %v5896
      %v6043 = vpop.f32.mrf.mxu0
      %6044 = vmatmul.f32.gmra.mxu0 %v5899
      %v6045 = vpop.f32.mrf.mxu0
      %6046 = vmatmul.f32.gmra.mxu0 %v5902
      %v6047 = vpop.f32.mrf.mxu0
      %6048 = vmatmul.f32.gmra.mxu0 %v5905
      %v6049 = vpop.f32.mrf.mxu0
      %6050 = vmatmul.f32.gmra.mxu0 %v5908
      %v6051 = vpop.f32.mrf.mxu0
      %6052 = vdwg.mxu0
      %6053 = vmatpush.msra.mxu0 0.0
      %6054 = vmatpush.msra.mxu0 0.0
      %6055 = vmatpush.msra.mxu0 0.0
      %6056 = vmatpush.msra.mxu0 0.0
      %6057 = vmatpush.msra.mxu0 0.0
      %6058 = vmatpush.msra.mxu0 0.0
      %6059 = vmatpush.msra.mxu0 0.0
      %6060 = vmatpush.msra.mxu0 0.0
      %6061 = vmatpush.msra.mxu0 0.0
      %6062 = vmatpush.msra.mxu0 %v5776
      %6063 = vmatpush.msra.mxu0 %v5774
      %6064 = vmatpush.msra.mxu0 %v5772
      %6065 = vmatpush.msra.mxu0 %v5770
      %6066 = vmatpush.msra.mxu0 %v5768
      %6067 = vmatpush.msra.mxu0 %v5766
      %6068 = vmatpush.msra.mxu0 %v5764
      %6069 = vmatmul.f32.gmra.mxu0 %v5779
      %v6070 = vpop.f32.mrf.mxu0
      %6071 = vmatmul.f32.gmra.mxu0 %v5782
      %v6072 = vpop.f32.mrf.mxu0
      %6073 = vmatmul.f32.gmra.mxu0 %v5785
      %v6074 = vpop.f32.mrf.mxu0
      %6075 = vmatmul.f32.gmra.mxu0 %v5788
      %v6076 = vpop.f32.mrf.mxu0
      %6077 = vmatmul.f32.gmra.mxu0 %v5791
      %v6078 = vpop.f32.mrf.mxu0
      %6079 = vmatmul.f32.gmra.mxu0 %v5794
      %v6080 = vpop.f32.mrf.mxu0
      %6081 = vmatmul.f32.gmra.mxu0 %v5797
      %v6082 = vpop.f32.mrf.mxu0
      %6083 = vmatmul.f32.gmra.mxu0 %v5800
      %v6084 = vpop.f32.mrf.mxu0
      %6085 = vmatmul.f32.gmra.mxu0 %v5803
      %v6086 = vpop.f32.mrf.mxu0
      %v6087 = vadd.f32 0.0, %v6086
      %6088 = vmatmul.f32.gmra.mxu0 %v5806
      %v6089 = vpop.f32.mrf.mxu0
      %v6090 = vadd.f32 0.0, %v6089
      %6091 = vmatmul.f32.gmra.mxu0 %v5809
      %v6092 = vpop.f32.mrf.mxu0
      %v6093 = vadd.f32 0.0, %v6092
      %6094 = vmatmul.f32.gmra.mxu0 %v5812
      %v6095 = vpop.f32.mrf.mxu0
      %v6096 = vadd.f32 0.0, %v6095
      %6097 = vmatmul.f32.gmra.mxu0 %v5815
      %v6098 = vpop.f32.mrf.mxu0
      %v6099 = vadd.f32 0.0, %v6098
      %6100 = vmatmul.f32.gmra.mxu0 %v5818
      %v6101 = vpop.f32.mrf.mxu0
      %v6102 = vadd.f32 0.0, %v6101
      %6103 = vmatmul.f32.gmra.mxu0 %v5821
      %v6104 = vpop.f32.mrf.mxu0
      %v6105 = vadd.f32 0.0, %v6104
      %6106 = vmatmul.f32.gmra.mxu0 %v5824
      %v6107 = vpop.f32.mrf.mxu0
      %v6108 = vadd.f32 0.0, %v6107
      %6109 = vmatmul.f32.gmra.mxu0 %v5827
      %v6110 = vpop.f32.mrf.mxu0
      %v6111 = vadd.f32 0.0, %v6110
      %6112 = vmatmul.f32.gmra.mxu0 %v5830
      %v6113 = vpop.f32.mrf.mxu0
      %v6114 = vadd.f32 0.0, %v6113
      %6115 = vmatmul.f32.gmra.mxu0 %v5833
      %v6116 = vpop.f32.mrf.mxu0
      %v6117 = vadd.f32 0.0, %v6116
      %6118 = vmatmul.f32.gmra.mxu0 %v5836
      %v6119 = vpop.f32.mrf.mxu0
      %v6120 = vadd.f32 0.0, %v6119
      %6121 = vmatmul.f32.gmra.mxu0 %v5839
      %v6122 = vpop.f32.mrf.mxu0
      %v6123 = vadd.f32 0.0, %v6122
      %6124 = vmatmul.f32.gmra.mxu0 %v5842
      %v6125 = vpop.f32.mrf.mxu0
      %v6126 = vadd.f32 0.0, %v6125
      %6127 = vmatmul.f32.gmra.mxu0 %v5845
      %v6128 = vpop.f32.mrf.mxu0
      %v6129 = vadd.f32 0.0, %v6128
      %6130 = vmatmul.f32.gmra.mxu0 %v5848
      %v6131 = vpop.f32.mrf.mxu0
      %v6132 = vadd.f32 0.0, %v6131
      %6133 = vmatmul.f32.gmra.mxu0 %v5851
      %v6134 = vpop.f32.mrf.mxu0
      %v6135 = vadd.f32 0.0, %v6134
      %6136 = vmatmul.f32.gmra.mxu0 %v5854
      %v6137 = vpop.f32.mrf.mxu0
      %v6138 = vadd.f32 0.0, %v6137
      %6139 = vmatmul.f32.gmra.mxu0 %v5857
      %v6140 = vpop.f32.mrf.mxu0
      %v6141 = vadd.f32 0.0, %v6140
      %6142 = vmatmul.f32.gmra.mxu0 %v5860
      %v6143 = vpop.f32.mrf.mxu0
      %v6144 = vadd.f32 0.0, %v6143
      %6145 = vmatmul.f32.gmra.mxu0 %v5863
      %v6146 = vpop.f32.mrf.mxu0
      %v6147 = vadd.f32 0.0, %v6146
      %6148 = vmatmul.f32.gmra.mxu0 %v5866
      %v6149 = vpop.f32.mrf.mxu0
      %v6150 = vadd.f32 0.0, %v6149
      %6151 = vmatmul.f32.gmra.mxu0 %v5869
      %v6152 = vpop.f32.mrf.mxu0
      %v6153 = vadd.f32 0.0, %v6152
      %6154 = vmatmul.f32.gmra.mxu0 %v5872
      %v6155 = vpop.f32.mrf.mxu0
      %v6156 = vadd.f32 0.0, %v6155
      %6157 = vmatmul.f32.gmra.mxu0 %v5875
      %v6158 = vpop.f32.mrf.mxu0
      %v6159 = vadd.f32 0.0, %v6158
      %6160 = vmatmul.f32.gmra.mxu0 %v5878
      %v6161 = vpop.f32.mrf.mxu0
      %v6162 = vadd.f32 0.0, %v6161
      %6163 = vmatmul.f32.gmra.mxu0 %v5881
      %v6164 = vpop.f32.mrf.mxu0
      %v6165 = vadd.f32 0.0, %v6164
      %6166 = vmatmul.f32.gmra.mxu0 %v5884
      %v6167 = vpop.f32.mrf.mxu0
      %v6168 = vadd.f32 0.0, %v6167
      %6169 = vmatmul.f32.gmra.mxu0 %v5887
      %v6170 = vpop.f32.mrf.mxu0
      %v6171 = vadd.f32 0.0, %v6170
      %6172 = vmatmul.f32.gmra.mxu0 %v5890
      %v6173 = vpop.f32.mrf.mxu0
      %v6174 = vadd.f32 0.0, %v6173
      %6175 = vmatmul.f32.gmra.mxu0 %v5893
      %v6176 = vpop.f32.mrf.mxu0
      %v6177 = vadd.f32 0.0, %v6176
      %6178 = vmatmul.f32.gmra.mxu0 %v5896
      %v6179 = vpop.f32.mrf.mxu0
      %v6180 = vadd.f32 0.0, %v6179
      %6181 = vmatmul.f32.gmra.mxu0 %v5899
      %v6182 = vpop.f32.mrf.mxu0
      %v6183 = vadd.f32 0.0, %v6182
      %6184 = vmatmul.f32.gmra.mxu0 %v5902
      %v6185 = vpop.f32.mrf.mxu0
      %v6186 = vadd.f32 0.0, %v6185
      %6187 = vmatmul.f32.gmra.mxu0 %v5905
      %v6188 = vpop.f32.mrf.mxu0
      %v6189 = vadd.f32 0.0, %v6188
      %6190 = vmatmul.f32.gmra.mxu0 %v5908
      %v6191 = vpop.f32.mrf.mxu0
      %v6192 = vadd.f32 0.0, %v6191
      %6193 = vdwg.mxu0
      %6226 = vrot.lane.b32.xlu0 %v5934, 96
      %v6227 = vpop.permute.xlu0 %6226
      %6228 = vrot.lane.b32.xlu0 %v5937, 96
      %v6229 = vpop.permute.xlu0 %6228
      %6230 = vrot.lane.b32.xlu0 %v5940, 96
      %v6231 = vpop.permute.xlu0 %6230
      %6232 = vrot.lane.b32.xlu0 %v5943, 96
      %v6233 = vpop.permute.xlu0 %6232
      %6234 = vrot.lane.b32.xlu0 %v5946, 96
      %v6235 = vpop.permute.xlu0 %6234
      %6236 = vrot.lane.b32.xlu0 %v5949, 96
      %v6237 = vpop.permute.xlu0 %6236
      %6238 = vrot.lane.b32.xlu0 %v5952, 96
      %v6239 = vpop.permute.xlu0 %6238
      %6240 = vrot.lane.b32.xlu0 %v5955, 96
      %v6241 = vpop.permute.xlu0 %6240
      %6242 = vrot.lane.b32.xlu0 %v5958, 96
      %v6243 = vpop.permute.xlu0 %6242
      %6244 = vrot.lane.b32.xlu0 %v5961, 96
      %v6245 = vpop.permute.xlu0 %6244
      %6246 = vrot.lane.b32.xlu0 %v5964, 96
      %v6247 = vpop.permute.xlu0 %6246
      %6248 = vrot.lane.b32.xlu0 %v5967, 96
      %v6249 = vpop.permute.xlu0 %6248
      %6250 = vrot.lane.b32.xlu0 %v5970, 96
      %v6251 = vpop.permute.xlu0 %6250
      %6252 = vrot.lane.b32.xlu0 %v5973, 96
      %v6253 = vpop.permute.xlu0 %6252
      %6254 = vrot.lane.b32.xlu0 %v5976, 96
      %v6255 = vpop.permute.xlu0 %6254
      %6256 = vrot.lane.b32.xlu0 %v5979, 96
      %v6257 = vpop.permute.xlu0 %6256
      %6258 = vrot.lane.b32.xlu0 %v5982, 96
      %v6259 = vpop.permute.xlu0 %6258
      %6260 = vrot.lane.b32.xlu0 %v5985, 96
      %v6261 = vpop.permute.xlu0 %6260
      %6262 = vrot.lane.b32.xlu0 %v5988, 96
      %v6263 = vpop.permute.xlu0 %6262
      %6264 = vrot.lane.b32.xlu0 %v5991, 96
      %v6265 = vpop.permute.xlu0 %6264
      %6266 = vrot.lane.b32.xlu0 %v5994, 96
      %v6267 = vpop.permute.xlu0 %6266
      %6268 = vrot.lane.b32.xlu0 %v5997, 96
      %v6269 = vpop.permute.xlu0 %6268
      %6270 = vrot.lane.b32.xlu0 %v6000, 96
      %v6271 = vpop.permute.xlu0 %6270
      %6272 = vrot.lane.b32.xlu0 %v6003, 96
      %v6273 = vpop.permute.xlu0 %6272
      %6274 = vrot.lane.b32.xlu0 %v6006, 96
      %v6275 = vpop.permute.xlu0 %6274
      %6276 = vrot.lane.b32.xlu0 %v6009, 96
      %v6277 = vpop.permute.xlu0 %6276
      %6278 = vrot.lane.b32.xlu0 %v6012, 96
      %v6279 = vpop.permute.xlu0 %6278
      %6280 = vrot.lane.b32.xlu0 %v6015, 96
      %v6281 = vpop.permute.xlu0 %6280
      %6282 = vrot.lane.b32.xlu0 %v6018, 96
      %v6283 = vpop.permute.xlu0 %6282
      %6284 = vrot.lane.b32.xlu0 %v6021, 96
      %v6285 = vpop.permute.xlu0 %6284
      %6286 = vrot.lane.b32.xlu0 %v6024, 96
      %v6287 = vpop.permute.xlu0 %6286
      %6288 = vrot.lane.b32.xlu0 %v6027, 96
      %v6289 = vpop.permute.xlu0 %6288
      %v6322 = vadd.f32 %v5928, %v6227
      %v6323 = vadd.f32 %v5931, %v6229
      %v6324 = vadd.f32 %v5934, %v6231
      %v6325 = vadd.f32 %v5937, %v6233
      %v6326 = vadd.f32 %v5940, %v6235
      %v6327 = vadd.f32 %v5943, %v6237
      %v6328 = vadd.f32 %v5946, %v6239
      %v6329 = vadd.f32 %v5949, %v6241
      %v6330 = vadd.f32 %v5952, %v6243
      %v6331 = vadd.f32 %v5955, %v6245
      %v6332 = vadd.f32 %v5958, %v6247
      %v6333 = vadd.f32 %v5961, %v6249
      %v6334 = vadd.f32 %v5964, %v6251
      %v6335 = vadd.f32 %v5967, %v6253
      %v6336 = vadd.f32 %v5970, %v6255
      %v6337 = vadd.f32 %v5973, %v6257
      %v6338 = vadd.f32 %v5976, %v6259
      %v6339 = vadd.f32 %v5979, %v6261
      %v6340 = vadd.f32 %v5982, %v6263
      %v6341 = vadd.f32 %v5985, %v6265
      %v6342 = vadd.f32 %v5988, %v6267
      %v6343 = vadd.f32 %v5991, %v6269
      %v6344 = vadd.f32 %v5994, %v6271
      %v6345 = vadd.f32 %v5997, %v6273
      %v6346 = vadd.f32 %v6000, %v6275
      %v6347 = vadd.f32 %v6003, %v6277
      %v6348 = vadd.f32 %v6006, %v6279
      %v6349 = vadd.f32 %v6009, %v6281
      %v6350 = vadd.f32 %v6012, %v6283
      %v6351 = vadd.f32 %v6015, %v6285
      %v6352 = vadd.f32 %v6018, %v6287
      %v6353 = vadd.f32 %v6021, %v6289
      %6356 = vrot.lane.b32.xlu0 %v5940, 64
      %v6357 = vpop.permute.xlu0 %6356
      %6358 = vrot.lane.b32.xlu0 %v5943, 64
      %v6359 = vpop.permute.xlu0 %6358
      %6360 = vrot.lane.b32.xlu0 %v5946, 64
      %v6361 = vpop.permute.xlu0 %6360
      %6362 = vrot.lane.b32.xlu0 %v5949, 64
      %v6363 = vpop.permute.xlu0 %6362
      %6364 = vrot.lane.b32.xlu0 %v5952, 64
      %v6365 = vpop.permute.xlu0 %6364
      %6366 = vrot.lane.b32.xlu0 %v5955, 64
      %v6367 = vpop.permute.xlu0 %6366
      %6368 = vrot.lane.b32.xlu0 %v5958, 64
      %v6369 = vpop.permute.xlu0 %6368
      %6370 = vrot.lane.b32.xlu0 %v5961, 64
      %v6371 = vpop.permute.xlu0 %6370
      %6372 = vrot.lane.b32.xlu0 %v5964, 64
      %v6373 = vpop.permute.xlu0 %6372
      %6374 = vrot.lane.b32.xlu0 %v5967, 64
      %v6375 = vpop.permute.xlu0 %6374
      %6376 = vrot.lane.b32.xlu0 %v5970, 64
      %v6377 = vpop.permute.xlu0 %6376
      %6378 = vrot.lane.b32.xlu0 %v5973, 64
      %v6379 = vpop.permute.xlu0 %6378
      %6380 = vrot.lane.b32.xlu0 %v5976, 64
      %v6381 = vpop.permute.xlu0 %6380
      %6382 = vrot.lane.b32.xlu0 %v5979, 64
      %v6383 = vpop.permute.xlu0 %6382
      %6384 = vrot.lane.b32.xlu0 %v5982, 64
      %v6385 = vpop.permute.xlu0 %6384
      %6386 = vrot.lane.b32.xlu0 %v5985, 64
      %v6387 = vpop.permute.xlu0 %6386
      %6388 = vrot.lane.b32.xlu0 %v5988, 64
      %v6389 = vpop.permute.xlu0 %6388
      %6390 = vrot.lane.b32.xlu0 %v5991, 64
      %v6391 = vpop.permute.xlu0 %6390
      %6392 = vrot.lane.b32.xlu0 %v5994, 64
      %v6393 = vpop.permute.xlu0 %6392
      %6394 = vrot.lane.b32.xlu0 %v5997, 64
      %v6395 = vpop.permute.xlu0 %6394
      %6396 = vrot.lane.b32.xlu0 %v6000, 64
      %v6397 = vpop.permute.xlu0 %6396
      %6398 = vrot.lane.b32.xlu0 %v6003, 64
      %v6399 = vpop.permute.xlu0 %6398
      %6400 = vrot.lane.b32.xlu0 %v6006, 64
      %v6401 = vpop.permute.xlu0 %6400
      %6402 = vrot.lane.b32.xlu0 %v6009, 64
      %v6403 = vpop.permute.xlu0 %6402
      %6404 = vrot.lane.b32.xlu0 %v6012, 64
      %v6405 = vpop.permute.xlu0 %6404
      %6406 = vrot.lane.b32.xlu0 %v6015, 64
      %v6407 = vpop.permute.xlu0 %6406
      %6408 = vrot.lane.b32.xlu0 %v6018, 64
      %v6409 = vpop.permute.xlu0 %6408
      %6410 = vrot.lane.b32.xlu0 %v6021, 64
      %v6411 = vpop.permute.xlu0 %6410
      %6412 = vrot.lane.b32.xlu0 %v6024, 64
      %v6413 = vpop.permute.xlu0 %6412
      %6414 = vrot.lane.b32.xlu0 %v6027, 64
      %v6415 = vpop.permute.xlu0 %6414
      %6416 = vrot.lane.b32.xlu0 %v6030, 64
      %v6417 = vpop.permute.xlu0 %6416
      %6418 = vrot.lane.b32.xlu0 %v6033, 64
      %v6419 = vpop.permute.xlu0 %6418
      %v6452 = vadd.f32 %v6322, %v6357
      %v6453 = vadd.f32 %v6323, %v6359
      %v6454 = vadd.f32 %v6324, %v6361
      %v6455 = vadd.f32 %v6325, %v6363
      %v6456 = vadd.f32 %v6326, %v6365
      %v6457 = vadd.f32 %v6327, %v6367
      %v6458 = vadd.f32 %v6328, %v6369
      %v6459 = vadd.f32 %v6329, %v6371
      %v6460 = vadd.f32 %v6330, %v6373
      %v6461 = vadd.f32 %v6331, %v6375
      %v6462 = vadd.f32 %v6332, %v6377
      %v6463 = vadd.f32 %v6333, %v6379
      %v6464 = vadd.f32 %v6334, %v6381
      %v6465 = vadd.f32 %v6335, %v6383
      %v6466 = vadd.f32 %v6336, %v6385
      %v6467 = vadd.f32 %v6337, %v6387
      %v6468 = vadd.f32 %v6338, %v6389
      %v6469 = vadd.f32 %v6339, %v6391
      %v6470 = vadd.f32 %v6340, %v6393
      %v6471 = vadd.f32 %v6341, %v6395
      %v6472 = vadd.f32 %v6342, %v6397
      %v6473 = vadd.f32 %v6343, %v6399
      %v6474 = vadd.f32 %v6344, %v6401
      %v6475 = vadd.f32 %v6345, %v6403
      %v6476 = vadd.f32 %v6346, %v6405
      %v6477 = vadd.f32 %v6347, %v6407
      %v6478 = vadd.f32 %v6348, %v6409
      %v6479 = vadd.f32 %v6349, %v6411
      %v6480 = vadd.f32 %v6350, %v6413
      %v6481 = vadd.f32 %v6351, %v6415
      %v6482 = vadd.f32 %v6352, %v6417
      %v6483 = vadd.f32 %v6353, %v6419
      %6486 = vrot.lane.b32.xlu0 %v5946, 32
      %v6487 = vpop.permute.xlu0 %6486
      %6488 = vrot.lane.b32.xlu0 %v5949, 32
      %v6489 = vpop.permute.xlu0 %6488
      %6490 = vrot.lane.b32.xlu0 %v5952, 32
      %v6491 = vpop.permute.xlu0 %6490
      %6492 = vrot.lane.b32.xlu0 %v5955, 32
      %v6493 = vpop.permute.xlu0 %6492
      %6494 = vrot.lane.b32.xlu0 %v5958, 32
      %v6495 = vpop.permute.xlu0 %6494
      %6496 = vrot.lane.b32.xlu0 %v5961, 32
      %v6497 = vpop.permute.xlu0 %6496
      %6498 = vrot.lane.b32.xlu0 %v5964, 32
      %v6499 = vpop.permute.xlu0 %6498
      %6500 = vrot.lane.b32.xlu0 %v5967, 32
      %v6501 = vpop.permute.xlu0 %6500
      %6502 = vrot.lane.b32.xlu0 %v5970, 32
      %v6503 = vpop.permute.xlu0 %6502
      %6504 = vrot.lane.b32.xlu0 %v5973, 32
      %v6505 = vpop.permute.xlu0 %6504
      %6506 = vrot.lane.b32.xlu0 %v5976, 32
      %v6507 = vpop.permute.xlu0 %6506
      %6508 = vrot.lane.b32.xlu0 %v5979, 32
      %v6509 = vpop.permute.xlu0 %6508
      %6510 = vrot.lane.b32.xlu0 %v5982, 32
      %v6511 = vpop.permute.xlu0 %6510
      %6512 = vrot.lane.b32.xlu0 %v5985, 32
      %v6513 = vpop.permute.xlu0 %6512
      %6514 = vrot.lane.b32.xlu0 %v5988, 32
      %v6515 = vpop.permute.xlu0 %6514
      %6516 = vrot.lane.b32.xlu0 %v5991, 32
      %v6517 = vpop.permute.xlu0 %6516
      %6518 = vrot.lane.b32.xlu0 %v5994, 32
      %v6519 = vpop.permute.xlu0 %6518
      %6520 = vrot.lane.b32.xlu0 %v5997, 32
      %v6521 = vpop.permute.xlu0 %6520
      %6522 = vrot.lane.b32.xlu0 %v6000, 32
      %v6523 = vpop.permute.xlu0 %6522
      %6524 = vrot.lane.b32.xlu0 %v6003, 32
      %v6525 = vpop.permute.xlu0 %6524
      %6526 = vrot.lane.b32.xlu0 %v6006, 32
      %v6527 = vpop.permute.xlu0 %6526
      %6528 = vrot.lane.b32.xlu0 %v6009, 32
      %v6529 = vpop.permute.xlu0 %6528
      %6530 = vrot.lane.b32.xlu0 %v6012, 32
      %v6531 = vpop.permute.xlu0 %6530
      %6532 = vrot.lane.b32.xlu0 %v6015, 32
      %v6533 = vpop.permute.xlu0 %6532
      %6534 = vrot.lane.b32.xlu0 %v6018, 32
      %v6535 = vpop.permute.xlu0 %6534
      %6536 = vrot.lane.b32.xlu0 %v6021, 32
      %v6537 = vpop.permute.xlu0 %6536
      %6538 = vrot.lane.b32.xlu0 %v6024, 32
      %v6539 = vpop.permute.xlu0 %6538
      %6540 = vrot.lane.b32.xlu0 %v6027, 32
      %v6541 = vpop.permute.xlu0 %6540
      %6542 = vrot.lane.b32.xlu0 %v6030, 32
      %v6543 = vpop.permute.xlu0 %6542
      %6544 = vrot.lane.b32.xlu0 %v6033, 32
      %v6545 = vpop.permute.xlu0 %6544
      %6546 = vrot.lane.b32.xlu0 %v6036, 32
      %v6547 = vpop.permute.xlu0 %6546
      %6548 = vrot.lane.b32.xlu0 %v6039, 32
      %v6549 = vpop.permute.xlu0 %6548
      %v6582 = vadd.f32 %v6452, %v6487
      %v6583 = vadd.f32 %v6453, %v6489
      %v6584 = vadd.f32 %v6454, %v6491
      %v6585 = vadd.f32 %v6455, %v6493
      %v6586 = vadd.f32 %v6456, %v6495
      %v6587 = vadd.f32 %v6457, %v6497
      %v6588 = vadd.f32 %v6458, %v6499
      %v6589 = vadd.f32 %v6459, %v6501
      %v6590 = vadd.f32 %v6460, %v6503
      %v6591 = vadd.f32 %v6461, %v6505
      %v6592 = vadd.f32 %v6462, %v6507
      %v6593 = vadd.f32 %v6463, %v6509
      %v6594 = vadd.f32 %v6464, %v6511
      %v6595 = vadd.f32 %v6465, %v6513
      %v6596 = vadd.f32 %v6466, %v6515
      %v6597 = vadd.f32 %v6467, %v6517
      %v6598 = vadd.f32 %v6468, %v6519
      %v6599 = vadd.f32 %v6469, %v6521
      %v6600 = vadd.f32 %v6470, %v6523
      %v6601 = vadd.f32 %v6471, %v6525
      %v6602 = vadd.f32 %v6472, %v6527
      %v6603 = vadd.f32 %v6473, %v6529
      %v6604 = vadd.f32 %v6474, %v6531
      %v6605 = vadd.f32 %v6475, %v6533
      %v6606 = vadd.f32 %v6476, %v6535
      %v6607 = vadd.f32 %v6477, %v6537
      %v6608 = vadd.f32 %v6478, %v6539
      %v6609 = vadd.f32 %v6479, %v6541
      %v6610 = vadd.f32 %v6480, %v6543
      %v6611 = vadd.f32 %v6481, %v6545
      %v6612 = vadd.f32 %v6482, %v6547
      %v6613 = vadd.f32 %v6483, %v6549
      %v6614 = vadd.f32 %v6582, %v6087
      %v6615 = vadd.f32 %v6583, %v6090
      %v6616 = vadd.f32 %v6584, %v6093
      %v6617 = vadd.f32 %v6585, %v6096
      %v6618 = vadd.f32 %v6586, %v6099
      %v6619 = vadd.f32 %v6587, %v6102
      %v6620 = vadd.f32 %v6588, %v6105
      %v6621 = vadd.f32 %v6589, %v6108
      %v6622 = vadd.f32 %v6590, %v6111
      %v6623 = vadd.f32 %v6591, %v6114
      %v6624 = vadd.f32 %v6592, %v6117
      %v6625 = vadd.f32 %v6593, %v6120
      %v6626 = vadd.f32 %v6594, %v6123
      %v6627 = vadd.f32 %v6595, %v6126
      %v6628 = vadd.f32 %v6596, %v6129
      %v6629 = vadd.f32 %v6597, %v6132
      %v6630 = vadd.f32 %v6598, %v6135
      %v6631 = vadd.f32 %v6599, %v6138
      %v6632 = vadd.f32 %v6600, %v6141
      %v6633 = vadd.f32 %v6601, %v6144
      %v6634 = vadd.f32 %v6602, %v6147
      %v6635 = vadd.f32 %v6603, %v6150
      %v6636 = vadd.f32 %v6604, %v6153
      %v6637 = vadd.f32 %v6605, %v6156
      %v6638 = vadd.f32 %v6606, %v6159
      %v6639 = vadd.f32 %v6607, %v6162
      %v6640 = vadd.f32 %v6608, %v6165
      %v6641 = vadd.f32 %v6609, %v6168
      %v6642 = vadd.f32 %v6610, %v6171
      %v6643 = vadd.f32 %v6611, %v6174
      %v6644 = vadd.f32 %v6612, %v6177
      %v6645 = vadd.f32 %v6613, %v6180
      %6678 = vrot.lane.b32.xlu0 %v6093, 96
      %v6679 = vpop.permute.xlu0 %6678
      %6680 = vrot.lane.b32.xlu0 %v6096, 96
      %v6681 = vpop.permute.xlu0 %6680
      %6682 = vrot.lane.b32.xlu0 %v6099, 96
      %v6683 = vpop.permute.xlu0 %6682
      %6684 = vrot.lane.b32.xlu0 %v6102, 96
      %v6685 = vpop.permute.xlu0 %6684
      %6686 = vrot.lane.b32.xlu0 %v6105, 96
      %v6687 = vpop.permute.xlu0 %6686
      %6688 = vrot.lane.b32.xlu0 %v6108, 96
      %v6689 = vpop.permute.xlu0 %6688
      %6690 = vrot.lane.b32.xlu0 %v6111, 96
      %v6691 = vpop.permute.xlu0 %6690
      %6692 = vrot.lane.b32.xlu0 %v6114, 96
      %v6693 = vpop.permute.xlu0 %6692
      %6694 = vrot.lane.b32.xlu0 %v6117, 96
      %v6695 = vpop.permute.xlu0 %6694
      %6696 = vrot.lane.b32.xlu0 %v6120, 96
      %v6697 = vpop.permute.xlu0 %6696
      %6698 = vrot.lane.b32.xlu0 %v6123, 96
      %v6699 = vpop.permute.xlu0 %6698
      %6700 = vrot.lane.b32.xlu0 %v6126, 96
      %v6701 = vpop.permute.xlu0 %6700
      %6702 = vrot.lane.b32.xlu0 %v6129, 96
      %v6703 = vpop.permute.xlu0 %6702
      %6704 = vrot.lane.b32.xlu0 %v6132, 96
      %v6705 = vpop.permute.xlu0 %6704
      %6706 = vrot.lane.b32.xlu0 %v6135, 96
      %v6707 = vpop.permute.xlu0 %6706
      %6708 = vrot.lane.b32.xlu0 %v6138, 96
      %v6709 = vpop.permute.xlu0 %6708
      %6710 = vrot.lane.b32.xlu0 %v6141, 96
      %v6711 = vpop.permute.xlu0 %6710
      %6712 = vrot.lane.b32.xlu0 %v6144, 96
      %v6713 = vpop.permute.xlu0 %6712
      %6714 = vrot.lane.b32.xlu0 %v6147, 96
      %v6715 = vpop.permute.xlu0 %6714
      %6716 = vrot.lane.b32.xlu0 %v6150, 96
      %v6717 = vpop.permute.xlu0 %6716
      %6718 = vrot.lane.b32.xlu0 %v6153, 96
      %v6719 = vpop.permute.xlu0 %6718
      %6720 = vrot.lane.b32.xlu0 %v6156, 96
      %v6721 = vpop.permute.xlu0 %6720
      %6722 = vrot.lane.b32.xlu0 %v6159, 96
      %v6723 = vpop.permute.xlu0 %6722
      %6724 = vrot.lane.b32.xlu0 %v6162, 96
      %v6725 = vpop.permute.xlu0 %6724
      %6726 = vrot.lane.b32.xlu0 %v6165, 96
      %v6727 = vpop.permute.xlu0 %6726
      %6728 = vrot.lane.b32.xlu0 %v6168, 96
      %v6729 = vpop.permute.xlu0 %6728
      %6730 = vrot.lane.b32.xlu0 %v6171, 96
      %v6731 = vpop.permute.xlu0 %6730
      %6732 = vrot.lane.b32.xlu0 %v6174, 96
      %v6733 = vpop.permute.xlu0 %6732
      %6734 = vrot.lane.b32.xlu0 %v6177, 96
      %v6735 = vpop.permute.xlu0 %6734
      %6736 = vrot.lane.b32.xlu0 %v6180, 96
      %v6737 = vpop.permute.xlu0 %6736
      %6738 = vrot.lane.b32.xlu0 %v6183, 96
      %v6739 = vpop.permute.xlu0 %6738
      %6740 = vrot.lane.b32.xlu0 %v6186, 96
      %v6741 = vpop.permute.xlu0 %6740
      %v6774 = vadd.f32 %v6614, %v6679
      %v6775 = vadd.f32 %v6615, %v6681
      %v6776 = vadd.f32 %v6616, %v6683
      %v6777 = vadd.f32 %v6617, %v6685
      %v6778 = vadd.f32 %v6618, %v6687
      %v6779 = vadd.f32 %v6619, %v6689
      %v6780 = vadd.f32 %v6620, %v6691
      %v6781 = vadd.f32 %v6621, %v6693
      %v6782 = vadd.f32 %v6622, %v6695
      %v6783 = vadd.f32 %v6623, %v6697
      %v6784 = vadd.f32 %v6624, %v6699
      %v6785 = vadd.f32 %v6625, %v6701
      %v6786 = vadd.f32 %v6626, %v6703
      %v6787 = vadd.f32 %v6627, %v6705
      %v6788 = vadd.f32 %v6628, %v6707
      %v6789 = vadd.f32 %v6629, %v6709
      %v6790 = vadd.f32 %v6630, %v6711
      %v6791 = vadd.f32 %v6631, %v6713
      %v6792 = vadd.f32 %v6632, %v6715
      %v6793 = vadd.f32 %v6633, %v6717
      %v6794 = vadd.f32 %v6634, %v6719
      %v6795 = vadd.f32 %v6635, %v6721
      %v6796 = vadd.f32 %v6636, %v6723
      %v6797 = vadd.f32 %v6637, %v6725
      %v6798 = vadd.f32 %v6638, %v6727
      %v6799 = vadd.f32 %v6639, %v6729
      %v6800 = vadd.f32 %v6640, %v6731
      %v6801 = vadd.f32 %v6641, %v6733
      %v6802 = vadd.f32 %v6642, %v6735
      %v6803 = vadd.f32 %v6643, %v6737
      %v6804 = vadd.f32 %v6644, %v6739
      %v6805 = vadd.f32 %v6645, %v6741
      %6808 = vrot.lane.b32.xlu0 %v6099, 64
      %v6809 = vpop.permute.xlu0 %6808
      %6810 = vrot.lane.b32.xlu0 %v6102, 64
      %v6811 = vpop.permute.xlu0 %6810
      %6812 = vrot.lane.b32.xlu0 %v6105, 64
      %v6813 = vpop.permute.xlu0 %6812
      %6814 = vrot.lane.b32.xlu0 %v6108, 64
      %v6815 = vpop.permute.xlu0 %6814
      %6816 = vrot.lane.b32.xlu0 %v6111, 64
      %v6817 = vpop.permute.xlu0 %6816
      %6818 = vrot.lane.b32.xlu0 %v6114, 64
      %v6819 = vpop.permute.xlu0 %6818
      %6820 = vrot.lane.b32.xlu0 %v6117, 64
      %v6821 = vpop.permute.xlu0 %6820
      %6822 = vrot.lane.b32.xlu0 %v6120, 64
      %v6823 = vpop.permute.xlu0 %6822
      %6824 = vrot.lane.b32.xlu0 %v6123, 64
      %v6825 = vpop.permute.xlu0 %6824
      %6826 = vrot.lane.b32.xlu0 %v6126, 64
      %v6827 = vpop.permute.xlu0 %6826
      %6828 = vrot.lane.b32.xlu0 %v6129, 64
      %v6829 = vpop.permute.xlu0 %6828
      %6830 = vrot.lane.b32.xlu0 %v6132, 64
      %v6831 = vpop.permute.xlu0 %6830
      %6832 = vrot.lane.b32.xlu0 %v6135, 64
      %v6833 = vpop.permute.xlu0 %6832
      %6834 = vrot.lane.b32.xlu0 %v6138, 64
      %v6835 = vpop.permute.xlu0 %6834
      %6836 = vrot.lane.b32.xlu0 %v6141, 64
      %v6837 = vpop.permute.xlu0 %6836
      %6838 = vrot.lane.b32.xlu0 %v6144, 64
      %v6839 = vpop.permute.xlu0 %6838
      %6840 = vrot.lane.b32.xlu0 %v6147, 64
      %v6841 = vpop.permute.xlu0 %6840
      %6842 = vrot.lane.b32.xlu0 %v6150, 64
      %v6843 = vpop.permute.xlu0 %6842
      %6844 = vrot.lane.b32.xlu0 %v6153, 64
      %v6845 = vpop.permute.xlu0 %6844
      %6846 = vrot.lane.b32.xlu0 %v6156, 64
      %v6847 = vpop.permute.xlu0 %6846
      %6848 = vrot.lane.b32.xlu0 %v6159, 64
      %v6849 = vpop.permute.xlu0 %6848
      %6850 = vrot.lane.b32.xlu0 %v6162, 64
      %v6851 = vpop.permute.xlu0 %6850
      %6852 = vrot.lane.b32.xlu0 %v6165, 64
      %v6853 = vpop.permute.xlu0 %6852
      %6854 = vrot.lane.b32.xlu0 %v6168, 64
      %v6855 = vpop.permute.xlu0 %6854
      %6856 = vrot.lane.b32.xlu0 %v6171, 64
      %v6857 = vpop.permute.xlu0 %6856
      %6858 = vrot.lane.b32.xlu0 %v6174, 64
      %v6859 = vpop.permute.xlu0 %6858
      %6860 = vrot.lane.b32.xlu0 %v6177, 64
      %v6861 = vpop.permute.xlu0 %6860
      %6862 = vrot.lane.b32.xlu0 %v6180, 64
      %v6863 = vpop.permute.xlu0 %6862
      %6864 = vrot.lane.b32.xlu0 %v6183, 64
      %v6865 = vpop.permute.xlu0 %6864
      %6866 = vrot.lane.b32.xlu0 %v6186, 64
      %v6867 = vpop.permute.xlu0 %6866
      %6868 = vrot.lane.b32.xlu0 %v6189, 64
      %v6869 = vpop.permute.xlu0 %6868
      %6870 = vrot.lane.b32.xlu0 %v6192, 64
      %v6871 = vpop.permute.xlu0 %6870
      %v6904 = vadd.f32 %v6774, %v6809
      %v6905 = vadd.f32 %v6775, %v6811
      %v6906 = vadd.f32 %v6776, %v6813
      %v6907 = vadd.f32 %v6777, %v6815
      %v6908 = vadd.f32 %v6778, %v6817
      %v6909 = vadd.f32 %v6779, %v6819
      %v6910 = vadd.f32 %v6780, %v6821
      %v6911 = vadd.f32 %v6781, %v6823
      %v6912 = vadd.f32 %v6782, %v6825
      %v6913 = vadd.f32 %v6783, %v6827
      %v6914 = vadd.f32 %v6784, %v6829
      %v6915 = vadd.f32 %v6785, %v6831
      %v6916 = vadd.f32 %v6786, %v6833
      %v6917 = vadd.f32 %v6787, %v6835
      %v6918 = vadd.f32 %v6788, %v6837
      %v6919 = vadd.f32 %v6789, %v6839
      %v6920 = vadd.f32 %v6790, %v6841
      %v6921 = vadd.f32 %v6791, %v6843
      %v6922 = vadd.f32 %v6792, %v6845
      %v6923 = vadd.f32 %v6793, %v6847
      %v6924 = vadd.f32 %v6794, %v6849
      %v6925 = vadd.f32 %v6795, %v6851
      %v6926 = vadd.f32 %v6796, %v6853
      %v6927 = vadd.f32 %v6797, %v6855
      %v6928 = vadd.f32 %v6798, %v6857
      %v6929 = vadd.f32 %v6799, %v6859
      %v6930 = vadd.f32 %v6800, %v6861
      %v6931 = vadd.f32 %v6801, %v6863
      %v6932 = vadd.f32 %v6802, %v6865
      %v6933 = vadd.f32 %v6803, %v6867
      %v6934 = vadd.f32 %v6804, %v6869
      %v6935 = vadd.f32 %v6805, %v6871
      %v6936 = vld [vmem:[%s9] sm:$0x1]
      %v6938 = vperm.slane %v6936, 0
      %v6940 = vmul.f32 %v6904, %v6938
      %v6941 = vmul.f32 %v6905, %v6938
      %v6942 = vmul.f32 %v6906, %v6938
      %v6943 = vmul.f32 %v6907, %v6938
      %v6944 = vmul.f32 %v6908, %v6938
      %v6945 = vmul.f32 %v6909, %v6938
      %v6946 = vmul.f32 %v6910, %v6938
      %v6947 = vmul.f32 %v6911, %v6938
      %v6948 = vmul.f32 %v6912, %v6938
      %v6949 = vmul.f32 %v6913, %v6938
      %v6950 = vmul.f32 %v6914, %v6938
      %v6951 = vmul.f32 %v6915, %v6938
      %v6952 = vmul.f32 %v6916, %v6938
      %v6953 = vmul.f32 %v6917, %v6938
      %v6954 = vmul.f32 %v6918, %v6938
      %v6955 = vmul.f32 %v6919, %v6938
      %v6956 = vmul.f32 %v6920, %v6938
      %v6957 = vmul.f32 %v6921, %v6938
      %v6958 = vmul.f32 %v6922, %v6938
      %v6959 = vmul.f32 %v6923, %v6938
      %v6960 = vmul.f32 %v6924, %v6938
      %v6961 = vmul.f32 %v6925, %v6938
      %v6962 = vmul.f32 %v6926, %v6938
      %v6963 = vmul.f32 %v6927, %v6938
      %v6964 = vmul.f32 %v6928, %v6938
      %v6965 = vmul.f32 %v6929, %v6938
      %v6966 = vmul.f32 %v6930, %v6938
      %v6967 = vmul.f32 %v6931, %v6938
      %v6968 = vmul.f32 %v6932, %v6938
      %v6969 = vmul.f32 %v6933, %v6938
      %v6970 = vmul.f32 %v6934, %v6938
      %v6971 = vmul.f32 %v6935, %v6938
      %v6972 = vld [vmem:[%s10] sm:$0x1]
      %v6974 = vperm.slane %v6972, 0
      %v6976 = vadd.f32 %v6940, %v6974
      %v6977 = vadd.f32 %v6941, %v6974
      %v6978 = vadd.f32 %v6942, %v6974
      %v6979 = vadd.f32 %v6943, %v6974
      %v6980 = vadd.f32 %v6944, %v6974
      %v6981 = vadd.f32 %v6945, %v6974
      %v6982 = vadd.f32 %v6946, %v6974
      %v6983 = vadd.f32 %v6947, %v6974
      %v6984 = vadd.f32 %v6948, %v6974
      %v6985 = vadd.f32 %v6949, %v6974
      %v6986 = vadd.f32 %v6950, %v6974
      %v6987 = vadd.f32 %v6951, %v6974
      %v6988 = vadd.f32 %v6952, %v6974
      %v6989 = vadd.f32 %v6953, %v6974
      %v6990 = vadd.f32 %v6954, %v6974
      %v6991 = vadd.f32 %v6955, %v6974
      %v6992 = vadd.f32 %v6956, %v6974
      %v6993 = vadd.f32 %v6957, %v6974
      %v6994 = vadd.f32 %v6958, %v6974
      %v6995 = vadd.f32 %v6959, %v6974
      %v6996 = vadd.f32 %v6960, %v6974
      %v6997 = vadd.f32 %v6961, %v6974
      %v6998 = vadd.f32 %v6962, %v6974
      %v6999 = vadd.f32 %v6963, %v6974
      %v7000 = vadd.f32 %v6964, %v6974
      %v7001 = vadd.f32 %v6965, %v6974
      %v7002 = vadd.f32 %v6966, %v6974
      %v7003 = vadd.f32 %v6967, %v6974
      %v7004 = vadd.f32 %v6968, %v6974
      %v7005 = vadd.f32 %v6969, %v6974
      %v7006 = vadd.f32 %v6970, %v6974
      %v7007 = vadd.f32 %v6971, %v6974
      %v7008 = vxor.u32 %v6976, 2147483648
      %v7009 = vxor.u32 %v6977, 2147483648
      %v7010 = vxor.u32 %v6978, 2147483648
      %v7011 = vxor.u32 %v6979, 2147483648
      %v7012 = vxor.u32 %v6980, 2147483648
      %v7013 = vxor.u32 %v6981, 2147483648
      %v7014 = vxor.u32 %v6982, 2147483648
      %v7015 = vxor.u32 %v6983, 2147483648
      %v7016 = vxor.u32 %v6984, 2147483648
      %v7017 = vxor.u32 %v6985, 2147483648
      %v7018 = vxor.u32 %v6986, 2147483648
      %v7019 = vxor.u32 %v6987, 2147483648
      %v7020 = vxor.u32 %v6988, 2147483648
      %v7021 = vxor.u32 %v6989, 2147483648
      %v7022 = vxor.u32 %v6990, 2147483648
      %v7023 = vxor.u32 %v6991, 2147483648
      %v7024 = vxor.u32 %v6992, 2147483648
      %v7025 = vxor.u32 %v6993, 2147483648
      %v7026 = vxor.u32 %v6994, 2147483648
      %v7027 = vxor.u32 %v6995, 2147483648
      %v7028 = vxor.u32 %v6996, 2147483648
      %v7029 = vxor.u32 %v6997, 2147483648
      %v7030 = vxor.u32 %v6998, 2147483648
      %v7031 = vxor.u32 %v6999, 2147483648
      %v7032 = vxor.u32 %v7000, 2147483648
      %v7033 = vxor.u32 %v7001, 2147483648
      %v7034 = vxor.u32 %v7002, 2147483648
      %v7035 = vxor.u32 %v7003, 2147483648
      %v7036 = vxor.u32 %v7004, 2147483648
      %v7037 = vxor.u32 %v7005, 2147483648
      %v7038 = vxor.u32 %v7006, 2147483648
      %v7039 = vxor.u32 %v7007, 2147483648
      %v7040 = vmul.f32 %v7008, 1.442695
      %v7041 = vpow.pop %v7040
      %v7042 = vmul.f32 %v7009, 1.442695
      %v7043 = vpow.pop %v7042
      %v7044 = vmul.f32 %v7010, 1.442695
      %v7045 = vpow.pop %v7044
      %v7046 = vmul.f32 %v7011, 1.442695
      %v7047 = vpow.pop %v7046
      %v7048 = vmul.f32 %v7012, 1.442695
      %v7049 = vpow.pop %v7048
      %v7050 = vmul.f32 %v7013, 1.442695
      %v7051 = vpow.pop %v7050
      %v7052 = vmul.f32 %v7014, 1.442695
      %v7053 = vpow.pop %v7052
      %v7054 = vmul.f32 %v7015, 1.442695
      %v7055 = vpow.pop %v7054
      %v7056 = vmul.f32 %v7016, 1.442695
      %v7057 = vpow.pop %v7056
      %v7058 = vmul.f32 %v7017, 1.442695
      %v7059 = vpow.pop %v7058
      %v7060 = vmul.f32 %v7018, 1.442695
      %v7061 = vpow.pop %v7060
      %v7062 = vmul.f32 %v7019, 1.442695
      %v7063 = vpow.pop %v7062
      %v7064 = vmul.f32 %v7020, 1.442695
      %v7065 = vpow.pop %v7064
      %v7066 = vmul.f32 %v7021, 1.442695
      %v7067 = vpow.pop %v7066
      %v7068 = vmul.f32 %v7022, 1.442695
      %v7069 = vpow.pop %v7068
      %v7070 = vmul.f32 %v7023, 1.442695
      %v7071 = vpow.pop %v7070
      %v7072 = vmul.f32 %v7024, 1.442695
      %v7073 = vpow.pop %v7072
      %v7074 = vmul.f32 %v7025, 1.442695
      %v7075 = vpow.pop %v7074
      %v7076 = vmul.f32 %v7026, 1.442695
      %v7077 = vpow.pop %v7076
      %v7078 = vmul.f32 %v7027, 1.442695
      %v7079 = vpow.pop %v7078
      %v7080 = vmul.f32 %v7028, 1.442695
      %v7081 = vpow.pop %v7080
      %v7082 = vmul.f32 %v7029, 1.442695
      %v7083 = vpow.pop %v7082
      %v7084 = vmul.f32 %v7030, 1.442695
      %v7085 = vpow.pop %v7084
      %v7086 = vmul.f32 %v7031, 1.442695
      %v7087 = vpow.pop %v7086
      %v7088 = vmul.f32 %v7032, 1.442695
      %v7089 = vpow.pop %v7088
      %v7090 = vmul.f32 %v7033, 1.442695
      %v7091 = vpow.pop %v7090
      %v7092 = vmul.f32 %v7034, 1.442695
      %v7093 = vpow.pop %v7092
      %v7094 = vmul.f32 %v7035, 1.442695
      %v7095 = vpow.pop %v7094
      %v7096 = vmul.f32 %v7036, 1.442695
      %v7097 = vpow.pop %v7096
      %v7098 = vmul.f32 %v7037, 1.442695
      %v7099 = vpow.pop %v7098
      %v7100 = vmul.f32 %v7038, 1.442695
      %v7101 = vpow.pop %v7100
      %v7102 = vmul.f32 %v7039, 1.442695
      %v7103 = vpow.pop %v7102
      %v7104 = vadd.f32 %v7041, 1.0
      %v7105 = vadd.f32 %v7043, 1.0
      %v7106 = vadd.f32 %v7045, 1.0
      %v7107 = vadd.f32 %v7047, 1.0
      %v7108 = vadd.f32 %v7049, 1.0
      %v7109 = vadd.f32 %v7051, 1.0
      %v7110 = vadd.f32 %v7053, 1.0
      %v7111 = vadd.f32 %v7055, 1.0
      %v7112 = vadd.f32 %v7057, 1.0
      %v7113 = vadd.f32 %v7059, 1.0
      %v7114 = vadd.f32 %v7061, 1.0
      %v7115 = vadd.f32 %v7063, 1.0
      %v7116 = vadd.f32 %v7065, 1.0
      %v7117 = vadd.f32 %v7067, 1.0
      %v7118 = vadd.f32 %v7069, 1.0
      %v7119 = vadd.f32 %v7071, 1.0
      %v7120 = vadd.f32 %v7073, 1.0
      %v7121 = vadd.f32 %v7075, 1.0
      %v7122 = vadd.f32 %v7077, 1.0
      %v7123 = vadd.f32 %v7079, 1.0
      %v7124 = vadd.f32 %v7081, 1.0
      %v7125 = vadd.f32 %v7083, 1.0
      %v7126 = vadd.f32 %v7085, 1.0
      %v7127 = vadd.f32 %v7087, 1.0
      %v7128 = vadd.f32 %v7089, 1.0
      %v7129 = vadd.f32 %v7091, 1.0
      %v7130 = vadd.f32 %v7093, 1.0
      %v7131 = vadd.f32 %v7095, 1.0
      %v7132 = vadd.f32 %v7097, 1.0
      %v7133 = vadd.f32 %v7099, 1.0
      %v7134 = vadd.f32 %v7101, 1.0
      %v7135 = vadd.f32 %v7103, 1.0
      %v7136 = vrcp.pop %v7104
      %v7137 = vmul.f32 %v7104, %v7136
      %v7138 = vsub.f32 1.0, %v7137
      %v7139 = vmul.f32 %v7136, %v7138
      %v7140 = vadd.f32 %v7136, %v7139
      %vm7141 = vweird.f32 %v7104
      %vm7142 = vweird.f32 %v7136
      %vm7143 = vmor %vm7141, %vm7142
      %v7144 = vsel %vm7143, %v7136, %v7140
      %v7145 = vand.u32 2147483647, %v7104
      %vm7146 = vcmp.eq.f32.partialorder %v7145, 8.507059e+37
      %v7147 = vand.u32 %v7104, 2147483648
      %v7148 = vor.u32 1.1754944e-38, %v7147
      %v7149 = vsel %vm7146, %v7148, %v7144
      %v7150 = vmul.f32 1.0, %v7149
      %v7151 = vrcp.pop %v7105
      %v7152 = vmul.f32 %v7105, %v7151
      %v7153 = vsub.f32 1.0, %v7152
      %v7154 = vmul.f32 %v7151, %v7153
      %v7155 = vadd.f32 %v7151, %v7154
      %vm7156 = vweird.f32 %v7105
      %vm7157 = vweird.f32 %v7151
      %vm7158 = vmor %vm7156, %vm7157
      %v7159 = vsel %vm7158, %v7151, %v7155
      %v7160 = vand.u32 2147483647, %v7105
      %vm7161 = vcmp.eq.f32.partialorder %v7160, 8.507059e+37
      %v7162 = vand.u32 %v7105, 2147483648
      %v7163 = vor.u32 1.1754944e-38, %v7162
      %v7164 = vsel %vm7161, %v7163, %v7159
      %v7165 = vmul.f32 1.0, %v7164
      %v7166 = vrcp.pop %v7106
      %v7167 = vmul.f32 %v7106, %v7166
      %v7168 = vsub.f32 1.0, %v7167
      %v7169 = vmul.f32 %v7166, %v7168
      %v7170 = vadd.f32 %v7166, %v7169
      %vm7171 = vweird.f32 %v7106
      %vm7172 = vweird.f32 %v7166
      %vm7173 = vmor %vm7171, %vm7172
      %v7174 = vsel %vm7173, %v7166, %v7170
      %v7175 = vand.u32 2147483647, %v7106
      %vm7176 = vcmp.eq.f32.partialorder %v7175, 8.507059e+37
      %v7177 = vand.u32 %v7106, 2147483648
      %v7178 = vor.u32 1.1754944e-38, %v7177
      %v7179 = vsel %vm7176, %v7178, %v7174
      %v7180 = vmul.f32 1.0, %v7179
      %v7181 = vrcp.pop %v7107
      %v7182 = vmul.f32 %v7107, %v7181
      %v7183 = vsub.f32 1.0, %v7182
      %v7184 = vmul.f32 %v7181, %v7183
      %v7185 = vadd.f32 %v7181, %v7184
      %vm7186 = vweird.f32 %v7107
      %vm7187 = vweird.f32 %v7181
      %vm7188 = vmor %vm7186, %vm7187
      %v7189 = vsel %vm7188, %v7181, %v7185
      %v7190 = vand.u32 2147483647, %v7107
      %vm7191 = vcmp.eq.f32.partialorder %v7190, 8.507059e+37
      %v7192 = vand.u32 %v7107, 2147483648
      %v7193 = vor.u32 1.1754944e-38, %v7192
      %v7194 = vsel %vm7191, %v7193, %v7189
      %v7195 = vmul.f32 1.0, %v7194
      %v7196 = vrcp.pop %v7108
      %v7197 = vmul.f32 %v7108, %v7196
      %v7198 = vsub.f32 1.0, %v7197
      %v7199 = vmul.f32 %v7196, %v7198
      %v7200 = vadd.f32 %v7196, %v7199
      %vm7201 = vweird.f32 %v7108
      %vm7202 = vweird.f32 %v7196
      %vm7203 = vmor %vm7201, %vm7202
      %v7204 = vsel %vm7203, %v7196, %v7200
      %v7205 = vand.u32 2147483647, %v7108
      %vm7206 = vcmp.eq.f32.partialorder %v7205, 8.507059e+37
      %v7207 = vand.u32 %v7108, 2147483648
      %v7208 = vor.u32 1.1754944e-38, %v7207
      %v7209 = vsel %vm7206, %v7208, %v7204
      %v7210 = vmul.f32 1.0, %v7209
      %v7211 = vrcp.pop %v7109
      %v7212 = vmul.f32 %v7109, %v7211
      %v7213 = vsub.f32 1.0, %v7212
      %v7214 = vmul.f32 %v7211, %v7213
      %v7215 = vadd.f32 %v7211, %v7214
      %vm7216 = vweird.f32 %v7109
      %vm7217 = vweird.f32 %v7211
      %vm7218 = vmor %vm7216, %vm7217
      %v7219 = vsel %vm7218, %v7211, %v7215
      %v7220 = vand.u32 2147483647, %v7109
      %vm7221 = vcmp.eq.f32.partialorder %v7220, 8.507059e+37
      %v7222 = vand.u32 %v7109, 2147483648
      %v7223 = vor.u32 1.1754944e-38, %v7222
      %v7224 = vsel %vm7221, %v7223, %v7219
      %v7225 = vmul.f32 1.0, %v7224
      %v7226 = vrcp.pop %v7110
      %v7227 = vmul.f32 %v7110, %v7226
      %v7228 = vsub.f32 1.0, %v7227
      %v7229 = vmul.f32 %v7226, %v7228
      %v7230 = vadd.f32 %v7226, %v7229
      %vm7231 = vweird.f32 %v7110
      %vm7232 = vweird.f32 %v7226
      %vm7233 = vmor %vm7231, %vm7232
      %v7234 = vsel %vm7233, %v7226, %v7230
      %v7235 = vand.u32 2147483647, %v7110
      %vm7236 = vcmp.eq.f32.partialorder %v7235, 8.507059e+37
      %v7237 = vand.u32 %v7110, 2147483648
      %v7238 = vor.u32 1.1754944e-38, %v7237
      %v7239 = vsel %vm7236, %v7238, %v7234
      %v7240 = vmul.f32 1.0, %v7239
      %v7241 = vrcp.pop %v7111
      %v7242 = vmul.f32 %v7111, %v7241
      %v7243 = vsub.f32 1.0, %v7242
      %v7244 = vmul.f32 %v7241, %v7243
      %v7245 = vadd.f32 %v7241, %v7244
      %vm7246 = vweird.f32 %v7111
      %vm7247 = vweird.f32 %v7241
      %vm7248 = vmor %vm7246, %vm7247
      %v7249 = vsel %vm7248, %v7241, %v7245
      %v7250 = vand.u32 2147483647, %v7111
      %vm7251 = vcmp.eq.f32.partialorder %v7250, 8.507059e+37
      %v7252 = vand.u32 %v7111, 2147483648
      %v7253 = vor.u32 1.1754944e-38, %v7252
      %v7254 = vsel %vm7251, %v7253, %v7249
      %v7255 = vmul.f32 1.0, %v7254
      %v7256 = vrcp.pop %v7112
      %v7257 = vmul.f32 %v7112, %v7256
      %v7258 = vsub.f32 1.0, %v7257
      %v7259 = vmul.f32 %v7256, %v7258
      %v7260 = vadd.f32 %v7256, %v7259
      %vm7261 = vweird.f32 %v7112
      %vm7262 = vweird.f32 %v7256
      %vm7263 = vmor %vm7261, %vm7262
      %v7264 = vsel %vm7263, %v7256, %v7260
      %v7265 = vand.u32 2147483647, %v7112
      %vm7266 = vcmp.eq.f32.partialorder %v7265, 8.507059e+37
      %v7267 = vand.u32 %v7112, 2147483648
      %v7268 = vor.u32 1.1754944e-38, %v7267
      %v7269 = vsel %vm7266, %v7268, %v7264
      %v7270 = vmul.f32 1.0, %v7269
      %v7271 = vrcp.pop %v7113
      %v7272 = vmul.f32 %v7113, %v7271
      %v7273 = vsub.f32 1.0, %v7272
      %v7274 = vmul.f32 %v7271, %v7273
      %v7275 = vadd.f32 %v7271, %v7274
      %vm7276 = vweird.f32 %v7113
      %vm7277 = vweird.f32 %v7271
      %vm7278 = vmor %vm7276, %vm7277
      %v7279 = vsel %vm7278, %v7271, %v7275
      %v7280 = vand.u32 2147483647, %v7113
      %vm7281 = vcmp.eq.f32.partialorder %v7280, 8.507059e+37
      %v7282 = vand.u32 %v7113, 2147483648
      %v7283 = vor.u32 1.1754944e-38, %v7282
      %v7284 = vsel %vm7281, %v7283, %v7279
      %v7285 = vmul.f32 1.0, %v7284
      %v7286 = vrcp.pop %v7114
      %v7287 = vmul.f32 %v7114, %v7286
      %v7288 = vsub.f32 1.0, %v7287
      %v7289 = vmul.f32 %v7286, %v7288
      %v7290 = vadd.f32 %v7286, %v7289
      %vm7291 = vweird.f32 %v7114
      %vm7292 = vweird.f32 %v7286
      %vm7293 = vmor %vm7291, %vm7292
      %v7294 = vsel %vm7293, %v7286, %v7290
      %v7295 = vand.u32 2147483647, %v7114
      %vm7296 = vcmp.eq.f32.partialorder %v7295, 8.507059e+37
      %v7297 = vand.u32 %v7114, 2147483648
      %v7298 = vor.u32 1.1754944e-38, %v7297
      %v7299 = vsel %vm7296, %v7298, %v7294
      %v7300 = vmul.f32 1.0, %v7299
      %v7301 = vrcp.pop %v7115
      %v7302 = vmul.f32 %v7115, %v7301
      %v7303 = vsub.f32 1.0, %v7302
      %v7304 = vmul.f32 %v7301, %v7303
      %v7305 = vadd.f32 %v7301, %v7304
      %vm7306 = vweird.f32 %v7115
      %vm7307 = vweird.f32 %v7301
      %vm7308 = vmor %vm7306, %vm7307
      %v7309 = vsel %vm7308, %v7301, %v7305
      %v7310 = vand.u32 2147483647, %v7115
      %vm7311 = vcmp.eq.f32.partialorder %v7310, 8.507059e+37
      %v7312 = vand.u32 %v7115, 2147483648
      %v7313 = vor.u32 1.1754944e-38, %v7312
      %v7314 = vsel %vm7311, %v7313, %v7309
      %v7315 = vmul.f32 1.0, %v7314
      %v7316 = vrcp.pop %v7116
      %v7317 = vmul.f32 %v7116, %v7316
      %v7318 = vsub.f32 1.0, %v7317
      %v7319 = vmul.f32 %v7316, %v7318
      %v7320 = vadd.f32 %v7316, %v7319
      %vm7321 = vweird.f32 %v7116
      %vm7322 = vweird.f32 %v7316
      %vm7323 = vmor %vm7321, %vm7322
      %v7324 = vsel %vm7323, %v7316, %v7320
      %v7325 = vand.u32 2147483647, %v7116
      %vm7326 = vcmp.eq.f32.partialorder %v7325, 8.507059e+37
      %v7327 = vand.u32 %v7116, 2147483648
      %v7328 = vor.u32 1.1754944e-38, %v7327
      %v7329 = vsel %vm7326, %v7328, %v7324
      %v7330 = vmul.f32 1.0, %v7329
      %v7331 = vrcp.pop %v7117
      %v7332 = vmul.f32 %v7117, %v7331
      %v7333 = vsub.f32 1.0, %v7332
      %v7334 = vmul.f32 %v7331, %v7333
      %v7335 = vadd.f32 %v7331, %v7334
      %vm7336 = vweird.f32 %v7117
      %vm7337 = vweird.f32 %v7331
      %vm7338 = vmor %vm7336, %vm7337
      %v7339 = vsel %vm7338, %v7331, %v7335
      %v7340 = vand.u32 2147483647, %v7117
      %vm7341 = vcmp.eq.f32.partialorder %v7340, 8.507059e+37
      %v7342 = vand.u32 %v7117, 2147483648
      %v7343 = vor.u32 1.1754944e-38, %v7342
      %v7344 = vsel %vm7341, %v7343, %v7339
      %v7345 = vmul.f32 1.0, %v7344
      %v7346 = vrcp.pop %v7118
      %v7347 = vmul.f32 %v7118, %v7346
      %v7348 = vsub.f32 1.0, %v7347
      %v7349 = vmul.f32 %v7346, %v7348
      %v7350 = vadd.f32 %v7346, %v7349
      %vm7351 = vweird.f32 %v7118
      %vm7352 = vweird.f32 %v7346
      %vm7353 = vmor %vm7351, %vm7352
      %v7354 = vsel %vm7353, %v7346, %v7350
      %v7355 = vand.u32 2147483647, %v7118
      %vm7356 = vcmp.eq.f32.partialorder %v7355, 8.507059e+37
      %v7357 = vand.u32 %v7118, 2147483648
      %v7358 = vor.u32 1.1754944e-38, %v7357
      %v7359 = vsel %vm7356, %v7358, %v7354
      %v7360 = vmul.f32 1.0, %v7359
      %v7361 = vrcp.pop %v7119
      %v7362 = vmul.f32 %v7119, %v7361
      %v7363 = vsub.f32 1.0, %v7362
      %v7364 = vmul.f32 %v7361, %v7363
      %v7365 = vadd.f32 %v7361, %v7364
      %vm7366 = vweird.f32 %v7119
      %vm7367 = vweird.f32 %v7361
      %vm7368 = vmor %vm7366, %vm7367
      %v7369 = vsel %vm7368, %v7361, %v7365
      %v7370 = vand.u32 2147483647, %v7119
      %vm7371 = vcmp.eq.f32.partialorder %v7370, 8.507059e+37
      %v7372 = vand.u32 %v7119, 2147483648
      %v7373 = vor.u32 1.1754944e-38, %v7372
      %v7374 = vsel %vm7371, %v7373, %v7369
      %v7375 = vmul.f32 1.0, %v7374
      %v7376 = vrcp.pop %v7120
      %v7377 = vmul.f32 %v7120, %v7376
      %v7378 = vsub.f32 1.0, %v7377
      %v7379 = vmul.f32 %v7376, %v7378
      %v7380 = vadd.f32 %v7376, %v7379
      %vm7381 = vweird.f32 %v7120
      %vm7382 = vweird.f32 %v7376
      %vm7383 = vmor %vm7381, %vm7382
      %v7384 = vsel %vm7383, %v7376, %v7380
      %v7385 = vand.u32 2147483647, %v7120
      %vm7386 = vcmp.eq.f32.partialorder %v7385, 8.507059e+37
      %v7387 = vand.u32 %v7120, 2147483648
      %v7388 = vor.u32 1.1754944e-38, %v7387
      %v7389 = vsel %vm7386, %v7388, %v7384
      %v7390 = vmul.f32 1.0, %v7389
      %v7391 = vrcp.pop %v7121
      %v7392 = vmul.f32 %v7121, %v7391
      %v7393 = vsub.f32 1.0, %v7392
      %v7394 = vmul.f32 %v7391, %v7393
      %v7395 = vadd.f32 %v7391, %v7394
      %vm7396 = vweird.f32 %v7121
      %vm7397 = vweird.f32 %v7391
      %vm7398 = vmor %vm7396, %vm7397
      %v7399 = vsel %vm7398, %v7391, %v7395
      %v7400 = vand.u32 2147483647, %v7121
      %vm7401 = vcmp.eq.f32.partialorder %v7400, 8.507059e+37
      %v7402 = vand.u32 %v7121, 2147483648
      %v7403 = vor.u32 1.1754944e-38, %v7402
      %v7404 = vsel %vm7401, %v7403, %v7399
      %v7405 = vmul.f32 1.0, %v7404
      %v7406 = vrcp.pop %v7122
      %v7407 = vmul.f32 %v7122, %v7406
      %v7408 = vsub.f32 1.0, %v7407
      %v7409 = vmul.f32 %v7406, %v7408
      %v7410 = vadd.f32 %v7406, %v7409
      %vm7411 = vweird.f32 %v7122
      %vm7412 = vweird.f32 %v7406
      %vm7413 = vmor %vm7411, %vm7412
      %v7414 = vsel %vm7413, %v7406, %v7410
      %v7415 = vand.u32 2147483647, %v7122
      %vm7416 = vcmp.eq.f32.partialorder %v7415, 8.507059e+37
      %v7417 = vand.u32 %v7122, 2147483648
      %v7418 = vor.u32 1.1754944e-38, %v7417
      %v7419 = vsel %vm7416, %v7418, %v7414
      %v7420 = vmul.f32 1.0, %v7419
      %v7421 = vrcp.pop %v7123
      %v7422 = vmul.f32 %v7123, %v7421
      %v7423 = vsub.f32 1.0, %v7422
      %v7424 = vmul.f32 %v7421, %v7423
      %v7425 = vadd.f32 %v7421, %v7424
      %vm7426 = vweird.f32 %v7123
      %vm7427 = vweird.f32 %v7421
      %vm7428 = vmor %vm7426, %vm7427
      %v7429 = vsel %vm7428, %v7421, %v7425
      %v7430 = vand.u32 2147483647, %v7123
      %vm7431 = vcmp.eq.f32.partialorder %v7430, 8.507059e+37
      %v7432 = vand.u32 %v7123, 2147483648
      %v7433 = vor.u32 1.1754944e-38, %v7432
      %v7434 = vsel %vm7431, %v7433, %v7429
      %v7435 = vmul.f32 1.0, %v7434
      %v7436 = vrcp.pop %v7124
      %v7437 = vmul.f32 %v7124, %v7436
      %v7438 = vsub.f32 1.0, %v7437
      %v7439 = vmul.f32 %v7436, %v7438
      %v7440 = vadd.f32 %v7436, %v7439
      %vm7441 = vweird.f32 %v7124
      %vm7442 = vweird.f32 %v7436
      %vm7443 = vmor %vm7441, %vm7442
      %v7444 = vsel %vm7443, %v7436, %v7440
      %v7445 = vand.u32 2147483647, %v7124
      %vm7446 = vcmp.eq.f32.partialorder %v7445, 8.507059e+37
      %v7447 = vand.u32 %v7124, 2147483648
      %v7448 = vor.u32 1.1754944e-38, %v7447
      %v7449 = vsel %vm7446, %v7448, %v7444
      %v7450 = vmul.f32 1.0, %v7449
      %v7451 = vrcp.pop %v7125
      %v7452 = vmul.f32 %v7125, %v7451
      %v7453 = vsub.f32 1.0, %v7452
      %v7454 = vmul.f32 %v7451, %v7453
      %v7455 = vadd.f32 %v7451, %v7454
      %vm7456 = vweird.f32 %v7125
      %vm7457 = vweird.f32 %v7451
      %vm7458 = vmor %vm7456, %vm7457
      %v7459 = vsel %vm7458, %v7451, %v7455
      %v7460 = vand.u32 2147483647, %v7125
      %vm7461 = vcmp.eq.f32.partialorder %v7460, 8.507059e+37
      %v7462 = vand.u32 %v7125, 2147483648
      %v7463 = vor.u32 1.1754944e-38, %v7462
      %v7464 = vsel %vm7461, %v7463, %v7459
      %v7465 = vmul.f32 1.0, %v7464
      %v7466 = vrcp.pop %v7126
      %v7467 = vmul.f32 %v7126, %v7466
      %v7468 = vsub.f32 1.0, %v7467
      %v7469 = vmul.f32 %v7466, %v7468
      %v7470 = vadd.f32 %v7466, %v7469
      %vm7471 = vweird.f32 %v7126
      %vm7472 = vweird.f32 %v7466
      %vm7473 = vmor %vm7471, %vm7472
      %v7474 = vsel %vm7473, %v7466, %v7470
      %v7475 = vand.u32 2147483647, %v7126
      %vm7476 = vcmp.eq.f32.partialorder %v7475, 8.507059e+37
      %v7477 = vand.u32 %v7126, 2147483648
      %v7478 = vor.u32 1.1754944e-38, %v7477
      %v7479 = vsel %vm7476, %v7478, %v7474
      %v7480 = vmul.f32 1.0, %v7479
      %v7481 = vrcp.pop %v7127
      %v7482 = vmul.f32 %v7127, %v7481
      %v7483 = vsub.f32 1.0, %v7482
      %v7484 = vmul.f32 %v7481, %v7483
      %v7485 = vadd.f32 %v7481, %v7484
      %vm7486 = vweird.f32 %v7127
      %vm7487 = vweird.f32 %v7481
      %vm7488 = vmor %vm7486, %vm7487
      %v7489 = vsel %vm7488, %v7481, %v7485
      %v7490 = vand.u32 2147483647, %v7127
      %vm7491 = vcmp.eq.f32.partialorder %v7490, 8.507059e+37
      %v7492 = vand.u32 %v7127, 2147483648
      %v7493 = vor.u32 1.1754944e-38, %v7492
      %v7494 = vsel %vm7491, %v7493, %v7489
      %v7495 = vmul.f32 1.0, %v7494
      %v7496 = vrcp.pop %v7128
      %v7497 = vmul.f32 %v7128, %v7496
      %v7498 = vsub.f32 1.0, %v7497
      %v7499 = vmul.f32 %v7496, %v7498
      %v7500 = vadd.f32 %v7496, %v7499
      %vm7501 = vweird.f32 %v7128
      %vm7502 = vweird.f32 %v7496
      %vm7503 = vmor %vm7501, %vm7502
      %v7504 = vsel %vm7503, %v7496, %v7500
      %v7505 = vand.u32 2147483647, %v7128
      %vm7506 = vcmp.eq.f32.partialorder %v7505, 8.507059e+37
      %v7507 = vand.u32 %v7128, 2147483648
      %v7508 = vor.u32 1.1754944e-38, %v7507
      %v7509 = vsel %vm7506, %v7508, %v7504
      %v7510 = vmul.f32 1.0, %v7509
      %v7511 = vrcp.pop %v7129
      %v7512 = vmul.f32 %v7129, %v7511
      %v7513 = vsub.f32 1.0, %v7512
      %v7514 = vmul.f32 %v7511, %v7513
      %v7515 = vadd.f32 %v7511, %v7514
      %vm7516 = vweird.f32 %v7129
      %vm7517 = vweird.f32 %v7511
      %vm7518 = vmor %vm7516, %vm7517
      %v7519 = vsel %vm7518, %v7511, %v7515
      %v7520 = vand.u32 2147483647, %v7129
      %vm7521 = vcmp.eq.f32.partialorder %v7520, 8.507059e+37
      %v7522 = vand.u32 %v7129, 2147483648
      %v7523 = vor.u32 1.1754944e-38, %v7522
      %v7524 = vsel %vm7521, %v7523, %v7519
      %v7525 = vmul.f32 1.0, %v7524
      %v7526 = vrcp.pop %v7130
      %v7527 = vmul.f32 %v7130, %v7526
      %v7528 = vsub.f32 1.0, %v7527
      %v7529 = vmul.f32 %v7526, %v7528
      %v7530 = vadd.f32 %v7526, %v7529
      %vm7531 = vweird.f32 %v7130
      %vm7532 = vweird.f32 %v7526
      %vm7533 = vmor %vm7531, %vm7532
      %v7534 = vsel %vm7533, %v7526, %v7530
      %v7535 = vand.u32 2147483647, %v7130
      %vm7536 = vcmp.eq.f32.partialorder %v7535, 8.507059e+37
      %v7537 = vand.u32 %v7130, 2147483648
      %v7538 = vor.u32 1.1754944e-38, %v7537
      %v7539 = vsel %vm7536, %v7538, %v7534
      %v7540 = vmul.f32 1.0, %v7539
      %v7541 = vrcp.pop %v7131
      %v7542 = vmul.f32 %v7131, %v7541
      %v7543 = vsub.f32 1.0, %v7542
      %v7544 = vmul.f32 %v7541, %v7543
      %v7545 = vadd.f32 %v7541, %v7544
      %vm7546 = vweird.f32 %v7131
      %vm7547 = vweird.f32 %v7541
      %vm7548 = vmor %vm7546, %vm7547
      %v7549 = vsel %vm7548, %v7541, %v7545
      %v7550 = vand.u32 2147483647, %v7131
      %vm7551 = vcmp.eq.f32.partialorder %v7550, 8.507059e+37
      %v7552 = vand.u32 %v7131, 2147483648
      %v7553 = vor.u32 1.1754944e-38, %v7552
      %v7554 = vsel %vm7551, %v7553, %v7549
      %v7555 = vmul.f32 1.0, %v7554
      %v7556 = vrcp.pop %v7132
      %v7557 = vmul.f32 %v7132, %v7556
      %v7558 = vsub.f32 1.0, %v7557
      %v7559 = vmul.f32 %v7556, %v7558
      %v7560 = vadd.f32 %v7556, %v7559
      %vm7561 = vweird.f32 %v7132
      %vm7562 = vweird.f32 %v7556
      %vm7563 = vmor %vm7561, %vm7562
      %v7564 = vsel %vm7563, %v7556, %v7560
      %v7565 = vand.u32 2147483647, %v7132
      %vm7566 = vcmp.eq.f32.partialorder %v7565, 8.507059e+37
      %v7567 = vand.u32 %v7132, 2147483648
      %v7568 = vor.u32 1.1754944e-38, %v7567
      %v7569 = vsel %vm7566, %v7568, %v7564
      %v7570 = vmul.f32 1.0, %v7569
      %v7571 = vrcp.pop %v7133
      %v7572 = vmul.f32 %v7133, %v7571
      %v7573 = vsub.f32 1.0, %v7572
      %v7574 = vmul.f32 %v7571, %v7573
      %v7575 = vadd.f32 %v7571, %v7574
      %vm7576 = vweird.f32 %v7133
      %vm7577 = vweird.f32 %v7571
      %vm7578 = vmor %vm7576, %vm7577
      %v7579 = vsel %vm7578, %v7571, %v7575
      %v7580 = vand.u32 2147483647, %v7133
      %vm7581 = vcmp.eq.f32.partialorder %v7580, 8.507059e+37
      %v7582 = vand.u32 %v7133, 2147483648
      %v7583 = vor.u32 1.1754944e-38, %v7582
      %v7584 = vsel %vm7581, %v7583, %v7579
      %v7585 = vmul.f32 1.0, %v7584
      %v7586 = vrcp.pop %v7134
      %v7587 = vmul.f32 %v7134, %v7586
      %v7588 = vsub.f32 1.0, %v7587
      %v7589 = vmul.f32 %v7586, %v7588
      %v7590 = vadd.f32 %v7586, %v7589
      %vm7591 = vweird.f32 %v7134
      %vm7592 = vweird.f32 %v7586
      %vm7593 = vmor %vm7591, %vm7592
      %v7594 = vsel %vm7593, %v7586, %v7590
      %v7595 = vand.u32 2147483647, %v7134
      %vm7596 = vcmp.eq.f32.partialorder %v7595, 8.507059e+37
      %v7597 = vand.u32 %v7134, 2147483648
      %v7598 = vor.u32 1.1754944e-38, %v7597
      %v7599 = vsel %vm7596, %v7598, %v7594
      %v7600 = vmul.f32 1.0, %v7599
      %v7601 = vrcp.pop %v7135
      %v7602 = vmul.f32 %v7135, %v7601
      %v7603 = vsub.f32 1.0, %v7602
      %v7604 = vmul.f32 %v7601, %v7603
      %v7605 = vadd.f32 %v7601, %v7604
      %vm7606 = vweird.f32 %v7135
      %vm7607 = vweird.f32 %v7601
      %vm7608 = vmor %vm7606, %vm7607
      %v7609 = vsel %vm7608, %v7601, %v7605
      %v7610 = vand.u32 2147483647, %v7135
      %vm7611 = vcmp.eq.f32.partialorder %v7610, 8.507059e+37
      %v7612 = vand.u32 %v7135, 2147483648
      %v7613 = vor.u32 1.1754944e-38, %v7612
      %v7614 = vsel %vm7611, %v7613, %v7609
      %v7615 = vmul.f32 1.0, %v7614
      %v7616 = vmul.f32 %v701, %v7150
      %v7617 = vmul.f32 %v702, %v7165
      %v7618 = vmul.f32 %v703, %v7180
      %v7619 = vmul.f32 %v704, %v7195
      %v7620 = vmul.f32 %v705, %v7210
      %v7621 = vmul.f32 %v706, %v7225
      %v7622 = vmul.f32 %v707, %v7240
      %v7623 = vmul.f32 %v708, %v7255
      %v7624 = vmul.f32 %v709, %v7270
      %v7625 = vmul.f32 %v710, %v7285
      %v7626 = vmul.f32 %v711, %v7300
      %v7627 = vmul.f32 %v712, %v7315
      %v7628 = vmul.f32 %v713, %v7330
      %v7629 = vmul.f32 %v714, %v7345
      %v7630 = vmul.f32 %v715, %v7360
      %v7631 = vmul.f32 %v716, %v7375
      %v7632 = vmul.f32 %v733, %v7390
      %v7633 = vmul.f32 %v734, %v7405
      %v7634 = vmul.f32 %v735, %v7420
      %v7635 = vmul.f32 %v736, %v7435
      %v7636 = vmul.f32 %v737, %v7450
      %v7637 = vmul.f32 %v738, %v7465
      %v7638 = vmul.f32 %v739, %v7480
      %v7639 = vmul.f32 %v740, %v7495
      %v7640 = vmul.f32 %v741, %v7510
      %v7641 = vmul.f32 %v742, %v7525
      %v7642 = vmul.f32 %v743, %v7540
      %v7643 = vmul.f32 %v744, %v7555
      %v7644 = vmul.f32 %v745, %v7570
      %v7645 = vmul.f32 %v746, %v7585
      %v7646 = vmul.f32 %v747, %v7600
      %v7647 = vmul.f32 %v748, %v7615
      %7648 = vxpose.xlu0.b32.start [1/16] %v7616, 128
      %7649 = vxpose.xlu0.b32.cont [2/16] %v7617, 128
      %7650 = vxpose.xlu0.b32.cont [3/16] %v7618, 128
      %7651 = vxpose.xlu0.b32.cont [4/16] %v7619, 128
      %7652 = vxpose.xlu0.b32.cont [5/16] %v7620, 128
      %7653 = vxpose.xlu0.b32.cont [6/16] %v7621, 128
      %7654 = vxpose.xlu0.b32.cont [7/16] %v7622, 128
      %7655 = vxpose.xlu0.b32.cont [8/16] %v7623, 128
      %7656 = vxpose.xlu0.b32.cont [9/16] %v7624, 128
      %7657 = vxpose.xlu0.b32.cont [10/16] %v7625, 128
      %7658 = vxpose.xlu0.b32.cont [11/16] %v7626, 128
      %7659 = vxpose.xlu0.b32.cont [12/16] %v7627, 128
      %7660 = vxpose.xlu0.b32.cont [13/16] %v7628, 128
      %7661 = vxpose.xlu0.b32.cont [14/16] %v7629, 128
      %7662 = vxpose.xlu0.b32.cont [15/16] %v7630, 128
      %7663 = vxpose.xlu0.b32.end [16/16] %v7631, 128
      %v7664 = vpop.trf.xlu0
      %v7665 = vpop.trf.xlu0
      %v7666 = vpop.trf.xlu0
      %v7667 = vpop.trf.xlu0
      %v7668 = vpop.trf.xlu0
      %v7669 = vpop.trf.xlu0
      %v7670 = vpop.trf.xlu0
      %v7671 = vpop.trf.xlu0
      %v7672 = vpop.trf.xlu0
      %v7673 = vpop.trf.xlu0
      %v7674 = vpop.trf.xlu0
      %v7675 = vpop.trf.xlu0
      %v7676 = vpop.trf.xlu0
      %v7677 = vpop.trf.xlu0
      %v7678 = vpop.trf.xlu0
      %v7679 = vpop.trf.xlu0
      %7680 = vxpose.xlu0.b32.start [1/16] %v7632, 128
      %7681 = vxpose.xlu0.b32.cont [2/16] %v7633, 128
      %7682 = vxpose.xlu0.b32.cont [3/16] %v7634, 128
      %7683 = vxpose.xlu0.b32.cont [4/16] %v7635, 128
      %7684 = vxpose.xlu0.b32.cont [5/16] %v7636, 128
      %7685 = vxpose.xlu0.b32.cont [6/16] %v7637, 128
      %7686 = vxpose.xlu0.b32.cont [7/16] %v7638, 128
      %7687 = vxpose.xlu0.b32.cont [8/16] %v7639, 128
      %7688 = vxpose.xlu0.b32.cont [9/16] %v7640, 128
      %7689 = vxpose.xlu0.b32.cont [10/16] %v7641, 128
      %7690 = vxpose.xlu0.b32.cont [11/16] %v7642, 128
      %7691 = vxpose.xlu0.b32.cont [12/16] %v7643, 128
      %7692 = vxpose.xlu0.b32.cont [13/16] %v7644, 128
      %7693 = vxpose.xlu0.b32.cont [14/16] %v7645, 128
      %7694 = vxpose.xlu0.b32.cont [15/16] %v7646, 128
      %7695 = vxpose.xlu0.b32.end [16/16] %v7647, 128
      %v7696 = vpop.trf.xlu0
      %v7697 = vpop.trf.xlu0
      %v7698 = vpop.trf.xlu0
      %v7699 = vpop.trf.xlu0
      %v7700 = vpop.trf.xlu0
      %v7701 = vpop.trf.xlu0
      %v7702 = vpop.trf.xlu0
      %v7703 = vpop.trf.xlu0
      %v7704 = vpop.trf.xlu0
      %v7705 = vpop.trf.xlu0
      %v7706 = vpop.trf.xlu0
      %v7707 = vpop.trf.xlu0
      %v7708 = vpop.trf.xlu0
      %v7709 = vpop.trf.xlu0
      %v7710 = vpop.trf.xlu0
      %v7711 = vpop.trf.xlu0
      %7712 = vst [vmem:[%s386] sm:$0xff] %v7664
      %7713 = vst [vmem:[%s386 + $0x8] sm:$0xff] %v7696
      %7714 = vst [vmem:[%s386 + $0x10] sm:$0xff] %v7665
      %7715 = vst [vmem:[%s386 + $0x18] sm:$0xff] %v7697
      %7716 = vst [vmem:[%s386 + $0x20] sm:$0xff] %v7666
      %7717 = vst [vmem:[%s386 + $0x28] sm:$0xff] %v7698
      %7718 = vst [vmem:[%s386 + $0x30] sm:$0xff] %v7667
      %7719 = vst [vmem:[%s386 + $0x38] sm:$0xff] %v7699
      %p7720 = scmp.lt.s32.totalorder %s22, 1
      %s7721 = scalar_select %p7720, %s22, 1
      %s7722 = smul.addr %s7721, 8
      %s7723 = smul.addr %s7722, 8
      %s7724 = scalar_lea.vmem %s11, %s7723
      // Predicated region
      $region65: #{sccsa_forward.1} parent=63 // pred_check
        %p7725 = pneg %p276
      $region66: #{sccsa_forward.1} parent=63 // pred_check_branch
        %7727 = sbr.rel (%p7725) target = $region68
      $region67: #{sccsa_forward.1} parent=63 // pred_region
        _
      $region68: #{sccsa_forward.1} parent=63 // pred_fallthru
        _
    $region64: #{sccsa_forward.1} parent=5 // pred_fallthru
      _
    %p7728 = scmp.le.s32.totalorder 2, %s17
    // Predicated region
    $region69: #{sccsa_forward.1} parent=5 // pred_check
      %p7729 = pneg %p7728
    $region70: #{sccsa_forward.1} parent=5 // pred_check_branch
      %7731 = sbr.rel (%p7729) target = $region72
    $region71: #{sccsa_forward.1} parent=5 // pred_region
      %s7732 = ssub.s32 %s17, 2
      // Predicated region
      $region73: #{sccsa_forward.1} parent=71 // pred_check
        %p7733 = pneg %p282
      $region74: #{sccsa_forward.1} parent=71 // pred_check_branch
        %7735 = sbr.rel (%p7733) target = $region76
      $region75: #{sccsa_forward.1} parent=71 // pred_region
        %p7736 = scmp.lt.s32.totalorder %s23, 1
        %s7737 = scalar_select %p7736, %s23, 1
        %s7738 = smul.addr %s7737, 8
        %s7739 = smul.addr %s7738, 8
        %s7740 = scalar_lea.vmem %s11, %s7739
      $region76: #{sccsa_forward.1} parent=71 // pred_fallthru
        _
    $region72: #{sccsa_forward.1} parent=5 // pred_fallthru
      _
  $region6: #{sccsa_forward.1} parent=0 // loop_footer
    %s21 = sadd.s32 1, %s17
  $region7: #{sccsa_forward.1} parent=0 // loop_footer_branch
    %16 = sbr.rel target = $region3
  $region8: #{sccsa_forward.1} parent=0 // loop_exit
    _

</llo_original>
